<compile_context>
chip_gen: v6e
topology: v6e:2x2x1
jax: 0.10.0
libtpu: 0.0.40
codegen_flags: <defaults>
</compile_context>

<pallas_src>
import functools

import jax
import jax.numpy as jnp
from jax.experimental import pallas as pl
from jax.experimental.pallas import tpu as pltpu

# ----------------------------- config (small) --------------------------------
IN_CHANNELS = 3
POOL_FEATURES = 32            # encoder.fc.in_features (surrogate)
META_DIM = 5
F_MID = POOL_FEATURES // 2    # fc1 output features
KTAPS = 9 * IN_CHANNELS       # 3x3 conv taps x input channels = 27
USE_META = True
USE_ACT = False               # ModelV2 default
DROP_RATE = 0.1               # inference mode -> dropout is identity


# ------------------------------ fused Pallas kernel ---------------------------
def _fused_stem_pool_head_kernel(
    img_ref,    # (C, H, W)          f32  per-batch image, NCHW layout (W in lanes)
    wct_ref,    # (CF, 27)           f32  conv weights: [co, (dh*3+dw)*C + ci]
    bc_ref,     # (CF, 1)            f32  conv bias (per out-channel column)
    meta_ref,   # (META_DIM, 1)      f32
    w1f_ref,    # (F_MID, CF)        f32  fc1 weight cols for pooled features
    w1m_ref,    # (F_MID, META_DIM)  f32  fc1 weight cols for meta
    b1_ref,     # (F_MID, 1)         f32
    w2_ref,     # (1, F_MID)         f32  fc2 weight (PyTorch (out,in) layout)
    b2_ref,     # (1, 1)             f32  fc2 bias, SMEM
    o_ref,      # (1, 1)             f32  output (batch dim squeezed)
    tap_ref,    # (27, W)            f32  scratch: per-row tap matrix
    acc_ref,    # (CF, 1)            f32  scratch: running per-channel pool sums
    *, row_tile, height, width, cin, inv_hw, use_act,
):
    t = pl.program_id(1)

    # NOTE: the init-at-t==0 / finalize-at-last-t accumulator pattern is only
    # correct because the grid iterates b-major / t-minor and t is "arbitrary".
    # Do NOT mark t parallel or reorder the grid axes.
    @pl.when(t == 0)
    def _init():
        acc_ref[...] = jnp.zeros_like(acc_ref)

    zero_col = jnp.zeros((1, 1), jnp.float32)
    h0 = pl.multiple_of(t * row_tile, row_tile)

    # Static unroll over the row band; per-row working set (tap matrix + one
    # (CF, W) feature slab) is small, so live ranges stay bounded.
    for i in range(row_tile):
        h = h0 + i

        # ---- assemble the (27, W) tap matrix for output row h ----------------
        # Taps are lane-aligned row copies of the NCHW image.  'Same' zero
        # padding is folded in here (row-validity scalar + zero edge columns),
        # so no padded image copy ever exists in HBM.
        for dh in range(3):
            src = h + (dh - 1)
            row_ok = jnp.logical_and(src >= 0, src < height).astype(jnp.float32)
            src_c = jnp.clip(src, 0, height - 1)
            for ci in range(cin):
                r = img_ref[ci, pl.ds(src_c, 1), :] * row_ok          # (1, W)
                k0 = (dh * 3) * cin + ci
                # dw = 0 -> img[..., w-1]: shift right, zero at w == 0
                tap_ref[pl.ds(k0, 1), :] = jnp.concatenate(
                    [zero_col, r[:, : width - 1]], axis=1)
                # dw = 1 -> unshifted
                tap_ref[pl.ds(k0 + cin, 1), :] = r
                # dw = 2 -> img[..., w+1]: shift left, zero at w == W-1
                tap_ref[pl.ds(k0 + 2 * cin, 1), :] = jnp.concatenate(
                    [r[:, 1:], zero_col], axis=1)

        # ---- one K=27 MXU dot for the whole row: (CF,27)@(27,W) -> (CF,W) ----
        ft = jnp.dot(wct_ref[...], tap_ref[...],
                     preferred_element_type=jnp.float32)
        ft = jnp.maximum(ft + bc_ref[...], 0.0)                        # bias + ReLU

        # ---- fused global average pool: per-channel partial sums -------------
        acc_ref[...] += jnp.sum(ft, axis=1, keepdims=True)             # (CF, 1)

    # ---- finalize: pool scale + head (fc1 two-dot trick, dropout(eval)=id, fc2)
    @pl.when(t == pl.num_programs(1) - 1)
    def _finalize():
        pooled = acc_ref[...] * inv_hw                                 # (CF, 1)
        h1 = (jnp.dot(w1f_ref[...], pooled, preferred_element_type=jnp.float32)
              + jnp.dot(w1m_ref[...], meta_ref[...],
                        preferred_element_type=jnp.float32)
              + b1_ref[...])                                           # (F_MID, 1)
        # F.dropout(..., training=False) -> identity (inference semantics)
        if use_act:
            h1 = jnp.maximum(h1, 0.0)
        o_ref[...] = (jnp.dot(w2_ref[...], h1,
                              preferred_element_type=jnp.float32)
                      + b2_ref[0, 0])                                  # (1, 1)


# ------------------------------ wrapper / glue --------------------------------
def init_params(key):
    ks = jax.random.split(key, 6)
    cin, cf, fmid = IN_CHANNELS, POOL_FEATURES, F_MID
    return {
        "conv_w": jax.random.normal(ks[0], (3, 3, cin, cf), jnp.float32) * 0.1,
        "conv_b": jax.random.normal(ks[1], (cf,), jnp.float32) * 0.1,
        "fc1_w": jax.random.normal(ks[2], (fmid, cf + META_DIM), jnp.float32) * 0.1,
        "fc1_b": jax.random.normal(ks[3], (fmid,), jnp.float32) * 0.1,
        "fc2_w": jax.random.normal(ks[4], (1, fmid), jnp.float32) * 0.1,
        "fc2_b": jax.random.normal(ks[5], (1,), jnp.float32) * 0.1,
    }


@functools.partial(jax.jit, static_argnames=("row_tile",))
def model_v2_forward(params, img_nchw, meta, *, row_tile=8):
    B, C, H, W = img_nchw.shape
    assert H % row_tile == 0, "row_tile must divide H"
    nt = H // row_tile

    # Image stays in NCHW; no transpose, no pad, no dtype-cast copy in HBM.
    img_f32 = img_nchw.astype(jnp.float32)
    meta_col = meta.astype(jnp.float32).reshape(B, META_DIM, 1)

    # Tiny weight repacks (negligible, weights are KB-scale).
    wc_t = jnp.transpose(params["conv_w"], (3, 0, 1, 2)).reshape(POOL_FEATURES, KTAPS)
    bc_col = params["conv_b"].reshape(POOL_FEATURES, 1)
    w1f_t = params["fc1_w"][:, :POOL_FEATURES]                         # (F_MID, CF)
    w1m_t = params["fc1_w"][:, POOL_FEATURES:]                         # (F_MID, 5)
    b1_col = params["fc1_b"].reshape(F_MID, 1)
    w2_row = params["fc2_w"]                                           # (1, F_MID)
    b2 = params["fc2_b"].reshape(1, 1)

    kernel = functools.partial(
        _fused_stem_pool_head_kernel,
        row_tile=row_tile, height=H, width=W, cin=C,
        inv_hw=1.0 / float(H * W), use_act=USE_ACT,
    )

    out = pl.pallas_call(
        kernel,
        out_shape=jax.ShapeDtypeStruct((B, 1, 1), jnp.float32),
        grid_spec=pltpu.PrefetchScalarGridSpec(
            num_scalar_prefetch=0,
            grid=(B, nt),
            in_specs=[
                # per-batch image, NCHW: W in lanes / H in sublanes (lane-dense),
                # resident across the row-band axis.
                pl.BlockSpec((None, C, H, W), lambda b, t: (b, 0, 0, 0)),
                # weights / biases: constant index_maps -> resident in VMEM
                pl.BlockSpec((POOL_FEATURES, KTAPS), lambda b, t: (0, 0)),
                pl.BlockSpec((POOL_FEATURES, 1), lambda b, t: (0, 0)),
                pl.BlockSpec((None, META_DIM, 1), lambda b, t: (b, 0, 0)),
                pl.BlockSpec((F_MID, POOL_FEATURES), lambda b, t: (0, 0)),
                pl.BlockSpec((F_MID, META_DIM), lambda b, t: (0, 0)),
                pl.BlockSpec((F_MID, 1), lambda b, t: (0, 0)),
                pl.BlockSpec((1, F_MID), lambda b, t: (0, 0)),
                # true scalar -> SMEM (no pointless VMEM double buffer)
                pl.BlockSpec(memory_space=pltpu.MemorySpace.SMEM),
            ],
            out_specs=pl.BlockSpec((None, 1, 1), lambda b, t: (b, 0, 0)),
            scratch_shapes=[
                pltpu.VMEM((KTAPS, W), jnp.float32),          # per-row tap matrix
                pltpu.VMEM((POOL_FEATURES, 1), jnp.float32),  # pool accumulator
            ],
        ),
        compiler_params=pltpu.CompilerParams(
            # batch axis parallel (megacore); pool reduction axis arbitrary.
            dimension_semantics=("parallel", "arbitrary"),
            # Generation-aware-ish: above the 16/32 MiB defaults, below v7x's
            # 64 MiB physical.  Actual need here is a few MiB.
            vmem_limit_bytes=56 * 1024 * 1024,
        ),
    )(img_f32, wc_t, bc_col, meta_col, w1f_t, w1m_t, b1_col, w2_row, b2)

    return out.reshape(B, 1)


# ---------------------------- pure-JAX reference -------------------------------
@jax.jit
def reference_forward(params, img_nchw, meta):
    B, C, H, W = img_nchw.shape
    x = jnp.transpose(img_nchw, (0, 2, 3, 1)).astype(jnp.float32)      # NHWC
    xp = jnp.pad(x, ((0, 0), (1, 1), (1, 1), (0, 0)))
    wc = params["conv_w"]                                              # (3,3,C,CF)
    feat = jnp.zeros((B, H, W, POOL_FEATURES), jnp.float32)
    for dh in range(3):
        for dw in range(3):
            tap = xp[:, dh:dh + H, dw:dw + W, :]                       # (B,H,W,C)
            feat = feat + jnp.einsum('bhwc,cf->bhwf', tap, wc[dh, dw])
    feat = jnp.maximum(feat + params["conv_b"].reshape(1, 1, 1, -1), 0.0)
    pooled = jnp.mean(feat, axis=(1, 2))                               # (B, CF)
    z = jnp.concatenate([pooled, meta.astype(jnp.float32)], axis=1)    # (B, CF+5)
    h1 = z @ params["fc1_w"].T + params["fc1_b"]
    if USE_ACT:
        h1 = jnp.maximum(h1, 0.0)
    return h1 @ params["fc2_w"].T + params["fc2_b"]                    # (B, 1)


# ------------------------------------ main ------------------------------------
if __name__ == "__main__":
    key = jax.random.PRNGKey(0)
    k_param, k_img, k_meta = jax.random.split(key, 3)

    params = init_params(k_param)
    img = jax.random.normal(k_img, (2, IN_CHANNELS, 16, 16), jnp.float32)  # NCHW
    meta = jax.random.normal(k_meta, (2, META_DIM), jnp.float32)

    out = model_v2_forward(params, img, meta, row_tile=8)   # 2 row bands per image
    out = jax.block_until_ready(out)

    assert out.shape == (2, 1), out.shape
    assert bool(jnp.all(jnp.isfinite(out)))

    ref = reference_forward(params, img, meta)
    assert jnp.allclose(out, ref, rtol=1e-2, atol=1e-3), (out, ref)

    print("KERNEL_OK")
</pallas_src>

<mosaic_0001>
module attributes {stable_mosaic.version = 11 : i64} {
  func.func @_fused_stem_pool_head_kernel(%arg0: i32, %arg1: i32, %arg2: memref<1x3x16x16xf32, #tpu.memory_space<vmem>>, %arg3: memref<32x27xf32, #tpu.memory_space<vmem>>, %arg4: memref<32x1xf32, #tpu.memory_space<vmem>>, %arg5: memref<1x5x1xf32, #tpu.memory_space<vmem>>, %arg6: memref<16x32xf32, #tpu.memory_space<vmem>>, %arg7: memref<16x5xf32, #tpu.memory_space<vmem>>, %arg8: memref<16x1xf32, #tpu.memory_space<vmem>>, %arg9: memref<1x16xf32, #tpu.memory_space<vmem>>, %arg10: memref<1x1xf32, #tpu.memory_space<smem>>, %arg11: memref<1x1x1xf32, #tpu.memory_space<vmem>>, %arg12: memref<27x16xf32, #tpu.memory_space<vmem>>, %arg13: memref<32x1xf32, #tpu.memory_space<vmem>>) attributes {dimension_semantics = [#tpu.dimension_semantics<parallel>, #tpu.dimension_semantics<arbitrary>], iteration_bounds = array<i64: 2, 2>, scalar_prefetch = 0 : i64, scratch_operands = 2 : i64, tpu.core_type = #tpu.core_type<tc>, window_params = [{transform_indices = @transform_0, window_bounds = array<i64: 1, 3, 16, 16>}, {pipeline_mode = #tpu.pipeline_mode<synchronous>, transform_indices = @transform_1, window_bounds = array<i64: 32, 27>}, {pipeline_mode = #tpu.pipeline_mode<synchronous>, transform_indices = @transform_2, window_bounds = array<i64: 32, 1>}, {transform_indices = @transform_3, window_bounds = array<i64: 1, 5, 1>}, {pipeline_mode = #tpu.pipeline_mode<synchronous>, transform_indices = @transform_4, window_bounds = array<i64: 16, 32>}, {pipeline_mode = #tpu.pipeline_mode<synchronous>, transform_indices = @transform_5, window_bounds = array<i64: 16, 5>}, {pipeline_mode = #tpu.pipeline_mode<synchronous>, transform_indices = @transform_6, window_bounds = array<i64: 16, 1>}, {pipeline_mode = #tpu.pipeline_mode<synchronous>, transform_indices = @transform_7, window_bounds = array<i64: 1, 16>}, {transform_indices = @transform_8, window_bounds = array<i64: 1, 1>}, {transform_indices = @transform_9, window_bounds = array<i64: 1, 1, 1>}]} {
    %c0_i32 = arith.constant 0 : i32
    %0 = arith.cmpi eq, %arg1, %c0_i32 : i32
    %1 = arith.extui %0 : i1 to i32
    %c0_i32_0 = arith.constant 0 : i32
    %2 = arith.cmpi ne, %1, %c0_i32_0 : i32
    scf.if %2 {
      %cst_846 = arith.constant 0.000000e+00 : f32
      %1177 = vector.broadcast %cst_846 : f32 to vector<32x1xf32>
      %c0_847 = arith.constant 0 : index
      %c0_848 = arith.constant 0 : index
      %1178 = vector.load %arg13[%c0_847, %c0_848] : memref<32x1xf32, #tpu.memory_space<vmem>>, vector<32x1xf32>
      tpu.vector_store %arg13[%c0_847, %c0_848], %1177 {strides = array<i32>} : memref<32x1xf32, #tpu.memory_space<vmem>>, vector<32x1xf32>,
    } else {
    }
    %cst = arith.constant 0.000000e+00 : f32
    %3 = vector.broadcast %cst : f32 to vector<1x1xf32>
    %c8_i32 = arith.constant 8 : i32
    %4 = arith.muli %arg1, %c8_i32 : i32
    %5 = tpu.assume_multiple %4, 8 : i32
    %c0_i32_1 = arith.constant 0 : i32
    %6 = arith.addi %5, %c0_i32_1 : i32
    %c-1_i32 = arith.constant -1 : i32
    %7 = arith.addi %6, %c-1_i32 : i32
    %c0_i32_2 = arith.constant 0 : i32
    %8 = arith.cmpi sge, %7, %c0_i32_2 : i32
    %c16_i32 = arith.constant 16 : i32
    %9 = arith.cmpi slt, %7, %c16_i32 : i32
    %10 = arith.andi %8, %9 : i1
    %11 = arith.extui %10 : i1 to i32
    %12 = arith.sitofp %11 : i32 to f32
    %c0_i32_3 = arith.constant 0 : i32
    %c15_i32 = arith.constant 15 : i32
    %13 = arith.maxsi %c0_i32_3, %7 : i32
    %14 = arith.minsi %c15_i32, %13 : i32
    %c0 = arith.constant 0 : index
    %c0_4 = arith.constant 0 : index
    %15 = arith.index_cast %14 : i32 to index
    %c0_5 = arith.constant 0 : index
    %16 = vector.load %arg2[%c0, %c0_4, %15, %c0_5] : memref<1x3x16x16xf32, #tpu.memory_space<vmem>>, vector<1x1x1x16xf32>
    %17 = vector.shape_cast %16 : vector<1x1x1x16xf32> to vector<1x16xf32>
    %18 = vector.broadcast %12 : f32 to vector<1x16xf32>
    %19 = arith.mulf %17, %18 : vector<1x16xf32>
    %20 = vector.extract_strided_slice %19 {offsets = [0, 0], sizes = [1, 15], strides = [1, 1]} : vector<1x16xf32> to vector<1x15xf32>
    %21 = tpu.concatenate %3, %20 in 1 : vector<1x1xf32>, vector<1x15xf32> -> vector<1x16xf32>
    %c0_6 = arith.constant 0 : index
    %c0_7 = arith.constant 0 : index
    %22 = vector.load %arg12[%c0_6, %c0_7] : memref<27x16xf32, #tpu.memory_space<vmem>>, vector<1x16xf32>
    tpu.vector_store %arg12[%c0_6, %c0_7], %21 {strides = array<i32>} : memref<27x16xf32, #tpu.memory_space<vmem>>, vector<1x16xf32>,
    %c3 = arith.constant 3 : index
    %c0_8 = arith.constant 0 : index
    %23 = vector.load %arg12[%c3, %c0_8] : memref<27x16xf32, #tpu.memory_space<vmem>>, vector<1x16xf32>
    tpu.vector_store %arg12[%c3, %c0_8], %19 {strides = array<i32>} : memref<27x16xf32, #tpu.memory_space<vmem>>, vector<1x16xf32>,
    %24 = vector.extract_strided_slice %19 {offsets = [0, 1], sizes = [1, 15], strides = [1, 1]} : vector<1x16xf32> to vector<1x15xf32>
    %25 = tpu.concatenate %24, %3 in 1 : vector<1x15xf32>, vector<1x1xf32> -> vector<1x16xf32>
    %c6 = arith.constant 6 : index
    %c0_9 = arith.constant 0 : index
    %26 = vector.load %arg12[%c6, %c0_9] : memref<27x16xf32, #tpu.memory_space<vmem>>, vector<1x16xf32>
    tpu.vector_store %arg12[%c6, %c0_9], %25 {strides = array<i32>} : memref<27x16xf32, #tpu.memory_space<vmem>>, vector<1x16xf32>,
    %c0_10 = arith.constant 0 : index
    %c1 = arith.constant 1 : index
    %27 = arith.index_cast %14 : i32 to index
    %c0_11 = arith.constant 0 : index
    %28 = vector.load %arg2[%c0_10, %c1, %27, %c0_11] : memref<1x3x16x16xf32, #tpu.memory_space<vmem>>, vector<1x1x1x16xf32>
    %29 = vector.shape_cast %28 : vector<1x1x1x16xf32> to vector<1x16xf32>
    %30 = vector.broadcast %12 : f32 to vector<1x16xf32>
    %31 = arith.mulf %29, %30 : vector<1x16xf32>
    %32 = vector.extract_strided_slice %31 {offsets = [0, 0], sizes = [1, 15], strides = [1, 1]} : vector<1x16xf32> to vector<1x15xf32>
    %33 = tpu.concatenate %3, %32 in 1 : vector<1x1xf32>, vector<1x15xf32> -> vector<1x16xf32>
    %c1_12 = arith.constant 1 : index
    %c0_13 = arith.constant 0 : index
    %34 = vector.load %arg12[%c1_12, %c0_13] : memref<27x16xf32, #tpu.memory_space<vmem>>, vector<1x16xf32>
    tpu.vector_store %arg12[%c1_12, %c0_13], %33 {strides = array<i32>} : memref<27x16xf32, #tpu.memory_space<vmem>>, vector<1x16xf32>,
    %c4 = arith.constant 4 : index
    %c0_14 = arith.constant 0 : index
    %35 = vector.load %arg12[%c4, %c0_14] : memref<27x16xf32, #tpu.memory_space<vmem>>, vector<1x16xf32>
    tpu.vector_store %arg12[%c4, %c0_14], %31 {strides = array<i32>} : memref<27x16xf32, #tpu.memory_space<vmem>>, vector<1x16xf32>,
    %36 = vector.extract_strided_slice %31 {offsets = [0, 1], sizes = [1, 15], strides = [1, 1]} : vector<1x16xf32> to vector<1x15xf32>
    %37 = tpu.concatenate %36, %3 in 1 : vector<1x15xf32>, vector<1x1xf32> -> vector<1x16xf32>
    %c7 = arith.constant 7 : index
    %c0_15 = arith.constant 0 : index
    %38 = vector.load %arg12[%c7, %c0_15] : memref<27x16xf32, #tpu.memory_space<vmem>>, vector<1x16xf32>
    tpu.vector_store %arg12[%c7, %c0_15], %37 {strides = array<i32>} : memref<27x16xf32, #tpu.memory_space<vmem>>, vector<1x16xf32>,
    %c0_16 = arith.constant 0 : index
    %c2 = arith.constant 2 : index
    %39 = arith.index_cast %14 : i32 to index
    %c0_17 = arith.constant 0 : index
    %40 = vector.load %arg2[%c0_16, %c2, %39, %c0_17] : memref<1x3x16x16xf32, #tpu.memory_space<vmem>>, vector<1x1x1x16xf32>
    %41 = vector.shape_cast %40 : vector<1x1x1x16xf32> to vector<1x16xf32>
    %42 = vector.broadcast %12 : f32 to vector<1x16xf32>
    %43 = arith.mulf %41, %42 : vector<1x16xf32>
    %44 = vector.extract_strided_slice %43 {offsets = [0, 0], sizes = [1, 15], strides = [1, 1]} : vector<1x16xf32> to vector<1x15xf32>
    %45 = tpu.concatenate %3, %44 in 1 : vector<1x1xf32>, vector<1x15xf32> -> vector<1x16xf32>
    %c2_18 = arith.constant 2 : index
    %c0_19 = arith.constant 0 : index
    %46 = vector.load %arg12[%c2_18, %c0_19] : memref<27x16xf32, #tpu.memory_space<vmem>>, vector<1x16xf32>
    tpu.vector_store %arg12[%c2_18, %c0_19], %45 {strides = array<i32>} : memref<27x16xf32, #tpu.memory_space<vmem>>, vector<1x16xf32>,
    %c5 = arith.constant 5 : index
    %c0_20 = arith.constant 0 : index
    %47 = vector.load %arg12[%c5, %c0_20] : memref<27x16xf32, #tpu.memory_space<vmem>>, vector<1x16xf32>
    tpu.vector_store %arg12[%c5, %c0_20], %43 {strides = array<i32>} : memref<27x16xf32, #tpu.memory_space<vmem>>, vector<1x16xf32>,
    %48 = vector.extract_strided_slice %43 {offsets = [0, 1], sizes = [1, 15], strides = [1, 1]} : vector<1x16xf32> to vector<1x15xf32>
    %49 = tpu.concatenate %48, %3 in 1 : vector<1x15xf32>, vector<1x1xf32> -> vector<1x16xf32>
    %c8 = arith.constant 8 : index
    %c0_21 = arith.constant 0 : index
    %50 = vector.load %arg12[%c8, %c0_21] : memref<27x16xf32, #tpu.memory_space<vmem>>, vector<1x16xf32>
    tpu.vector_store %arg12[%c8, %c0_21], %49 {strides = array<i32>} : memref<27x16xf32, #tpu.memory_space<vmem>>, vector<1x16xf32>,
    %c0_i32_22 = arith.constant 0 : i32
    %51 = arith.addi %6, %c0_i32_22 : i32
    %c0_i32_23 = arith.constant 0 : i32
    %52 = arith.cmpi sge, %51, %c0_i32_23 : i32
    %c16_i32_24 = arith.constant 16 : i32
    %53 = arith.cmpi slt, %51, %c16_i32_24 : i32
    %54 = arith.andi %52, %53 : i1
    %55 = arith.extui %54 : i1 to i32
    %56 = arith.sitofp %55 : i32 to f32
    %c0_i32_25 = arith.constant 0 : i32
    %c15_i32_26 = arith.constant 15 : i32
    %57 = arith.maxsi %c0_i32_25, %51 : i32
    %58 = arith.minsi %c15_i32_26, %57 : i32
    %c0_27 = arith.constant 0 : index
    %c0_28 = arith.constant 0 : index
    %59 = arith.index_cast %58 : i32 to index
    %c0_29 = arith.constant 0 : index
    %60 = vector.load %arg2[%c0_27, %c0_28, %59, %c0_29] : memref<1x3x16x16xf32, #tpu.memory_space<vmem>>, vector<1x1x1x16xf32>
    %61 = vector.shape_cast %60 : vector<1x1x1x16xf32> to vector<1x16xf32>
    %62 = vector.broadcast %56 : f32 to vector<1x16xf32>
    %63 = arith.mulf %61, %62 : vector<1x16xf32>
    %64 = vector.extract_strided_slice %63 {offsets = [0, 0], sizes = [1, 15], strides = [1, 1]} : vector<1x16xf32> to vector<1x15xf32>
    %65 = tpu.concatenate %3, %64 in 1 : vector<1x1xf32>, vector<1x15xf32> -> vector<1x16xf32>
    %c9 = arith.constant 9 : index
    %c0_30 = arith.constant 0 : index
    %66 = vector.load %arg12[%c9, %c0_30] : memref<27x16xf32, #tpu.memory_space<vmem>>, vector<1x16xf32>
    tpu.vector_store %arg12[%c9, %c0_30], %65 {strides = array<i32>} : memref<27x16xf32, #tpu.memory_space<vmem>>, vector<1x16xf32>,
    %c12 = arith.constant 12 : index
    %c0_31 = arith.constant 0 : index
    %67 = vector.load %arg12[%c12, %c0_31] : memref<27x16xf32, #tpu.memory_space<vmem>>, vector<1x16xf32>
    tpu.vector_store %arg12[%c12, %c0_31], %63 {strides = array<i32>} : memref<27x16xf32, #tpu.memory_space<vmem>>, vector<1x16xf32>,
    %68 = vector.extract_strided_slice %63 {offsets = [0, 1], sizes = [1, 15], strides = [1, 1]} : vector<1x16xf32> to vector<1x15xf32>
    %69 = tpu.concatenate %68, %3 in 1 : vector<1x15xf32>, vector<1x1xf32> -> vector<1x16xf32>
    %c15 = arith.constant 15 : index
    %c0_32 = arith.constant 0 : index
    %70 = vector.load %arg12[%c15, %c0_32] : memref<27x16xf32, #tpu.memory_space<vmem>>, vector<1x16xf32>
    tpu.vector_store %arg12[%c15, %c0_32], %69 {strides = array<i32>} : memref<27x16xf32, #tpu.memory_space<vmem>>, vector<1x16xf32>,
    %c0_33 = arith.constant 0 : index
    %c1_34 = arith.constant 1 : index
    %71 = arith.index_cast %58 : i32 to index
    %c0_35 = arith.constant 0 : index
    %72 = vector.load %arg2[%c0_33, %c1_34, %71, %c0_35] : memref<1x3x16x16xf32, #tpu.memory_space<vmem>>, vector<1x1x1x16xf32>
    %73 = vector.shape_cast %72 : vector<1x1x1x16xf32> to vector<1x16xf32>
    %74 = vector.broadcast %56 : f32 to vector<1x16xf32>
    %75 = arith.mulf %73, %74 : vector<1x16xf32>
    %76 = vector.extract_strided_slice %75 {offsets = [0, 0], sizes = [1, 15], strides = [1, 1]} : vector<1x16xf32> to vector<1x15xf32>
    %77 = tpu.concatenate %3, %76 in 1 : vector<1x1xf32>, vector<1x15xf32> -> vector<1x16xf32>
    %c10 = arith.constant 10 : index
    %c0_36 = arith.constant 0 : index
    %78 = vector.load %arg12[%c10, %c0_36] : memref<27x16xf32, #tpu.memory_space<vmem>>, vector<1x16xf32>
    tpu.vector_store %arg12[%c10, %c0_36], %77 {strides = array<i32>} : memref<27x16xf32, #tpu.memory_space<vmem>>, vector<1x16xf32>,
    %c13 = arith.constant 13 : index
    %c0_37 = arith.constant 0 : index
    %79 = vector.load %arg12[%c13, %c0_37] : memref<27x16xf32, #tpu.memory_space<vmem>>, vector<1x16xf32>
    tpu.vector_store %arg12[%c13, %c0_37], %75 {strides = array<i32>} : memref<27x16xf32, #tpu.memory_space<vmem>>, vector<1x16xf32>,
    %80 = vector.extract_strided_slice %75 {offsets = [0, 1], sizes = [1, 15], strides = [1, 1]} : vector<1x16xf32> to vector<1x15xf32>
    %81 = tpu.concatenate %80, %3 in 1 : vector<1x15xf32>, vector<1x1xf32> -> vector<1x16xf32>
    %c16 = arith.constant 16 : index
    %c0_38 = arith.constant 0 : index
    %82 = vector.load %arg12[%c16, %c0_38] : memref<27x16xf32, #tpu.memory_space<vmem>>, vector<1x16xf32>
    tpu.vector_store %arg12[%c16, %c0_38], %81 {strides = array<i32>} : memref<27x16xf32, #tpu.memory_space<vmem>>, vector<1x16xf32>,
    %c0_39 = arith.constant 0 : index
    %c2_40 = arith.constant 2 : index
    %83 = arith.index_cast %58 : i32 to index
    %c0_41 = arith.constant 0 : index
    %84 = vector.load %arg2[%c0_39, %c2_40, %83, %c0_41] : memref<1x3x16x16xf32, #tpu.memory_space<vmem>>, vector<1x1x1x16xf32>
    %85 = vector.shape_cast %84 : vector<1x1x1x16xf32> to vector<1x16xf32>
    %86 = vector.broadcast %56 : f32 to vector<1x16xf32>
    %87 = arith.mulf %85, %86 : vector<1x16xf32>
    %88 = vector.extract_strided_slice %87 {offsets = [0, 0], sizes = [1, 15], strides = [1, 1]} : vector<1x16xf32> to vector<1x15xf32>
    %89 = tpu.concatenate %3, %88 in 1 : vector<1x1xf32>, vector<1x15xf32> -> vector<1x16xf32>
    %c11 = arith.constant 11 : index
    %c0_42 = arith.constant 0 : index
    %90 = vector.load %arg12[%c11, %c0_42] : memref<27x16xf32, #tpu.memory_space<vmem>>, vector<1x16xf32>
    tpu.vector_store %arg12[%c11, %c0_42], %89 {strides = array<i32>} : memref<27x16xf32, #tpu.memory_space<vmem>>, vector<1x16xf32>,
    %c14 = arith.constant 14 : index
    %c0_43 = arith.constant 0 : index
    %91 = vector.load %arg12[%c14, %c0_43] : memref<27x16xf32, #tpu.memory_space<vmem>>, vector<1x16xf32>
    tpu.vector_store %arg12[%c14, %c0_43], %87 {strides = array<i32>} : memref<27x16xf32, #tpu.memory_space<vmem>>, vector<1x16xf32>,
    %92 = vector.extract_strided_slice %87 {offsets = [0, 1], sizes = [1, 15], strides = [1, 1]} : vector<1x16xf32> to vector<1x15xf32>
    %93 = tpu.concatenate %92, %3 in 1 : vector<1x15xf32>, vector<1x1xf32> -> vector<1x16xf32>
    %c17 = arith.constant 17 : index
    %c0_44 = arith.constant 0 : index
    %94 = vector.load %arg12[%c17, %c0_44] : memref<27x16xf32, #tpu.memory_space<vmem>>, vector<1x16xf32>
    tpu.vector_store %arg12[%c17, %c0_44], %93 {strides = array<i32>} : memref<27x16xf32, #tpu.memory_space<vmem>>, vector<1x16xf32>,
    %c1_i32 = arith.constant 1 : i32
    %95 = arith.addi %6, %c1_i32 : i32
    %c0_i32_45 = arith.constant 0 : i32
    %96 = arith.cmpi sge, %95, %c0_i32_45 : i32
    %c16_i32_46 = arith.constant 16 : i32
    %97 = arith.cmpi slt, %95, %c16_i32_46 : i32
    %98 = arith.andi %96, %97 : i1
    %99 = arith.extui %98 : i1 to i32
    %100 = arith.sitofp %99 : i32 to f32
    %c0_i32_47 = arith.constant 0 : i32
    %c15_i32_48 = arith.constant 15 : i32
    %101 = arith.maxsi %c0_i32_47, %95 : i32
    %102 = arith.minsi %c15_i32_48, %101 : i32
    %c0_49 = arith.constant 0 : index
    %c0_50 = arith.constant 0 : index
    %103 = arith.index_cast %102 : i32 to index
    %c0_51 = arith.constant 0 : index
    %104 = vector.load %arg2[%c0_49, %c0_50, %103, %c0_51] : memref<1x3x16x16xf32, #tpu.memory_space<vmem>>, vector<1x1x1x16xf32>
    %105 = vector.shape_cast %104 : vector<1x1x1x16xf32> to vector<1x16xf32>
    %106 = vector.broadcast %100 : f32 to vector<1x16xf32>
    %107 = arith.mulf %105, %106 : vector<1x16xf32>
    %108 = vector.extract_strided_slice %107 {offsets = [0, 0], sizes = [1, 15], strides = [1, 1]} : vector<1x16xf32> to vector<1x15xf32>
    %109 = tpu.concatenate %3, %108 in 1 : vector<1x1xf32>, vector<1x15xf32> -> vector<1x16xf32>
    %c18 = arith.constant 18 : index
    %c0_52 = arith.constant 0 : index
    %110 = vector.load %arg12[%c18, %c0_52] : memref<27x16xf32, #tpu.memory_space<vmem>>, vector<1x16xf32>
    tpu.vector_store %arg12[%c18, %c0_52], %109 {strides = array<i32>} : memref<27x16xf32, #tpu.memory_space<vmem>>, vector<1x16xf32>,
    %c21 = arith.constant 21 : index
    %c0_53 = arith.constant 0 : index
    %111 = vector.load %arg12[%c21, %c0_53] : memref<27x16xf32, #tpu.memory_space<vmem>>, vector<1x16xf32>
    tpu.vector_store %arg12[%c21, %c0_53], %107 {strides = array<i32>} : memref<27x16xf32, #tpu.memory_space<vmem>>, vector<1x16xf32>,
    %112 = vector.extract_strided_slice %107 {offsets = [0, 1], sizes = [1, 15], strides = [1, 1]} : vector<1x16xf32> to vector<1x15xf32>
    %113 = tpu.concatenate %112, %3 in 1 : vector<1x15xf32>, vector<1x1xf32> -> vector<1x16xf32>
    %c24 = arith.constant 24 : index
    %c0_54 = arith.constant 0 : index
    %114 = vector.load %arg12[%c24, %c0_54] : memref<27x16xf32, #tpu.memory_space<vmem>>, vector<1x16xf32>
    tpu.vector_store %arg12[%c24, %c0_54], %113 {strides = array<i32>} : memref<27x16xf32, #tpu.memory_space<vmem>>, vector<1x16xf32>,
    %c0_55 = arith.constant 0 : index
    %c1_56 = arith.constant 1 : index
    %115 = arith.index_cast %102 : i32 to index
    %c0_57 = arith.constant 0 : index
    %116 = vector.load %arg2[%c0_55, %c1_56, %115, %c0_57] : memref<1x3x16x16xf32, #tpu.memory_space<vmem>>, vector<1x1x1x16xf32>
    %117 = vector.shape_cast %116 : vector<1x1x1x16xf32> to vector<1x16xf32>
    %118 = vector.broadcast %100 : f32 to vector<1x16xf32>
    %119 = arith.mulf %117, %118 : vector<1x16xf32>
    %120 = vector.extract_strided_slice %119 {offsets = [0, 0], sizes = [1, 15], strides = [1, 1]} : vector<1x16xf32> to vector<1x15xf32>
    %121 = tpu.concatenate %3, %120 in 1 : vector<1x1xf32>, vector<1x15xf32> -> vector<1x16xf32>
    %c19 = arith.constant 19 : index
    %c0_58 = arith.constant 0 : index
    %122 = vector.load %arg12[%c19, %c0_58] : memref<27x16xf32, #tpu.memory_space<vmem>>, vector<1x16xf32>
    tpu.vector_store %arg12[%c19, %c0_58], %121 {strides = array<i32>} : memref<27x16xf32, #tpu.memory_space<vmem>>, vector<1x16xf32>,
    %c22 = arith.constant 22 : index
    %c0_59 = arith.constant 0 : index
    %123 = vector.load %arg12[%c22, %c0_59] : memref<27x16xf32, #tpu.memory_space<vmem>>, vector<1x16xf32>
    tpu.vector_store %arg12[%c22, %c0_59], %119 {strides = array<i32>} : memref<27x16xf32, #tpu.memory_space<vmem>>, vector<1x16xf32>,
    %124 = vector.extract_strided_slice %119 {offsets = [0, 1], sizes = [1, 15], strides = [1, 1]} : vector<1x16xf32> to vector<1x15xf32>
    %125 = tpu.concatenate %124, %3 in 1 : vector<1x15xf32>, vector<1x1xf32> -> vector<1x16xf32>
    %c25 = arith.constant 25 : index
    %c0_60 = arith.constant 0 : index
    %126 = vector.load %arg12[%c25, %c0_60] : memref<27x16xf32, #tpu.memory_space<vmem>>, vector<1x16xf32>
    tpu.vector_store %arg12[%c25, %c0_60], %125 {strides = array<i32>} : memref<27x16xf32, #tpu.memory_space<vmem>>, vector<1x16xf32>,
    %c0_61 = arith.constant 0 : index
    %c2_62 = arith.constant 2 : index
    %127 = arith.index_cast %102 : i32 to index
    %c0_63 = arith.constant 0 : index
    %128 = vector.load %arg2[%c0_61, %c2_62, %127, %c0_63] : memref<1x3x16x16xf32, #tpu.memory_space<vmem>>, vector<1x1x1x16xf32>
    %129 = vector.shape_cast %128 : vector<1x1x1x16xf32> to vector<1x16xf32>
    %130 = vector.broadcast %100 : f32 to vector<1x16xf32>
    %131 = arith.mulf %129, %130 : vector<1x16xf32>
    %132 = vector.extract_strided_slice %131 {offsets = [0, 0], sizes = [1, 15], strides = [1, 1]} : vector<1x16xf32> to vector<1x15xf32>
    %133 = tpu.concatenate %3, %132 in 1 : vector<1x1xf32>, vector<1x15xf32> -> vector<1x16xf32>
    %c20 = arith.constant 20 : index
    %c0_64 = arith.constant 0 : index
    %134 = vector.load %arg12[%c20, %c0_64] : memref<27x16xf32, #tpu.memory_space<vmem>>, vector<1x16xf32>
    tpu.vector_store %arg12[%c20, %c0_64], %133 {strides = array<i32>} : memref<27x16xf32, #tpu.memory_space<vmem>>, vector<1x16xf32>,
    %c23 = arith.constant 23 : index
    %c0_65 = arith.constant 0 : index
    %135 = vector.load %arg12[%c23, %c0_65] : memref<27x16xf32, #tpu.memory_space<vmem>>, vector<1x16xf32>
    tpu.vector_store %arg12[%c23, %c0_65], %131 {strides = array<i32>} : memref<27x16xf32, #tpu.memory_space<vmem>>, vector<1x16xf32>,
    %136 = vector.extract_strided_slice %131 {offsets = [0, 1], sizes = [1, 15], strides = [1, 1]} : vector<1x16xf32> to vector<1x15xf32>
    %137 = tpu.concatenate %136, %3 in 1 : vector<1x15xf32>, vector<1x1xf32> -> vector<1x16xf32>
    %c26 = arith.constant 26 : index
    %c0_66 = arith.constant 0 : index
    %138 = vector.load %arg12[%c26, %c0_66] : memref<27x16xf32, #tpu.memory_space<vmem>>, vector<1x16xf32>
    tpu.vector_store %arg12[%c26, %c0_66], %137 {strides = array<i32>} : memref<27x16xf32, #tpu.memory_space<vmem>>, vector<1x16xf32>,
    %c0_67 = arith.constant 0 : index
    %c0_68 = arith.constant 0 : index
    %139 = vector.load %arg3[%c0_67, %c0_68] : memref<32x27xf32, #tpu.memory_space<vmem>>, vector<32x27xf32>
    %c0_69 = arith.constant 0 : index
    %c0_70 = arith.constant 0 : index
    %140 = vector.load %arg12[%c0_69, %c0_70] : memref<27x16xf32, #tpu.memory_space<vmem>>, vector<27x16xf32>
    %cst_71 = arith.constant dense<0.000000e+00> : vector<32x16xf32>
    %141 = tpu.matmul %139, %140, %cst_71 {dimension_numbers = #tpu.dot_dimension_numbers<[1], [0], [0], [1], [0, 0, 1, 1], [], []>} : vector<32x27xf32>, vector<27x16xf32>, vector<32x16xf32> -> vector<32x16xf32>
    %c0_72 = arith.constant 0 : index
    %c0_73 = arith.constant 0 : index
    %142 = vector.load %arg4[%c0_72, %c0_73] : memref<32x1xf32, #tpu.memory_space<vmem>>, vector<32x1xf32>
    %143 = vector.broadcast %142 : vector<32x1xf32> to vector<32x16xf32>
    %144 = arith.addf %141, %143 : vector<32x16xf32>
    %cst_74 = arith.constant 0.000000e+00 : f32
    %145 = vector.broadcast %cst_74 : f32 to vector<32x16xf32>
    %146 = arith.maximumf %144, %145 : vector<32x16xf32>
    %c0_75 = arith.constant 0 : index
    %c0_76 = arith.constant 0 : index
    %147 = vector.load %arg13[%c0_75, %c0_76] : memref<32x1xf32, #tpu.memory_space<vmem>>, vector<32x1xf32>
    %cst_77 = arith.constant dense<0.000000e+00> : vector<32xf32>
    %148 = vector.multi_reduction <add>, %146, %cst_77 [1] : vector<32x16xf32> to vector<32xf32>
    %149 = vector.shape_cast %148 : vector<32xf32> to vector<32x1xf32>
    %150 = arith.addf %147, %149 : vector<32x1xf32>
    %c0_78 = arith.constant 0 : index
    %c0_79 = arith.constant 0 : index
    %151 = vector.load %arg13[%c0_78, %c0_79] : memref<32x1xf32, #tpu.memory_space<vmem>>, vector<32x1xf32>
    tpu.vector_store %arg13[%c0_78, %c0_79], %150 {strides = array<i32>} : memref<32x1xf32, #tpu.memory_space<vmem>>, vector<32x1xf32>,
    %c1_i32_80 = arith.constant 1 : i32
    %152 = arith.addi %5, %c1_i32_80 : i32
    %c-1_i32_81 = arith.constant -1 : i32
    %153 = arith.addi %152, %c-1_i32_81 : i32
    %c0_i32_82 = arith.constant 0 : i32
    %154 = arith.cmpi sge, %153, %c0_i32_82 : i32
    %c16_i32_83 = arith.constant 16 : i32
    %155 = arith.cmpi slt, %153, %c16_i32_83 : i32
    %156 = arith.andi %154, %155 : i1
    %157 = arith.extui %156 : i1 to i32
    %158 = arith.sitofp %157 : i32 to f32
    %c0_i32_84 = arith.constant 0 : i32
    %c15_i32_85 = arith.constant 15 : i32
    %159 = arith.maxsi %c0_i32_84, %153 : i32
    %160 = arith.minsi %c15_i32_85, %159 : i32
    %c0_86 = arith.constant 0 : index
    %c0_87 = arith.constant 0 : index
    %161 = arith.index_cast %160 : i32 to index
    %c0_88 = arith.constant 0 : index
    %162 = vector.load %arg2[%c0_86, %c0_87, %161, %c0_88] : memref<1x3x16x16xf32, #tpu.memory_space<vmem>>, vector<1x1x1x16xf32>
    %163 = vector.shape_cast %162 : vector<1x1x1x16xf32> to vector<1x16xf32>
    %164 = vector.broadcast %158 : f32 to vector<1x16xf32>
    %165 = arith.mulf %163, %164 : vector<1x16xf32>
    %166 = vector.extract_strided_slice %165 {offsets = [0, 0], sizes = [1, 15], strides = [1, 1]} : vector<1x16xf32> to vector<1x15xf32>
    %167 = tpu.concatenate %3, %166 in 1 : vector<1x1xf32>, vector<1x15xf32> -> vector<1x16xf32>
    %c0_89 = arith.constant 0 : index
    %c0_90 = arith.constant 0 : index
    %168 = vector.load %arg12[%c0_89, %c0_90] : memref<27x16xf32, #tpu.memory_space<vmem>>, vector<1x16xf32>
    tpu.vector_store %arg12[%c0_89, %c0_90], %167 {strides = array<i32>} : memref<27x16xf32, #tpu.memory_space<vmem>>, vector<1x16xf32>,
    %c3_91 = arith.constant 3 : index
    %c0_92 = arith.constant 0 : index
    %169 = vector.load %arg12[%c3_91, %c0_92] : memref<27x16xf32, #tpu.memory_space<vmem>>, vector<1x16xf32>
    tpu.vector_store %arg12[%c3_91, %c0_92], %165 {strides = array<i32>} : memref<27x16xf32, #tpu.memory_space<vmem>>, vector<1x16xf32>,
    %170 = vector.extract_strided_slice %165 {offsets = [0, 1], sizes = [1, 15], strides = [1, 1]} : vector<1x16xf32> to vector<1x15xf32>
    %171 = tpu.concatenate %170, %3 in 1 : vector<1x15xf32>, vector<1x1xf32> -> vector<1x16xf32>
    %c6_93 = arith.constant 6 : index
    %c0_94 = arith.constant 0 : index
    %172 = vector.load %arg12[%c6_93, %c0_94] : memref<27x16xf32, #tpu.memory_space<vmem>>, vector<1x16xf32>
    tpu.vector_store %arg12[%c6_93, %c0_94], %171 {strides = array<i32>} : memref<27x16xf32, #tpu.memory_space<vmem>>, vector<1x16xf32>,
    %c0_95 = arith.constant 0 : index
    %c1_96 = arith.constant 1 : index
    %173 = arith.index_cast %160 : i32 to index
    %c0_97 = arith.constant 0 : index
    %174 = vector.load %arg2[%c0_95, %c1_96, %173, %c0_97] : memref<1x3x16x16xf32, #tpu.memory_space<vmem>>, vector<1x1x1x16xf32>
    %175 = vector.shape_cast %174 : vector<1x1x1x16xf32> to vector<1x16xf32>
    %176 = vector.broadcast %158 : f32 to vector<1x16xf32>
    %177 = arith.mulf %175, %176 : vector<1x16xf32>
    %178 = vector.extract_strided_slice %177 {offsets = [0, 0], sizes = [1, 15], strides = [1, 1]} : vector<1x16xf32> to vector<1x15xf32>
    %179 = tpu.concatenate %3, %178 in 1 : vector<1x1xf32>, vector<1x15xf32> -> vector<1x16xf32>
    %c1_98 = arith.constant 1 : index
    %c0_99 = arith.constant 0 : index
    %180 = vector.load %arg12[%c1_98, %c0_99] : memref<27x16xf32, #tpu.memory_space<vmem>>, vector<1x16xf32>
    tpu.vector_store %arg12[%c1_98, %c0_99], %179 {strides = array<i32>} : memref<27x16xf32, #tpu.memory_space<vmem>>, vector<1x16xf32>,
    %c4_100 = arith.constant 4 : index
    %c0_101 = arith.constant 0 : index
    %181 = vector.load %arg12[%c4_100, %c0_101] : memref<27x16xf32, #tpu.memory_space<vmem>>, vector<1x16xf32>
    tpu.vector_store %arg12[%c4_100, %c0_101], %177 {strides = array<i32>} : memref<27x16xf32, #tpu.memory_space<vmem>>, vector<1x16xf32>,
    %182 = vector.extract_strided_slice %177 {offsets = [0, 1], sizes = [1, 15], strides = [1, 1]} : vector<1x16xf32> to vector<1x15xf32>
    %183 = tpu.concatenate %182, %3 in 1 : vector<1x15xf32>, vector<1x1xf32> -> vector<1x16xf32>
    %c7_102 = arith.constant 7 : index
    %c0_103 = arith.constant 0 : index
    %184 = vector.load %arg12[%c7_102, %c0_103] : memref<27x16xf32, #tpu.memory_space<vmem>>, vector<1x16xf32>
    tpu.vector_store %arg12[%c7_102, %c0_103], %183 {strides = array<i32>} : memref<27x16xf32, #tpu.memory_space<vmem>>, vector<1x16xf32>,
    %c0_104 = arith.constant 0 : index
    %c2_105 = arith.constant 2 : index
    %185 = arith.index_cast %160 : i32 to index
    %c0_106 = arith.constant 0 : index
    %186 = vector.load %arg2[%c0_104, %c2_105, %185, %c0_106] : memref<1x3x16x16xf32, #tpu.memory_space<vmem>>, vector<1x1x1x16xf32>
    %187 = vector.shape_cast %186 : vector<1x1x1x16xf32> to vector<1x16xf32>
    %188 = vector.broadcast %158 : f32 to vector<1x16xf32>
    %189 = arith.mulf %187, %188 : vector<1x16xf32>
    %190 = vector.extract_strided_slice %189 {offsets = [0, 0], sizes = [1, 15], strides = [1, 1]} : vector<1x16xf32> to vector<1x15xf32>
    %191 = tpu.concatenate %3, %190 in 1 : vector<1x1xf32>, vector<1x15xf32> -> vector<1x16xf32>
    %c2_107 = arith.constant 2 : index
    %c0_108 = arith.constant 0 : index
    %192 = vector.load %arg12[%c2_107, %c0_108] : memref<27x16xf32, #tpu.memory_space<vmem>>, vector<1x16xf32>
    tpu.vector_store %arg12[%c2_107, %c0_108], %191 {strides = array<i32>} : memref<27x16xf32, #tpu.memory_space<vmem>>, vector<1x16xf32>,
    %c5_109 = arith.constant 5 : index
    %c0_110 = arith.constant 0 : index
    %193 = vector.load %arg12[%c5_109, %c0_110] : memref<27x16xf32, #tpu.memory_space<vmem>>, vector<1x16xf32>
    tpu.vector_store %arg12[%c5_109, %c0_110], %189 {strides = array<i32>} : memref<27x16xf32, #tpu.memory_space<vmem>>, vector<1x16xf32>,
    %194 = vector.extract_strided_slice %189 {offsets = [0, 1], sizes = [1, 15], strides = [1, 1]} : vector<1x16xf32> to vector<1x15xf32>
    %195 = tpu.concatenate %194, %3 in 1 : vector<1x15xf32>, vector<1x1xf32> -> vector<1x16xf32>
    %c8_111 = arith.constant 8 : index
    %c0_112 = arith.constant 0 : index
    %196 = vector.load %arg12[%c8_111, %c0_112] : memref<27x16xf32, #tpu.memory_space<vmem>>, vector<1x16xf32>
    tpu.vector_store %arg12[%c8_111, %c0_112], %195 {strides = array<i32>} : memref<27x16xf32, #tpu.memory_space<vmem>>, vector<1x16xf32>,
    %c0_i32_113 = arith.constant 0 : i32
    %197 = arith.addi %152, %c0_i32_113 : i32
    %c0_i32_114 = arith.constant 0 : i32
    %198 = arith.cmpi sge, %197, %c0_i32_114 : i32
    %c16_i32_115 = arith.constant 16 : i32
    %199 = arith.cmpi slt, %197, %c16_i32_115 : i32
    %200 = arith.andi %198, %199 : i1
    %201 = arith.extui %200 : i1 to i32
    %202 = arith.sitofp %201 : i32 to f32
    %c0_i32_116 = arith.constant 0 : i32
    %c15_i32_117 = arith.constant 15 : i32
    %203 = arith.maxsi %c0_i32_116, %197 : i32
    %204 = arith.minsi %c15_i32_117, %203 : i32
    %c0_118 = arith.constant 0 : index
    %c0_119 = arith.constant 0 : index
    %205 = arith.index_cast %204 : i32 to index
    %c0_120 = arith.constant 0 : index
    %206 = vector.load %arg2[%c0_118, %c0_119, %205, %c0_120] : memref<1x3x16x16xf32, #tpu.memory_space<vmem>>, vector<1x1x1x16xf32>
    %207 = vector.shape_cast %206 : vector<1x1x1x16xf32> to vector<1x16xf32>
    %208 = vector.broadcast %202 : f32 to vector<1x16xf32>
    %209 = arith.mulf %207, %208 : vector<1x16xf32>
    %210 = vector.extract_strided_slice %209 {offsets = [0, 0], sizes = [1, 15], strides = [1, 1]} : vector<1x16xf32> to vector<1x15xf32>
    %211 = tpu.concatenate %3, %210 in 1 : vector<1x1xf32>, vector<1x15xf32> -> vector<1x16xf32>
    %c9_121 = arith.constant 9 : index
    %c0_122 = arith.constant 0 : index
    %212 = vector.load %arg12[%c9_121, %c0_122] : memref<27x16xf32, #tpu.memory_space<vmem>>, vector<1x16xf32>
    tpu.vector_store %arg12[%c9_121, %c0_122], %211 {strides = array<i32>} : memref<27x16xf32, #tpu.memory_space<vmem>>, vector<1x16xf32>,
    %c12_123 = arith.constant 12 : index
    %c0_124 = arith.constant 0 : index
    %213 = vector.load %arg12[%c12_123, %c0_124] : memref<27x16xf32, #tpu.memory_space<vmem>>, vector<1x16xf32>
    tpu.vector_store %arg12[%c12_123, %c0_124], %209 {strides = array<i32>} : memref<27x16xf32, #tpu.memory_space<vmem>>, vector<1x16xf32>,
    %214 = vector.extract_strided_slice %209 {offsets = [0, 1], sizes = [1, 15], strides = [1, 1]} : vector<1x16xf32> to vector<1x15xf32>
    %215 = tpu.concatenate %214, %3 in 1 : vector<1x15xf32>, vector<1x1xf32> -> vector<1x16xf32>
    %c15_125 = arith.constant 15 : index
    %c0_126 = arith.constant 0 : index
    %216 = vector.load %arg12[%c15_125, %c0_126] : memref<27x16xf32, #tpu.memory_space<vmem>>, vector<1x16xf32>
    tpu.vector_store %arg12[%c15_125, %c0_126], %215 {strides = array<i32>} : memref<27x16xf32, #tpu.memory_space<vmem>>, vector<1x16xf32>,
    %c0_127 = arith.constant 0 : index
    %c1_128 = arith.constant 1 : index
    %217 = arith.index_cast %204 : i32 to index
    %c0_129 = arith.constant 0 : index
    %218 = vector.load %arg2[%c0_127, %c1_128, %217, %c0_129] : memref<1x3x16x16xf32, #tpu.memory_space<vmem>>, vector<1x1x1x16xf32>
    %219 = vector.shape_cast %218 : vector<1x1x1x16xf32> to vector<1x16xf32>
    %220 = vector.broadcast %202 : f32 to vector<1x16xf32>
    %221 = arith.mulf %219, %220 : vector<1x16xf32>
    %222 = vector.extract_strided_slice %221 {offsets = [0, 0], sizes = [1, 15], strides = [1, 1]} : vector<1x16xf32> to vector<1x15xf32>
    %223 = tpu.concatenate %3, %222 in 1 : vector<1x1xf32>, vector<1x15xf32> -> vector<1x16xf32>
    %c10_130 = arith.constant 10 : index
    %c0_131 = arith.constant 0 : index
    %224 = vector.load %arg12[%c10_130, %c0_131] : memref<27x16xf32, #tpu.memory_space<vmem>>, vector<1x16xf32>
    tpu.vector_store %arg12[%c10_130, %c0_131], %223 {strides = array<i32>} : memref<27x16xf32, #tpu.memory_space<vmem>>, vector<1x16xf32>,
    %c13_132 = arith.constant 13 : index
    %c0_133 = arith.constant 0 : index
    %225 = vector.load %arg12[%c13_132, %c0_133] : memref<27x16xf32, #tpu.memory_space<vmem>>, vector<1x16xf32>
    tpu.vector_store %arg12[%c13_132, %c0_133], %221 {strides = array<i32>} : memref<27x16xf32, #tpu.memory_space<vmem>>, vector<1x16xf32>,
    %226 = vector.extract_strided_slice %221 {offsets = [0, 1], sizes = [1, 15], strides = [1, 1]} : vector<1x16xf32> to vector<1x15xf32>
    %227 = tpu.concatenate %226, %3 in 1 : vector<1x15xf32>, vector<1x1xf32> -> vector<1x16xf32>
    %c16_134 = arith.constant 16 : index
    %c0_135 = arith.constant 0 : index
    %228 = vector.load %arg12[%c16_134, %c0_135] : memref<27x16xf32, #tpu.memory_space<vmem>>, vector<1x16xf32>
    tpu.vector_store %arg12[%c16_134, %c0_135], %227 {strides = array<i32>} : memref<27x16xf32, #tpu.memory_space<vmem>>, vector<1x16xf32>,
    %c0_136 = arith.constant 0 : index
    %c2_137 = arith.constant 2 : index
    %229 = arith.index_cast %204 : i32 to index
    %c0_138 = arith.constant 0 : index
    %230 = vector.load %arg2[%c0_136, %c2_137, %229, %c0_138] : memref<1x3x16x16xf32, #tpu.memory_space<vmem>>, vector<1x1x1x16xf32>
    %231 = vector.shape_cast %230 : vector<1x1x1x16xf32> to vector<1x16xf32>
    %232 = vector.broadcast %202 : f32 to vector<1x16xf32>
    %233 = arith.mulf %231, %232 : vector<1x16xf32>
    %234 = vector.extract_strided_slice %233 {offsets = [0, 0], sizes = [1, 15], strides = [1, 1]} : vector<1x16xf32> to vector<1x15xf32>
    %235 = tpu.concatenate %3, %234 in 1 : vector<1x1xf32>, vector<1x15xf32> -> vector<1x16xf32>
    %c11_139 = arith.constant 11 : index
    %c0_140 = arith.constant 0 : index
    %236 = vector.load %arg12[%c11_139, %c0_140] : memref<27x16xf32, #tpu.memory_space<vmem>>, vector<1x16xf32>
    tpu.vector_store %arg12[%c11_139, %c0_140], %235 {strides = array<i32>} : memref<27x16xf32, #tpu.memory_space<vmem>>, vector<1x16xf32>,
    %c14_141 = arith.constant 14 : index
    %c0_142 = arith.constant 0 : index
    %237 = vector.load %arg12[%c14_141, %c0_142] : memref<27x16xf32, #tpu.memory_space<vmem>>, vector<1x16xf32>
    tpu.vector_store %arg12[%c14_141, %c0_142], %233 {strides = array<i32>} : memref<27x16xf32, #tpu.memory_space<vmem>>, vector<1x16xf32>,
    %238 = vector.extract_strided_slice %233 {offsets = [0, 1], sizes = [1, 15], strides = [1, 1]} : vector<1x16xf32> to vector<1x15xf32>
    %239 = tpu.concatenate %238, %3 in 1 : vector<1x15xf32>, vector<1x1xf32> -> vector<1x16xf32>
    %c17_143 = arith.constant 17 : index
    %c0_144 = arith.constant 0 : index
    %240 = vector.load %arg12[%c17_143, %c0_144] : memref<27x16xf32, #tpu.memory_space<vmem>>, vector<1x16xf32>
    tpu.vector_store %arg12[%c17_143, %c0_144], %239 {strides = array<i32>} : memref<27x16xf32, #tpu.memory_space<vmem>>, vector<1x16xf32>,
    %c1_i32_145 = arith.constant 1 : i32
    %241 = arith.addi %152, %c1_i32_145 : i32
    %c0_i32_146 = arith.constant 0 : i32
    %242 = arith.cmpi sge, %241, %c0_i32_146 : i32
    %c16_i32_147 = arith.constant 16 : i32
    %243 = arith.cmpi slt, %241, %c16_i32_147 : i32
    %244 = arith.andi %242, %243 : i1
    %245 = arith.extui %244 : i1 to i32
    %246 = arith.sitofp %245 : i32 to f32
    %c0_i32_148 = arith.constant 0 : i32
    %c15_i32_149 = arith.constant 15 : i32
    %247 = arith.maxsi %c0_i32_148, %241 : i32
    %248 = arith.minsi %c15_i32_149, %247 : i32
    %c0_150 = arith.constant 0 : index
    %c0_151 = arith.constant 0 : index
    %249 = arith.index_cast %248 : i32 to index
    %c0_152 = arith.constant 0 : index
    %250 = vector.load %arg2[%c0_150, %c0_151, %249, %c0_152] : memref<1x3x16x16xf32, #tpu.memory_space<vmem>>, vector<1x1x1x16xf32>
    %251 = vector.shape_cast %250 : vector<1x1x1x16xf32> to vector<1x16xf32>
    %252 = vector.broadcast %246 : f32 to vector<1x16xf32>
    %253 = arith.mulf %251, %252 : vector<1x16xf32>
    %254 = vector.extract_strided_slice %253 {offsets = [0, 0], sizes = [1, 15], strides = [1, 1]} : vector<1x16xf32> to vector<1x15xf32>
    %255 = tpu.concatenate %3, %254 in 1 : vector<1x1xf32>, vector<1x15xf32> -> vector<1x16xf32>
    %c18_153 = arith.constant 18 : index
    %c0_154 = arith.constant 0 : index
    %256 = vector.load %arg12[%c18_153, %c0_154] : memref<27x16xf32, #tpu.memory_space<vmem>>, vector<1x16xf32>
    tpu.vector_store %arg12[%c18_153, %c0_154], %255 {strides = array<i32>} : memref<27x16xf32, #tpu.memory_space<vmem>>, vector<1x16xf32>,
    %c21_155 = arith.constant 21 : index
    %c0_156 = arith.constant 0 : index
    %257 = vector.load %arg12[%c21_155, %c0_156] : memref<27x16xf32, #tpu.memory_space<vmem>>, vector<1x16xf32>
    tpu.vector_store %arg12[%c21_155, %c0_156], %253 {strides = array<i32>} : memref<27x16xf32, #tpu.memory_space<vmem>>, vector<1x16xf32>,
    %258 = vector.extract_strided_slice %253 {offsets = [0, 1], sizes = [1, 15], strides = [1, 1]} : vector<1x16xf32> to vector<1x15xf32>
    %259 = tpu.concatenate %258, %3 in 1 : vector<1x15xf32>, vector<1x1xf32> -> vector<1x16xf32>
    %c24_157 = arith.constant 24 : index
    %c0_158 = arith.constant 0 : index
    %260 = vector.load %arg12[%c24_157, %c0_158] : memref<27x16xf32, #tpu.memory_space<vmem>>, vector<1x16xf32>
    tpu.vector_store %arg12[%c24_157, %c0_158], %259 {strides = array<i32>} : memref<27x16xf32, #tpu.memory_space<vmem>>, vector<1x16xf32>,
    %c0_159 = arith.constant 0 : index
    %c1_160 = arith.constant 1 : index
    %261 = arith.index_cast %248 : i32 to index
    %c0_161 = arith.constant 0 : index
    %262 = vector.load %arg2[%c0_159, %c1_160, %261, %c0_161] : memref<1x3x16x16xf32, #tpu.memory_space<vmem>>, vector<1x1x1x16xf32>
    %263 = vector.shape_cast %262 : vector<1x1x1x16xf32> to vector<1x16xf32>
    %264 = vector.broadcast %246 : f32 to vector<1x16xf32>
    %265 = arith.mulf %263, %264 : vector<1x16xf32>
    %266 = vector.extract_strided_slice %265 {offsets = [0, 0], sizes = [1, 15], strides = [1, 1]} : vector<1x16xf32> to vector<1x15xf32>
    %267 = tpu.concatenate %3, %266 in 1 : vector<1x1xf32>, vector<1x15xf32> -> vector<1x16xf32>
    %c19_162 = arith.constant 19 : index
    %c0_163 = arith.constant 0 : index
    %268 = vector.load %arg12[%c19_162, %c0_163] : memref<27x16xf32, #tpu.memory_space<vmem>>, vector<1x16xf32>
    tpu.vector_store %arg12[%c19_162, %c0_163], %267 {strides = array<i32>} : memref<27x16xf32, #tpu.memory_space<vmem>>, vector<1x16xf32>,
    %c22_164 = arith.constant 22 : index
    %c0_165 = arith.constant 0 : index
    %269 = vector.load %arg12[%c22_164, %c0_165] : memref<27x16xf32, #tpu.memory_space<vmem>>, vector<1x16xf32>
    tpu.vector_store %arg12[%c22_164, %c0_165], %265 {strides = array<i32>} : memref<27x16xf32, #tpu.memory_space<vmem>>, vector<1x16xf32>,
    %270 = vector.extract_strided_slice %265 {offsets = [0, 1], sizes = [1, 15], strides = [1, 1]} : vector<1x16xf32> to vector<1x15xf32>
    %271 = tpu.concatenate %270, %3 in 1 : vector<1x15xf32>, vector<1x1xf32> -> vector<1x16xf32>
    %c25_166 = arith.constant 25 : index
    %c0_167 = arith.constant 0 : index
    %272 = vector.load %arg12[%c25_166, %c0_167] : memref<27x16xf32, #tpu.memory_space<vmem>>, vector<1x16xf32>
    tpu.vector_store %arg12[%c25_166, %c0_167], %271 {strides = array<i32>} : memref<27x16xf32, #tpu.memory_space<vmem>>, vector<1x16xf32>,
    %c0_168 = arith.constant 0 : index
    %c2_169 = arith.constant 2 : index
    %273 = arith.index_cast %248 : i32 to index
    %c0_170 = arith.constant 0 : index
    %274 = vector.load %arg2[%c0_168, %c2_169, %273, %c0_170] : memref<1x3x16x16xf32, #tpu.memory_space<vmem>>, vector<1x1x1x16xf32>
    %275 = vector.shape_cast %274 : vector<1x1x1x16xf32> to vector<1x16xf32>
    %276 = vector.broadcast %246 : f32 to vector<1x16xf32>
    %277 = arith.mulf %275, %276 : vector<1x16xf32>
    %278 = vector.extract_strided_slice %277 {offsets = [0, 0], sizes = [1, 15], strides = [1, 1]} : vector<1x16xf32> to vector<1x15xf32>
    %279 = tpu.concatenate %3, %278 in 1 : vector<1x1xf32>, vector<1x15xf32> -> vector<1x16xf32>
    %c20_171 = arith.constant 20 : index
    %c0_172 = arith.constant 0 : index
    %280 = vector.load %arg12[%c20_171, %c0_172] : memref<27x16xf32, #tpu.memory_space<vmem>>, vector<1x16xf32>
    tpu.vector_store %arg12[%c20_171, %c0_172], %279 {strides = array<i32>} : memref<27x16xf32, #tpu.memory_space<vmem>>, vector<1x16xf32>,
    %c23_173 = arith.constant 23 : index
    %c0_174 = arith.constant 0 : index
    %281 = vector.load %arg12[%c23_173, %c0_174] : memref<27x16xf32, #tpu.memory_space<vmem>>, vector<1x16xf32>
    tpu.vector_store %arg12[%c23_173, %c0_174], %277 {strides = array<i32>} : memref<27x16xf32, #tpu.memory_space<vmem>>, vector<1x16xf32>,
    %282 = vector.extract_strided_slice %277 {offsets = [0, 1], sizes = [1, 15], strides = [1, 1]} : vector<1x16xf32> to vector<1x15xf32>
    %283 = tpu.concatenate %282, %3 in 1 : vector<1x15xf32>, vector<1x1xf32> -> vector<1x16xf32>
    %c26_175 = arith.constant 26 : index
    %c0_176 = arith.constant 0 : index
    %284 = vector.load %arg12[%c26_175, %c0_176] : memref<27x16xf32, #tpu.memory_space<vmem>>, vector<1x16xf32>
    tpu.vector_store %arg12[%c26_175, %c0_176], %283 {strides = array<i32>} : memref<27x16xf32, #tpu.memory_space<vmem>>, vector<1x16xf32>,
    %c0_177 = arith.constant 0 : index
    %c0_178 = arith.constant 0 : index
    %285 = vector.load %arg3[%c0_177, %c0_178] : memref<32x27xf32, #tpu.memory_space<vmem>>, vector<32x27xf32>
    %c0_179 = arith.constant 0 : index
    %c0_180 = arith.constant 0 : index
    %286 = vector.load %arg12[%c0_179, %c0_180] : memref<27x16xf32, #tpu.memory_space<vmem>>, vector<27x16xf32>
    %cst_181 = arith.constant dense<0.000000e+00> : vector<32x16xf32>
    %287 = tpu.matmul %285, %286, %cst_181 {dimension_numbers = #tpu.dot_dimension_numbers<[1], [0], [0], [1], [0, 0, 1, 1], [], []>} : vector<32x27xf32>, vector<27x16xf32>, vector<32x16xf32> -> vector<32x16xf32>
    %c0_182 = arith.constant 0 : index
    %c0_183 = arith.constant 0 : index
    %288 = vector.load %arg4[%c0_182, %c0_183] : memref<32x1xf32, #tpu.memory_space<vmem>>, vector<32x1xf32>
    %289 = vector.broadcast %288 : vector<32x1xf32> to vector<32x16xf32>
    %290 = arith.addf %287, %289 : vector<32x16xf32>
    %cst_184 = arith.constant 0.000000e+00 : f32
    %291 = vector.broadcast %cst_184 : f32 to vector<32x16xf32>
    %292 = arith.maximumf %290, %291 : vector<32x16xf32>
    %c0_185 = arith.constant 0 : index
    %c0_186 = arith.constant 0 : index
    %293 = vector.load %arg13[%c0_185, %c0_186] : memref<32x1xf32, #tpu.memory_space<vmem>>, vector<32x1xf32>
    %cst_187 = arith.constant dense<0.000000e+00> : vector<32xf32>
    %294 = vector.multi_reduction <add>, %292, %cst_187 [1] : vector<32x16xf32> to vector<32xf32>
    %295 = vector.shape_cast %294 : vector<32xf32> to vector<32x1xf32>
    %296 = arith.addf %293, %295 : vector<32x1xf32>
    %c0_188 = arith.constant 0 : index
    %c0_189 = arith.constant 0 : index
    %297 = vector.load %arg13[%c0_188, %c0_189] : memref<32x1xf32, #tpu.memory_space<vmem>>, vector<32x1xf32>
    tpu.vector_store %arg13[%c0_188, %c0_189], %296 {strides = array<i32>} : memref<32x1xf32, #tpu.memory_space<vmem>>, vector<32x1xf32>,
    %c2_i32 = arith.constant 2 : i32
    %298 = arith.addi %5, %c2_i32 : i32
    %c-1_i32_190 = arith.constant -1 : i32
    %299 = arith.addi %298, %c-1_i32_190 : i32
    %c0_i32_191 = arith.constant 0 : i32
    %300 = arith.cmpi sge, %299, %c0_i32_191 : i32
    %c16_i32_192 = arith.constant 16 : i32
    %301 = arith.cmpi slt, %299, %c16_i32_192 : i32
    %302 = arith.andi %300, %301 : i1
    %303 = arith.extui %302 : i1 to i32
    %304 = arith.sitofp %303 : i32 to f32
    %c0_i32_193 = arith.constant 0 : i32
    %c15_i32_194 = arith.constant 15 : i32
    %305 = arith.maxsi %c0_i32_193, %299 : i32
    %306 = arith.minsi %c15_i32_194, %305 : i32
    %c0_195 = arith.constant 0 : index
    %c0_196 = arith.constant 0 : index
    %307 = arith.index_cast %306 : i32 to index
    %c0_197 = arith.constant 0 : index
    %308 = vector.load %arg2[%c0_195, %c0_196, %307, %c0_197] : memref<1x3x16x16xf32, #tpu.memory_space<vmem>>, vector<1x1x1x16xf32>
    %309 = vector.shape_cast %308 : vector<1x1x1x16xf32> to vector<1x16xf32>
    %310 = vector.broadcast %304 : f32 to vector<1x16xf32>
    %311 = arith.mulf %309, %310 : vector<1x16xf32>
    %312 = vector.extract_strided_slice %311 {offsets = [0, 0], sizes = [1, 15], strides = [1, 1]} : vector<1x16xf32> to vector<1x15xf32>
    %313 = tpu.concatenate %3, %312 in 1 : vector<1x1xf32>, vector<1x15xf32> -> vector<1x16xf32>
    %c0_198 = arith.constant 0 : index
    %c0_199 = arith.constant 0 : index
    %314 = vector.load %arg12[%c0_198, %c0_199] : memref<27x16xf32, #tpu.memory_space<vmem>>, vector<1x16xf32>
    tpu.vector_store %arg12[%c0_198, %c0_199], %313 {strides = array<i32>} : memref<27x16xf32, #tpu.memory_space<vmem>>, vector<1x16xf32>,
    %c3_200 = arith.constant 3 : index
    %c0_201 = arith.constant 0 : index
    %315 = vector.load %arg12[%c3_200, %c0_201] : memref<27x16xf32, #tpu.memory_space<vmem>>, vector<1x16xf32>
    tpu.vector_store %arg12[%c3_200, %c0_201], %311 {strides = array<i32>} : memref<27x16xf32, #tpu.memory_space<vmem>>, vector<1x16xf32>,
    %316 = vector.extract_strided_slice %311 {offsets = [0, 1], sizes = [1, 15], strides = [1, 1]} : vector<1x16xf32> to vector<1x15xf32>
    %317 = tpu.concatenate %316, %3 in 1 : vector<1x15xf32>, vector<1x1xf32> -> vector<1x16xf32>
    %c6_202 = arith.constant 6 : index
    %c0_203 = arith.constant 0 : index
    %318 = vector.load %arg12[%c6_202, %c0_203] : memref<27x16xf32, #tpu.memory_space<vmem>>, vector<1x16xf32>
    tpu.vector_store %arg12[%c6_202, %c0_203], %317 {strides = array<i32>} : memref<27x16xf32, #tpu.memory_space<vmem>>, vector<1x16xf32>,
    %c0_204 = arith.constant 0 : index
    %c1_205 = arith.constant 1 : index
    %319 = arith.index_cast %306 : i32 to index
    %c0_206 = arith.constant 0 : index
    %320 = vector.load %arg2[%c0_204, %c1_205, %319, %c0_206] : memref<1x3x16x16xf32, #tpu.memory_space<vmem>>, vector<1x1x1x16xf32>
    %321 = vector.shape_cast %320 : vector<1x1x1x16xf32> to vector<1x16xf32>
    %322 = vector.broadcast %304 : f32 to vector<1x16xf32>
    %323 = arith.mulf %321, %322 : vector<1x16xf32>
    %324 = vector.extract_strided_slice %323 {offsets = [0, 0], sizes = [1, 15], strides = [1, 1]} : vector<1x16xf32> to vector<1x15xf32>
    %325 = tpu.concatenate %3, %324 in 1 : vector<1x1xf32>, vector<1x15xf32> -> vector<1x16xf32>
    %c1_207 = arith.constant 1 : index
    %c0_208 = arith.constant 0 : index
    %326 = vector.load %arg12[%c1_207, %c0_208] : memref<27x16xf32, #tpu.memory_space<vmem>>, vector<1x16xf32>
    tpu.vector_store %arg12[%c1_207, %c0_208], %325 {strides = array<i32>} : memref<27x16xf32, #tpu.memory_space<vmem>>, vector<1x16xf32>,
    %c4_209 = arith.constant 4 : index
    %c0_210 = arith.constant 0 : index
    %327 = vector.load %arg12[%c4_209, %c0_210] : memref<27x16xf32, #tpu.memory_space<vmem>>, vector<1x16xf32>
    tpu.vector_store %arg12[%c4_209, %c0_210], %323 {strides = array<i32>} : memref<27x16xf32, #tpu.memory_space<vmem>>, vector<1x16xf32>,
    %328 = vector.extract_strided_slice %323 {offsets = [0, 1], sizes = [1, 15], strides = [1, 1]} : vector<1x16xf32> to vector<1x15xf32>
    %329 = tpu.concatenate %328, %3 in 1 : vector<1x15xf32>, vector<1x1xf32> -> vector<1x16xf32>
    %c7_211 = arith.constant 7 : index
    %c0_212 = arith.constant 0 : index
    %330 = vector.load %arg12[%c7_211, %c0_212] : memref<27x16xf32, #tpu.memory_space<vmem>>, vector<1x16xf32>
    tpu.vector_store %arg12[%c7_211, %c0_212], %329 {strides = array<i32>} : memref<27x16xf32, #tpu.memory_space<vmem>>, vector<1x16xf32>,
    %c0_213 = arith.constant 0 : index
    %c2_214 = arith.constant 2 : index
    %331 = arith.index_cast %306 : i32 to index
    %c0_215 = arith.constant 0 : index
    %332 = vector.load %arg2[%c0_213, %c2_214, %331, %c0_215] : memref<1x3x16x16xf32, #tpu.memory_space<vmem>>, vector<1x1x1x16xf32>
    %333 = vector.shape_cast %332 : vector<1x1x1x16xf32> to vector<1x16xf32>
    %334 = vector.broadcast %304 : f32 to vector<1x16xf32>
    %335 = arith.mulf %333, %334 : vector<1x16xf32>
    %336 = vector.extract_strided_slice %335 {offsets = [0, 0], sizes = [1, 15], strides = [1, 1]} : vector<1x16xf32> to vector<1x15xf32>
    %337 = tpu.concatenate %3, %336 in 1 : vector<1x1xf32>, vector<1x15xf32> -> vector<1x16xf32>
    %c2_216 = arith.constant 2 : index
    %c0_217 = arith.constant 0 : index
    %338 = vector.load %arg12[%c2_216, %c0_217] : memref<27x16xf32, #tpu.memory_space<vmem>>, vector<1x16xf32>
    tpu.vector_store %arg12[%c2_216, %c0_217], %337 {strides = array<i32>} : memref<27x16xf32, #tpu.memory_space<vmem>>, vector<1x16xf32>,
    %c5_218 = arith.constant 5 : index
    %c0_219 = arith.constant 0 : index
    %339 = vector.load %arg12[%c5_218, %c0_219] : memref<27x16xf32, #tpu.memory_space<vmem>>, vector<1x16xf32>
    tpu.vector_store %arg12[%c5_218, %c0_219], %335 {strides = array<i32>} : memref<27x16xf32, #tpu.memory_space<vmem>>, vector<1x16xf32>,
    %340 = vector.extract_strided_slice %335 {offsets = [0, 1], sizes = [1, 15], strides = [1, 1]} : vector<1x16xf32> to vector<1x15xf32>
    %341 = tpu.concatenate %340, %3 in 1 : vector<1x15xf32>, vector<1x1xf32> -> vector<1x16xf32>
    %c8_220 = arith.constant 8 : index
    %c0_221 = arith.constant 0 : index
    %342 = vector.load %arg12[%c8_220, %c0_221] : memref<27x16xf32, #tpu.memory_space<vmem>>, vector<1x16xf32>
    tpu.vector_store %arg12[%c8_220, %c0_221], %341 {strides = array<i32>} : memref<27x16xf32, #tpu.memory_space<vmem>>, vector<1x16xf32>,
    %c0_i32_222 = arith.constant 0 : i32
    %343 = arith.addi %298, %c0_i32_222 : i32
    %c0_i32_223 = arith.constant 0 : i32
    %344 = arith.cmpi sge, %343, %c0_i32_223 : i32
    %c16_i32_224 = arith.constant 16 : i32
    %345 = arith.cmpi slt, %343, %c16_i32_224 : i32
    %346 = arith.andi %344, %345 : i1
    %347 = arith.extui %346 : i1 to i32
    %348 = arith.sitofp %347 : i32 to f32
    %c0_i32_225 = arith.constant 0 : i32
    %c15_i32_226 = arith.constant 15 : i32
    %349 = arith.maxsi %c0_i32_225, %343 : i32
    %350 = arith.minsi %c15_i32_226, %349 : i32
    %c0_227 = arith.constant 0 : index
    %c0_228 = arith.constant 0 : index
    %351 = arith.index_cast %350 : i32 to index
    %c0_229 = arith.constant 0 : index
    %352 = vector.load %arg2[%c0_227, %c0_228, %351, %c0_229] : memref<1x3x16x16xf32, #tpu.memory_space<vmem>>, vector<1x1x1x16xf32>
    %353 = vector.shape_cast %352 : vector<1x1x1x16xf32> to vector<1x16xf32>
    %354 = vector.broadcast %348 : f32 to vector<1x16xf32>
    %355 = arith.mulf %353, %354 : vector<1x16xf32>
    %356 = vector.extract_strided_slice %355 {offsets = [0, 0], sizes = [1, 15], strides = [1, 1]} : vector<1x16xf32> to vector<1x15xf32>
    %357 = tpu.concatenate %3, %356 in 1 : vector<1x1xf32>, vector<1x15xf32> -> vector<1x16xf32>
    %c9_230 = arith.constant 9 : index
    %c0_231 = arith.constant 0 : index
    %358 = vector.load %arg12[%c9_230, %c0_231] : memref<27x16xf32, #tpu.memory_space<vmem>>, vector<1x16xf32>
    tpu.vector_store %arg12[%c9_230, %c0_231], %357 {strides = array<i32>} : memref<27x16xf32, #tpu.memory_space<vmem>>, vector<1x16xf32>,
    %c12_232 = arith.constant 12 : index
    %c0_233 = arith.constant 0 : index
    %359 = vector.load %arg12[%c12_232, %c0_233] : memref<27x16xf32, #tpu.memory_space<vmem>>, vector<1x16xf32>
    tpu.vector_store %arg12[%c12_232, %c0_233], %355 {strides = array<i32>} : memref<27x16xf32, #tpu.memory_space<vmem>>, vector<1x16xf32>,
    %360 = vector.extract_strided_slice %355 {offsets = [0, 1], sizes = [1, 15], strides = [1, 1]} : vector<1x16xf32> to vector<1x15xf32>
    %361 = tpu.concatenate %360, %3 in 1 : vector<1x15xf32>, vector<1x1xf32> -> vector<1x16xf32>
    %c15_234 = arith.constant 15 : index
    %c0_235 = arith.constant 0 : index
    %362 = vector.load %arg12[%c15_234, %c0_235] : memref<27x16xf32, #tpu.memory_space<vmem>>, vector<1x16xf32>
    tpu.vector_store %arg12[%c15_234, %c0_235], %361 {strides = array<i32>} : memref<27x16xf32, #tpu.memory_space<vmem>>, vector<1x16xf32>,
    %c0_236 = arith.constant 0 : index
    %c1_237 = arith.constant 1 : index
    %363 = arith.index_cast %350 : i32 to index
    %c0_238 = arith.constant 0 : index
    %364 = vector.load %arg2[%c0_236, %c1_237, %363, %c0_238] : memref<1x3x16x16xf32, #tpu.memory_space<vmem>>, vector<1x1x1x16xf32>
    %365 = vector.shape_cast %364 : vector<1x1x1x16xf32> to vector<1x16xf32>
    %366 = vector.broadcast %348 : f32 to vector<1x16xf32>
    %367 = arith.mulf %365, %366 : vector<1x16xf32>
    %368 = vector.extract_strided_slice %367 {offsets = [0, 0], sizes = [1, 15], strides = [1, 1]} : vector<1x16xf32> to vector<1x15xf32>
    %369 = tpu.concatenate %3, %368 in 1 : vector<1x1xf32>, vector<1x15xf32> -> vector<1x16xf32>
    %c10_239 = arith.constant 10 : index
    %c0_240 = arith.constant 0 : index
    %370 = vector.load %arg12[%c10_239, %c0_240] : memref<27x16xf32, #tpu.memory_space<vmem>>, vector<1x16xf32>
    tpu.vector_store %arg12[%c10_239, %c0_240], %369 {strides = array<i32>} : memref<27x16xf32, #tpu.memory_space<vmem>>, vector<1x16xf32>,
    %c13_241 = arith.constant 13 : index
    %c0_242 = arith.constant 0 : index
    %371 = vector.load %arg12[%c13_241, %c0_242] : memref<27x16xf32, #tpu.memory_space<vmem>>, vector<1x16xf32>
    tpu.vector_store %arg12[%c13_241, %c0_242], %367 {strides = array<i32>} : memref<27x16xf32, #tpu.memory_space<vmem>>, vector<1x16xf32>,
    %372 = vector.extract_strided_slice %367 {offsets = [0, 1], sizes = [1, 15], strides = [1, 1]} : vector<1x16xf32> to vector<1x15xf32>
    %373 = tpu.concatenate %372, %3 in 1 : vector<1x15xf32>, vector<1x1xf32> -> vector<1x16xf32>
    %c16_243 = arith.constant 16 : index
    %c0_244 = arith.constant 0 : index
    %374 = vector.load %arg12[%c16_243, %c0_244] : memref<27x16xf32, #tpu.memory_space<vmem>>, vector<1x16xf32>
    tpu.vector_store %arg12[%c16_243, %c0_244], %373 {strides = array<i32>} : memref<27x16xf32, #tpu.memory_space<vmem>>, vector<1x16xf32>,
    %c0_245 = arith.constant 0 : index
    %c2_246 = arith.constant 2 : index
    %375 = arith.index_cast %350 : i32 to index
    %c0_247 = arith.constant 0 : index
    %376 = vector.load %arg2[%c0_245, %c2_246, %375, %c0_247] : memref<1x3x16x16xf32, #tpu.memory_space<vmem>>, vector<1x1x1x16xf32>
    %377 = vector.shape_cast %376 : vector<1x1x1x16xf32> to vector<1x16xf32>
    %378 = vector.broadcast %348 : f32 to vector<1x16xf32>
    %379 = arith.mulf %377, %378 : vector<1x16xf32>
    %380 = vector.extract_strided_slice %379 {offsets = [0, 0], sizes = [1, 15], strides = [1, 1]} : vector<1x16xf32> to vector<1x15xf32>
    %381 = tpu.concatenate %3, %380 in 1 : vector<1x1xf32>, vector<1x15xf32> -> vector<1x16xf32>
    %c11_248 = arith.constant 11 : index
    %c0_249 = arith.constant 0 : index
    %382 = vector.load %arg12[%c11_248, %c0_249] : memref<27x16xf32, #tpu.memory_space<vmem>>, vector<1x16xf32>
    tpu.vector_store %arg12[%c11_248, %c0_249], %381 {strides = array<i32>} : memref<27x16xf32, #tpu.memory_space<vmem>>, vector<1x16xf32>,
    %c14_250 = arith.constant 14 : index
    %c0_251 = arith.constant 0 : index
    %383 = vector.load %arg12[%c14_250, %c0_251] : memref<27x16xf32, #tpu.memory_space<vmem>>, vector<1x16xf32>
    tpu.vector_store %arg12[%c14_250, %c0_251], %379 {strides = array<i32>} : memref<27x16xf32, #tpu.memory_space<vmem>>, vector<1x16xf32>,
    %384 = vector.extract_strided_slice %379 {offsets = [0, 1], sizes = [1, 15], strides = [1, 1]} : vector<1x16xf32> to vector<1x15xf32>
    %385 = tpu.concatenate %384, %3 in 1 : vector<1x15xf32>, vector<1x1xf32> -> vector<1x16xf32>
    %c17_252 = arith.constant 17 : index
    %c0_253 = arith.constant 0 : index
    %386 = vector.load %arg12[%c17_252, %c0_253] : memref<27x16xf32, #tpu.memory_space<vmem>>, vector<1x16xf32>
    tpu.vector_store %arg12[%c17_252, %c0_253], %385 {strides = array<i32>} : memref<27x16xf32, #tpu.memory_space<vmem>>, vector<1x16xf32>,
    %c1_i32_254 = arith.constant 1 : i32
    %387 = arith.addi %298, %c1_i32_254 : i32
    %c0_i32_255 = arith.constant 0 : i32
    %388 = arith.cmpi sge, %387, %c0_i32_255 : i32
    %c16_i32_256 = arith.constant 16 : i32
    %389 = arith.cmpi slt, %387, %c16_i32_256 : i32
    %390 = arith.andi %388, %389 : i1
    %391 = arith.extui %390 : i1 to i32
    %392 = arith.sitofp %391 : i32 to f32
    %c0_i32_257 = arith.constant 0 : i32
    %c15_i32_258 = arith.constant 15 : i32
    %393 = arith.maxsi %c0_i32_257, %387 : i32
    %394 = arith.minsi %c15_i32_258, %393 : i32
    %c0_259 = arith.constant 0 : index
    %c0_260 = arith.constant 0 : index
    %395 = arith.index_cast %394 : i32 to index
    %c0_261 = arith.constant 0 : index
    %396 = vector.load %arg2[%c0_259, %c0_260, %395, %c0_261] : memref<1x3x16x16xf32, #tpu.memory_space<vmem>>, vector<1x1x1x16xf32>
    %397 = vector.shape_cast %396 : vector<1x1x1x16xf32> to vector<1x16xf32>
    %398 = vector.broadcast %392 : f32 to vector<1x16xf32>
    %399 = arith.mulf %397, %398 : vector<1x16xf32>
    %400 = vector.extract_strided_slice %399 {offsets = [0, 0], sizes = [1, 15], strides = [1, 1]} : vector<1x16xf32> to vector<1x15xf32>
    %401 = tpu.concatenate %3, %400 in 1 : vector<1x1xf32>, vector<1x15xf32> -> vector<1x16xf32>
    %c18_262 = arith.constant 18 : index
    %c0_263 = arith.constant 0 : index
    %402 = vector.load %arg12[%c18_262, %c0_263] : memref<27x16xf32, #tpu.memory_space<vmem>>, vector<1x16xf32>
    tpu.vector_store %arg12[%c18_262, %c0_263], %401 {strides = array<i32>} : memref<27x16xf32, #tpu.memory_space<vmem>>, vector<1x16xf32>,
    %c21_264 = arith.constant 21 : index
    %c0_265 = arith.constant 0 : index
    %403 = vector.load %arg12[%c21_264, %c0_265] : memref<27x16xf32, #tpu.memory_space<vmem>>, vector<1x16xf32>
    tpu.vector_store %arg12[%c21_264, %c0_265], %399 {strides = array<i32>} : memref<27x16xf32, #tpu.memory_space<vmem>>, vector<1x16xf32>,
    %404 = vector.extract_strided_slice %399 {offsets = [0, 1], sizes = [1, 15], strides = [1, 1]} : vector<1x16xf32> to vector<1x15xf32>
    %405 = tpu.concatenate %404, %3 in 1 : vector<1x15xf32>, vector<1x1xf32> -> vector<1x16xf32>
    %c24_266 = arith.constant 24 : index
    %c0_267 = arith.constant 0 : index
    %406 = vector.load %arg12[%c24_266, %c0_267] : memref<27x16xf32, #tpu.memory_space<vmem>>, vector<1x16xf32>
    tpu.vector_store %arg12[%c24_266, %c0_267], %405 {strides = array<i32>} : memref<27x16xf32, #tpu.memory_space<vmem>>, vector<1x16xf32>,
    %c0_268 = arith.constant 0 : index
    %c1_269 = arith.constant 1 : index
    %407 = arith.index_cast %394 : i32 to index
    %c0_270 = arith.constant 0 : index
    %408 = vector.load %arg2[%c0_268, %c1_269, %407, %c0_270] : memref<1x3x16x16xf32, #tpu.memory_space<vmem>>, vector<1x1x1x16xf32>
    %409 = vector.shape_cast %408 : vector<1x1x1x16xf32> to vector<1x16xf32>
    %410 = vector.broadcast %392 : f32 to vector<1x16xf32>
    %411 = arith.mulf %409, %410 : vector<1x16xf32>
    %412 = vector.extract_strided_slice %411 {offsets = [0, 0], sizes = [1, 15], strides = [1, 1]} : vector<1x16xf32> to vector<1x15xf32>
    %413 = tpu.concatenate %3, %412 in 1 : vector<1x1xf32>, vector<1x15xf32> -> vector<1x16xf32>
    %c19_271 = arith.constant 19 : index
    %c0_272 = arith.constant 0 : index
    %414 = vector.load %arg12[%c19_271, %c0_272] : memref<27x16xf32, #tpu.memory_space<vmem>>, vector<1x16xf32>
    tpu.vector_store %arg12[%c19_271, %c0_272], %413 {strides = array<i32>} : memref<27x16xf32, #tpu.memory_space<vmem>>, vector<1x16xf32>,
    %c22_273 = arith.constant 22 : index
    %c0_274 = arith.constant 0 : index
    %415 = vector.load %arg12[%c22_273, %c0_274] : memref<27x16xf32, #tpu.memory_space<vmem>>, vector<1x16xf32>
    tpu.vector_store %arg12[%c22_273, %c0_274], %411 {strides = array<i32>} : memref<27x16xf32, #tpu.memory_space<vmem>>, vector<1x16xf32>,
    %416 = vector.extract_strided_slice %411 {offsets = [0, 1], sizes = [1, 15], strides = [1, 1]} : vector<1x16xf32> to vector<1x15xf32>
    %417 = tpu.concatenate %416, %3 in 1 : vector<1x15xf32>, vector<1x1xf32> -> vector<1x16xf32>
    %c25_275 = arith.constant 25 : index
    %c0_276 = arith.constant 0 : index
    %418 = vector.load %arg12[%c25_275, %c0_276] : memref<27x16xf32, #tpu.memory_space<vmem>>, vector<1x16xf32>
    tpu.vector_store %arg12[%c25_275, %c0_276], %417 {strides = array<i32>} : memref<27x16xf32, #tpu.memory_space<vmem>>, vector<1x16xf32>,
    %c0_277 = arith.constant 0 : index
    %c2_278 = arith.constant 2 : index
    %419 = arith.index_cast %394 : i32 to index
    %c0_279 = arith.constant 0 : index
    %420 = vector.load %arg2[%c0_277, %c2_278, %419, %c0_279] : memref<1x3x16x16xf32, #tpu.memory_space<vmem>>, vector<1x1x1x16xf32>
    %421 = vector.shape_cast %420 : vector<1x1x1x16xf32> to vector<1x16xf32>
    %422 = vector.broadcast %392 : f32 to vector<1x16xf32>
    %423 = arith.mulf %421, %422 : vector<1x16xf32>
    %424 = vector.extract_strided_slice %423 {offsets = [0, 0], sizes = [1, 15], strides = [1, 1]} : vector<1x16xf32> to vector<1x15xf32>
    %425 = tpu.concatenate %3, %424 in 1 : vector<1x1xf32>, vector<1x15xf32> -> vector<1x16xf32>
    %c20_280 = arith.constant 20 : index
    %c0_281 = arith.constant 0 : index
    %426 = vector.load %arg12[%c20_280, %c0_281] : memref<27x16xf32, #tpu.memory_space<vmem>>, vector<1x16xf32>
    tpu.vector_store %arg12[%c20_280, %c0_281], %425 {strides = array<i32>} : memref<27x16xf32, #tpu.memory_space<vmem>>, vector<1x16xf32>,
    %c23_282 = arith.constant 23 : index
    %c0_283 = arith.constant 0 : index
    %427 = vector.load %arg12[%c23_282, %c0_283] : memref<27x16xf32, #tpu.memory_space<vmem>>, vector<1x16xf32>
    tpu.vector_store %arg12[%c23_282, %c0_283], %423 {strides = array<i32>} : memref<27x16xf32, #tpu.memory_space<vmem>>, vector<1x16xf32>,
    %428 = vector.extract_strided_slice %423 {offsets = [0, 1], sizes = [1, 15], strides = [1, 1]} : vector<1x16xf32> to vector<1x15xf32>
    %429 = tpu.concatenate %428, %3 in 1 : vector<1x15xf32>, vector<1x1xf32> -> vector<1x16xf32>
    %c26_284 = arith.constant 26 : index
    %c0_285 = arith.constant 0 : index
    %430 = vector.load %arg12[%c26_284, %c0_285] : memref<27x16xf32, #tpu.memory_space<vmem>>, vector<1x16xf32>
    tpu.vector_store %arg12[%c26_284, %c0_285], %429 {strides = array<i32>} : memref<27x16xf32, #tpu.memory_space<vmem>>, vector<1x16xf32>,
    %c0_286 = arith.constant 0 : index
    %c0_287 = arith.constant 0 : index
    %431 = vector.load %arg3[%c0_286, %c0_287] : memref<32x27xf32, #tpu.memory_space<vmem>>, vector<32x27xf32>
    %c0_288 = arith.constant 0 : index
    %c0_289 = arith.constant 0 : index
    %432 = vector.load %arg12[%c0_288, %c0_289] : memref<27x16xf32, #tpu.memory_space<vmem>>, vector<27x16xf32>
    %cst_290 = arith.constant dense<0.000000e+00> : vector<32x16xf32>
    %433 = tpu.matmul %431, %432, %cst_290 {dimension_numbers = #tpu.dot_dimension_numbers<[1], [0], [0], [1], [0, 0, 1, 1], [], []>} : vector<32x27xf32>, vector<27x16xf32>, vector<32x16xf32> -> vector<32x16xf32>
    %c0_291 = arith.constant 0 : index
    %c0_292 = arith.constant 0 : index
    %434 = vector.load %arg4[%c0_291, %c0_292] : memref<32x1xf32, #tpu.memory_space<vmem>>, vector<32x1xf32>
    %435 = vector.broadcast %434 : vector<32x1xf32> to vector<32x16xf32>
    %436 = arith.addf %433, %435 : vector<32x16xf32>
    %cst_293 = arith.constant 0.000000e+00 : f32
    %437 = vector.broadcast %cst_293 : f32 to vector<32x16xf32>
    %438 = arith.maximumf %436, %437 : vector<32x16xf32>
    %c0_294 = arith.constant 0 : index
    %c0_295 = arith.constant 0 : index
    %439 = vector.load %arg13[%c0_294, %c0_295] : memref<32x1xf32, #tpu.memory_space<vmem>>, vector<32x1xf32>
    %cst_296 = arith.constant dense<0.000000e+00> : vector<32xf32>
    %440 = vector.multi_reduction <add>, %438, %cst_296 [1] : vector<32x16xf32> to vector<32xf32>
    %441 = vector.shape_cast %440 : vector<32xf32> to vector<32x1xf32>
    %442 = arith.addf %439, %441 : vector<32x1xf32>
    %c0_297 = arith.constant 0 : index
    %c0_298 = arith.constant 0 : index
    %443 = vector.load %arg13[%c0_297, %c0_298] : memref<32x1xf32, #tpu.memory_space<vmem>>, vector<32x1xf32>
    tpu.vector_store %arg13[%c0_297, %c0_298], %442 {strides = array<i32>} : memref<32x1xf32, #tpu.memory_space<vmem>>, vector<32x1xf32>,
    %c3_i32 = arith.constant 3 : i32
    %444 = arith.addi %5, %c3_i32 : i32
    %c-1_i32_299 = arith.constant -1 : i32
    %445 = arith.addi %444, %c-1_i32_299 : i32
    %c0_i32_300 = arith.constant 0 : i32
    %446 = arith.cmpi sge, %445, %c0_i32_300 : i32
    %c16_i32_301 = arith.constant 16 : i32
    %447 = arith.cmpi slt, %445, %c16_i32_301 : i32
    %448 = arith.andi %446, %447 : i1
    %449 = arith.extui %448 : i1 to i32
    %450 = arith.sitofp %449 : i32 to f32
    %c0_i32_302 = arith.constant 0 : i32
    %c15_i32_303 = arith.constant 15 : i32
    %451 = arith.maxsi %c0_i32_302, %445 : i32
    %452 = arith.minsi %c15_i32_303, %451 : i32
    %c0_304 = arith.constant 0 : index
    %c0_305 = arith.constant 0 : index
    %453 = arith.index_cast %452 : i32 to index
    %c0_306 = arith.constant 0 : index
    %454 = vector.load %arg2[%c0_304, %c0_305, %453, %c0_306] : memref<1x3x16x16xf32, #tpu.memory_space<vmem>>, vector<1x1x1x16xf32>
    %455 = vector.shape_cast %454 : vector<1x1x1x16xf32> to vector<1x16xf32>
    %456 = vector.broadcast %450 : f32 to vector<1x16xf32>
    %457 = arith.mulf %455, %456 : vector<1x16xf32>
    %458 = vector.extract_strided_slice %457 {offsets = [0, 0], sizes = [1, 15], strides = [1, 1]} : vector<1x16xf32> to vector<1x15xf32>
    %459 = tpu.concatenate %3, %458 in 1 : vector<1x1xf32>, vector<1x15xf32> -> vector<1x16xf32>
    %c0_307 = arith.constant 0 : index
    %c0_308 = arith.constant 0 : index
    %460 = vector.load %arg12[%c0_307, %c0_308] : memref<27x16xf32, #tpu.memory_space<vmem>>, vector<1x16xf32>
    tpu.vector_store %arg12[%c0_307, %c0_308], %459 {strides = array<i32>} : memref<27x16xf32, #tpu.memory_space<vmem>>, vector<1x16xf32>,
    %c3_309 = arith.constant 3 : index
    %c0_310 = arith.constant 0 : index
    %461 = vector.load %arg12[%c3_309, %c0_310] : memref<27x16xf32, #tpu.memory_space<vmem>>, vector<1x16xf32>
    tpu.vector_store %arg12[%c3_309, %c0_310], %457 {strides = array<i32>} : memref<27x16xf32, #tpu.memory_space<vmem>>, vector<1x16xf32>,
    %462 = vector.extract_strided_slice %457 {offsets = [0, 1], sizes = [1, 15], strides = [1, 1]} : vector<1x16xf32> to vector<1x15xf32>
    %463 = tpu.concatenate %462, %3 in 1 : vector<1x15xf32>, vector<1x1xf32> -> vector<1x16xf32>
    %c6_311 = arith.constant 6 : index
    %c0_312 = arith.constant 0 : index
    %464 = vector.load %arg12[%c6_311, %c0_312] : memref<27x16xf32, #tpu.memory_space<vmem>>, vector<1x16xf32>
    tpu.vector_store %arg12[%c6_311, %c0_312], %463 {strides = array<i32>} : memref<27x16xf32, #tpu.memory_space<vmem>>, vector<1x16xf32>,
    %c0_313 = arith.constant 0 : index
    %c1_314 = arith.constant 1 : index
    %465 = arith.index_cast %452 : i32 to index
    %c0_315 = arith.constant 0 : index
    %466 = vector.load %arg2[%c0_313, %c1_314, %465, %c0_315] : memref<1x3x16x16xf32, #tpu.memory_space<vmem>>, vector<1x1x1x16xf32>
    %467 = vector.shape_cast %466 : vector<1x1x1x16xf32> to vector<1x16xf32>
    %468 = vector.broadcast %450 : f32 to vector<1x16xf32>
    %469 = arith.mulf %467, %468 : vector<1x16xf32>
    %470 = vector.extract_strided_slice %469 {offsets = [0, 0], sizes = [1, 15], strides = [1, 1]} : vector<1x16xf32> to vector<1x15xf32>
    %471 = tpu.concatenate %3, %470 in 1 : vector<1x1xf32>, vector<1x15xf32> -> vector<1x16xf32>
    %c1_316 = arith.constant 1 : index
    %c0_317 = arith.constant 0 : index
    %472 = vector.load %arg12[%c1_316, %c0_317] : memref<27x16xf32, #tpu.memory_space<vmem>>, vector<1x16xf32>
    tpu.vector_store %arg12[%c1_316, %c0_317], %471 {strides = array<i32>} : memref<27x16xf32, #tpu.memory_space<vmem>>, vector<1x16xf32>,
    %c4_318 = arith.constant 4 : index
    %c0_319 = arith.constant 0 : index
    %473 = vector.load %arg12[%c4_318, %c0_319] : memref<27x16xf32, #tpu.memory_space<vmem>>, vector<1x16xf32>
    tpu.vector_store %arg12[%c4_318, %c0_319], %469 {strides = array<i32>} : memref<27x16xf32, #tpu.memory_space<vmem>>, vector<1x16xf32>,
    %474 = vector.extract_strided_slice %469 {offsets = [0, 1], sizes = [1, 15], strides = [1, 1]} : vector<1x16xf32> to vector<1x15xf32>
    %475 = tpu.concatenate %474, %3 in 1 : vector<1x15xf32>, vector<1x1xf32> -> vector<1x16xf32>
    %c7_320 = arith.constant 7 : index
    %c0_321 = arith.constant 0 : index
    %476 = vector.load %arg12[%c7_320, %c0_321] : memref<27x16xf32, #tpu.memory_space<vmem>>, vector<1x16xf32>
    tpu.vector_store %arg12[%c7_320, %c0_321], %475 {strides = array<i32>} : memref<27x16xf32, #tpu.memory_space<vmem>>, vector<1x16xf32>,
    %c0_322 = arith.constant 0 : index
    %c2_323 = arith.constant 2 : index
    %477 = arith.index_cast %452 : i32 to index
    %c0_324 = arith.constant 0 : index
    %478 = vector.load %arg2[%c0_322, %c2_323, %477, %c0_324] : memref<1x3x16x16xf32, #tpu.memory_space<vmem>>, vector<1x1x1x16xf32>
    %479 = vector.shape_cast %478 : vector<1x1x1x16xf32> to vector<1x16xf32>
    %480 = vector.broadcast %450 : f32 to vector<1x16xf32>
    %481 = arith.mulf %479, %480 : vector<1x16xf32>
    %482 = vector.extract_strided_slice %481 {offsets = [0, 0], sizes = [1, 15], strides = [1, 1]} : vector<1x16xf32> to vector<1x15xf32>
    %483 = tpu.concatenate %3, %482 in 1 : vector<1x1xf32>, vector<1x15xf32> -> vector<1x16xf32>
    %c2_325 = arith.constant 2 : index
    %c0_326 = arith.constant 0 : index
    %484 = vector.load %arg12[%c2_325, %c0_326] : memref<27x16xf32, #tpu.memory_space<vmem>>, vector<1x16xf32>
    tpu.vector_store %arg12[%c2_325, %c0_326], %483 {strides = array<i32>} : memref<27x16xf32, #tpu.memory_space<vmem>>, vector<1x16xf32>,
    %c5_327 = arith.constant 5 : index
    %c0_328 = arith.constant 0 : index
    %485 = vector.load %arg12[%c5_327, %c0_328] : memref<27x16xf32, #tpu.memory_space<vmem>>, vector<1x16xf32>
    tpu.vector_store %arg12[%c5_327, %c0_328], %481 {strides = array<i32>} : memref<27x16xf32, #tpu.memory_space<vmem>>, vector<1x16xf32>,
    %486 = vector.extract_strided_slice %481 {offsets = [0, 1], sizes = [1, 15], strides = [1, 1]} : vector<1x16xf32> to vector<1x15xf32>
    %487 = tpu.concatenate %486, %3 in 1 : vector<1x15xf32>, vector<1x1xf32> -> vector<1x16xf32>
    %c8_329 = arith.constant 8 : index
    %c0_330 = arith.constant 0 : index
    %488 = vector.load %arg12[%c8_329, %c0_330] : memref<27x16xf32, #tpu.memory_space<vmem>>, vector<1x16xf32>
    tpu.vector_store %arg12[%c8_329, %c0_330], %487 {strides = array<i32>} : memref<27x16xf32, #tpu.memory_space<vmem>>, vector<1x16xf32>,
    %c0_i32_331 = arith.constant 0 : i32
    %489 = arith.addi %444, %c0_i32_331 : i32
    %c0_i32_332 = arith.constant 0 : i32
    %490 = arith.cmpi sge, %489, %c0_i32_332 : i32
    %c16_i32_333 = arith.constant 16 : i32
    %491 = arith.cmpi slt, %489, %c16_i32_333 : i32
    %492 = arith.andi %490, %491 : i1
    %493 = arith.extui %492 : i1 to i32
    %494 = arith.sitofp %493 : i32 to f32
    %c0_i32_334 = arith.constant 0 : i32
    %c15_i32_335 = arith.constant 15 : i32
    %495 = arith.maxsi %c0_i32_334, %489 : i32
    %496 = arith.minsi %c15_i32_335, %495 : i32
    %c0_336 = arith.constant 0 : index
    %c0_337 = arith.constant 0 : index
    %497 = arith.index_cast %496 : i32 to index
    %c0_338 = arith.constant 0 : index
    %498 = vector.load %arg2[%c0_336, %c0_337, %497, %c0_338] : memref<1x3x16x16xf32, #tpu.memory_space<vmem>>, vector<1x1x1x16xf32>
    %499 = vector.shape_cast %498 : vector<1x1x1x16xf32> to vector<1x16xf32>
    %500 = vector.broadcast %494 : f32 to vector<1x16xf32>
    %501 = arith.mulf %499, %500 : vector<1x16xf32>
    %502 = vector.extract_strided_slice %501 {offsets = [0, 0], sizes = [1, 15], strides = [1, 1]} : vector<1x16xf32> to vector<1x15xf32>
    %503 = tpu.concatenate %3, %502 in 1 : vector<1x1xf32>, vector<1x15xf32> -> vector<1x16xf32>
    %c9_339 = arith.constant 9 : index
    %c0_340 = arith.constant 0 : index
    %504 = vector.load %arg12[%c9_339, %c0_340] : memref<27x16xf32, #tpu.memory_space<vmem>>, vector<1x16xf32>
    tpu.vector_store %arg12[%c9_339, %c0_340], %503 {strides = array<i32>} : memref<27x16xf32, #tpu.memory_space<vmem>>, vector<1x16xf32>,
    %c12_341 = arith.constant 12 : index
    %c0_342 = arith.constant 0 : index
    %505 = vector.load %arg12[%c12_341, %c0_342] : memref<27x16xf32, #tpu.memory_space<vmem>>, vector<1x16xf32>
    tpu.vector_store %arg12[%c12_341, %c0_342], %501 {strides = array<i32>} : memref<27x16xf32, #tpu.memory_space<vmem>>, vector<1x16xf32>,
    %506 = vector.extract_strided_slice %501 {offsets = [0, 1], sizes = [1, 15], strides = [1, 1]} : vector<1x16xf32> to vector<1x15xf32>
    %507 = tpu.concatenate %506, %3 in 1 : vector<1x15xf32>, vector<1x1xf32> -> vector<1x16xf32>
    %c15_343 = arith.constant 15 : index
    %c0_344 = arith.constant 0 : index
    %508 = vector.load %arg12[%c15_343, %c0_344] : memref<27x16xf32, #tpu.memory_space<vmem>>, vector<1x16xf32>
    tpu.vector_store %arg12[%c15_343, %c0_344], %507 {strides = array<i32>} : memref<27x16xf32, #tpu.memory_space<vmem>>, vector<1x16xf32>,
    %c0_345 = arith.constant 0 : index
    %c1_346 = arith.constant 1 : index
    %509 = arith.index_cast %496 : i32 to index
    %c0_347 = arith.constant 0 : index
    %510 = vector.load %arg2[%c0_345, %c1_346, %509, %c0_347] : memref<1x3x16x16xf32, #tpu.memory_space<vmem>>, vector<1x1x1x16xf32>
    %511 = vector.shape_cast %510 : vector<1x1x1x16xf32> to vector<1x16xf32>
    %512 = vector.broadcast %494 : f32 to vector<1x16xf32>
    %513 = arith.mulf %511, %512 : vector<1x16xf32>
    %514 = vector.extract_strided_slice %513 {offsets = [0, 0], sizes = [1, 15], strides = [1, 1]} : vector<1x16xf32> to vector<1x15xf32>
    %515 = tpu.concatenate %3, %514 in 1 : vector<1x1xf32>, vector<1x15xf32> -> vector<1x16xf32>
    %c10_348 = arith.constant 10 : index
    %c0_349 = arith.constant 0 : index
    %516 = vector.load %arg12[%c10_348, %c0_349] : memref<27x16xf32, #tpu.memory_space<vmem>>, vector<1x16xf32>
    tpu.vector_store %arg12[%c10_348, %c0_349], %515 {strides = array<i32>} : memref<27x16xf32, #tpu.memory_space<vmem>>, vector<1x16xf32>,
    %c13_350 = arith.constant 13 : index
    %c0_351 = arith.constant 0 : index
    %517 = vector.load %arg12[%c13_350, %c0_351] : memref<27x16xf32, #tpu.memory_space<vmem>>, vector<1x16xf32>
    tpu.vector_store %arg12[%c13_350, %c0_351], %513 {strides = array<i32>} : memref<27x16xf32, #tpu.memory_space<vmem>>, vector<1x16xf32>,
    %518 = vector.extract_strided_slice %513 {offsets = [0, 1], sizes = [1, 15], strides = [1, 1]} : vector<1x16xf32> to vector<1x15xf32>
    %519 = tpu.concatenate %518, %3 in 1 : vector<1x15xf32>, vector<1x1xf32> -> vector<1x16xf32>
    %c16_352 = arith.constant 16 : index
    %c0_353 = arith.constant 0 : index
    %520 = vector.load %arg12[%c16_352, %c0_353] : memref<27x16xf32, #tpu.memory_space<vmem>>, vector<1x16xf32>
    tpu.vector_store %arg12[%c16_352, %c0_353], %519 {strides = array<i32>} : memref<27x16xf32, #tpu.memory_space<vmem>>, vector<1x16xf32>,
    %c0_354 = arith.constant 0 : index
    %c2_355 = arith.constant 2 : index
    %521 = arith.index_cast %496 : i32 to index
    %c0_356 = arith.constant 0 : index
    %522 = vector.load %arg2[%c0_354, %c2_355, %521, %c0_356] : memref<1x3x16x16xf32, #tpu.memory_space<vmem>>, vector<1x1x1x16xf32>
    %523 = vector.shape_cast %522 : vector<1x1x1x16xf32> to vector<1x16xf32>
    %524 = vector.broadcast %494 : f32 to vector<1x16xf32>
    %525 = arith.mulf %523, %524 : vector<1x16xf32>
    %526 = vector.extract_strided_slice %525 {offsets = [0, 0], sizes = [1, 15], strides = [1, 1]} : vector<1x16xf32> to vector<1x15xf32>
    %527 = tpu.concatenate %3, %526 in 1 : vector<1x1xf32>, vector<1x15xf32> -> vector<1x16xf32>
    %c11_357 = arith.constant 11 : index
    %c0_358 = arith.constant 0 : index
    %528 = vector.load %arg12[%c11_357, %c0_358] : memref<27x16xf32, #tpu.memory_space<vmem>>, vector<1x16xf32>
    tpu.vector_store %arg12[%c11_357, %c0_358], %527 {strides = array<i32>} : memref<27x16xf32, #tpu.memory_space<vmem>>, vector<1x16xf32>,
    %c14_359 = arith.constant 14 : index
    %c0_360 = arith.constant 0 : index
    %529 = vector.load %arg12[%c14_359, %c0_360] : memref<27x16xf32, #tpu.memory_space<vmem>>, vector<1x16xf32>
    tpu.vector_store %arg12[%c14_359, %c0_360], %525 {strides = array<i32>} : memref<27x16xf32, #tpu.memory_space<vmem>>, vector<1x16xf32>,
    %530 = vector.extract_strided_slice %525 {offsets = [0, 1], sizes = [1, 15], strides = [1, 1]} : vector<1x16xf32> to vector<1x15xf32>
    %531 = tpu.concatenate %530, %3 in 1 : vector<1x15xf32>, vector<1x1xf32> -> vector<1x16xf32>
    %c17_361 = arith.constant 17 : index
    %c0_362 = arith.constant 0 : index
    %532 = vector.load %arg12[%c17_361, %c0_362] : memref<27x16xf32, #tpu.memory_space<vmem>>, vector<1x16xf32>
    tpu.vector_store %arg12[%c17_361, %c0_362], %531 {strides = array<i32>} : memref<27x16xf32, #tpu.memory_space<vmem>>, vector<1x16xf32>,
    %c1_i32_363 = arith.constant 1 : i32
    %533 = arith.addi %444, %c1_i32_363 : i32
    %c0_i32_364 = arith.constant 0 : i32
    %534 = arith.cmpi sge, %533, %c0_i32_364 : i32
    %c16_i32_365 = arith.constant 16 : i32
    %535 = arith.cmpi slt, %533, %c16_i32_365 : i32
    %536 = arith.andi %534, %535 : i1
    %537 = arith.extui %536 : i1 to i32
    %538 = arith.sitofp %537 : i32 to f32
    %c0_i32_366 = arith.constant 0 : i32
    %c15_i32_367 = arith.constant 15 : i32
    %539 = arith.maxsi %c0_i32_366, %533 : i32
    %540 = arith.minsi %c15_i32_367, %539 : i32
    %c0_368 = arith.constant 0 : index
    %c0_369 = arith.constant 0 : index
    %541 = arith.index_cast %540 : i32 to index
    %c0_370 = arith.constant 0 : index
    %542 = vector.load %arg2[%c0_368, %c0_369, %541, %c0_370] : memref<1x3x16x16xf32, #tpu.memory_space<vmem>>, vector<1x1x1x16xf32>
    %543 = vector.shape_cast %542 : vector<1x1x1x16xf32> to vector<1x16xf32>
    %544 = vector.broadcast %538 : f32 to vector<1x16xf32>
    %545 = arith.mulf %543, %544 : vector<1x16xf32>
    %546 = vector.extract_strided_slice %545 {offsets = [0, 0], sizes = [1, 15], strides = [1, 1]} : vector<1x16xf32> to vector<1x15xf32>
    %547 = tpu.concatenate %3, %546 in 1 : vector<1x1xf32>, vector<1x15xf32> -> vector<1x16xf32>
    %c18_371 = arith.constant 18 : index
    %c0_372 = arith.constant 0 : index
    %548 = vector.load %arg12[%c18_371, %c0_372] : memref<27x16xf32, #tpu.memory_space<vmem>>, vector<1x16xf32>
    tpu.vector_store %arg12[%c18_371, %c0_372], %547 {strides = array<i32>} : memref<27x16xf32, #tpu.memory_space<vmem>>, vector<1x16xf32>,
    %c21_373 = arith.constant 21 : index
    %c0_374 = arith.constant 0 : index
    %549 = vector.load %arg12[%c21_373, %c0_374] : memref<27x16xf32, #tpu.memory_space<vmem>>, vector<1x16xf32>
    tpu.vector_store %arg12[%c21_373, %c0_374], %545 {strides = array<i32>} : memref<27x16xf32, #tpu.memory_space<vmem>>, vector<1x16xf32>,
    %550 = vector.extract_strided_slice %545 {offsets = [0, 1], sizes = [1, 15], strides = [1, 1]} : vector<1x16xf32> to vector<1x15xf32>
    %551 = tpu.concatenate %550, %3 in 1 : vector<1x15xf32>, vector<1x1xf32> -> vector<1x16xf32>
    %c24_375 = arith.constant 24 : index
    %c0_376 = arith.constant 0 : index
    %552 = vector.load %arg12[%c24_375, %c0_376] : memref<27x16xf32, #tpu.memory_space<vmem>>, vector<1x16xf32>
    tpu.vector_store %arg12[%c24_375, %c0_376], %551 {strides = array<i32>} : memref<27x16xf32, #tpu.memory_space<vmem>>, vector<1x16xf32>,
    %c0_377 = arith.constant 0 : index
    %c1_378 = arith.constant 1 : index
    %553 = arith.index_cast %540 : i32 to index
    %c0_379 = arith.constant 0 : index
    %554 = vector.load %arg2[%c0_377, %c1_378, %553, %c0_379] : memref<1x3x16x16xf32, #tpu.memory_space<vmem>>, vector<1x1x1x16xf32>
    %555 = vector.shape_cast %554 : vector<1x1x1x16xf32> to vector<1x16xf32>
    %556 = vector.broadcast %538 : f32 to vector<1x16xf32>
    %557 = arith.mulf %555, %556 : vector<1x16xf32>
    %558 = vector.extract_strided_slice %557 {offsets = [0, 0], sizes = [1, 15], strides = [1, 1]} : vector<1x16xf32> to vector<1x15xf32>
    %559 = tpu.concatenate %3, %558 in 1 : vector<1x1xf32>, vector<1x15xf32> -> vector<1x16xf32>
    %c19_380 = arith.constant 19 : index
    %c0_381 = arith.constant 0 : index
    %560 = vector.load %arg12[%c19_380, %c0_381] : memref<27x16xf32, #tpu.memory_space<vmem>>, vector<1x16xf32>
    tpu.vector_store %arg12[%c19_380, %c0_381], %559 {strides = array<i32>} : memref<27x16xf32, #tpu.memory_space<vmem>>, vector<1x16xf32>,
    %c22_382 = arith.constant 22 : index
    %c0_383 = arith.constant 0 : index
    %561 = vector.load %arg12[%c22_382, %c0_383] : memref<27x16xf32, #tpu.memory_space<vmem>>, vector<1x16xf32>
    tpu.vector_store %arg12[%c22_382, %c0_383], %557 {strides = array<i32>} : memref<27x16xf32, #tpu.memory_space<vmem>>, vector<1x16xf32>,
    %562 = vector.extract_strided_slice %557 {offsets = [0, 1], sizes = [1, 15], strides = [1, 1]} : vector<1x16xf32> to vector<1x15xf32>
    %563 = tpu.concatenate %562, %3 in 1 : vector<1x15xf32>, vector<1x1xf32> -> vector<1x16xf32>
    %c25_384 = arith.constant 25 : index
    %c0_385 = arith.constant 0 : index
    %564 = vector.load %arg12[%c25_384, %c0_385] : memref<27x16xf32, #tpu.memory_space<vmem>>, vector<1x16xf32>
    tpu.vector_store %arg12[%c25_384, %c0_385], %563 {strides = array<i32>} : memref<27x16xf32, #tpu.memory_space<vmem>>, vector<1x16xf32>,
    %c0_386 = arith.constant 0 : index
    %c2_387 = arith.constant 2 : index
    %565 = arith.index_cast %540 : i32 to index
    %c0_388 = arith.constant 0 : index
    %566 = vector.load %arg2[%c0_386, %c2_387, %565, %c0_388] : memref<1x3x16x16xf32, #tpu.memory_space<vmem>>, vector<1x1x1x16xf32>
    %567 = vector.shape_cast %566 : vector<1x1x1x16xf32> to vector<1x16xf32>
    %568 = vector.broadcast %538 : f32 to vector<1x16xf32>
    %569 = arith.mulf %567, %568 : vector<1x16xf32>
    %570 = vector.extract_strided_slice %569 {offsets = [0, 0], sizes = [1, 15], strides = [1, 1]} : vector<1x16xf32> to vector<1x15xf32>
    %571 = tpu.concatenate %3, %570 in 1 : vector<1x1xf32>, vector<1x15xf32> -> vector<1x16xf32>
    %c20_389 = arith.constant 20 : index
    %c0_390 = arith.constant 0 : index
    %572 = vector.load %arg12[%c20_389, %c0_390] : memref<27x16xf32, #tpu.memory_space<vmem>>, vector<1x16xf32>
    tpu.vector_store %arg12[%c20_389, %c0_390], %571 {strides = array<i32>} : memref<27x16xf32, #tpu.memory_space<vmem>>, vector<1x16xf32>,
    %c23_391 = arith.constant 23 : index
    %c0_392 = arith.constant 0 : index
    %573 = vector.load %arg12[%c23_391, %c0_392] : memref<27x16xf32, #tpu.memory_space<vmem>>, vector<1x16xf32>
    tpu.vector_store %arg12[%c23_391, %c0_392], %569 {strides = array<i32>} : memref<27x16xf32, #tpu.memory_space<vmem>>, vector<1x16xf32>,
    %574 = vector.extract_strided_slice %569 {offsets = [0, 1], sizes = [1, 15], strides = [1, 1]} : vector<1x16xf32> to vector<1x15xf32>
    %575 = tpu.concatenate %574, %3 in 1 : vector<1x15xf32>, vector<1x1xf32> -> vector<1x16xf32>
    %c26_393 = arith.constant 26 : index
    %c0_394 = arith.constant 0 : index
    %576 = vector.load %arg12[%c26_393, %c0_394] : memref<27x16xf32, #tpu.memory_space<vmem>>, vector<1x16xf32>
    tpu.vector_store %arg12[%c26_393, %c0_394], %575 {strides = array<i32>} : memref<27x16xf32, #tpu.memory_space<vmem>>, vector<1x16xf32>,
    %c0_395 = arith.constant 0 : index
    %c0_396 = arith.constant 0 : index
    %577 = vector.load %arg3[%c0_395, %c0_396] : memref<32x27xf32, #tpu.memory_space<vmem>>, vector<32x27xf32>
    %c0_397 = arith.constant 0 : index
    %c0_398 = arith.constant 0 : index
    %578 = vector.load %arg12[%c0_397, %c0_398] : memref<27x16xf32, #tpu.memory_space<vmem>>, vector<27x16xf32>
    %cst_399 = arith.constant dense<0.000000e+00> : vector<32x16xf32>
    %579 = tpu.matmul %577, %578, %cst_399 {dimension_numbers = #tpu.dot_dimension_numbers<[1], [0], [0], [1], [0, 0, 1, 1], [], []>} : vector<32x27xf32>, vector<27x16xf32>, vector<32x16xf32> -> vector<32x16xf32>
    %c0_400 = arith.constant 0 : index
    %c0_401 = arith.constant 0 : index
    %580 = vector.load %arg4[%c0_400, %c0_401] : memref<32x1xf32, #tpu.memory_space<vmem>>, vector<32x1xf32>
    %581 = vector.broadcast %580 : vector<32x1xf32> to vector<32x16xf32>
    %582 = arith.addf %579, %581 : vector<32x16xf32>
    %cst_402 = arith.constant 0.000000e+00 : f32
    %583 = vector.broadcast %cst_402 : f32 to vector<32x16xf32>
    %584 = arith.maximumf %582, %583 : vector<32x16xf32>
    %c0_403 = arith.constant 0 : index
    %c0_404 = arith.constant 0 : index
    %585 = vector.load %arg13[%c0_403, %c0_404] : memref<32x1xf32, #tpu.memory_space<vmem>>, vector<32x1xf32>
    %cst_405 = arith.constant dense<0.000000e+00> : vector<32xf32>
    %586 = vector.multi_reduction <add>, %584, %cst_405 [1] : vector<32x16xf32> to vector<32xf32>
    %587 = vector.shape_cast %586 : vector<32xf32> to vector<32x1xf32>
    %588 = arith.addf %585, %587 : vector<32x1xf32>
    %c0_406 = arith.constant 0 : index
    %c0_407 = arith.constant 0 : index
    %589 = vector.load %arg13[%c0_406, %c0_407] : memref<32x1xf32, #tpu.memory_space<vmem>>, vector<32x1xf32>
    tpu.vector_store %arg13[%c0_406, %c0_407], %588 {strides = array<i32>} : memref<32x1xf32, #tpu.memory_space<vmem>>, vector<32x1xf32>,
    %c4_i32 = arith.constant 4 : i32
    %590 = arith.addi %5, %c4_i32 : i32
    %c-1_i32_408 = arith.constant -1 : i32
    %591 = arith.addi %590, %c-1_i32_408 : i32
    %c0_i32_409 = arith.constant 0 : i32
    %592 = arith.cmpi sge, %591, %c0_i32_409 : i32
    %c16_i32_410 = arith.constant 16 : i32
    %593 = arith.cmpi slt, %591, %c16_i32_410 : i32
    %594 = arith.andi %592, %593 : i1
    %595 = arith.extui %594 : i1 to i32
    %596 = arith.sitofp %595 : i32 to f32
    %c0_i32_411 = arith.constant 0 : i32
    %c15_i32_412 = arith.constant 15 : i32
    %597 = arith.maxsi %c0_i32_411, %591 : i32
    %598 = arith.minsi %c15_i32_412, %597 : i32
    %c0_413 = arith.constant 0 : index
    %c0_414 = arith.constant 0 : index
    %599 = arith.index_cast %598 : i32 to index
    %c0_415 = arith.constant 0 : index
    %600 = vector.load %arg2[%c0_413, %c0_414, %599, %c0_415] : memref<1x3x16x16xf32, #tpu.memory_space<vmem>>, vector<1x1x1x16xf32>
    %601 = vector.shape_cast %600 : vector<1x1x1x16xf32> to vector<1x16xf32>
    %602 = vector.broadcast %596 : f32 to vector<1x16xf32>
    %603 = arith.mulf %601, %602 : vector<1x16xf32>
    %604 = vector.extract_strided_slice %603 {offsets = [0, 0], sizes = [1, 15], strides = [1, 1]} : vector<1x16xf32> to vector<1x15xf32>
    %605 = tpu.concatenate %3, %604 in 1 : vector<1x1xf32>, vector<1x15xf32> -> vector<1x16xf32>
    %c0_416 = arith.constant 0 : index
    %c0_417 = arith.constant 0 : index
    %606 = vector.load %arg12[%c0_416, %c0_417] : memref<27x16xf32, #tpu.memory_space<vmem>>, vector<1x16xf32>
    tpu.vector_store %arg12[%c0_416, %c0_417], %605 {strides = array<i32>} : memref<27x16xf32, #tpu.memory_space<vmem>>, vector<1x16xf32>,
    %c3_418 = arith.constant 3 : index
    %c0_419 = arith.constant 0 : index
    %607 = vector.load %arg12[%c3_418, %c0_419] : memref<27x16xf32, #tpu.memory_space<vmem>>, vector<1x16xf32>
    tpu.vector_store %arg12[%c3_418, %c0_419], %603 {strides = array<i32>} : memref<27x16xf32, #tpu.memory_space<vmem>>, vector<1x16xf32>,
    %608 = vector.extract_strided_slice %603 {offsets = [0, 1], sizes = [1, 15], strides = [1, 1]} : vector<1x16xf32> to vector<1x15xf32>
    %609 = tpu.concatenate %608, %3 in 1 : vector<1x15xf32>, vector<1x1xf32> -> vector<1x16xf32>
    %c6_420 = arith.constant 6 : index
    %c0_421 = arith.constant 0 : index
    %610 = vector.load %arg12[%c6_420, %c0_421] : memref<27x16xf32, #tpu.memory_space<vmem>>, vector<1x16xf32>
    tpu.vector_store %arg12[%c6_420, %c0_421], %609 {strides = array<i32>} : memref<27x16xf32, #tpu.memory_space<vmem>>, vector<1x16xf32>,
    %c0_422 = arith.constant 0 : index
    %c1_423 = arith.constant 1 : index
    %611 = arith.index_cast %598 : i32 to index
    %c0_424 = arith.constant 0 : index
    %612 = vector.load %arg2[%c0_422, %c1_423, %611, %c0_424] : memref<1x3x16x16xf32, #tpu.memory_space<vmem>>, vector<1x1x1x16xf32>
    %613 = vector.shape_cast %612 : vector<1x1x1x16xf32> to vector<1x16xf32>
    %614 = vector.broadcast %596 : f32 to vector<1x16xf32>
    %615 = arith.mulf %613, %614 : vector<1x16xf32>
    %616 = vector.extract_strided_slice %615 {offsets = [0, 0], sizes = [1, 15], strides = [1, 1]} : vector<1x16xf32> to vector<1x15xf32>
    %617 = tpu.concatenate %3, %616 in 1 : vector<1x1xf32>, vector<1x15xf32> -> vector<1x16xf32>
    %c1_425 = arith.constant 1 : index
    %c0_426 = arith.constant 0 : index
    %618 = vector.load %arg12[%c1_425, %c0_426] : memref<27x16xf32, #tpu.memory_space<vmem>>, vector<1x16xf32>
    tpu.vector_store %arg12[%c1_425, %c0_426], %617 {strides = array<i32>} : memref<27x16xf32, #tpu.memory_space<vmem>>, vector<1x16xf32>,
    %c4_427 = arith.constant 4 : index
    %c0_428 = arith.constant 0 : index
    %619 = vector.load %arg12[%c4_427, %c0_428] : memref<27x16xf32, #tpu.memory_space<vmem>>, vector<1x16xf32>
    tpu.vector_store %arg12[%c4_427, %c0_428], %615 {strides = array<i32>} : memref<27x16xf32, #tpu.memory_space<vmem>>, vector<1x16xf32>,
    %620 = vector.extract_strided_slice %615 {offsets = [0, 1], sizes = [1, 15], strides = [1, 1]} : vector<1x16xf32> to vector<1x15xf32>
    %621 = tpu.concatenate %620, %3 in 1 : vector<1x15xf32>, vector<1x1xf32> -> vector<1x16xf32>
    %c7_429 = arith.constant 7 : index
    %c0_430 = arith.constant 0 : index
    %622 = vector.load %arg12[%c7_429, %c0_430] : memref<27x16xf32, #tpu.memory_space<vmem>>, vector<1x16xf32>
    tpu.vector_store %arg12[%c7_429, %c0_430], %621 {strides = array<i32>} : memref<27x16xf32, #tpu.memory_space<vmem>>, vector<1x16xf32>,
    %c0_431 = arith.constant 0 : index
    %c2_432 = arith.constant 2 : index
    %623 = arith.index_cast %598 : i32 to index
    %c0_433 = arith.constant 0 : index
    %624 = vector.load %arg2[%c0_431, %c2_432, %623, %c0_433] : memref<1x3x16x16xf32, #tpu.memory_space<vmem>>, vector<1x1x1x16xf32>
    %625 = vector.shape_cast %624 : vector<1x1x1x16xf32> to vector<1x16xf32>
    %626 = vector.broadcast %596 : f32 to vector<1x16xf32>
    %627 = arith.mulf %625, %626 : vector<1x16xf32>
    %628 = vector.extract_strided_slice %627 {offsets = [0, 0], sizes = [1, 15], strides = [1, 1]} : vector<1x16xf32> to vector<1x15xf32>
    %629 = tpu.concatenate %3, %628 in 1 : vector<1x1xf32>, vector<1x15xf32> -> vector<1x16xf32>
    %c2_434 = arith.constant 2 : index
    %c0_435 = arith.constant 0 : index
    %630 = vector.load %arg12[%c2_434, %c0_435] : memref<27x16xf32, #tpu.memory_space<vmem>>, vector<1x16xf32>
    tpu.vector_store %arg12[%c2_434, %c0_435], %629 {strides = array<i32>} : memref<27x16xf32, #tpu.memory_space<vmem>>, vector<1x16xf32>,
    %c5_436 = arith.constant 5 : index
    %c0_437 = arith.constant 0 : index
    %631 = vector.load %arg12[%c5_436, %c0_437] : memref<27x16xf32, #tpu.memory_space<vmem>>, vector<1x16xf32>
    tpu.vector_store %arg12[%c5_436, %c0_437], %627 {strides = array<i32>} : memref<27x16xf32, #tpu.memory_space<vmem>>, vector<1x16xf32>,
    %632 = vector.extract_strided_slice %627 {offsets = [0, 1], sizes = [1, 15], strides = [1, 1]} : vector<1x16xf32> to vector<1x15xf32>
    %633 = tpu.concatenate %632, %3 in 1 : vector<1x15xf32>, vector<1x1xf32> -> vector<1x16xf32>
    %c8_438 = arith.constant 8 : index
    %c0_439 = arith.constant 0 : index
    %634 = vector.load %arg12[%c8_438, %c0_439] : memref<27x16xf32, #tpu.memory_space<vmem>>, vector<1x16xf32>
    tpu.vector_store %arg12[%c8_438, %c0_439], %633 {strides = array<i32>} : memref<27x16xf32, #tpu.memory_space<vmem>>, vector<1x16xf32>,
    %c0_i32_440 = arith.constant 0 : i32
    %635 = arith.addi %590, %c0_i32_440 : i32
    %c0_i32_441 = arith.constant 0 : i32
    %636 = arith.cmpi sge, %635, %c0_i32_441 : i32
    %c16_i32_442 = arith.constant 16 : i32
    %637 = arith.cmpi slt, %635, %c16_i32_442 : i32
    %638 = arith.andi %636, %637 : i1
    %639 = arith.extui %638 : i1 to i32
    %640 = arith.sitofp %639 : i32 to f32
    %c0_i32_443 = arith.constant 0 : i32
    %c15_i32_444 = arith.constant 15 : i32
    %641 = arith.maxsi %c0_i32_443, %635 : i32
    %642 = arith.minsi %c15_i32_444, %641 : i32
    %c0_445 = arith.constant 0 : index
    %c0_446 = arith.constant 0 : index
    %643 = arith.index_cast %642 : i32 to index
    %c0_447 = arith.constant 0 : index
    %644 = vector.load %arg2[%c0_445, %c0_446, %643, %c0_447] : memref<1x3x16x16xf32, #tpu.memory_space<vmem>>, vector<1x1x1x16xf32>
    %645 = vector.shape_cast %644 : vector<1x1x1x16xf32> to vector<1x16xf32>
    %646 = vector.broadcast %640 : f32 to vector<1x16xf32>
    %647 = arith.mulf %645, %646 : vector<1x16xf32>
    %648 = vector.extract_strided_slice %647 {offsets = [0, 0], sizes = [1, 15], strides = [1, 1]} : vector<1x16xf32> to vector<1x15xf32>
    %649 = tpu.concatenate %3, %648 in 1 : vector<1x1xf32>, vector<1x15xf32> -> vector<1x16xf32>
    %c9_448 = arith.constant 9 : index
    %c0_449 = arith.constant 0 : index
    %650 = vector.load %arg12[%c9_448, %c0_449] : memref<27x16xf32, #tpu.memory_space<vmem>>, vector<1x16xf32>
    tpu.vector_store %arg12[%c9_448, %c0_449], %649 {strides = array<i32>} : memref<27x16xf32, #tpu.memory_space<vmem>>, vector<1x16xf32>,
    %c12_450 = arith.constant 12 : index
    %c0_451 = arith.constant 0 : index
    %651 = vector.load %arg12[%c12_450, %c0_451] : memref<27x16xf32, #tpu.memory_space<vmem>>, vector<1x16xf32>
    tpu.vector_store %arg12[%c12_450, %c0_451], %647 {strides = array<i32>} : memref<27x16xf32, #tpu.memory_space<vmem>>, vector<1x16xf32>,
    %652 = vector.extract_strided_slice %647 {offsets = [0, 1], sizes = [1, 15], strides = [1, 1]} : vector<1x16xf32> to vector<1x15xf32>
    %653 = tpu.concatenate %652, %3 in 1 : vector<1x15xf32>, vector<1x1xf32> -> vector<1x16xf32>
    %c15_452 = arith.constant 15 : index
    %c0_453 = arith.constant 0 : index
    %654 = vector.load %arg12[%c15_452, %c0_453] : memref<27x16xf32, #tpu.memory_space<vmem>>, vector<1x16xf32>
    tpu.vector_store %arg12[%c15_452, %c0_453], %653 {strides = array<i32>} : memref<27x16xf32, #tpu.memory_space<vmem>>, vector<1x16xf32>,
    %c0_454 = arith.constant 0 : index
    %c1_455 = arith.constant 1 : index
    %655 = arith.index_cast %642 : i32 to index
    %c0_456 = arith.constant 0 : index
    %656 = vector.load %arg2[%c0_454, %c1_455, %655, %c0_456] : memref<1x3x16x16xf32, #tpu.memory_space<vmem>>, vector<1x1x1x16xf32>
    %657 = vector.shape_cast %656 : vector<1x1x1x16xf32> to vector<1x16xf32>
    %658 = vector.broadcast %640 : f32 to vector<1x16xf32>
    %659 = arith.mulf %657, %658 : vector<1x16xf32>
    %660 = vector.extract_strided_slice %659 {offsets = [0, 0], sizes = [1, 15], strides = [1, 1]} : vector<1x16xf32> to vector<1x15xf32>
    %661 = tpu.concatenate %3, %660 in 1 : vector<1x1xf32>, vector<1x15xf32> -> vector<1x16xf32>
    %c10_457 = arith.constant 10 : index
    %c0_458 = arith.constant 0 : index
    %662 = vector.load %arg12[%c10_457, %c0_458] : memref<27x16xf32, #tpu.memory_space<vmem>>, vector<1x16xf32>
    tpu.vector_store %arg12[%c10_457, %c0_458], %661 {strides = array<i32>} : memref<27x16xf32, #tpu.memory_space<vmem>>, vector<1x16xf32>,
    %c13_459 = arith.constant 13 : index
    %c0_460 = arith.constant 0 : index
    %663 = vector.load %arg12[%c13_459, %c0_460] : memref<27x16xf32, #tpu.memory_space<vmem>>, vector<1x16xf32>
    tpu.vector_store %arg12[%c13_459, %c0_460], %659 {strides = array<i32>} : memref<27x16xf32, #tpu.memory_space<vmem>>, vector<1x16xf32>,
    %664 = vector.extract_strided_slice %659 {offsets = [0, 1], sizes = [1, 15], strides = [1, 1]} : vector<1x16xf32> to vector<1x15xf32>
    %665 = tpu.concatenate %664, %3 in 1 : vector<1x15xf32>, vector<1x1xf32> -> vector<1x16xf32>
    %c16_461 = arith.constant 16 : index
    %c0_462 = arith.constant 0 : index
    %666 = vector.load %arg12[%c16_461, %c0_462] : memref<27x16xf32, #tpu.memory_space<vmem>>, vector<1x16xf32>
    tpu.vector_store %arg12[%c16_461, %c0_462], %665 {strides = array<i32>} : memref<27x16xf32, #tpu.memory_space<vmem>>, vector<1x16xf32>,
    %c0_463 = arith.constant 0 : index
    %c2_464 = arith.constant 2 : index
    %667 = arith.index_cast %642 : i32 to index
    %c0_465 = arith.constant 0 : index
    %668 = vector.load %arg2[%c0_463, %c2_464, %667, %c0_465] : memref<1x3x16x16xf32, #tpu.memory_space<vmem>>, vector<1x1x1x16xf32>
    %669 = vector.shape_cast %668 : vector<1x1x1x16xf32> to vector<1x16xf32>
    %670 = vector.broadcast %640 : f32 to vector<1x16xf32>
    %671 = arith.mulf %669, %670 : vector<1x16xf32>
    %672 = vector.extract_strided_slice %671 {offsets = [0, 0], sizes = [1, 15], strides = [1, 1]} : vector<1x16xf32> to vector<1x15xf32>
    %673 = tpu.concatenate %3, %672 in 1 : vector<1x1xf32>, vector<1x15xf32> -> vector<1x16xf32>
    %c11_466 = arith.constant 11 : index
    %c0_467 = arith.constant 0 : index
    %674 = vector.load %arg12[%c11_466, %c0_467] : memref<27x16xf32, #tpu.memory_space<vmem>>, vector<1x16xf32>
    tpu.vector_store %arg12[%c11_466, %c0_467], %673 {strides = array<i32>} : memref<27x16xf32, #tpu.memory_space<vmem>>, vector<1x16xf32>,
    %c14_468 = arith.constant 14 : index
    %c0_469 = arith.constant 0 : index
    %675 = vector.load %arg12[%c14_468, %c0_469] : memref<27x16xf32, #tpu.memory_space<vmem>>, vector<1x16xf32>
    tpu.vector_store %arg12[%c14_468, %c0_469], %671 {strides = array<i32>} : memref<27x16xf32, #tpu.memory_space<vmem>>, vector<1x16xf32>,
    %676 = vector.extract_strided_slice %671 {offsets = [0, 1], sizes = [1, 15], strides = [1, 1]} : vector<1x16xf32> to vector<1x15xf32>
    %677 = tpu.concatenate %676, %3 in 1 : vector<1x15xf32>, vector<1x1xf32> -> vector<1x16xf32>
    %c17_470 = arith.constant 17 : index
    %c0_471 = arith.constant 0 : index
    %678 = vector.load %arg12[%c17_470, %c0_471] : memref<27x16xf32, #tpu.memory_space<vmem>>, vector<1x16xf32>
    tpu.vector_store %arg12[%c17_470, %c0_471], %677 {strides = array<i32>} : memref<27x16xf32, #tpu.memory_space<vmem>>, vector<1x16xf32>,
    %c1_i32_472 = arith.constant 1 : i32
    %679 = arith.addi %590, %c1_i32_472 : i32
    %c0_i32_473 = arith.constant 0 : i32
    %680 = arith.cmpi sge, %679, %c0_i32_473 : i32
    %c16_i32_474 = arith.constant 16 : i32
    %681 = arith.cmpi slt, %679, %c16_i32_474 : i32
    %682 = arith.andi %680, %681 : i1
    %683 = arith.extui %682 : i1 to i32
    %684 = arith.sitofp %683 : i32 to f32
    %c0_i32_475 = arith.constant 0 : i32
    %c15_i32_476 = arith.constant 15 : i32
    %685 = arith.maxsi %c0_i32_475, %679 : i32
    %686 = arith.minsi %c15_i32_476, %685 : i32
    %c0_477 = arith.constant 0 : index
    %c0_478 = arith.constant 0 : index
    %687 = arith.index_cast %686 : i32 to index
    %c0_479 = arith.constant 0 : index
    %688 = vector.load %arg2[%c0_477, %c0_478, %687, %c0_479] : memref<1x3x16x16xf32, #tpu.memory_space<vmem>>, vector<1x1x1x16xf32>
    %689 = vector.shape_cast %688 : vector<1x1x1x16xf32> to vector<1x16xf32>
    %690 = vector.broadcast %684 : f32 to vector<1x16xf32>
    %691 = arith.mulf %689, %690 : vector<1x16xf32>
    %692 = vector.extract_strided_slice %691 {offsets = [0, 0], sizes = [1, 15], strides = [1, 1]} : vector<1x16xf32> to vector<1x15xf32>
    %693 = tpu.concatenate %3, %692 in 1 : vector<1x1xf32>, vector<1x15xf32> -> vector<1x16xf32>
    %c18_480 = arith.constant 18 : index
    %c0_481 = arith.constant 0 : index
    %694 = vector.load %arg12[%c18_480, %c0_481] : memref<27x16xf32, #tpu.memory_space<vmem>>, vector<1x16xf32>
    tpu.vector_store %arg12[%c18_480, %c0_481], %693 {strides = array<i32>} : memref<27x16xf32, #tpu.memory_space<vmem>>, vector<1x16xf32>,
    %c21_482 = arith.constant 21 : index
    %c0_483 = arith.constant 0 : index
    %695 = vector.load %arg12[%c21_482, %c0_483] : memref<27x16xf32, #tpu.memory_space<vmem>>, vector<1x16xf32>
    tpu.vector_store %arg12[%c21_482, %c0_483], %691 {strides = array<i32>} : memref<27x16xf32, #tpu.memory_space<vmem>>, vector<1x16xf32>,
    %696 = vector.extract_strided_slice %691 {offsets = [0, 1], sizes = [1, 15], strides = [1, 1]} : vector<1x16xf32> to vector<1x15xf32>
    %697 = tpu.concatenate %696, %3 in 1 : vector<1x15xf32>, vector<1x1xf32> -> vector<1x16xf32>
    %c24_484 = arith.constant 24 : index
    %c0_485 = arith.constant 0 : index
    %698 = vector.load %arg12[%c24_484, %c0_485] : memref<27x16xf32, #tpu.memory_space<vmem>>, vector<1x16xf32>
    tpu.vector_store %arg12[%c24_484, %c0_485], %697 {strides = array<i32>} : memref<27x16xf32, #tpu.memory_space<vmem>>, vector<1x16xf32>,
    %c0_486 = arith.constant 0 : index
    %c1_487 = arith.constant 1 : index
    %699 = arith.index_cast %686 : i32 to index
    %c0_488 = arith.constant 0 : index
    %700 = vector.load %arg2[%c0_486, %c1_487, %699, %c0_488] : memref<1x3x16x16xf32, #tpu.memory_space<vmem>>, vector<1x1x1x16xf32>
    %701 = vector.shape_cast %700 : vector<1x1x1x16xf32> to vector<1x16xf32>
    %702 = vector.broadcast %684 : f32 to vector<1x16xf32>
    %703 = arith.mulf %701, %702 : vector<1x16xf32>
    %704 = vector.extract_strided_slice %703 {offsets = [0, 0], sizes = [1, 15], strides = [1, 1]} : vector<1x16xf32> to vector<1x15xf32>
    %705 = tpu.concatenate %3, %704 in 1 : vector<1x1xf32>, vector<1x15xf32> -> vector<1x16xf32>
    %c19_489 = arith.constant 19 : index
    %c0_490 = arith.constant 0 : index
    %706 = vector.load %arg12[%c19_489, %c0_490] : memref<27x16xf32, #tpu.memory_space<vmem>>, vector<1x16xf32>
    tpu.vector_store %arg12[%c19_489, %c0_490], %705 {strides = array<i32>} : memref<27x16xf32, #tpu.memory_space<vmem>>, vector<1x16xf32>,
    %c22_491 = arith.constant 22 : index
    %c0_492 = arith.constant 0 : index
    %707 = vector.load %arg12[%c22_491, %c0_492] : memref<27x16xf32, #tpu.memory_space<vmem>>, vector<1x16xf32>
    tpu.vector_store %arg12[%c22_491, %c0_492], %703 {strides = array<i32>} : memref<27x16xf32, #tpu.memory_space<vmem>>, vector<1x16xf32>,
    %708 = vector.extract_strided_slice %703 {offsets = [0, 1], sizes = [1, 15], strides = [1, 1]} : vector<1x16xf32> to vector<1x15xf32>
    %709 = tpu.concatenate %708, %3 in 1 : vector<1x15xf32>, vector<1x1xf32> -> vector<1x16xf32>
    %c25_493 = arith.constant 25 : index
    %c0_494 = arith.constant 0 : index
    %710 = vector.load %arg12[%c25_493, %c0_494] : memref<27x16xf32, #tpu.memory_space<vmem>>, vector<1x16xf32>
    tpu.vector_store %arg12[%c25_493, %c0_494], %709 {strides = array<i32>} : memref<27x16xf32, #tpu.memory_space<vmem>>, vector<1x16xf32>,
    %c0_495 = arith.constant 0 : index
    %c2_496 = arith.constant 2 : index
    %711 = arith.index_cast %686 : i32 to index
    %c0_497 = arith.constant 0 : index
    %712 = vector.load %arg2[%c0_495, %c2_496, %711, %c0_497] : memref<1x3x16x16xf32, #tpu.memory_space<vmem>>, vector<1x1x1x16xf32>
    %713 = vector.shape_cast %712 : vector<1x1x1x16xf32> to vector<1x16xf32>
    %714 = vector.broadcast %684 : f32 to vector<1x16xf32>
    %715 = arith.mulf %713, %714 : vector<1x16xf32>
    %716 = vector.extract_strided_slice %715 {offsets = [0, 0], sizes = [1, 15], strides = [1, 1]} : vector<1x16xf32> to vector<1x15xf32>
    %717 = tpu.concatenate %3, %716 in 1 : vector<1x1xf32>, vector<1x15xf32> -> vector<1x16xf32>
    %c20_498 = arith.constant 20 : index
    %c0_499 = arith.constant 0 : index
    %718 = vector.load %arg12[%c20_498, %c0_499] : memref<27x16xf32, #tpu.memory_space<vmem>>, vector<1x16xf32>
    tpu.vector_store %arg12[%c20_498, %c0_499], %717 {strides = array<i32>} : memref<27x16xf32, #tpu.memory_space<vmem>>, vector<1x16xf32>,
    %c23_500 = arith.constant 23 : index
    %c0_501 = arith.constant 0 : index
    %719 = vector.load %arg12[%c23_500, %c0_501] : memref<27x16xf32, #tpu.memory_space<vmem>>, vector<1x16xf32>
    tpu.vector_store %arg12[%c23_500, %c0_501], %715 {strides = array<i32>} : memref<27x16xf32, #tpu.memory_space<vmem>>, vector<1x16xf32>,
    %720 = vector.extract_strided_slice %715 {offsets = [0, 1], sizes = [1, 15], strides = [1, 1]} : vector<1x16xf32> to vector<1x15xf32>
    %721 = tpu.concatenate %720, %3 in 1 : vector<1x15xf32>, vector<1x1xf32> -> vector<1x16xf32>
    %c26_502 = arith.constant 26 : index
    %c0_503 = arith.constant 0 : index
    %722 = vector.load %arg12[%c26_502, %c0_503] : memref<27x16xf32, #tpu.memory_space<vmem>>, vector<1x16xf32>
    tpu.vector_store %arg12[%c26_502, %c0_503], %721 {strides = array<i32>} : memref<27x16xf32, #tpu.memory_space<vmem>>, vector<1x16xf32>,
    %c0_504 = arith.constant 0 : index
    %c0_505 = arith.constant 0 : index
    %723 = vector.load %arg3[%c0_504, %c0_505] : memref<32x27xf32, #tpu.memory_space<vmem>>, vector<32x27xf32>
    %c0_506 = arith.constant 0 : index
    %c0_507 = arith.constant 0 : index
    %724 = vector.load %arg12[%c0_506, %c0_507] : memref<27x16xf32, #tpu.memory_space<vmem>>, vector<27x16xf32>
    %cst_508 = arith.constant dense<0.000000e+00> : vector<32x16xf32>
    %725 = tpu.matmul %723, %724, %cst_508 {dimension_numbers = #tpu.dot_dimension_numbers<[1], [0], [0], [1], [0, 0, 1, 1], [], []>} : vector<32x27xf32>, vector<27x16xf32>, vector<32x16xf32> -> vector<32x16xf32>
    %c0_509 = arith.constant 0 : index
    %c0_510 = arith.constant 0 : index
    %726 = vector.load %arg4[%c0_509, %c0_510] : memref<32x1xf32, #tpu.memory_space<vmem>>, vector<32x1xf32>
    %727 = vector.broadcast %726 : vector<32x1xf32> to vector<32x16xf32>
    %728 = arith.addf %725, %727 : vector<32x16xf32>
    %cst_511 = arith.constant 0.000000e+00 : f32
    %729 = vector.broadcast %cst_511 : f32 to vector<32x16xf32>
    %730 = arith.maximumf %728, %729 : vector<32x16xf32>
    %c0_512 = arith.constant 0 : index
    %c0_513 = arith.constant 0 : index
    %731 = vector.load %arg13[%c0_512, %c0_513] : memref<32x1xf32, #tpu.memory_space<vmem>>, vector<32x1xf32>
    %cst_514 = arith.constant dense<0.000000e+00> : vector<32xf32>
    %732 = vector.multi_reduction <add>, %730, %cst_514 [1] : vector<32x16xf32> to vector<32xf32>
    %733 = vector.shape_cast %732 : vector<32xf32> to vector<32x1xf32>
    %734 = arith.addf %731, %733 : vector<32x1xf32>
    %c0_515 = arith.constant 0 : index
    %c0_516 = arith.constant 0 : index
    %735 = vector.load %arg13[%c0_515, %c0_516] : memref<32x1xf32, #tpu.memory_space<vmem>>, vector<32x1xf32>
    tpu.vector_store %arg13[%c0_515, %c0_516], %734 {strides = array<i32>} : memref<32x1xf32, #tpu.memory_space<vmem>>, vector<32x1xf32>,
    %c5_i32 = arith.constant 5 : i32
    %736 = arith.addi %5, %c5_i32 : i32
    %c-1_i32_517 = arith.constant -1 : i32
    %737 = arith.addi %736, %c-1_i32_517 : i32
    %c0_i32_518 = arith.constant 0 : i32
    %738 = arith.cmpi sge, %737, %c0_i32_518 : i32
    %c16_i32_519 = arith.constant 16 : i32
    %739 = arith.cmpi slt, %737, %c16_i32_519 : i32
    %740 = arith.andi %738, %739 : i1
    %741 = arith.extui %740 : i1 to i32
    %742 = arith.sitofp %741 : i32 to f32
    %c0_i32_520 = arith.constant 0 : i32
    %c15_i32_521 = arith.constant 15 : i32
    %743 = arith.maxsi %c0_i32_520, %737 : i32
    %744 = arith.minsi %c15_i32_521, %743 : i32
    %c0_522 = arith.constant 0 : index
    %c0_523 = arith.constant 0 : index
    %745 = arith.index_cast %744 : i32 to index
    %c0_524 = arith.constant 0 : index
    %746 = vector.load %arg2[%c0_522, %c0_523, %745, %c0_524] : memref<1x3x16x16xf32, #tpu.memory_space<vmem>>, vector<1x1x1x16xf32>
    %747 = vector.shape_cast %746 : vector<1x1x1x16xf32> to vector<1x16xf32>
    %748 = vector.broadcast %742 : f32 to vector<1x16xf32>
    %749 = arith.mulf %747, %748 : vector<1x16xf32>
    %750 = vector.extract_strided_slice %749 {offsets = [0, 0], sizes = [1, 15], strides = [1, 1]} : vector<1x16xf32> to vector<1x15xf32>
    %751 = tpu.concatenate %3, %750 in 1 : vector<1x1xf32>, vector<1x15xf32> -> vector<1x16xf32>
    %c0_525 = arith.constant 0 : index
    %c0_526 = arith.constant 0 : index
    %752 = vector.load %arg12[%c0_525, %c0_526] : memref<27x16xf32, #tpu.memory_space<vmem>>, vector<1x16xf32>
    tpu.vector_store %arg12[%c0_525, %c0_526], %751 {strides = array<i32>} : memref<27x16xf32, #tpu.memory_space<vmem>>, vector<1x16xf32>,
    %c3_527 = arith.constant 3 : index
    %c0_528 = arith.constant 0 : index
    %753 = vector.load %arg12[%c3_527, %c0_528] : memref<27x16xf32, #tpu.memory_space<vmem>>, vector<1x16xf32>
    tpu.vector_store %arg12[%c3_527, %c0_528], %749 {strides = array<i32>} : memref<27x16xf32, #tpu.memory_space<vmem>>, vector<1x16xf32>,
    %754 = vector.extract_strided_slice %749 {offsets = [0, 1], sizes = [1, 15], strides = [1, 1]} : vector<1x16xf32> to vector<1x15xf32>
    %755 = tpu.concatenate %754, %3 in 1 : vector<1x15xf32>, vector<1x1xf32> -> vector<1x16xf32>
    %c6_529 = arith.constant 6 : index
    %c0_530 = arith.constant 0 : index
    %756 = vector.load %arg12[%c6_529, %c0_530] : memref<27x16xf32, #tpu.memory_space<vmem>>, vector<1x16xf32>
    tpu.vector_store %arg12[%c6_529, %c0_530], %755 {strides = array<i32>} : memref<27x16xf32, #tpu.memory_space<vmem>>, vector<1x16xf32>,
    %c0_531 = arith.constant 0 : index
    %c1_532 = arith.constant 1 : index
    %757 = arith.index_cast %744 : i32 to index
    %c0_533 = arith.constant 0 : index
    %758 = vector.load %arg2[%c0_531, %c1_532, %757, %c0_533] : memref<1x3x16x16xf32, #tpu.memory_space<vmem>>, vector<1x1x1x16xf32>
    %759 = vector.shape_cast %758 : vector<1x1x1x16xf32> to vector<1x16xf32>
    %760 = vector.broadcast %742 : f32 to vector<1x16xf32>
    %761 = arith.mulf %759, %760 : vector<1x16xf32>
    %762 = vector.extract_strided_slice %761 {offsets = [0, 0], sizes = [1, 15], strides = [1, 1]} : vector<1x16xf32> to vector<1x15xf32>
    %763 = tpu.concatenate %3, %762 in 1 : vector<1x1xf32>, vector<1x15xf32> -> vector<1x16xf32>
    %c1_534 = arith.constant 1 : index
    %c0_535 = arith.constant 0 : index
    %764 = vector.load %arg12[%c1_534, %c0_535] : memref<27x16xf32, #tpu.memory_space<vmem>>, vector<1x16xf32>
    tpu.vector_store %arg12[%c1_534, %c0_535], %763 {strides = array<i32>} : memref<27x16xf32, #tpu.memory_space<vmem>>, vector<1x16xf32>,
    %c4_536 = arith.constant 4 : index
    %c0_537 = arith.constant 0 : index
    %765 = vector.load %arg12[%c4_536, %c0_537] : memref<27x16xf32, #tpu.memory_space<vmem>>, vector<1x16xf32>
    tpu.vector_store %arg12[%c4_536, %c0_537], %761 {strides = array<i32>} : memref<27x16xf32, #tpu.memory_space<vmem>>, vector<1x16xf32>,
    %766 = vector.extract_strided_slice %761 {offsets = [0, 1], sizes = [1, 15], strides = [1, 1]} : vector<1x16xf32> to vector<1x15xf32>
    %767 = tpu.concatenate %766, %3 in 1 : vector<1x15xf32>, vector<1x1xf32> -> vector<1x16xf32>
    %c7_538 = arith.constant 7 : index
    %c0_539 = arith.constant 0 : index
    %768 = vector.load %arg12[%c7_538, %c0_539] : memref<27x16xf32, #tpu.memory_space<vmem>>, vector<1x16xf32>
    tpu.vector_store %arg12[%c7_538, %c0_539], %767 {strides = array<i32>} : memref<27x16xf32, #tpu.memory_space<vmem>>, vector<1x16xf32>,
    %c0_540 = arith.constant 0 : index
    %c2_541 = arith.constant 2 : index
    %769 = arith.index_cast %744 : i32 to index
    %c0_542 = arith.constant 0 : index
    %770 = vector.load %arg2[%c0_540, %c2_541, %769, %c0_542] : memref<1x3x16x16xf32, #tpu.memory_space<vmem>>, vector<1x1x1x16xf32>
    %771 = vector.shape_cast %770 : vector<1x1x1x16xf32> to vector<1x16xf32>
    %772 = vector.broadcast %742 : f32 to vector<1x16xf32>
    %773 = arith.mulf %771, %772 : vector<1x16xf32>
    %774 = vector.extract_strided_slice %773 {offsets = [0, 0], sizes = [1, 15], strides = [1, 1]} : vector<1x16xf32> to vector<1x15xf32>
    %775 = tpu.concatenate %3, %774 in 1 : vector<1x1xf32>, vector<1x15xf32> -> vector<1x16xf32>
    %c2_543 = arith.constant 2 : index
    %c0_544 = arith.constant 0 : index
    %776 = vector.load %arg12[%c2_543, %c0_544] : memref<27x16xf32, #tpu.memory_space<vmem>>, vector<1x16xf32>
    tpu.vector_store %arg12[%c2_543, %c0_544], %775 {strides = array<i32>} : memref<27x16xf32, #tpu.memory_space<vmem>>, vector<1x16xf32>,
    %c5_545 = arith.constant 5 : index
    %c0_546 = arith.constant 0 : index
    %777 = vector.load %arg12[%c5_545, %c0_546] : memref<27x16xf32, #tpu.memory_space<vmem>>, vector<1x16xf32>
    tpu.vector_store %arg12[%c5_545, %c0_546], %773 {strides = array<i32>} : memref<27x16xf32, #tpu.memory_space<vmem>>, vector<1x16xf32>,
    %778 = vector.extract_strided_slice %773 {offsets = [0, 1], sizes = [1, 15], strides = [1, 1]} : vector<1x16xf32> to vector<1x15xf32>
    %779 = tpu.concatenate %778, %3 in 1 : vector<1x15xf32>, vector<1x1xf32> -> vector<1x16xf32>
    %c8_547 = arith.constant 8 : index
    %c0_548 = arith.constant 0 : index
    %780 = vector.load %arg12[%c8_547, %c0_548] : memref<27x16xf32, #tpu.memory_space<vmem>>, vector<1x16xf32>
    tpu.vector_store %arg12[%c8_547, %c0_548], %779 {strides = array<i32>} : memref<27x16xf32, #tpu.memory_space<vmem>>, vector<1x16xf32>,
    %c0_i32_549 = arith.constant 0 : i32
    %781 = arith.addi %736, %c0_i32_549 : i32
    %c0_i32_550 = arith.constant 0 : i32
    %782 = arith.cmpi sge, %781, %c0_i32_550 : i32
    %c16_i32_551 = arith.constant 16 : i32
    %783 = arith.cmpi slt, %781, %c16_i32_551 : i32
    %784 = arith.andi %782, %783 : i1
    %785 = arith.extui %784 : i1 to i32
    %786 = arith.sitofp %785 : i32 to f32
    %c0_i32_552 = arith.constant 0 : i32
    %c15_i32_553 = arith.constant 15 : i32
    %787 = arith.maxsi %c0_i32_552, %781 : i32
    %788 = arith.minsi %c15_i32_553, %787 : i32
    %c0_554 = arith.constant 0 : index
    %c0_555 = arith.constant 0 : index
    %789 = arith.index_cast %788 : i32 to index
    %c0_556 = arith.constant 0 : index
    %790 = vector.load %arg2[%c0_554, %c0_555, %789, %c0_556] : memref<1x3x16x16xf32, #tpu.memory_space<vmem>>, vector<1x1x1x16xf32>
    %791 = vector.shape_cast %790 : vector<1x1x1x16xf32> to vector<1x16xf32>
    %792 = vector.broadcast %786 : f32 to vector<1x16xf32>
    %793 = arith.mulf %791, %792 : vector<1x16xf32>
    %794 = vector.extract_strided_slice %793 {offsets = [0, 0], sizes = [1, 15], strides = [1, 1]} : vector<1x16xf32> to vector<1x15xf32>
    %795 = tpu.concatenate %3, %794 in 1 : vector<1x1xf32>, vector<1x15xf32> -> vector<1x16xf32>
    %c9_557 = arith.constant 9 : index
    %c0_558 = arith.constant 0 : index
    %796 = vector.load %arg12[%c9_557, %c0_558] : memref<27x16xf32, #tpu.memory_space<vmem>>, vector<1x16xf32>
    tpu.vector_store %arg12[%c9_557, %c0_558], %795 {strides = array<i32>} : memref<27x16xf32, #tpu.memory_space<vmem>>, vector<1x16xf32>,
    %c12_559 = arith.constant 12 : index
    %c0_560 = arith.constant 0 : index
    %797 = vector.load %arg12[%c12_559, %c0_560] : memref<27x16xf32, #tpu.memory_space<vmem>>, vector<1x16xf32>
    tpu.vector_store %arg12[%c12_559, %c0_560], %793 {strides = array<i32>} : memref<27x16xf32, #tpu.memory_space<vmem>>, vector<1x16xf32>,
    %798 = vector.extract_strided_slice %793 {offsets = [0, 1], sizes = [1, 15], strides = [1, 1]} : vector<1x16xf32> to vector<1x15xf32>
    %799 = tpu.concatenate %798, %3 in 1 : vector<1x15xf32>, vector<1x1xf32> -> vector<1x16xf32>
    %c15_561 = arith.constant 15 : index
    %c0_562 = arith.constant 0 : index
    %800 = vector.load %arg12[%c15_561, %c0_562] : memref<27x16xf32, #tpu.memory_space<vmem>>, vector<1x16xf32>
    tpu.vector_store %arg12[%c15_561, %c0_562], %799 {strides = array<i32>} : memref<27x16xf32, #tpu.memory_space<vmem>>, vector<1x16xf32>,
    %c0_563 = arith.constant 0 : index
    %c1_564 = arith.constant 1 : index
    %801 = arith.index_cast %788 : i32 to index
    %c0_565 = arith.constant 0 : index
    %802 = vector.load %arg2[%c0_563, %c1_564, %801, %c0_565] : memref<1x3x16x16xf32, #tpu.memory_space<vmem>>, vector<1x1x1x16xf32>
    %803 = vector.shape_cast %802 : vector<1x1x1x16xf32> to vector<1x16xf32>
    %804 = vector.broadcast %786 : f32 to vector<1x16xf32>
    %805 = arith.mulf %803, %804 : vector<1x16xf32>
    %806 = vector.extract_strided_slice %805 {offsets = [0, 0], sizes = [1, 15], strides = [1, 1]} : vector<1x16xf32> to vector<1x15xf32>
    %807 = tpu.concatenate %3, %806 in 1 : vector<1x1xf32>, vector<1x15xf32> -> vector<1x16xf32>
    %c10_566 = arith.constant 10 : index
    %c0_567 = arith.constant 0 : index
    %808 = vector.load %arg12[%c10_566, %c0_567] : memref<27x16xf32, #tpu.memory_space<vmem>>, vector<1x16xf32>
    tpu.vector_store %arg12[%c10_566, %c0_567], %807 {strides = array<i32>} : memref<27x16xf32, #tpu.memory_space<vmem>>, vector<1x16xf32>,
    %c13_568 = arith.constant 13 : index
    %c0_569 = arith.constant 0 : index
    %809 = vector.load %arg12[%c13_568, %c0_569] : memref<27x16xf32, #tpu.memory_space<vmem>>, vector<1x16xf32>
    tpu.vector_store %arg12[%c13_568, %c0_569], %805 {strides = array<i32>} : memref<27x16xf32, #tpu.memory_space<vmem>>, vector<1x16xf32>,
    %810 = vector.extract_strided_slice %805 {offsets = [0, 1], sizes = [1, 15], strides = [1, 1]} : vector<1x16xf32> to vector<1x15xf32>
    %811 = tpu.concatenate %810, %3 in 1 : vector<1x15xf32>, vector<1x1xf32> -> vector<1x16xf32>
    %c16_570 = arith.constant 16 : index
    %c0_571 = arith.constant 0 : index
    %812 = vector.load %arg12[%c16_570, %c0_571] : memref<27x16xf32, #tpu.memory_space<vmem>>, vector<1x16xf32>
    tpu.vector_store %arg12[%c16_570, %c0_571], %811 {strides = array<i32>} : memref<27x16xf32, #tpu.memory_space<vmem>>, vector<1x16xf32>,
    %c0_572 = arith.constant 0 : index
    %c2_573 = arith.constant 2 : index
    %813 = arith.index_cast %788 : i32 to index
    %c0_574 = arith.constant 0 : index
    %814 = vector.load %arg2[%c0_572, %c2_573, %813, %c0_574] : memref<1x3x16x16xf32, #tpu.memory_space<vmem>>, vector<1x1x1x16xf32>
    %815 = vector.shape_cast %814 : vector<1x1x1x16xf32> to vector<1x16xf32>
    %816 = vector.broadcast %786 : f32 to vector<1x16xf32>
    %817 = arith.mulf %815, %816 : vector<1x16xf32>
    %818 = vector.extract_strided_slice %817 {offsets = [0, 0], sizes = [1, 15], strides = [1, 1]} : vector<1x16xf32> to vector<1x15xf32>
    %819 = tpu.concatenate %3, %818 in 1 : vector<1x1xf32>, vector<1x15xf32> -> vector<1x16xf32>
    %c11_575 = arith.constant 11 : index
    %c0_576 = arith.constant 0 : index
    %820 = vector.load %arg12[%c11_575, %c0_576] : memref<27x16xf32, #tpu.memory_space<vmem>>, vector<1x16xf32>
    tpu.vector_store %arg12[%c11_575, %c0_576], %819 {strides = array<i32>} : memref<27x16xf32, #tpu.memory_space<vmem>>, vector<1x16xf32>,
    %c14_577 = arith.constant 14 : index
    %c0_578 = arith.constant 0 : index
    %821 = vector.load %arg12[%c14_577, %c0_578] : memref<27x16xf32, #tpu.memory_space<vmem>>, vector<1x16xf32>
    tpu.vector_store %arg12[%c14_577, %c0_578], %817 {strides = array<i32>} : memref<27x16xf32, #tpu.memory_space<vmem>>, vector<1x16xf32>,
    %822 = vector.extract_strided_slice %817 {offsets = [0, 1], sizes = [1, 15], strides = [1, 1]} : vector<1x16xf32> to vector<1x15xf32>
    %823 = tpu.concatenate %822, %3 in 1 : vector<1x15xf32>, vector<1x1xf32> -> vector<1x16xf32>
    %c17_579 = arith.constant 17 : index
    %c0_580 = arith.constant 0 : index
    %824 = vector.load %arg12[%c17_579, %c0_580] : memref<27x16xf32, #tpu.memory_space<vmem>>, vector<1x16xf32>
    tpu.vector_store %arg12[%c17_579, %c0_580], %823 {strides = array<i32>} : memref<27x16xf32, #tpu.memory_space<vmem>>, vector<1x16xf32>,
    %c1_i32_581 = arith.constant 1 : i32
    %825 = arith.addi %736, %c1_i32_581 : i32
    %c0_i32_582 = arith.constant 0 : i32
    %826 = arith.cmpi sge, %825, %c0_i32_582 : i32
    %c16_i32_583 = arith.constant 16 : i32
    %827 = arith.cmpi slt, %825, %c16_i32_583 : i32
    %828 = arith.andi %826, %827 : i1
    %829 = arith.extui %828 : i1 to i32
    %830 = arith.sitofp %829 : i32 to f32
    %c0_i32_584 = arith.constant 0 : i32
    %c15_i32_585 = arith.constant 15 : i32
    %831 = arith.maxsi %c0_i32_584, %825 : i32
    %832 = arith.minsi %c15_i32_585, %831 : i32
    %c0_586 = arith.constant 0 : index
    %c0_587 = arith.constant 0 : index
    %833 = arith.index_cast %832 : i32 to index
    %c0_588 = arith.constant 0 : index
    %834 = vector.load %arg2[%c0_586, %c0_587, %833, %c0_588] : memref<1x3x16x16xf32, #tpu.memory_space<vmem>>, vector<1x1x1x16xf32>
    %835 = vector.shape_cast %834 : vector<1x1x1x16xf32> to vector<1x16xf32>
    %836 = vector.broadcast %830 : f32 to vector<1x16xf32>
    %837 = arith.mulf %835, %836 : vector<1x16xf32>
    %838 = vector.extract_strided_slice %837 {offsets = [0, 0], sizes = [1, 15], strides = [1, 1]} : vector<1x16xf32> to vector<1x15xf32>
    %839 = tpu.concatenate %3, %838 in 1 : vector<1x1xf32>, vector<1x15xf32> -> vector<1x16xf32>
    %c18_589 = arith.constant 18 : index
    %c0_590 = arith.constant 0 : index
    %840 = vector.load %arg12[%c18_589, %c0_590] : memref<27x16xf32, #tpu.memory_space<vmem>>, vector<1x16xf32>
    tpu.vector_store %arg12[%c18_589, %c0_590], %839 {strides = array<i32>} : memref<27x16xf32, #tpu.memory_space<vmem>>, vector<1x16xf32>,
    %c21_591 = arith.constant 21 : index
    %c0_592 = arith.constant 0 : index
    %841 = vector.load %arg12[%c21_591, %c0_592] : memref<27x16xf32, #tpu.memory_space<vmem>>, vector<1x16xf32>
    tpu.vector_store %arg12[%c21_591, %c0_592], %837 {strides = array<i32>} : memref<27x16xf32, #tpu.memory_space<vmem>>, vector<1x16xf32>,
    %842 = vector.extract_strided_slice %837 {offsets = [0, 1], sizes = [1, 15], strides = [1, 1]} : vector<1x16xf32> to vector<1x15xf32>
    %843 = tpu.concatenate %842, %3 in 1 : vector<1x15xf32>, vector<1x1xf32> -> vector<1x16xf32>
    %c24_593 = arith.constant 24 : index
    %c0_594 = arith.constant 0 : index
    %844 = vector.load %arg12[%c24_593, %c0_594] : memref<27x16xf32, #tpu.memory_space<vmem>>, vector<1x16xf32>
    tpu.vector_store %arg12[%c24_593, %c0_594], %843 {strides = array<i32>} : memref<27x16xf32, #tpu.memory_space<vmem>>, vector<1x16xf32>,
    %c0_595 = arith.constant 0 : index
    %c1_596 = arith.constant 1 : index
    %845 = arith.index_cast %832 : i32 to index
    %c0_597 = arith.constant 0 : index
    %846 = vector.load %arg2[%c0_595, %c1_596, %845, %c0_597] : memref<1x3x16x16xf32, #tpu.memory_space<vmem>>, vector<1x1x1x16xf32>
    %847 = vector.shape_cast %846 : vector<1x1x1x16xf32> to vector<1x16xf32>
    %848 = vector.broadcast %830 : f32 to vector<1x16xf32>
    %849 = arith.mulf %847, %848 : vector<1x16xf32>
    %850 = vector.extract_strided_slice %849 {offsets = [0, 0], sizes = [1, 15], strides = [1, 1]} : vector<1x16xf32> to vector<1x15xf32>
    %851 = tpu.concatenate %3, %850 in 1 : vector<1x1xf32>, vector<1x15xf32> -> vector<1x16xf32>
    %c19_598 = arith.constant 19 : index
    %c0_599 = arith.constant 0 : index
    %852 = vector.load %arg12[%c19_598, %c0_599] : memref<27x16xf32, #tpu.memory_space<vmem>>, vector<1x16xf32>
    tpu.vector_store %arg12[%c19_598, %c0_599], %851 {strides = array<i32>} : memref<27x16xf32, #tpu.memory_space<vmem>>, vector<1x16xf32>,
    %c22_600 = arith.constant 22 : index
    %c0_601 = arith.constant 0 : index
    %853 = vector.load %arg12[%c22_600, %c0_601] : memref<27x16xf32, #tpu.memory_space<vmem>>, vector<1x16xf32>
    tpu.vector_store %arg12[%c22_600, %c0_601], %849 {strides = array<i32>} : memref<27x16xf32, #tpu.memory_space<vmem>>, vector<1x16xf32>,
    %854 = vector.extract_strided_slice %849 {offsets = [0, 1], sizes = [1, 15], strides = [1, 1]} : vector<1x16xf32> to vector<1x15xf32>
    %855 = tpu.concatenate %854, %3 in 1 : vector<1x15xf32>, vector<1x1xf32> -> vector<1x16xf32>
    %c25_602 = arith.constant 25 : index
    %c0_603 = arith.constant 0 : index
    %856 = vector.load %arg12[%c25_602, %c0_603] : memref<27x16xf32, #tpu.memory_space<vmem>>, vector<1x16xf32>
    tpu.vector_store %arg12[%c25_602, %c0_603], %855 {strides = array<i32>} : memref<27x16xf32, #tpu.memory_space<vmem>>, vector<1x16xf32>,
    %c0_604 = arith.constant 0 : index
    %c2_605 = arith.constant 2 : index
    %857 = arith.index_cast %832 : i32 to index
    %c0_606 = arith.constant 0 : index
    %858 = vector.load %arg2[%c0_604, %c2_605, %857, %c0_606] : memref<1x3x16x16xf32, #tpu.memory_space<vmem>>, vector<1x1x1x16xf32>
    %859 = vector.shape_cast %858 : vector<1x1x1x16xf32> to vector<1x16xf32>
    %860 = vector.broadcast %830 : f32 to vector<1x16xf32>
    %861 = arith.mulf %859, %860 : vector<1x16xf32>
    %862 = vector.extract_strided_slice %861 {offsets = [0, 0], sizes = [1, 15], strides = [1, 1]} : vector<1x16xf32> to vector<1x15xf32>
    %863 = tpu.concatenate %3, %862 in 1 : vector<1x1xf32>, vector<1x15xf32> -> vector<1x16xf32>
    %c20_607 = arith.constant 20 : index
    %c0_608 = arith.constant 0 : index
    %864 = vector.load %arg12[%c20_607, %c0_608] : memref<27x16xf32, #tpu.memory_space<vmem>>, vector<1x16xf32>
    tpu.vector_store %arg12[%c20_607, %c0_608], %863 {strides = array<i32>} : memref<27x16xf32, #tpu.memory_space<vmem>>, vector<1x16xf32>,
    %c23_609 = arith.constant 23 : index
    %c0_610 = arith.constant 0 : index
    %865 = vector.load %arg12[%c23_609, %c0_610] : memref<27x16xf32, #tpu.memory_space<vmem>>, vector<1x16xf32>
    tpu.vector_store %arg12[%c23_609, %c0_610], %861 {strides = array<i32>} : memref<27x16xf32, #tpu.memory_space<vmem>>, vector<1x16xf32>,
    %866 = vector.extract_strided_slice %861 {offsets = [0, 1], sizes = [1, 15], strides = [1, 1]} : vector<1x16xf32> to vector<1x15xf32>
    %867 = tpu.concatenate %866, %3 in 1 : vector<1x15xf32>, vector<1x1xf32> -> vector<1x16xf32>
    %c26_611 = arith.constant 26 : index
    %c0_612 = arith.constant 0 : index
    %868 = vector.load %arg12[%c26_611, %c0_612] : memref<27x16xf32, #tpu.memory_space<vmem>>, vector<1x16xf32>
    tpu.vector_store %arg12[%c26_611, %c0_612], %867 {strides = array<i32>} : memref<27x16xf32, #tpu.memory_space<vmem>>, vector<1x16xf32>,
    %c0_613 = arith.constant 0 : index
    %c0_614 = arith.constant 0 : index
    %869 = vector.load %arg3[%c0_613, %c0_614] : memref<32x27xf32, #tpu.memory_space<vmem>>, vector<32x27xf32>
    %c0_615 = arith.constant 0 : index
    %c0_616 = arith.constant 0 : index
    %870 = vector.load %arg12[%c0_615, %c0_616] : memref<27x16xf32, #tpu.memory_space<vmem>>, vector<27x16xf32>
    %cst_617 = arith.constant dense<0.000000e+00> : vector<32x16xf32>
    %871 = tpu.matmul %869, %870, %cst_617 {dimension_numbers = #tpu.dot_dimension_numbers<[1], [0], [0], [1], [0, 0, 1, 1], [], []>} : vector<32x27xf32>, vector<27x16xf32>, vector<32x16xf32> -> vector<32x16xf32>
    %c0_618 = arith.constant 0 : index
    %c0_619 = arith.constant 0 : index
    %872 = vector.load %arg4[%c0_618, %c0_619] : memref<32x1xf32, #tpu.memory_space<vmem>>, vector<32x1xf32>
    %873 = vector.broadcast %872 : vector<32x1xf32> to vector<32x16xf32>
    %874 = arith.addf %871, %873 : vector<32x16xf32>
    %cst_620 = arith.constant 0.000000e+00 : f32
    %875 = vector.broadcast %cst_620 : f32 to vector<32x16xf32>
    %876 = arith.maximumf %874, %875 : vector<32x16xf32>
    %c0_621 = arith.constant 0 : index
    %c0_622 = arith.constant 0 : index
    %877 = vector.load %arg13[%c0_621, %c0_622] : memref<32x1xf32, #tpu.memory_space<vmem>>, vector<32x1xf32>
    %cst_623 = arith.constant dense<0.000000e+00> : vector<32xf32>
    %878 = vector.multi_reduction <add>, %876, %cst_623 [1] : vector<32x16xf32> to vector<32xf32>
    %879 = vector.shape_cast %878 : vector<32xf32> to vector<32x1xf32>
    %880 = arith.addf %877, %879 : vector<32x1xf32>
    %c0_624 = arith.constant 0 : index
    %c0_625 = arith.constant 0 : index
    %881 = vector.load %arg13[%c0_624, %c0_625] : memref<32x1xf32, #tpu.memory_space<vmem>>, vector<32x1xf32>
    tpu.vector_store %arg13[%c0_624, %c0_625], %880 {strides = array<i32>} : memref<32x1xf32, #tpu.memory_space<vmem>>, vector<32x1xf32>,
    %c6_i32 = arith.constant 6 : i32
    %882 = arith.addi %5, %c6_i32 : i32
    %c-1_i32_626 = arith.constant -1 : i32
    %883 = arith.addi %882, %c-1_i32_626 : i32
    %c0_i32_627 = arith.constant 0 : i32
    %884 = arith.cmpi sge, %883, %c0_i32_627 : i32
    %c16_i32_628 = arith.constant 16 : i32
    %885 = arith.cmpi slt, %883, %c16_i32_628 : i32
    %886 = arith.andi %884, %885 : i1
    %887 = arith.extui %886 : i1 to i32
    %888 = arith.sitofp %887 : i32 to f32
    %c0_i32_629 = arith.constant 0 : i32
    %c15_i32_630 = arith.constant 15 : i32
    %889 = arith.maxsi %c0_i32_629, %883 : i32
    %890 = arith.minsi %c15_i32_630, %889 : i32
    %c0_631 = arith.constant 0 : index
    %c0_632 = arith.constant 0 : index
    %891 = arith.index_cast %890 : i32 to index
    %c0_633 = arith.constant 0 : index
    %892 = vector.load %arg2[%c0_631, %c0_632, %891, %c0_633] : memref<1x3x16x16xf32, #tpu.memory_space<vmem>>, vector<1x1x1x16xf32>
    %893 = vector.shape_cast %892 : vector<1x1x1x16xf32> to vector<1x16xf32>
    %894 = vector.broadcast %888 : f32 to vector<1x16xf32>
    %895 = arith.mulf %893, %894 : vector<1x16xf32>
    %896 = vector.extract_strided_slice %895 {offsets = [0, 0], sizes = [1, 15], strides = [1, 1]} : vector<1x16xf32> to vector<1x15xf32>
    %897 = tpu.concatenate %3, %896 in 1 : vector<1x1xf32>, vector<1x15xf32> -> vector<1x16xf32>
    %c0_634 = arith.constant 0 : index
    %c0_635 = arith.constant 0 : index
    %898 = vector.load %arg12[%c0_634, %c0_635] : memref<27x16xf32, #tpu.memory_space<vmem>>, vector<1x16xf32>
    tpu.vector_store %arg12[%c0_634, %c0_635], %897 {strides = array<i32>} : memref<27x16xf32, #tpu.memory_space<vmem>>, vector<1x16xf32>,
    %c3_636 = arith.constant 3 : index
    %c0_637 = arith.constant 0 : index
    %899 = vector.load %arg12[%c3_636, %c0_637] : memref<27x16xf32, #tpu.memory_space<vmem>>, vector<1x16xf32>
    tpu.vector_store %arg12[%c3_636, %c0_637], %895 {strides = array<i32>} : memref<27x16xf32, #tpu.memory_space<vmem>>, vector<1x16xf32>,
    %900 = vector.extract_strided_slice %895 {offsets = [0, 1], sizes = [1, 15], strides = [1, 1]} : vector<1x16xf32> to vector<1x15xf32>
    %901 = tpu.concatenate %900, %3 in 1 : vector<1x15xf32>, vector<1x1xf32> -> vector<1x16xf32>
    %c6_638 = arith.constant 6 : index
    %c0_639 = arith.constant 0 : index
    %902 = vector.load %arg12[%c6_638, %c0_639] : memref<27x16xf32, #tpu.memory_space<vmem>>, vector<1x16xf32>
    tpu.vector_store %arg12[%c6_638, %c0_639], %901 {strides = array<i32>} : memref<27x16xf32, #tpu.memory_space<vmem>>, vector<1x16xf32>,
    %c0_640 = arith.constant 0 : index
    %c1_641 = arith.constant 1 : index
    %903 = arith.index_cast %890 : i32 to index
    %c0_642 = arith.constant 0 : index
    %904 = vector.load %arg2[%c0_640, %c1_641, %903, %c0_642] : memref<1x3x16x16xf32, #tpu.memory_space<vmem>>, vector<1x1x1x16xf32>
    %905 = vector.shape_cast %904 : vector<1x1x1x16xf32> to vector<1x16xf32>
    %906 = vector.broadcast %888 : f32 to vector<1x16xf32>
    %907 = arith.mulf %905, %906 : vector<1x16xf32>
    %908 = vector.extract_strided_slice %907 {offsets = [0, 0], sizes = [1, 15], strides = [1, 1]} : vector<1x16xf32> to vector<1x15xf32>
    %909 = tpu.concatenate %3, %908 in 1 : vector<1x1xf32>, vector<1x15xf32> -> vector<1x16xf32>
    %c1_643 = arith.constant 1 : index
    %c0_644 = arith.constant 0 : index
    %910 = vector.load %arg12[%c1_643, %c0_644] : memref<27x16xf32, #tpu.memory_space<vmem>>, vector<1x16xf32>
    tpu.vector_store %arg12[%c1_643, %c0_644], %909 {strides = array<i32>} : memref<27x16xf32, #tpu.memory_space<vmem>>, vector<1x16xf32>,
    %c4_645 = arith.constant 4 : index
    %c0_646 = arith.constant 0 : index
    %911 = vector.load %arg12[%c4_645, %c0_646] : memref<27x16xf32, #tpu.memory_space<vmem>>, vector<1x16xf32>
    tpu.vector_store %arg12[%c4_645, %c0_646], %907 {strides = array<i32>} : memref<27x16xf32, #tpu.memory_space<vmem>>, vector<1x16xf32>,
    %912 = vector.extract_strided_slice %907 {offsets = [0, 1], sizes = [1, 15], strides = [1, 1]} : vector<1x16xf32> to vector<1x15xf32>
    %913 = tpu.concatenate %912, %3 in 1 : vector<1x15xf32>, vector<1x1xf32> -> vector<1x16xf32>
    %c7_647 = arith.constant 7 : index
    %c0_648 = arith.constant 0 : index
    %914 = vector.load %arg12[%c7_647, %c0_648] : memref<27x16xf32, #tpu.memory_space<vmem>>, vector<1x16xf32>
    tpu.vector_store %arg12[%c7_647, %c0_648], %913 {strides = array<i32>} : memref<27x16xf32, #tpu.memory_space<vmem>>, vector<1x16xf32>,
    %c0_649 = arith.constant 0 : index
    %c2_650 = arith.constant 2 : index
    %915 = arith.index_cast %890 : i32 to index
    %c0_651 = arith.constant 0 : index
    %916 = vector.load %arg2[%c0_649, %c2_650, %915, %c0_651] : memref<1x3x16x16xf32, #tpu.memory_space<vmem>>, vector<1x1x1x16xf32>
    %917 = vector.shape_cast %916 : vector<1x1x1x16xf32> to vector<1x16xf32>
    %918 = vector.broadcast %888 : f32 to vector<1x16xf32>
    %919 = arith.mulf %917, %918 : vector<1x16xf32>
    %920 = vector.extract_strided_slice %919 {offsets = [0, 0], sizes = [1, 15], strides = [1, 1]} : vector<1x16xf32> to vector<1x15xf32>
    %921 = tpu.concatenate %3, %920 in 1 : vector<1x1xf32>, vector<1x15xf32> -> vector<1x16xf32>
    %c2_652 = arith.constant 2 : index
    %c0_653 = arith.constant 0 : index
    %922 = vector.load %arg12[%c2_652, %c0_653] : memref<27x16xf32, #tpu.memory_space<vmem>>, vector<1x16xf32>
    tpu.vector_store %arg12[%c2_652, %c0_653], %921 {strides = array<i32>} : memref<27x16xf32, #tpu.memory_space<vmem>>, vector<1x16xf32>,
    %c5_654 = arith.constant 5 : index
    %c0_655 = arith.constant 0 : index
    %923 = vector.load %arg12[%c5_654, %c0_655] : memref<27x16xf32, #tpu.memory_space<vmem>>, vector<1x16xf32>
    tpu.vector_store %arg12[%c5_654, %c0_655], %919 {strides = array<i32>} : memref<27x16xf32, #tpu.memory_space<vmem>>, vector<1x16xf32>,
    %924 = vector.extract_strided_slice %919 {offsets = [0, 1], sizes = [1, 15], strides = [1, 1]} : vector<1x16xf32> to vector<1x15xf32>
    %925 = tpu.concatenate %924, %3 in 1 : vector<1x15xf32>, vector<1x1xf32> -> vector<1x16xf32>
    %c8_656 = arith.constant 8 : index
    %c0_657 = arith.constant 0 : index
    %926 = vector.load %arg12[%c8_656, %c0_657] : memref<27x16xf32, #tpu.memory_space<vmem>>, vector<1x16xf32>
    tpu.vector_store %arg12[%c8_656, %c0_657], %925 {strides = array<i32>} : memref<27x16xf32, #tpu.memory_space<vmem>>, vector<1x16xf32>,
    %c0_i32_658 = arith.constant 0 : i32
    %927 = arith.addi %882, %c0_i32_658 : i32
    %c0_i32_659 = arith.constant 0 : i32
    %928 = arith.cmpi sge, %927, %c0_i32_659 : i32
    %c16_i32_660 = arith.constant 16 : i32
    %929 = arith.cmpi slt, %927, %c16_i32_660 : i32
    %930 = arith.andi %928, %929 : i1
    %931 = arith.extui %930 : i1 to i32
    %932 = arith.sitofp %931 : i32 to f32
    %c0_i32_661 = arith.constant 0 : i32
    %c15_i32_662 = arith.constant 15 : i32
    %933 = arith.maxsi %c0_i32_661, %927 : i32
    %934 = arith.minsi %c15_i32_662, %933 : i32
    %c0_663 = arith.constant 0 : index
    %c0_664 = arith.constant 0 : index
    %935 = arith.index_cast %934 : i32 to index
    %c0_665 = arith.constant 0 : index
    %936 = vector.load %arg2[%c0_663, %c0_664, %935, %c0_665] : memref<1x3x16x16xf32, #tpu.memory_space<vmem>>, vector<1x1x1x16xf32>
    %937 = vector.shape_cast %936 : vector<1x1x1x16xf32> to vector<1x16xf32>
    %938 = vector.broadcast %932 : f32 to vector<1x16xf32>
    %939 = arith.mulf %937, %938 : vector<1x16xf32>
    %940 = vector.extract_strided_slice %939 {offsets = [0, 0], sizes = [1, 15], strides = [1, 1]} : vector<1x16xf32> to vector<1x15xf32>
    %941 = tpu.concatenate %3, %940 in 1 : vector<1x1xf32>, vector<1x15xf32> -> vector<1x16xf32>
    %c9_666 = arith.constant 9 : index
    %c0_667 = arith.constant 0 : index
    %942 = vector.load %arg12[%c9_666, %c0_667] : memref<27x16xf32, #tpu.memory_space<vmem>>, vector<1x16xf32>
    tpu.vector_store %arg12[%c9_666, %c0_667], %941 {strides = array<i32>} : memref<27x16xf32, #tpu.memory_space<vmem>>, vector<1x16xf32>,
    %c12_668 = arith.constant 12 : index
    %c0_669 = arith.constant 0 : index
    %943 = vector.load %arg12[%c12_668, %c0_669] : memref<27x16xf32, #tpu.memory_space<vmem>>, vector<1x16xf32>
    tpu.vector_store %arg12[%c12_668, %c0_669], %939 {strides = array<i32>} : memref<27x16xf32, #tpu.memory_space<vmem>>, vector<1x16xf32>,
    %944 = vector.extract_strided_slice %939 {offsets = [0, 1], sizes = [1, 15], strides = [1, 1]} : vector<1x16xf32> to vector<1x15xf32>
    %945 = tpu.concatenate %944, %3 in 1 : vector<1x15xf32>, vector<1x1xf32> -> vector<1x16xf32>
    %c15_670 = arith.constant 15 : index
    %c0_671 = arith.constant 0 : index
    %946 = vector.load %arg12[%c15_670, %c0_671] : memref<27x16xf32, #tpu.memory_space<vmem>>, vector<1x16xf32>
    tpu.vector_store %arg12[%c15_670, %c0_671], %945 {strides = array<i32>} : memref<27x16xf32, #tpu.memory_space<vmem>>, vector<1x16xf32>,
    %c0_672 = arith.constant 0 : index
    %c1_673 = arith.constant 1 : index
    %947 = arith.index_cast %934 : i32 to index
    %c0_674 = arith.constant 0 : index
    %948 = vector.load %arg2[%c0_672, %c1_673, %947, %c0_674] : memref<1x3x16x16xf32, #tpu.memory_space<vmem>>, vector<1x1x1x16xf32>
    %949 = vector.shape_cast %948 : vector<1x1x1x16xf32> to vector<1x16xf32>
    %950 = vector.broadcast %932 : f32 to vector<1x16xf32>
    %951 = arith.mulf %949, %950 : vector<1x16xf32>
    %952 = vector.extract_strided_slice %951 {offsets = [0, 0], sizes = [1, 15], strides = [1, 1]} : vector<1x16xf32> to vector<1x15xf32>
    %953 = tpu.concatenate %3, %952 in 1 : vector<1x1xf32>, vector<1x15xf32> -> vector<1x16xf32>
    %c10_675 = arith.constant 10 : index
    %c0_676 = arith.constant 0 : index
    %954 = vector.load %arg12[%c10_675, %c0_676] : memref<27x16xf32, #tpu.memory_space<vmem>>, vector<1x16xf32>
    tpu.vector_store %arg12[%c10_675, %c0_676], %953 {strides = array<i32>} : memref<27x16xf32, #tpu.memory_space<vmem>>, vector<1x16xf32>,
    %c13_677 = arith.constant 13 : index
    %c0_678 = arith.constant 0 : index
    %955 = vector.load %arg12[%c13_677, %c0_678] : memref<27x16xf32, #tpu.memory_space<vmem>>, vector<1x16xf32>
    tpu.vector_store %arg12[%c13_677, %c0_678], %951 {strides = array<i32>} : memref<27x16xf32, #tpu.memory_space<vmem>>, vector<1x16xf32>,
    %956 = vector.extract_strided_slice %951 {offsets = [0, 1], sizes = [1, 15], strides = [1, 1]} : vector<1x16xf32> to vector<1x15xf32>
    %957 = tpu.concatenate %956, %3 in 1 : vector<1x15xf32>, vector<1x1xf32> -> vector<1x16xf32>
    %c16_679 = arith.constant 16 : index
    %c0_680 = arith.constant 0 : index
    %958 = vector.load %arg12[%c16_679, %c0_680] : memref<27x16xf32, #tpu.memory_space<vmem>>, vector<1x16xf32>
    tpu.vector_store %arg12[%c16_679, %c0_680], %957 {strides = array<i32>} : memref<27x16xf32, #tpu.memory_space<vmem>>, vector<1x16xf32>,
    %c0_681 = arith.constant 0 : index
    %c2_682 = arith.constant 2 : index
    %959 = arith.index_cast %934 : i32 to index
    %c0_683 = arith.constant 0 : index
    %960 = vector.load %arg2[%c0_681, %c2_682, %959, %c0_683] : memref<1x3x16x16xf32, #tpu.memory_space<vmem>>, vector<1x1x1x16xf32>
    %961 = vector.shape_cast %960 : vector<1x1x1x16xf32> to vector<1x16xf32>
    %962 = vector.broadcast %932 : f32 to vector<1x16xf32>
    %963 = arith.mulf %961, %962 : vector<1x16xf32>
    %964 = vector.extract_strided_slice %963 {offsets = [0, 0], sizes = [1, 15], strides = [1, 1]} : vector<1x16xf32> to vector<1x15xf32>
    %965 = tpu.concatenate %3, %964 in 1 : vector<1x1xf32>, vector<1x15xf32> -> vector<1x16xf32>
    %c11_684 = arith.constant 11 : index
    %c0_685 = arith.constant 0 : index
    %966 = vector.load %arg12[%c11_684, %c0_685] : memref<27x16xf32, #tpu.memory_space<vmem>>, vector<1x16xf32>
    tpu.vector_store %arg12[%c11_684, %c0_685], %965 {strides = array<i32>} : memref<27x16xf32, #tpu.memory_space<vmem>>, vector<1x16xf32>,
    %c14_686 = arith.constant 14 : index
    %c0_687 = arith.constant 0 : index
    %967 = vector.load %arg12[%c14_686, %c0_687] : memref<27x16xf32, #tpu.memory_space<vmem>>, vector<1x16xf32>
    tpu.vector_store %arg12[%c14_686, %c0_687], %963 {strides = array<i32>} : memref<27x16xf32, #tpu.memory_space<vmem>>, vector<1x16xf32>,
    %968 = vector.extract_strided_slice %963 {offsets = [0, 1], sizes = [1, 15], strides = [1, 1]} : vector<1x16xf32> to vector<1x15xf32>
    %969 = tpu.concatenate %968, %3 in 1 : vector<1x15xf32>, vector<1x1xf32> -> vector<1x16xf32>
    %c17_688 = arith.constant 17 : index
    %c0_689 = arith.constant 0 : index
    %970 = vector.load %arg12[%c17_688, %c0_689] : memref<27x16xf32, #tpu.memory_space<vmem>>, vector<1x16xf32>
    tpu.vector_store %arg12[%c17_688, %c0_689], %969 {strides = array<i32>} : memref<27x16xf32, #tpu.memory_space<vmem>>, vector<1x16xf32>,
    %c1_i32_690 = arith.constant 1 : i32
    %971 = arith.addi %882, %c1_i32_690 : i32
    %c0_i32_691 = arith.constant 0 : i32
    %972 = arith.cmpi sge, %971, %c0_i32_691 : i32
    %c16_i32_692 = arith.constant 16 : i32
    %973 = arith.cmpi slt, %971, %c16_i32_692 : i32
    %974 = arith.andi %972, %973 : i1
    %975 = arith.extui %974 : i1 to i32
    %976 = arith.sitofp %975 : i32 to f32
    %c0_i32_693 = arith.constant 0 : i32
    %c15_i32_694 = arith.constant 15 : i32
    %977 = arith.maxsi %c0_i32_693, %971 : i32
    %978 = arith.minsi %c15_i32_694, %977 : i32
    %c0_695 = arith.constant 0 : index
    %c0_696 = arith.constant 0 : index
    %979 = arith.index_cast %978 : i32 to index
    %c0_697 = arith.constant 0 : index
    %980 = vector.load %arg2[%c0_695, %c0_696, %979, %c0_697] : memref<1x3x16x16xf32, #tpu.memory_space<vmem>>, vector<1x1x1x16xf32>
    %981 = vector.shape_cast %980 : vector<1x1x1x16xf32> to vector<1x16xf32>
    %982 = vector.broadcast %976 : f32 to vector<1x16xf32>
    %983 = arith.mulf %981, %982 : vector<1x16xf32>
    %984 = vector.extract_strided_slice %983 {offsets = [0, 0], sizes = [1, 15], strides = [1, 1]} : vector<1x16xf32> to vector<1x15xf32>
    %985 = tpu.concatenate %3, %984 in 1 : vector<1x1xf32>, vector<1x15xf32> -> vector<1x16xf32>
    %c18_698 = arith.constant 18 : index
    %c0_699 = arith.constant 0 : index
    %986 = vector.load %arg12[%c18_698, %c0_699] : memref<27x16xf32, #tpu.memory_space<vmem>>, vector<1x16xf32>
    tpu.vector_store %arg12[%c18_698, %c0_699], %985 {strides = array<i32>} : memref<27x16xf32, #tpu.memory_space<vmem>>, vector<1x16xf32>,
    %c21_700 = arith.constant 21 : index
    %c0_701 = arith.constant 0 : index
    %987 = vector.load %arg12[%c21_700, %c0_701] : memref<27x16xf32, #tpu.memory_space<vmem>>, vector<1x16xf32>
    tpu.vector_store %arg12[%c21_700, %c0_701], %983 {strides = array<i32>} : memref<27x16xf32, #tpu.memory_space<vmem>>, vector<1x16xf32>,
    %988 = vector.extract_strided_slice %983 {offsets = [0, 1], sizes = [1, 15], strides = [1, 1]} : vector<1x16xf32> to vector<1x15xf32>
    %989 = tpu.concatenate %988, %3 in 1 : vector<1x15xf32>, vector<1x1xf32> -> vector<1x16xf32>
    %c24_702 = arith.constant 24 : index
    %c0_703 = arith.constant 0 : index
    %990 = vector.load %arg12[%c24_702, %c0_703] : memref<27x16xf32, #tpu.memory_space<vmem>>, vector<1x16xf32>
    tpu.vector_store %arg12[%c24_702, %c0_703], %989 {strides = array<i32>} : memref<27x16xf32, #tpu.memory_space<vmem>>, vector<1x16xf32>,
    %c0_704 = arith.constant 0 : index
    %c1_705 = arith.constant 1 : index
    %991 = arith.index_cast %978 : i32 to index
    %c0_706 = arith.constant 0 : index
    %992 = vector.load %arg2[%c0_704, %c1_705, %991, %c0_706] : memref<1x3x16x16xf32, #tpu.memory_space<vmem>>, vector<1x1x1x16xf32>
    %993 = vector.shape_cast %992 : vector<1x1x1x16xf32> to vector<1x16xf32>
    %994 = vector.broadcast %976 : f32 to vector<1x16xf32>
    %995 = arith.mulf %993, %994 : vector<1x16xf32>
    %996 = vector.extract_strided_slice %995 {offsets = [0, 0], sizes = [1, 15], strides = [1, 1]} : vector<1x16xf32> to vector<1x15xf32>
    %997 = tpu.concatenate %3, %996 in 1 : vector<1x1xf32>, vector<1x15xf32> -> vector<1x16xf32>
    %c19_707 = arith.constant 19 : index
    %c0_708 = arith.constant 0 : index
    %998 = vector.load %arg12[%c19_707, %c0_708] : memref<27x16xf32, #tpu.memory_space<vmem>>, vector<1x16xf32>
    tpu.vector_store %arg12[%c19_707, %c0_708], %997 {strides = array<i32>} : memref<27x16xf32, #tpu.memory_space<vmem>>, vector<1x16xf32>,
    %c22_709 = arith.constant 22 : index
    %c0_710 = arith.constant 0 : index
    %999 = vector.load %arg12[%c22_709, %c0_710] : memref<27x16xf32, #tpu.memory_space<vmem>>, vector<1x16xf32>
    tpu.vector_store %arg12[%c22_709, %c0_710], %995 {strides = array<i32>} : memref<27x16xf32, #tpu.memory_space<vmem>>, vector<1x16xf32>,
    %1000 = vector.extract_strided_slice %995 {offsets = [0, 1], sizes = [1, 15], strides = [1, 1]} : vector<1x16xf32> to vector<1x15xf32>
    %1001 = tpu.concatenate %1000, %3 in 1 : vector<1x15xf32>, vector<1x1xf32> -> vector<1x16xf32>
    %c25_711 = arith.constant 25 : index
    %c0_712 = arith.constant 0 : index
    %1002 = vector.load %arg12[%c25_711, %c0_712] : memref<27x16xf32, #tpu.memory_space<vmem>>, vector<1x16xf32>
    tpu.vector_store %arg12[%c25_711, %c0_712], %1001 {strides = array<i32>} : memref<27x16xf32, #tpu.memory_space<vmem>>, vector<1x16xf32>,
    %c0_713 = arith.constant 0 : index
    %c2_714 = arith.constant 2 : index
    %1003 = arith.index_cast %978 : i32 to index
    %c0_715 = arith.constant 0 : index
    %1004 = vector.load %arg2[%c0_713, %c2_714, %1003, %c0_715] : memref<1x3x16x16xf32, #tpu.memory_space<vmem>>, vector<1x1x1x16xf32>
    %1005 = vector.shape_cast %1004 : vector<1x1x1x16xf32> to vector<1x16xf32>
    %1006 = vector.broadcast %976 : f32 to vector<1x16xf32>
    %1007 = arith.mulf %1005, %1006 : vector<1x16xf32>
    %1008 = vector.extract_strided_slice %1007 {offsets = [0, 0], sizes = [1, 15], strides = [1, 1]} : vector<1x16xf32> to vector<1x15xf32>
    %1009 = tpu.concatenate %3, %1008 in 1 : vector<1x1xf32>, vector<1x15xf32> -> vector<1x16xf32>
    %c20_716 = arith.constant 20 : index
    %c0_717 = arith.constant 0 : index
    %1010 = vector.load %arg12[%c20_716, %c0_717] : memref<27x16xf32, #tpu.memory_space<vmem>>, vector<1x16xf32>
    tpu.vector_store %arg12[%c20_716, %c0_717], %1009 {strides = array<i32>} : memref<27x16xf32, #tpu.memory_space<vmem>>, vector<1x16xf32>,
    %c23_718 = arith.constant 23 : index
    %c0_719 = arith.constant 0 : index
    %1011 = vector.load %arg12[%c23_718, %c0_719] : memref<27x16xf32, #tpu.memory_space<vmem>>, vector<1x16xf32>
    tpu.vector_store %arg12[%c23_718, %c0_719], %1007 {strides = array<i32>} : memref<27x16xf32, #tpu.memory_space<vmem>>, vector<1x16xf32>,
    %1012 = vector.extract_strided_slice %1007 {offsets = [0, 1], sizes = [1, 15], strides = [1, 1]} : vector<1x16xf32> to vector<1x15xf32>
    %1013 = tpu.concatenate %1012, %3 in 1 : vector<1x15xf32>, vector<1x1xf32> -> vector<1x16xf32>
    %c26_720 = arith.constant 26 : index
    %c0_721 = arith.constant 0 : index
    %1014 = vector.load %arg12[%c26_720, %c0_721] : memref<27x16xf32, #tpu.memory_space<vmem>>, vector<1x16xf32>
    tpu.vector_store %arg12[%c26_720, %c0_721], %1013 {strides = array<i32>} : memref<27x16xf32, #tpu.memory_space<vmem>>, vector<1x16xf32>,
    %c0_722 = arith.constant 0 : index
    %c0_723 = arith.constant 0 : index
    %1015 = vector.load %arg3[%c0_722, %c0_723] : memref<32x27xf32, #tpu.memory_space<vmem>>, vector<32x27xf32>
    %c0_724 = arith.constant 0 : index
    %c0_725 = arith.constant 0 : index
    %1016 = vector.load %arg12[%c0_724, %c0_725] : memref<27x16xf32, #tpu.memory_space<vmem>>, vector<27x16xf32>
    %cst_726 = arith.constant dense<0.000000e+00> : vector<32x16xf32>
    %1017 = tpu.matmul %1015, %1016, %cst_726 {dimension_numbers = #tpu.dot_dimension_numbers<[1], [0], [0], [1], [0, 0, 1, 1], [], []>} : vector<32x27xf32>, vector<27x16xf32>, vector<32x16xf32> -> vector<32x16xf32>
    %c0_727 = arith.constant 0 : index
    %c0_728 = arith.constant 0 : index
    %1018 = vector.load %arg4[%c0_727, %c0_728] : memref<32x1xf32, #tpu.memory_space<vmem>>, vector<32x1xf32>
    %1019 = vector.broadcast %1018 : vector<32x1xf32> to vector<32x16xf32>
    %1020 = arith.addf %1017, %1019 : vector<32x16xf32>
    %cst_729 = arith.constant 0.000000e+00 : f32
    %1021 = vector.broadcast %cst_729 : f32 to vector<32x16xf32>
    %1022 = arith.maximumf %1020, %1021 : vector<32x16xf32>
    %c0_730 = arith.constant 0 : index
    %c0_731 = arith.constant 0 : index
    %1023 = vector.load %arg13[%c0_730, %c0_731] : memref<32x1xf32, #tpu.memory_space<vmem>>, vector<32x1xf32>
    %cst_732 = arith.constant dense<0.000000e+00> : vector<32xf32>
    %1024 = vector.multi_reduction <add>, %1022, %cst_732 [1] : vector<32x16xf32> to vector<32xf32>
    %1025 = vector.shape_cast %1024 : vector<32xf32> to vector<32x1xf32>
    %1026 = arith.addf %1023, %1025 : vector<32x1xf32>
    %c0_733 = arith.constant 0 : index
    %c0_734 = arith.constant 0 : index
    %1027 = vector.load %arg13[%c0_733, %c0_734] : memref<32x1xf32, #tpu.memory_space<vmem>>, vector<32x1xf32>
    tpu.vector_store %arg13[%c0_733, %c0_734], %1026 {strides = array<i32>} : memref<32x1xf32, #tpu.memory_space<vmem>>, vector<32x1xf32>,
    %c7_i32 = arith.constant 7 : i32
    %1028 = arith.addi %5, %c7_i32 : i32
    %c-1_i32_735 = arith.constant -1 : i32
    %1029 = arith.addi %1028, %c-1_i32_735 : i32
    %c0_i32_736 = arith.constant 0 : i32
    %1030 = arith.cmpi sge, %1029, %c0_i32_736 : i32
    %c16_i32_737 = arith.constant 16 : i32
    %1031 = arith.cmpi slt, %1029, %c16_i32_737 : i32
    %1032 = arith.andi %1030, %1031 : i1
    %1033 = arith.extui %1032 : i1 to i32
    %1034 = arith.sitofp %1033 : i32 to f32
    %c0_i32_738 = arith.constant 0 : i32
    %c15_i32_739 = arith.constant 15 : i32
    %1035 = arith.maxsi %c0_i32_738, %1029 : i32
    %1036 = arith.minsi %c15_i32_739, %1035 : i32
    %c0_740 = arith.constant 0 : index
    %c0_741 = arith.constant 0 : index
    %1037 = arith.index_cast %1036 : i32 to index
    %c0_742 = arith.constant 0 : index
    %1038 = vector.load %arg2[%c0_740, %c0_741, %1037, %c0_742] : memref<1x3x16x16xf32, #tpu.memory_space<vmem>>, vector<1x1x1x16xf32>
    %1039 = vector.shape_cast %1038 : vector<1x1x1x16xf32> to vector<1x16xf32>
    %1040 = vector.broadcast %1034 : f32 to vector<1x16xf32>
    %1041 = arith.mulf %1039, %1040 : vector<1x16xf32>
    %1042 = vector.extract_strided_slice %1041 {offsets = [0, 0], sizes = [1, 15], strides = [1, 1]} : vector<1x16xf32> to vector<1x15xf32>
    %1043 = tpu.concatenate %3, %1042 in 1 : vector<1x1xf32>, vector<1x15xf32> -> vector<1x16xf32>
    %c0_743 = arith.constant 0 : index
    %c0_744 = arith.constant 0 : index
    %1044 = vector.load %arg12[%c0_743, %c0_744] : memref<27x16xf32, #tpu.memory_space<vmem>>, vector<1x16xf32>
    tpu.vector_store %arg12[%c0_743, %c0_744], %1043 {strides = array<i32>} : memref<27x16xf32, #tpu.memory_space<vmem>>, vector<1x16xf32>,
    %c3_745 = arith.constant 3 : index
    %c0_746 = arith.constant 0 : index
    %1045 = vector.load %arg12[%c3_745, %c0_746] : memref<27x16xf32, #tpu.memory_space<vmem>>, vector<1x16xf32>
    tpu.vector_store %arg12[%c3_745, %c0_746], %1041 {strides = array<i32>} : memref<27x16xf32, #tpu.memory_space<vmem>>, vector<1x16xf32>,
    %1046 = vector.extract_strided_slice %1041 {offsets = [0, 1], sizes = [1, 15], strides = [1, 1]} : vector<1x16xf32> to vector<1x15xf32>
    %1047 = tpu.concatenate %1046, %3 in 1 : vector<1x15xf32>, vector<1x1xf32> -> vector<1x16xf32>
    %c6_747 = arith.constant 6 : index
    %c0_748 = arith.constant 0 : index
    %1048 = vector.load %arg12[%c6_747, %c0_748] : memref<27x16xf32, #tpu.memory_space<vmem>>, vector<1x16xf32>
    tpu.vector_store %arg12[%c6_747, %c0_748], %1047 {strides = array<i32>} : memref<27x16xf32, #tpu.memory_space<vmem>>, vector<1x16xf32>,
    %c0_749 = arith.constant 0 : index
    %c1_750 = arith.constant 1 : index
    %1049 = arith.index_cast %1036 : i32 to index
    %c0_751 = arith.constant 0 : index
    %1050 = vector.load %arg2[%c0_749, %c1_750, %1049, %c0_751] : memref<1x3x16x16xf32, #tpu.memory_space<vmem>>, vector<1x1x1x16xf32>
    %1051 = vector.shape_cast %1050 : vector<1x1x1x16xf32> to vector<1x16xf32>
    %1052 = vector.broadcast %1034 : f32 to vector<1x16xf32>
    %1053 = arith.mulf %1051, %1052 : vector<1x16xf32>
    %1054 = vector.extract_strided_slice %1053 {offsets = [0, 0], sizes = [1, 15], strides = [1, 1]} : vector<1x16xf32> to vector<1x15xf32>
    %1055 = tpu.concatenate %3, %1054 in 1 : vector<1x1xf32>, vector<1x15xf32> -> vector<1x16xf32>
    %c1_752 = arith.constant 1 : index
    %c0_753 = arith.constant 0 : index
    %1056 = vector.load %arg12[%c1_752, %c0_753] : memref<27x16xf32, #tpu.memory_space<vmem>>, vector<1x16xf32>
    tpu.vector_store %arg12[%c1_752, %c0_753], %1055 {strides = array<i32>} : memref<27x16xf32, #tpu.memory_space<vmem>>, vector<1x16xf32>,
    %c4_754 = arith.constant 4 : index
    %c0_755 = arith.constant 0 : index
    %1057 = vector.load %arg12[%c4_754, %c0_755] : memref<27x16xf32, #tpu.memory_space<vmem>>, vector<1x16xf32>
    tpu.vector_store %arg12[%c4_754, %c0_755], %1053 {strides = array<i32>} : memref<27x16xf32, #tpu.memory_space<vmem>>, vector<1x16xf32>,
    %1058 = vector.extract_strided_slice %1053 {offsets = [0, 1], sizes = [1, 15], strides = [1, 1]} : vector<1x16xf32> to vector<1x15xf32>
    %1059 = tpu.concatenate %1058, %3 in 1 : vector<1x15xf32>, vector<1x1xf32> -> vector<1x16xf32>
    %c7_756 = arith.constant 7 : index
    %c0_757 = arith.constant 0 : index
    %1060 = vector.load %arg12[%c7_756, %c0_757] : memref<27x16xf32, #tpu.memory_space<vmem>>, vector<1x16xf32>
    tpu.vector_store %arg12[%c7_756, %c0_757], %1059 {strides = array<i32>} : memref<27x16xf32, #tpu.memory_space<vmem>>, vector<1x16xf32>,
    %c0_758 = arith.constant 0 : index
    %c2_759 = arith.constant 2 : index
    %1061 = arith.index_cast %1036 : i32 to index
    %c0_760 = arith.constant 0 : index
    %1062 = vector.load %arg2[%c0_758, %c2_759, %1061, %c0_760] : memref<1x3x16x16xf32, #tpu.memory_space<vmem>>, vector<1x1x1x16xf32>
    %1063 = vector.shape_cast %1062 : vector<1x1x1x16xf32> to vector<1x16xf32>
    %1064 = vector.broadcast %1034 : f32 to vector<1x16xf32>
    %1065 = arith.mulf %1063, %1064 : vector<1x16xf32>
    %1066 = vector.extract_strided_slice %1065 {offsets = [0, 0], sizes = [1, 15], strides = [1, 1]} : vector<1x16xf32> to vector<1x15xf32>
    %1067 = tpu.concatenate %3, %1066 in 1 : vector<1x1xf32>, vector<1x15xf32> -> vector<1x16xf32>
    %c2_761 = arith.constant 2 : index
    %c0_762 = arith.constant 0 : index
    %1068 = vector.load %arg12[%c2_761, %c0_762] : memref<27x16xf32, #tpu.memory_space<vmem>>, vector<1x16xf32>
    tpu.vector_store %arg12[%c2_761, %c0_762], %1067 {strides = array<i32>} : memref<27x16xf32, #tpu.memory_space<vmem>>, vector<1x16xf32>,
    %c5_763 = arith.constant 5 : index
    %c0_764 = arith.constant 0 : index
    %1069 = vector.load %arg12[%c5_763, %c0_764] : memref<27x16xf32, #tpu.memory_space<vmem>>, vector<1x16xf32>
    tpu.vector_store %arg12[%c5_763, %c0_764], %1065 {strides = array<i32>} : memref<27x16xf32, #tpu.memory_space<vmem>>, vector<1x16xf32>,
    %1070 = vector.extract_strided_slice %1065 {offsets = [0, 1], sizes = [1, 15], strides = [1, 1]} : vector<1x16xf32> to vector<1x15xf32>
    %1071 = tpu.concatenate %1070, %3 in 1 : vector<1x15xf32>, vector<1x1xf32> -> vector<1x16xf32>
    %c8_765 = arith.constant 8 : index
    %c0_766 = arith.constant 0 : index
    %1072 = vector.load %arg12[%c8_765, %c0_766] : memref<27x16xf32, #tpu.memory_space<vmem>>, vector<1x16xf32>
    tpu.vector_store %arg12[%c8_765, %c0_766], %1071 {strides = array<i32>} : memref<27x16xf32, #tpu.memory_space<vmem>>, vector<1x16xf32>,
    %c0_i32_767 = arith.constant 0 : i32
    %1073 = arith.addi %1028, %c0_i32_767 : i32
    %c0_i32_768 = arith.constant 0 : i32
    %1074 = arith.cmpi sge, %1073, %c0_i32_768 : i32
    %c16_i32_769 = arith.constant 16 : i32
    %1075 = arith.cmpi slt, %1073, %c16_i32_769 : i32
    %1076 = arith.andi %1074, %1075 : i1
    %1077 = arith.extui %1076 : i1 to i32
    %1078 = arith.sitofp %1077 : i32 to f32
    %c0_i32_770 = arith.constant 0 : i32
    %c15_i32_771 = arith.constant 15 : i32
    %1079 = arith.maxsi %c0_i32_770, %1073 : i32
    %1080 = arith.minsi %c15_i32_771, %1079 : i32
    %c0_772 = arith.constant 0 : index
    %c0_773 = arith.constant 0 : index
    %1081 = arith.index_cast %1080 : i32 to index
    %c0_774 = arith.constant 0 : index
    %1082 = vector.load %arg2[%c0_772, %c0_773, %1081, %c0_774] : memref<1x3x16x16xf32, #tpu.memory_space<vmem>>, vector<1x1x1x16xf32>
    %1083 = vector.shape_cast %1082 : vector<1x1x1x16xf32> to vector<1x16xf32>
    %1084 = vector.broadcast %1078 : f32 to vector<1x16xf32>
    %1085 = arith.mulf %1083, %1084 : vector<1x16xf32>
    %1086 = vector.extract_strided_slice %1085 {offsets = [0, 0], sizes = [1, 15], strides = [1, 1]} : vector<1x16xf32> to vector<1x15xf32>
    %1087 = tpu.concatenate %3, %1086 in 1 : vector<1x1xf32>, vector<1x15xf32> -> vector<1x16xf32>
    %c9_775 = arith.constant 9 : index
    %c0_776 = arith.constant 0 : index
    %1088 = vector.load %arg12[%c9_775, %c0_776] : memref<27x16xf32, #tpu.memory_space<vmem>>, vector<1x16xf32>
    tpu.vector_store %arg12[%c9_775, %c0_776], %1087 {strides = array<i32>} : memref<27x16xf32, #tpu.memory_space<vmem>>, vector<1x16xf32>,
    %c12_777 = arith.constant 12 : index
    %c0_778 = arith.constant 0 : index
    %1089 = vector.load %arg12[%c12_777, %c0_778] : memref<27x16xf32, #tpu.memory_space<vmem>>, vector<1x16xf32>
    tpu.vector_store %arg12[%c12_777, %c0_778], %1085 {strides = array<i32>} : memref<27x16xf32, #tpu.memory_space<vmem>>, vector<1x16xf32>,
    %1090 = vector.extract_strided_slice %1085 {offsets = [0, 1], sizes = [1, 15], strides = [1, 1]} : vector<1x16xf32> to vector<1x15xf32>
    %1091 = tpu.concatenate %1090, %3 in 1 : vector<1x15xf32>, vector<1x1xf32> -> vector<1x16xf32>
    %c15_779 = arith.constant 15 : index
    %c0_780 = arith.constant 0 : index
    %1092 = vector.load %arg12[%c15_779, %c0_780] : memref<27x16xf32, #tpu.memory_space<vmem>>, vector<1x16xf32>
    tpu.vector_store %arg12[%c15_779, %c0_780], %1091 {strides = array<i32>} : memref<27x16xf32, #tpu.memory_space<vmem>>, vector<1x16xf32>,
    %c0_781 = arith.constant 0 : index
    %c1_782 = arith.constant 1 : index
    %1093 = arith.index_cast %1080 : i32 to index
    %c0_783 = arith.constant 0 : index
    %1094 = vector.load %arg2[%c0_781, %c1_782, %1093, %c0_783] : memref<1x3x16x16xf32, #tpu.memory_space<vmem>>, vector<1x1x1x16xf32>
    %1095 = vector.shape_cast %1094 : vector<1x1x1x16xf32> to vector<1x16xf32>
    %1096 = vector.broadcast %1078 : f32 to vector<1x16xf32>
    %1097 = arith.mulf %1095, %1096 : vector<1x16xf32>
    %1098 = vector.extract_strided_slice %1097 {offsets = [0, 0], sizes = [1, 15], strides = [1, 1]} : vector<1x16xf32> to vector<1x15xf32>
    %1099 = tpu.concatenate %3, %1098 in 1 : vector<1x1xf32>, vector<1x15xf32> -> vector<1x16xf32>
    %c10_784 = arith.constant 10 : index
    %c0_785 = arith.constant 0 : index
    %1100 = vector.load %arg12[%c10_784, %c0_785] : memref<27x16xf32, #tpu.memory_space<vmem>>, vector<1x16xf32>
    tpu.vector_store %arg12[%c10_784, %c0_785], %1099 {strides = array<i32>} : memref<27x16xf32, #tpu.memory_space<vmem>>, vector<1x16xf32>,
    %c13_786 = arith.constant 13 : index
    %c0_787 = arith.constant 0 : index
    %1101 = vector.load %arg12[%c13_786, %c0_787] : memref<27x16xf32, #tpu.memory_space<vmem>>, vector<1x16xf32>
    tpu.vector_store %arg12[%c13_786, %c0_787], %1097 {strides = array<i32>} : memref<27x16xf32, #tpu.memory_space<vmem>>, vector<1x16xf32>,
    %1102 = vector.extract_strided_slice %1097 {offsets = [0, 1], sizes = [1, 15], strides = [1, 1]} : vector<1x16xf32> to vector<1x15xf32>
    %1103 = tpu.concatenate %1102, %3 in 1 : vector<1x15xf32>, vector<1x1xf32> -> vector<1x16xf32>
    %c16_788 = arith.constant 16 : index
    %c0_789 = arith.constant 0 : index
    %1104 = vector.load %arg12[%c16_788, %c0_789] : memref<27x16xf32, #tpu.memory_space<vmem>>, vector<1x16xf32>
    tpu.vector_store %arg12[%c16_788, %c0_789], %1103 {strides = array<i32>} : memref<27x16xf32, #tpu.memory_space<vmem>>, vector<1x16xf32>,
    %c0_790 = arith.constant 0 : index
    %c2_791 = arith.constant 2 : index
    %1105 = arith.index_cast %1080 : i32 to index
    %c0_792 = arith.constant 0 : index
    %1106 = vector.load %arg2[%c0_790, %c2_791, %1105, %c0_792] : memref<1x3x16x16xf32, #tpu.memory_space<vmem>>, vector<1x1x1x16xf32>
    %1107 = vector.shape_cast %1106 : vector<1x1x1x16xf32> to vector<1x16xf32>
    %1108 = vector.broadcast %1078 : f32 to vector<1x16xf32>
    %1109 = arith.mulf %1107, %1108 : vector<1x16xf32>
    %1110 = vector.extract_strided_slice %1109 {offsets = [0, 0], sizes = [1, 15], strides = [1, 1]} : vector<1x16xf32> to vector<1x15xf32>
    %1111 = tpu.concatenate %3, %1110 in 1 : vector<1x1xf32>, vector<1x15xf32> -> vector<1x16xf32>
    %c11_793 = arith.constant 11 : index
    %c0_794 = arith.constant 0 : index
    %1112 = vector.load %arg12[%c11_793, %c0_794] : memref<27x16xf32, #tpu.memory_space<vmem>>, vector<1x16xf32>
    tpu.vector_store %arg12[%c11_793, %c0_794], %1111 {strides = array<i32>} : memref<27x16xf32, #tpu.memory_space<vmem>>, vector<1x16xf32>,
    %c14_795 = arith.constant 14 : index
    %c0_796 = arith.constant 0 : index
    %1113 = vector.load %arg12[%c14_795, %c0_796] : memref<27x16xf32, #tpu.memory_space<vmem>>, vector<1x16xf32>
    tpu.vector_store %arg12[%c14_795, %c0_796], %1109 {strides = array<i32>} : memref<27x16xf32, #tpu.memory_space<vmem>>, vector<1x16xf32>,
    %1114 = vector.extract_strided_slice %1109 {offsets = [0, 1], sizes = [1, 15], strides = [1, 1]} : vector<1x16xf32> to vector<1x15xf32>
    %1115 = tpu.concatenate %1114, %3 in 1 : vector<1x15xf32>, vector<1x1xf32> -> vector<1x16xf32>
    %c17_797 = arith.constant 17 : index
    %c0_798 = arith.constant 0 : index
    %1116 = vector.load %arg12[%c17_797, %c0_798] : memref<27x16xf32, #tpu.memory_space<vmem>>, vector<1x16xf32>
    tpu.vector_store %arg12[%c17_797, %c0_798], %1115 {strides = array<i32>} : memref<27x16xf32, #tpu.memory_space<vmem>>, vector<1x16xf32>,
    %c1_i32_799 = arith.constant 1 : i32
    %1117 = arith.addi %1028, %c1_i32_799 : i32
    %c0_i32_800 = arith.constant 0 : i32
    %1118 = arith.cmpi sge, %1117, %c0_i32_800 : i32
    %c16_i32_801 = arith.constant 16 : i32
    %1119 = arith.cmpi slt, %1117, %c16_i32_801 : i32
    %1120 = arith.andi %1118, %1119 : i1
    %1121 = arith.extui %1120 : i1 to i32
    %1122 = arith.sitofp %1121 : i32 to f32
    %c0_i32_802 = arith.constant 0 : i32
    %c15_i32_803 = arith.constant 15 : i32
    %1123 = arith.maxsi %c0_i32_802, %1117 : i32
    %1124 = arith.minsi %c15_i32_803, %1123 : i32
    %c0_804 = arith.constant 0 : index
    %c0_805 = arith.constant 0 : index
    %1125 = arith.index_cast %1124 : i32 to index
    %c0_806 = arith.constant 0 : index
    %1126 = vector.load %arg2[%c0_804, %c0_805, %1125, %c0_806] : memref<1x3x16x16xf32, #tpu.memory_space<vmem>>, vector<1x1x1x16xf32>
    %1127 = vector.shape_cast %1126 : vector<1x1x1x16xf32> to vector<1x16xf32>
    %1128 = vector.broadcast %1122 : f32 to vector<1x16xf32>
    %1129 = arith.mulf %1127, %1128 : vector<1x16xf32>
    %1130 = vector.extract_strided_slice %1129 {offsets = [0, 0], sizes = [1, 15], strides = [1, 1]} : vector<1x16xf32> to vector<1x15xf32>
    %1131 = tpu.concatenate %3, %1130 in 1 : vector<1x1xf32>, vector<1x15xf32> -> vector<1x16xf32>
    %c18_807 = arith.constant 18 : index
    %c0_808 = arith.constant 0 : index
    %1132 = vector.load %arg12[%c18_807, %c0_808] : memref<27x16xf32, #tpu.memory_space<vmem>>, vector<1x16xf32>
    tpu.vector_store %arg12[%c18_807, %c0_808], %1131 {strides = array<i32>} : memref<27x16xf32, #tpu.memory_space<vmem>>, vector<1x16xf32>,
    %c21_809 = arith.constant 21 : index
    %c0_810 = arith.constant 0 : index
    %1133 = vector.load %arg12[%c21_809, %c0_810] : memref<27x16xf32, #tpu.memory_space<vmem>>, vector<1x16xf32>
    tpu.vector_store %arg12[%c21_809, %c0_810], %1129 {strides = array<i32>} : memref<27x16xf32, #tpu.memory_space<vmem>>, vector<1x16xf32>,
    %1134 = vector.extract_strided_slice %1129 {offsets = [0, 1], sizes = [1, 15], strides = [1, 1]} : vector<1x16xf32> to vector<1x15xf32>
    %1135 = tpu.concatenate %1134, %3 in 1 : vector<1x15xf32>, vector<1x1xf32> -> vector<1x16xf32>
    %c24_811 = arith.constant 24 : index
    %c0_812 = arith.constant 0 : index
    %1136 = vector.load %arg12[%c24_811, %c0_812] : memref<27x16xf32, #tpu.memory_space<vmem>>, vector<1x16xf32>
    tpu.vector_store %arg12[%c24_811, %c0_812], %1135 {strides = array<i32>} : memref<27x16xf32, #tpu.memory_space<vmem>>, vector<1x16xf32>,
    %c0_813 = arith.constant 0 : index
    %c1_814 = arith.constant 1 : index
    %1137 = arith.index_cast %1124 : i32 to index
    %c0_815 = arith.constant 0 : index
    %1138 = vector.load %arg2[%c0_813, %c1_814, %1137, %c0_815] : memref<1x3x16x16xf32, #tpu.memory_space<vmem>>, vector<1x1x1x16xf32>
    %1139 = vector.shape_cast %1138 : vector<1x1x1x16xf32> to vector<1x16xf32>
    %1140 = vector.broadcast %1122 : f32 to vector<1x16xf32>
    %1141 = arith.mulf %1139, %1140 : vector<1x16xf32>
    %1142 = vector.extract_strided_slice %1141 {offsets = [0, 0], sizes = [1, 15], strides = [1, 1]} : vector<1x16xf32> to vector<1x15xf32>
    %1143 = tpu.concatenate %3, %1142 in 1 : vector<1x1xf32>, vector<1x15xf32> -> vector<1x16xf32>
    %c19_816 = arith.constant 19 : index
    %c0_817 = arith.constant 0 : index
    %1144 = vector.load %arg12[%c19_816, %c0_817] : memref<27x16xf32, #tpu.memory_space<vmem>>, vector<1x16xf32>
    tpu.vector_store %arg12[%c19_816, %c0_817], %1143 {strides = array<i32>} : memref<27x16xf32, #tpu.memory_space<vmem>>, vector<1x16xf32>,
    %c22_818 = arith.constant 22 : index
    %c0_819 = arith.constant 0 : index
    %1145 = vector.load %arg12[%c22_818, %c0_819] : memref<27x16xf32, #tpu.memory_space<vmem>>, vector<1x16xf32>
    tpu.vector_store %arg12[%c22_818, %c0_819], %1141 {strides = array<i32>} : memref<27x16xf32, #tpu.memory_space<vmem>>, vector<1x16xf32>,
    %1146 = vector.extract_strided_slice %1141 {offsets = [0, 1], sizes = [1, 15], strides = [1, 1]} : vector<1x16xf32> to vector<1x15xf32>
    %1147 = tpu.concatenate %1146, %3 in 1 : vector<1x15xf32>, vector<1x1xf32> -> vector<1x16xf32>
    %c25_820 = arith.constant 25 : index
    %c0_821 = arith.constant 0 : index
    %1148 = vector.load %arg12[%c25_820, %c0_821] : memref<27x16xf32, #tpu.memory_space<vmem>>, vector<1x16xf32>
    tpu.vector_store %arg12[%c25_820, %c0_821], %1147 {strides = array<i32>} : memref<27x16xf32, #tpu.memory_space<vmem>>, vector<1x16xf32>,
    %c0_822 = arith.constant 0 : index
    %c2_823 = arith.constant 2 : index
    %1149 = arith.index_cast %1124 : i32 to index
    %c0_824 = arith.constant 0 : index
    %1150 = vector.load %arg2[%c0_822, %c2_823, %1149, %c0_824] : memref<1x3x16x16xf32, #tpu.memory_space<vmem>>, vector<1x1x1x16xf32>
    %1151 = vector.shape_cast %1150 : vector<1x1x1x16xf32> to vector<1x16xf32>
    %1152 = vector.broadcast %1122 : f32 to vector<1x16xf32>
    %1153 = arith.mulf %1151, %1152 : vector<1x16xf32>
    %1154 = vector.extract_strided_slice %1153 {offsets = [0, 0], sizes = [1, 15], strides = [1, 1]} : vector<1x16xf32> to vector<1x15xf32>
    %1155 = tpu.concatenate %3, %1154 in 1 : vector<1x1xf32>, vector<1x15xf32> -> vector<1x16xf32>
    %c20_825 = arith.constant 20 : index
    %c0_826 = arith.constant 0 : index
    %1156 = vector.load %arg12[%c20_825, %c0_826] : memref<27x16xf32, #tpu.memory_space<vmem>>, vector<1x16xf32>
    tpu.vector_store %arg12[%c20_825, %c0_826], %1155 {strides = array<i32>} : memref<27x16xf32, #tpu.memory_space<vmem>>, vector<1x16xf32>,
    %c23_827 = arith.constant 23 : index
    %c0_828 = arith.constant 0 : index
    %1157 = vector.load %arg12[%c23_827, %c0_828] : memref<27x16xf32, #tpu.memory_space<vmem>>, vector<1x16xf32>
    tpu.vector_store %arg12[%c23_827, %c0_828], %1153 {strides = array<i32>} : memref<27x16xf32, #tpu.memory_space<vmem>>, vector<1x16xf32>,
    %1158 = vector.extract_strided_slice %1153 {offsets = [0, 1], sizes = [1, 15], strides = [1, 1]} : vector<1x16xf32> to vector<1x15xf32>
    %1159 = tpu.concatenate %1158, %3 in 1 : vector<1x15xf32>, vector<1x1xf32> -> vector<1x16xf32>
    %c26_829 = arith.constant 26 : index
    %c0_830 = arith.constant 0 : index
    %1160 = vector.load %arg12[%c26_829, %c0_830] : memref<27x16xf32, #tpu.memory_space<vmem>>, vector<1x16xf32>
    tpu.vector_store %arg12[%c26_829, %c0_830], %1159 {strides = array<i32>} : memref<27x16xf32, #tpu.memory_space<vmem>>, vector<1x16xf32>,
    %c0_831 = arith.constant 0 : index
    %c0_832 = arith.constant 0 : index
    %1161 = vector.load %arg3[%c0_831, %c0_832] : memref<32x27xf32, #tpu.memory_space<vmem>>, vector<32x27xf32>
    %c0_833 = arith.constant 0 : index
    %c0_834 = arith.constant 0 : index
    %1162 = vector.load %arg12[%c0_833, %c0_834] : memref<27x16xf32, #tpu.memory_space<vmem>>, vector<27x16xf32>
    %cst_835 = arith.constant dense<0.000000e+00> : vector<32x16xf32>
    %1163 = tpu.matmul %1161, %1162, %cst_835 {dimension_numbers = #tpu.dot_dimension_numbers<[1], [0], [0], [1], [0, 0, 1, 1], [], []>} : vector<32x27xf32>, vector<27x16xf32>, vector<32x16xf32> -> vector<32x16xf32>
    %c0_836 = arith.constant 0 : index
    %c0_837 = arith.constant 0 : index
    %1164 = vector.load %arg4[%c0_836, %c0_837] : memref<32x1xf32, #tpu.memory_space<vmem>>, vector<32x1xf32>
    %1165 = vector.broadcast %1164 : vector<32x1xf32> to vector<32x16xf32>
    %1166 = arith.addf %1163, %1165 : vector<32x16xf32>
    %cst_838 = arith.constant 0.000000e+00 : f32
    %1167 = vector.broadcast %cst_838 : f32 to vector<32x16xf32>
    %1168 = arith.maximumf %1166, %1167 : vector<32x16xf32>
    %c0_839 = arith.constant 0 : index
    %c0_840 = arith.constant 0 : index
    %1169 = vector.load %arg13[%c0_839, %c0_840] : memref<32x1xf32, #tpu.memory_space<vmem>>, vector<32x1xf32>
    %cst_841 = arith.constant dense<0.000000e+00> : vector<32xf32>
    %1170 = vector.multi_reduction <add>, %1168, %cst_841 [1] : vector<32x16xf32> to vector<32xf32>
    %1171 = vector.shape_cast %1170 : vector<32xf32> to vector<32x1xf32>
    %1172 = arith.addf %1169, %1171 : vector<32x1xf32>
    %c0_842 = arith.constant 0 : index
    %c0_843 = arith.constant 0 : index
    %1173 = vector.load %arg13[%c0_842, %c0_843] : memref<32x1xf32, #tpu.memory_space<vmem>>, vector<32x1xf32>
    tpu.vector_store %arg13[%c0_842, %c0_843], %1172 {strides = array<i32>} : memref<32x1xf32, #tpu.memory_space<vmem>>, vector<32x1xf32>,
    %c1_i32_844 = arith.constant 1 : i32
    %1174 = arith.cmpi eq, %arg1, %c1_i32_844 : i32
    %1175 = arith.extui %1174 : i1 to i32
    %c0_i32_845 = arith.constant 0 : i32
    %1176 = arith.cmpi ne, %1175, %c0_i32_845 : i32
    scf.if %1176 {
      %c0_846 = arith.constant 0 : index
      %c0_847 = arith.constant 0 : index
      %1177 = vector.load %arg13[%c0_846, %c0_847] : memref<32x1xf32, #tpu.memory_space<vmem>>, vector<32x1xf32>
      %cst_848 = arith.constant 3.906250e-03 : f32
      %1178 = vector.broadcast %cst_848 : f32 to vector<32x1xf32>
      %1179 = arith.mulf %1177, %1178 : vector<32x1xf32>
      %c0_849 = arith.constant 0 : index
      %c0_850 = arith.constant 0 : index
      %1180 = vector.load %arg6[%c0_849, %c0_850] : memref<16x32xf32, #tpu.memory_space<vmem>>, vector<16x32xf32>
      %cst_851 = arith.constant dense<0.000000e+00> : vector<16x1xf32>
      %1181 = tpu.matmul %1180, %1179, %cst_851 {dimension_numbers = #tpu.dot_dimension_numbers<[1], [0], [0], [1], [0, 0, 1, 1], [], []>} : vector<16x32xf32>, vector<32x1xf32>, vector<16x1xf32> -> vector<16x1xf32>
      %c0_852 = arith.constant 0 : index
      %c0_853 = arith.constant 0 : index
      %1182 = vector.load %arg7[%c0_852, %c0_853] : memref<16x5xf32, #tpu.memory_space<vmem>>, vector<16x5xf32>
      %c0_854 = arith.constant 0 : index
      %c0_855 = arith.constant 0 : index
      %c0_856 = arith.constant 0 : index
      %1183 = vector.load %arg5[%c0_854, %c0_855, %c0_856] : memref<1x5x1xf32, #tpu.memory_space<vmem>>, vector<1x5x1xf32>
      %1184 = vector.shape_cast %1183 : vector<1x5x1xf32> to vector<5x1xf32>
      %cst_857 = arith.constant dense<0.000000e+00> : vector<16x1xf32>
      %1185 = tpu.matmul %1182, %1184, %cst_857 {dimension_numbers = #tpu.dot_dimension_numbers<[1], [0], [0], [1], [0, 0, 1, 1], [], []>} : vector<16x5xf32>, vector<5x1xf32>, vector<16x1xf32> -> vector<16x1xf32>
      %1186 = arith.addf %1181, %1185 : vector<16x1xf32>
      %c0_858 = arith.constant 0 : index
      %c0_859 = arith.constant 0 : index
      %1187 = vector.load %arg8[%c0_858, %c0_859] : memref<16x1xf32, #tpu.memory_space<vmem>>, vector<16x1xf32>
      %1188 = arith.addf %1186, %1187 : vector<16x1xf32>
      %c0_860 = arith.constant 0 : index
      %c0_861 = arith.constant 0 : index
      %1189 = vector.load %arg9[%c0_860, %c0_861] : memref<1x16xf32, #tpu.memory_space<vmem>>, vector<1x16xf32>
      %cst_862 = arith.constant dense<0.000000e+00> : vector<1x1xf32>
      %1190 = tpu.matmul %1189, %1188, %cst_862 {dimension_numbers = #tpu.dot_dimension_numbers<[1], [0], [0], [1], [0, 0, 1, 1], [], []>} : vector<1x16xf32>, vector<16x1xf32>, vector<1x1xf32> -> vector<1x1xf32>
      %c0_863 = arith.constant 0 : index
      %c0_864 = arith.constant 0 : index
      %1191 = memref.load %arg10[%c0_863, %c0_864] : memref<1x1xf32, #tpu.memory_space<smem>>
      %1192 = vector.broadcast %1191 : f32 to vector<1x1xf32>
      %1193 = arith.addf %1190, %1192 : vector<1x1xf32>
      %c0_865 = arith.constant 0 : index
      %c0_866 = arith.constant 0 : index
      %c0_867 = arith.constant 0 : index
      %1194 = vector.load %arg11[%c0_865, %c0_866, %c0_867] : memref<1x1x1xf32, #tpu.memory_space<vmem>>, vector<1x1x1xf32>
      %1195 = vector.shape_cast %1194 : vector<1x1x1xf32> to vector<1x1xf32>
      %1196 = vector.shape_cast %1193 : vector<1x1xf32> to vector<1x1x1xf32>
      tpu.vector_store %arg11[%c0_865, %c0_866, %c0_867], %1196 {strides = array<i32>} : memref<1x1x1xf32, #tpu.memory_space<vmem>>, vector<1x1x1xf32>,
    } else {
    }
    return
  }
  func.func @transform_0(%arg0: i32, %arg1: i32) -> (i32, i32, i32, i32) {
    %c0_i32 = arith.constant 0 : i32
    %c0_i32_0 = arith.constant 0 : i32
    %c0_i32_1 = arith.constant 0 : i32
    %c0_i32_2 = arith.constant 0 : i32
    return %arg0, %c0_i32, %c0_i32_0, %c0_i32_1 : i32, i32, i32, i32
  }
  func.func @transform_1(%arg0: i32, %arg1: i32) -> (i32, i32) {
    %c0_i32 = arith.constant 0 : i32
    %c0_i32_0 = arith.constant 0 : i32
    %c0_i32_1 = arith.constant 0 : i32
    return %c0_i32, %c0_i32_0 : i32, i32
  }
  func.func @transform_2(%arg0: i32, %arg1: i32) -> (i32, i32) {
    %c0_i32 = arith.constant 0 : i32
    %c0_i32_0 = arith.constant 0 : i32
    %c0_i32_1 = arith.constant 0 : i32
    return %c0_i32, %c0_i32_0 : i32, i32
  }
  func.func @transform_3(%arg0: i32, %arg1: i32) -> (i32, i32, i32) {
    %c0_i32 = arith.constant 0 : i32
    %c0_i32_0 = arith.constant 0 : i32
    %c0_i32_1 = arith.constant 0 : i32
    return %arg0, %c0_i32, %c0_i32_0 : i32, i32, i32
  }
  func.func @transform_4(%arg0: i32, %arg1: i32) -> (i32, i32) {
    %c0_i32 = arith.constant 0 : i32
    %c0_i32_0 = arith.constant 0 : i32
    %c0_i32_1 = arith.constant 0 : i32
    return %c0_i32, %c0_i32_0 : i32, i32
  }
  func.func @transform_5(%arg0: i32, %arg1: i32) -> (i32, i32) {
    %c0_i32 = arith.constant 0 : i32
    %c0_i32_0 = arith.constant 0 : i32
    %c0_i32_1 = arith.constant 0 : i32
    return %c0_i32, %c0_i32_0 : i32, i32
  }
  func.func @transform_6(%arg0: i32, %arg1: i32) -> (i32, i32) {
    %c0_i32 = arith.constant 0 : i32
    %c0_i32_0 = arith.constant 0 : i32
    %c0_i32_1 = arith.constant 0 : i32
    return %c0_i32, %c0_i32_0 : i32, i32
  }
  func.func @transform_7(%arg0: i32, %arg1: i32) -> (i32, i32) {
    %c0_i32 = arith.constant 0 : i32
    %c0_i32_0 = arith.constant 0 : i32
    %c0_i32_1 = arith.constant 0 : i32
    return %c0_i32, %c0_i32_0 : i32, i32
  }
  func.func @transform_8(%arg0: i32, %arg1: i32) -> (i32, i32) {
    %c0_i32 = arith.constant 0 : i32
    %c0_i32_0 = arith.constant 0 : i32
    %c0_i32_1 = arith.constant 0 : i32
    return %c0_i32, %c0_i32_0 : i32, i32
  }
  func.func @transform_9(%arg0: i32, %arg1: i32) -> (i32, i32, i32) {
    %c0_i32 = arith.constant 0 : i32
    %c0_i32_0 = arith.constant 0 : i32
    %c0_i32_1 = arith.constant 0 : i32
    return %arg0, %c0_i32, %c0_i32_0 : i32, i32, i32
  }
}

</mosaic_0001>

<llo_original>
// kernel: model_v2_forward.1
$region0: #{model_v2_forward.1}
  #allocation0 [shape = 'u32[]', space=smem, size = 0x4, offset = 0x4, fixed_abs, tag = 'smem constant byte address 0x4 - core index']
  #allocation1 [shape = 'u32[144,128]{1,0:T(1,128)}', space=vmem, size = 0x12000, scoped, tag = 'internal scratch']
  #allocation2 [shape = 'f32[27,16]{1,0:T(8,128)}', space=vmem, size = 0x4000, scoped, tag = 'scratch operand']
  #allocation3 [shape = 'f32[32,1]{1,0:T(8,128)}', space=vmem, size = 0x4000, scoped, tag = 'scratch operand']
  #allocation4 [shape = 'f32[1,1]{1,0:T(1,128)S(6)}', space=smem, size = 0x200, scoped, tag = 'scoped memory for model_v2_forward.1']
  %s0 = inlined_call_operand.vmem [shape: f32[2,3,16,16], index: 0, kind: input, shape index: {}]
  %s1 = inlined_call_operand.vmem [shape: f32[32,27], index: 1, kind: input, shape index: {}]
  %s2 = inlined_call_operand.vmem [shape: f32[32,1], index: 2, kind: input, shape index: {}]
  %s3 = inlined_call_operand.vmem [shape: f32[2,5,1], index: 3, kind: input, shape index: {}]
  %s4 = inlined_call_operand.vmem [shape: f32[16,32], index: 4, kind: input, shape index: {}]
  %s5 = inlined_call_operand.vmem [shape: f32[16,5], index: 5, kind: input, shape index: {}]
  %s6 = inlined_call_operand.vmem [shape: f32[16,1], index: 6, kind: input, shape index: {}]
  %s7 = inlined_call_operand.vmem [shape: f32[1,16], index: 7, kind: input, shape index: {}]
  %s8 = inlined_call_operand.<no memory space> [shape: f32[1,1], index: 8, kind: input, shape index: {}]
  %s9 = inlined_call_operand.vmem [shape: f32[2,1,1], index: 9, kind: output, shape index: {}]
  %s10 = sld [smem:[#allocation0]]
  $region77: #{model_v2_forward.1} parent=0
    _
  %s12 = ssub.s32 1, %s10
  %s13 = scalar_select 0, %s12, %s10
  %14 = sst [smem:[#allocation4]] %s8
  loop: start=0, step=1, limit=6
  $region2: #{model_v2_forward.1} parent=0 // loop_pre_header
    _
  $region3: #{model_v2_forward.1} parent=0 // loop_header
    %s16 = sphi 0, %s20
    %p17 = scmp.ge.s32.totalorder %s16, 6
    %s23 = sphi 0, %s35
    %s24 = sphi 0, %s31
    %s25 = sphi 0, %s23
    %s26 = sphi 0, %s24
    %s27 = sphi 0, %s25
    %s28 = sphi 0, %s26
    %s38 = sphi 0, %s40
    %s41 = sphi 0, %s38
    %s42 = sphi 0, %s41
    %s58 = sphi 0, %s42
    %s62 = sphi 0, %s62
    %s64 = sphi 0, %s62
    %s65 = sphi 0, %s64
    %s79 = sphi 0, %s65
    %s83 = sphi 0, %s83
    %s85 = sphi 0, %s83
    %s86 = sphi 0, %s85
    %s100 = sphi 0, %s86
    %s106 = sphi 0, %s108
    %s109 = sphi 0, %s106
    %s110 = sphi 0, %s109
    %s126 = sphi 0, %s110
    %s130 = sphi 0, %s130
    %s132 = sphi 0, %s130
    %s133 = sphi 0, %s132
    %s147 = sphi 0, %s133
    %s151 = sphi 0, %s151
    %s153 = sphi 0, %s151
    %s154 = sphi 0, %s153
    %s168 = sphi 0, %s154
    %s172 = sphi 0, %s172
    %s174 = sphi 0, %s172
    %s175 = sphi 0, %s174
    %s189 = sphi 0, %s175
    %s193 = sphi 0, %s193
    %s195 = sphi 0, %s193
    %s196 = sphi 0, %s195
    %s210 = sphi 0, %s196
    %s214 = sphi 0, %s214
    %s216 = sphi 0, %s214
    %s217 = sphi 0, %s216
    %s231 = sphi 0, %s217
    %s237 = sphi 0, %s239
    %s240 = sphi 0, %s237
    %s241 = sphi 0, %s240
    %s257 = sphi 0, %s241
  $region4: #{model_v2_forward.1} parent=0 // loop_header_branch
    %19 = sbr.rel (%p17) target = $region8
  $region5: #{model_v2_forward.1} parent=0 // loop_body
    %s21 = ssub.s32 %s16, 1
    %s22 = ssub.s32 %s16, 2
    %s29 = sadd.s32 1, %s24
    %p30 = scmp.ge.s32.totalorder %s29, 2
    %s31 = scalar_select %p30, 0, %s29
    %s32 = sadd.s32 1, %s23
    %s33 = scalar_select %p30, %s32, %s23
    %p34 = scmp.ge.s32.totalorder %s33, 2
    %s35 = scalar_select %p34, 0, %s33
    %s36 = ssub.s32 %s23, %s35
    %p37 = scmp.eq.s32.totalorder %s36, 0
    %s39 = sadd.s32 %s38, 1
    %s40 = scalar_select %p37, %s38, %s39
    %p43 = pneg %p37
    %p44 = scmp.eq.s32.totalorder %s16, 3
    %p45 = por %p43, %p44
    %p46 = scmp.ne.s32.totalorder %s38, %s41
    %p47 = scmp.eq.s32.totalorder %s16, 0
    %p48 = por %p46, %p47
    %p49 = scmp.ne.s32.totalorder %s38, %s41
    %p50 = scmp.eq.s32.totalorder %s21, 3
    %p51 = por %p49, %p50
    %p52 = scmp.ne.s32.totalorder %s41, %s42
    %p53 = scmp.eq.s32.totalorder %s21, 0
    %p54 = por %p52, %p53
    %p55 = scmp.ne.s32.totalorder %s41, %s42
    %p56 = scmp.eq.s32.totalorder %s22, 3
    %p57 = por %p55, %p56
    %p59 = scmp.ne.s32.totalorder %s42, %s58
    %p60 = scmp.eq.s32.totalorder %s22, 0
    %p61 = por %p59, %p60
    %s63 = sadd.s32 %s62, 1
    %p66 = scmp.eq.s32.totalorder %s16, 3
    %p67 = scmp.ne.s32.totalorder %s62, %s64
    %p68 = scmp.eq.s32.totalorder %s16, 0
    %p69 = por %p67, %p68
    %p70 = scmp.ne.s32.totalorder %s62, %s64
    %p71 = scmp.eq.s32.totalorder %s21, 3
    %p72 = por %p70, %p71
    %p73 = scmp.ne.s32.totalorder %s64, %s65
    %p74 = scmp.eq.s32.totalorder %s21, 0
    %p75 = por %p73, %p74
    %p76 = scmp.ne.s32.totalorder %s64, %s65
    %p77 = scmp.eq.s32.totalorder %s22, 3
    %p78 = por %p76, %p77
    %p80 = scmp.ne.s32.totalorder %s65, %s79
    %p81 = scmp.eq.s32.totalorder %s22, 0
    %p82 = por %p80, %p81
    %s84 = sadd.s32 %s83, 1
    %p87 = scmp.eq.s32.totalorder %s16, 3
    %p88 = scmp.ne.s32.totalorder %s83, %s85
    %p89 = scmp.eq.s32.totalorder %s16, 0
    %p90 = por %p88, %p89
    %p91 = scmp.ne.s32.totalorder %s83, %s85
    %p92 = scmp.eq.s32.totalorder %s21, 3
    %p93 = por %p91, %p92
    %p94 = scmp.ne.s32.totalorder %s85, %s86
    %p95 = scmp.eq.s32.totalorder %s21, 0
    %p96 = por %p94, %p95
    %p97 = scmp.ne.s32.totalorder %s85, %s86
    %p98 = scmp.eq.s32.totalorder %s22, 3
    %p99 = por %p97, %p98
    %p101 = scmp.ne.s32.totalorder %s86, %s100
    %p102 = scmp.eq.s32.totalorder %s22, 0
    %p103 = por %p101, %p102
    %s104 = ssub.s32 %s23, %s35
    %p105 = scmp.eq.s32.totalorder %s104, 0
    %s107 = sadd.s32 %s106, 1
    %s108 = scalar_select %p105, %s106, %s107
    %p111 = pneg %p105
    %p112 = scmp.eq.s32.totalorder %s16, 3
    %p113 = por %p111, %p112
    %p114 = scmp.ne.s32.totalorder %s106, %s109
    %p115 = scmp.eq.s32.totalorder %s16, 0
    %p116 = por %p114, %p115
    %p117 = scmp.ne.s32.totalorder %s106, %s109
    %p118 = scmp.eq.s32.totalorder %s21, 3
    %p119 = por %p117, %p118
    %p120 = scmp.ne.s32.totalorder %s109, %s110
    %p121 = scmp.eq.s32.totalorder %s21, 0
    %p122 = por %p120, %p121
    %p123 = scmp.ne.s32.totalorder %s109, %s110
    %p124 = scmp.eq.s32.totalorder %s22, 3
    %p125 = por %p123, %p124
    %p127 = scmp.ne.s32.totalorder %s110, %s126
    %p128 = scmp.eq.s32.totalorder %s22, 0
    %p129 = por %p127, %p128
    %s131 = sadd.s32 %s130, 1
    %p134 = scmp.eq.s32.totalorder %s16, 3
    %p135 = scmp.ne.s32.totalorder %s130, %s132
    %p136 = scmp.eq.s32.totalorder %s16, 0
    %p137 = por %p135, %p136
    %p138 = scmp.ne.s32.totalorder %s130, %s132
    %p139 = scmp.eq.s32.totalorder %s21, 3
    %p140 = por %p138, %p139
    %p141 = scmp.ne.s32.totalorder %s132, %s133
    %p142 = scmp.eq.s32.totalorder %s21, 0
    %p143 = por %p141, %p142
    %p144 = scmp.ne.s32.totalorder %s132, %s133
    %p145 = scmp.eq.s32.totalorder %s22, 3
    %p146 = por %p144, %p145
    %p148 = scmp.ne.s32.totalorder %s133, %s147
    %p149 = scmp.eq.s32.totalorder %s22, 0
    %p150 = por %p148, %p149
    %s152 = sadd.s32 %s151, 1
    %p155 = scmp.eq.s32.totalorder %s16, 3
    %p156 = scmp.ne.s32.totalorder %s151, %s153
    %p157 = scmp.eq.s32.totalorder %s16, 0
    %p158 = por %p156, %p157
    %p159 = scmp.ne.s32.totalorder %s151, %s153
    %p160 = scmp.eq.s32.totalorder %s21, 3
    %p161 = por %p159, %p160
    %p162 = scmp.ne.s32.totalorder %s153, %s154
    %p163 = scmp.eq.s32.totalorder %s21, 0
    %p164 = por %p162, %p163
    %p165 = scmp.ne.s32.totalorder %s153, %s154
    %p166 = scmp.eq.s32.totalorder %s22, 3
    %p167 = por %p165, %p166
    %p169 = scmp.ne.s32.totalorder %s154, %s168
    %p170 = scmp.eq.s32.totalorder %s22, 0
    %p171 = por %p169, %p170
    %s173 = sadd.s32 %s172, 1
    %p176 = scmp.eq.s32.totalorder %s16, 3
    %p177 = scmp.ne.s32.totalorder %s172, %s174
    %p178 = scmp.eq.s32.totalorder %s16, 0
    %p179 = por %p177, %p178
    %p180 = scmp.ne.s32.totalorder %s172, %s174
    %p181 = scmp.eq.s32.totalorder %s21, 3
    %p182 = por %p180, %p181
    %p183 = scmp.ne.s32.totalorder %s174, %s175
    %p184 = scmp.eq.s32.totalorder %s21, 0
    %p185 = por %p183, %p184
    %p186 = scmp.ne.s32.totalorder %s174, %s175
    %p187 = scmp.eq.s32.totalorder %s22, 3
    %p188 = por %p186, %p187
    %p190 = scmp.ne.s32.totalorder %s175, %s189
    %p191 = scmp.eq.s32.totalorder %s22, 0
    %p192 = por %p190, %p191
    %s194 = sadd.s32 %s193, 1
    %p197 = scmp.eq.s32.totalorder %s16, 3
    %p198 = scmp.ne.s32.totalorder %s193, %s195
    %p199 = scmp.eq.s32.totalorder %s16, 0
    %p200 = por %p198, %p199
    %p201 = scmp.ne.s32.totalorder %s193, %s195
    %p202 = scmp.eq.s32.totalorder %s21, 3
    %p203 = por %p201, %p202
    %p204 = scmp.ne.s32.totalorder %s195, %s196
    %p205 = scmp.eq.s32.totalorder %s21, 0
    %p206 = por %p204, %p205
    %p207 = scmp.ne.s32.totalorder %s195, %s196
    %p208 = scmp.eq.s32.totalorder %s22, 3
    %p209 = por %p207, %p208
    %p211 = scmp.ne.s32.totalorder %s196, %s210
    %p212 = scmp.eq.s32.totalorder %s22, 0
    %p213 = por %p211, %p212
    %s215 = sadd.s32 %s214, 1
    %p218 = scmp.eq.s32.totalorder %s16, 3
    %p219 = scmp.ne.s32.totalorder %s214, %s216
    %p220 = scmp.eq.s32.totalorder %s16, 0
    %p221 = por %p219, %p220
    %p222 = scmp.ne.s32.totalorder %s214, %s216
    %p223 = scmp.eq.s32.totalorder %s21, 3
    %p224 = por %p222, %p223
    %p225 = scmp.ne.s32.totalorder %s216, %s217
    %p226 = scmp.eq.s32.totalorder %s21, 0
    %p227 = por %p225, %p226
    %p228 = scmp.ne.s32.totalorder %s216, %s217
    %p229 = scmp.eq.s32.totalorder %s22, 3
    %p230 = por %p228, %p229
    %p232 = scmp.ne.s32.totalorder %s217, %s231
    %p233 = scmp.eq.s32.totalorder %s22, 0
    %p234 = por %p232, %p233
    %s235 = ssub.s32 %s23, %s35
    %p236 = scmp.eq.s32.totalorder %s235, 0
    %s238 = sadd.s32 %s237, 1
    %s239 = scalar_select %p236, %s237, %s238
    %p242 = pneg %p236
    %p243 = scmp.eq.s32.totalorder %s16, 3
    %p244 = por %p242, %p243
    %p245 = scmp.ne.s32.totalorder %s237, %s240
    %p246 = scmp.eq.s32.totalorder %s16, 0
    %p247 = por %p245, %p246
    %p248 = scmp.ne.s32.totalorder %s237, %s240
    %p249 = scmp.eq.s32.totalorder %s21, 3
    %p250 = por %p248, %p249
    %p251 = scmp.ne.s32.totalorder %s240, %s241
    %p252 = scmp.eq.s32.totalorder %s21, 0
    %p253 = por %p251, %p252
    %p254 = scmp.ne.s32.totalorder %s240, %s241
    %p255 = scmp.eq.s32.totalorder %s22, 3
    %p256 = por %p254, %p255
    %p258 = scmp.ne.s32.totalorder %s241, %s257
    %p259 = scmp.eq.s32.totalorder %s22, 0
    %p260 = por %p258, %p259
    %p261 = scmp.le.s32.totalorder 1, %s16
    %p262 = scmp.lt.s32.totalorder %s16, 5
    %p263 = pnand %p261, %p262
    %p264 = pneg %p263
    // Predicated region
    $region9: #{model_v2_forward.1} parent=5 // pred_check
      _
    $region10: #{model_v2_forward.1} parent=5 // pred_check_branch
      %266 = sbr.rel (%p263) target = $region12
    $region11: #{model_v2_forward.1} parent=5 // pred_region
      %s267 = ssub.s32 %s16, 1
      // Predicated region
      $region13: #{model_v2_forward.1} parent=11 // pred_check
        %p268 = pneg %p75
      $region14: #{model_v2_forward.1} parent=11 // pred_check_branch
        %270 = sbr.rel (%p268) target = $region16
      $region15: #{model_v2_forward.1} parent=11 // pred_region
        _
      $region16: #{model_v2_forward.1} parent=11 // pred_fallthru
        _
      // Predicated region
      $region17: #{model_v2_forward.1} parent=11 // pred_check
        %p271 = pneg %p96
      $region18: #{model_v2_forward.1} parent=11 // pred_check_branch
        %273 = sbr.rel (%p271) target = $region20
      $region19: #{model_v2_forward.1} parent=11 // pred_region
        _
      $region20: #{model_v2_forward.1} parent=11 // pred_fallthru
        _
      // Predicated region
      $region21: #{model_v2_forward.1} parent=11 // pred_check
        %p274 = pneg %p143
      $region22: #{model_v2_forward.1} parent=11 // pred_check_branch
        %276 = sbr.rel (%p274) target = $region24
      $region23: #{model_v2_forward.1} parent=11 // pred_region
        _
      $region24: #{model_v2_forward.1} parent=11 // pred_fallthru
        _
      // Predicated region
      $region25: #{model_v2_forward.1} parent=11 // pred_check
        %p277 = pneg %p164
      $region26: #{model_v2_forward.1} parent=11 // pred_check_branch
        %279 = sbr.rel (%p277) target = $region28
      $region27: #{model_v2_forward.1} parent=11 // pred_region
        _
      $region28: #{model_v2_forward.1} parent=11 // pred_fallthru
        _
      // Predicated region
      $region29: #{model_v2_forward.1} parent=11 // pred_check
        %p280 = pneg %p185
      $region30: #{model_v2_forward.1} parent=11 // pred_check_branch
        %282 = sbr.rel (%p280) target = $region32
      $region31: #{model_v2_forward.1} parent=11 // pred_region
        _
      $region32: #{model_v2_forward.1} parent=11 // pred_fallthru
        _
      // Predicated region
      $region33: #{model_v2_forward.1} parent=11 // pred_check
        %p283 = pneg %p206
      $region34: #{model_v2_forward.1} parent=11 // pred_check_branch
        %285 = sbr.rel (%p283) target = $region36
      $region35: #{model_v2_forward.1} parent=11 // pred_region
        _
      $region36: #{model_v2_forward.1} parent=11 // pred_fallthru
        _
      // Predicated region
      $region37: #{model_v2_forward.1} parent=11 // pred_check
        %p286 = pneg %p227
      $region38: #{model_v2_forward.1} parent=11 // pred_check_branch
        %288 = sbr.rel (%p286) target = $region40
      $region39: #{model_v2_forward.1} parent=11 // pred_region
        _
      $region40: #{model_v2_forward.1} parent=11 // pred_fallthru
        _
    $region12: #{model_v2_forward.1} parent=5 // pred_fallthru
      _
    %p289 = scmp.lt.s32.totalorder %s16, 4
    // Predicated region
    $region41: #{model_v2_forward.1} parent=5 // pred_check
      %p290 = pneg %p289
    $region42: #{model_v2_forward.1} parent=5 // pred_check_branch
      %292 = sbr.rel (%p290) target = $region44
    $region43: #{model_v2_forward.1} parent=5 // pred_region
      // Predicated region
      $region45: #{model_v2_forward.1} parent=43 // pred_check
        %p293 = pneg %p48
      $region46: #{model_v2_forward.1} parent=43 // pred_check_branch
        %295 = sbr.rel (%p293) target = $region48
      $region47: #{model_v2_forward.1} parent=43 // pred_region
        %p296 = scmp.lt.s32.totalorder %s23, 1
        %s297 = scalar_select %p296, %s23, 1
        %s298 = smul.addr %s297, 6
        %s299 = smul.addr %s298, 8
        %s300 = scalar_lea.vmem %s0, %s299
      $region48: #{model_v2_forward.1} parent=43 // pred_fallthru
        _
      // Predicated region
      $region49: #{model_v2_forward.1} parent=43 // pred_check
        %p301 = pneg %p116
      $region50: #{model_v2_forward.1} parent=43 // pred_check_branch
        %303 = sbr.rel (%p301) target = $region52
      $region51: #{model_v2_forward.1} parent=43 // pred_region
        %p304 = scmp.lt.s32.totalorder %s23, 1
        %s305 = scalar_select %p304, %s23, 1
        %s306 = smul.addr %s305, 8
        %s307 = scalar_lea.vmem %s3, %s306
      $region52: #{model_v2_forward.1} parent=43 // pred_fallthru
        _
    $region44: #{model_v2_forward.1} parent=5 // pred_fallthru
      _
    %p308 = scmp.le.s32.totalorder 1, %s16
    %p309 = scmp.lt.s32.totalorder %s16, 5
    %p310 = pnand %p308, %p309
    %p311 = pneg %p310
    // Predicated region
    $region53: #{model_v2_forward.1} parent=5 // pred_check
      _
    $region54: #{model_v2_forward.1} parent=5 // pred_check_branch
      %313 = sbr.rel (%p310) target = $region56
    $region55: #{model_v2_forward.1} parent=5 // pred_region
      %s314 = ssub.s32 %s16, 1
      %p315 = scmp.lt.s32.totalorder %s25, 1
      %s316 = scalar_select %p315, %s25, 1
      %s317 = smul.addr %s316, 6
      %s318 = smul.addr %s317, 8
      %s319 = scalar_lea.vmem %s0, %s318
      %p320 = pneg %p54
      %p321 = pneg %p51
      %p322 = pneg %p75
      %p323 = pneg %p72
      %p324 = pneg %p96
      %p325 = pneg %p93
      %p326 = scmp.lt.s32.totalorder %s25, 1
      %s327 = scalar_select %p326, %s25, 1
      %s328 = smul.addr %s327, 8
      %s329 = scalar_lea.vmem %s3, %s328
      %p330 = pneg %p122
      %p331 = pneg %p119
      %p332 = pneg %p143
      %p333 = pneg %p140
      %p334 = pneg %p164
      %p335 = pneg %p161
      %p336 = pneg %p185
      %p337 = pneg %p182
      %p338 = pneg %p206
      %p339 = pneg %p203
      %p340 = pneg %p227
      %p341 = pneg %p224
      %p342 = pneg %p253
      %p343 = pneg %p250
      %p344 = scmp.lt.s32.totalorder %s25, 1
      %s345 = scalar_select %p344, %s25, 1
      %s346 = scalar_lea.vmem %s9, %s345
      %p347 = scmp.lt.s32.totalorder %s25, 1
      %s348 = scalar_select %p347, %s25, 1
      %s349 = smul.addr %s348, 6
      %s350 = smul.addr %s349, 8
      %s351 = scalar_lea.vmem %s0, %s350
      %p352 = scmp.lt.s32.totalorder %s25, 1
      %s353 = scalar_select %p352, %s25, 1
      %s354 = smul.addr %s353, 8
      %s355 = scalar_lea.vmem %s3, %s354
      %p356 = scmp.lt.s32.totalorder %s25, 1
      %s357 = scalar_select %p356, %s25, 1
      %s358 = scalar_lea.vmem %s9, %s357
      %p359 = scmp.eq.s32.totalorder %s26, 0
      // Predicated region
      $region57: #{model_v2_forward.1} parent=55 // pred_check
        %p360 = pneg %p359
      $region58: #{model_v2_forward.1} parent=55 // pred_check_branch
        %362 = sbr.rel (%p360) target = $region60
      $region59: #{model_v2_forward.1} parent=55 // pred_region
        %vm363 = vcmask 7168
        %364 = vst.msk [vmem:[#allocation3] sm:$0xff] %vm363, 0.0
        %365 = vst.msk [vmem:[#allocation3 + $0x8] sm:$0xff] %vm363, 0.0
        %366 = vst.msk [vmem:[#allocation3 + $0x10] sm:$0xff] %vm363, 0.0
        %367 = vst.msk [vmem:[#allocation3 + $0x18] sm:$0xff] %vm363, 0.0
      $region60: #{model_v2_forward.1} parent=55 // pred_fallthru
        _
      %s368 = smul.u32 %s26, 8
      %s369 = sadd.s32 %s368, 4294967295
      %p370 = scmp.ge.s32.totalorder %s369, 0
      %p371 = scmp.lt.s32.totalorder %s369, 16
      %p372 = pnand %p370, %p371
      %p373 = pneg %p372
      %s374 = scalar_select %p373, 1, 0
      %s375 = scvt.s32.f32 %s374
      %p376 = scmp.gt.s32.totalorder %s369, 0
      %s377 = scalar_select %p376, %s369, 0
      %p378 = scmp.lt.s32.totalorder %s377, 15
      %s379 = scalar_select %p378, %s377, 15
      %s380 = scalar_lea.vmem %s351, %s379
      %v381 = vld [vmem:[%s380] sm:$0x1]
      %v382 = vstv %s375
      %v383 = vmul.f32 %v381, %v382
      %385 = vrot.lane.b32.xlu0 %v383, 1
      %v386 = vpop.permute.xlu0 %385
      %vm388 = vcmask 7168
      %v389 = vsel %vm388, 0.0, %v386
      %vm390 = vcmask 122880
      %391 = vst.msk [vmem:[#allocation2] sm:$0x1] %vm390, %v389
      %392 = vst.msk [vmem:[#allocation2 + $0x3] sm:$0x1] %vm390, %v383
      %393 = vrot.lane.b32.xlu0 %v383, 127
      %v394 = vpop.permute.xlu0 %393
      %vm396 = vcmask 121856
      %v397 = vsel %vm396, %v394, 0.0
      %398 = vst.msk [vmem:[#allocation2 + $0x6] sm:$0x1] %vm390, %v397
      %s399 = sadd.s32 %s379, 16
      %s400 = scalar_lea.vmem %s351, %s399
      %v401 = vld [vmem:[%s400] sm:$0x1]
      %v402 = vmul.f32 %v401, %v382
      %404 = vrot.lane.b32.xlu0 %v402, 1
      %v405 = vpop.permute.xlu0 %404
      %v407 = vsel %vm388, 0.0, %v405
      %408 = vst.msk [vmem:[#allocation2 + $0x1] sm:$0x1] %vm390, %v407
      %409 = vst.msk [vmem:[#allocation2 + $0x4] sm:$0x1] %vm390, %v402
      %410 = vrot.lane.b32.xlu0 %v402, 127
      %v411 = vpop.permute.xlu0 %410
      %v413 = vsel %vm396, %v411, 0.0
      %414 = vst.msk [vmem:[#allocation2 + $0x7] sm:$0x1] %vm390, %v413
      %s415 = sadd.s32 %s379, 32
      %s416 = scalar_lea.vmem %s351, %s415
      %v417 = vld [vmem:[%s416] sm:$0x1]
      %v418 = vmul.f32 %v417, %v382
      %420 = vrot.lane.b32.xlu0 %v418, 1
      %v421 = vpop.permute.xlu0 %420
      %v423 = vsel %vm388, 0.0, %v421
      %424 = vst.msk [vmem:[#allocation2 + $0x2] sm:$0x1] %vm390, %v423
      %425 = vst.msk [vmem:[#allocation2 + $0x5] sm:$0x1] %vm390, %v418
      %426 = vrot.lane.b32.xlu0 %v418, 127
      %v427 = vpop.permute.xlu0 %426
      %v429 = vsel %vm396, %v427, 0.0
      %430 = vst.msk [vmem:[#allocation2 + $0x8] sm:$0x1] %vm390, %v429
      %p431 = scmp.ge.s32.totalorder %s368, 0
      %p432 = scmp.lt.s32.totalorder %s368, 16
      %p433 = pnand %p431, %p432
      %p434 = pneg %p433
      %s435 = scalar_select %p434, 1, 0
      %s436 = scvt.s32.f32 %s435
      %p437 = scmp.gt.s32.totalorder %s368, 0
      %s438 = scalar_select %p437, %s368, 0
      %p439 = scmp.lt.s32.totalorder %s438, 15
      %s440 = scalar_select %p439, %s438, 15
      %s441 = scalar_lea.vmem %s351, %s440
      %v442 = vld [vmem:[%s441] sm:$0x1]
      %v443 = vstv %s436
      %v444 = vmul.f32 %v442, %v443
      %446 = vrot.lane.b32.xlu0 %v444, 1
      %v447 = vpop.permute.xlu0 %446
      %v449 = vsel %vm388, 0.0, %v447
      %450 = vst.msk [vmem:[#allocation2 + $0x9] sm:$0x1] %vm390, %v449
      %451 = vst.msk [vmem:[#allocation2 + $0xc] sm:$0x1] %vm390, %v444
      %452 = vrot.lane.b32.xlu0 %v444, 127
      %v453 = vpop.permute.xlu0 %452
      %v455 = vsel %vm396, %v453, 0.0
      %456 = vst.msk [vmem:[#allocation2 + $0xf] sm:$0x1] %vm390, %v455
      %s457 = sadd.s32 %s440, 16
      %s458 = scalar_lea.vmem %s351, %s457
      %v459 = vld [vmem:[%s458] sm:$0x1]
      %v460 = vmul.f32 %v459, %v443
      %462 = vrot.lane.b32.xlu0 %v460, 1
      %v463 = vpop.permute.xlu0 %462
      %v465 = vsel %vm388, 0.0, %v463
      %466 = vst.msk [vmem:[#allocation2 + $0xa] sm:$0x1] %vm390, %v465
      %467 = vst.msk [vmem:[#allocation2 + $0xd] sm:$0x1] %vm390, %v460
      %468 = vrot.lane.b32.xlu0 %v460, 127
      %v469 = vpop.permute.xlu0 %468
      %v471 = vsel %vm396, %v469, 0.0
      %472 = vst.msk [vmem:[#allocation2 + $0x10] sm:$0x1] %vm390, %v471
      %s473 = sadd.s32 %s440, 32
      %s474 = scalar_lea.vmem %s351, %s473
      %v475 = vld [vmem:[%s474] sm:$0x1]
      %v476 = vmul.f32 %v475, %v443
      %478 = vrot.lane.b32.xlu0 %v476, 1
      %v479 = vpop.permute.xlu0 %478
      %v481 = vsel %vm388, 0.0, %v479
      %482 = vst.msk [vmem:[#allocation2 + $0xb] sm:$0x1] %vm390, %v481
      %483 = vst.msk [vmem:[#allocation2 + $0xe] sm:$0x1] %vm390, %v476
      %484 = vrot.lane.b32.xlu0 %v476, 127
      %v485 = vpop.permute.xlu0 %484
      %v487 = vsel %vm396, %v485, 0.0
      %488 = vst.msk [vmem:[#allocation2 + $0x11] sm:$0x1] %vm390, %v487
      %s489 = sadd.s32 %s368, 1
      %p490 = scmp.ge.s32.totalorder %s489, 0
      %p491 = scmp.lt.s32.totalorder %s489, 16
      %p492 = pnand %p490, %p491
      %p493 = pneg %p492
      %s494 = scalar_select %p493, 1, 0
      %s495 = scvt.s32.f32 %s494
      %p496 = scmp.gt.s32.totalorder %s489, 0
      %s497 = scalar_select %p496, %s489, 0
      %p498 = scmp.lt.s32.totalorder %s497, 15
      %s499 = scalar_select %p498, %s497, 15
      %s500 = scalar_lea.vmem %s351, %s499
      %v501 = vld [vmem:[%s500] sm:$0x1]
      %v502 = vstv %s495
      %v503 = vmul.f32 %v501, %v502
      %505 = vrot.lane.b32.xlu0 %v503, 1
      %v506 = vpop.permute.xlu0 %505
      %v508 = vsel %vm388, 0.0, %v506
      %509 = vst.msk [vmem:[#allocation2 + $0x12] sm:$0x1] %vm390, %v508
      %510 = vst.msk [vmem:[#allocation2 + $0x15] sm:$0x1] %vm390, %v503
      %511 = vrot.lane.b32.xlu0 %v503, 127
      %v512 = vpop.permute.xlu0 %511
      %v514 = vsel %vm396, %v512, 0.0
      %515 = vst.msk [vmem:[#allocation2 + $0x18] sm:$0x1] %vm390, %v514
      %s516 = sadd.s32 %s499, 16
      %s517 = scalar_lea.vmem %s351, %s516
      %v518 = vld [vmem:[%s517] sm:$0x1]
      %v519 = vmul.f32 %v518, %v502
      %521 = vrot.lane.b32.xlu0 %v519, 1
      %v522 = vpop.permute.xlu0 %521
      %v524 = vsel %vm388, 0.0, %v522
      %525 = vst.msk [vmem:[#allocation2 + $0x13] sm:$0x1] %vm390, %v524
      %526 = vst.msk [vmem:[#allocation2 + $0x16] sm:$0x1] %vm390, %v519
      %527 = vrot.lane.b32.xlu0 %v519, 127
      %v528 = vpop.permute.xlu0 %527
      %v530 = vsel %vm396, %v528, 0.0
      %531 = vst.msk [vmem:[#allocation2 + $0x19] sm:$0x1] %vm390, %v530
      %s532 = sadd.s32 %s499, 32
      %s533 = scalar_lea.vmem %s351, %s532
      %v534 = vld [vmem:[%s533] sm:$0x1]
      %v535 = vmul.f32 %v534, %v502
      %537 = vrot.lane.b32.xlu0 %v535, 1
      %v538 = vpop.permute.xlu0 %537
      %v540 = vsel %vm388, 0.0, %v538
      %541 = vst.msk [vmem:[#allocation2 + $0x14] sm:$0x1] %vm390, %v540
      %542 = vst.msk [vmem:[#allocation2 + $0x17] sm:$0x1] %vm390, %v535
      %543 = vrot.lane.b32.xlu0 %v535, 127
      %v544 = vpop.permute.xlu0 %543
      %v546 = vsel %vm396, %v544, 0.0
      %547 = vst.msk [vmem:[#allocation2 + $0x1a] sm:$0x1] %vm390, %v546
      %v548 = vld [vmem:[%s1] sm:$0xff]
      %v549 = vld [vmem:[%s1 + $0x8] sm:$0xff]
      %v550 = vld [vmem:[%s1 + $0x10] sm:$0xff]
      %v551 = vld [vmem:[%s1 + $0x18] sm:$0xff]
      %v552 = vld [vmem:[#allocation2] sm:$0xff]
      %v553 = vld [vmem:[#allocation2 + $0x8] sm:$0xff]
      %v554 = vld [vmem:[#allocation2 + $0x10] sm:$0xff]
      %v555 = vld [vmem:[#allocation2 + $0x18] sm:$0x7]
      %v556 = vld [vmem:[%s2] sm:$0xff]
      %v557 = vld [vmem:[%s2 + $0x8] sm:$0xff]
      %v558 = vld [vmem:[%s2 + $0x10] sm:$0xff]
      %v559 = vld [vmem:[%s2 + $0x18] sm:$0xff]
      %561 = vset.pattern.permute.xlu0 0
      %562 = vperm.xlu0 %561, %v556
      %v563 = vpop.permute.xlu0 %562
      %566 = vset.pattern.permute.xlu0 0
      %567 = vperm.xlu0 %566, %v557
      %v568 = vpop.permute.xlu0 %567
      %571 = vset.pattern.permute.xlu0 0
      %572 = vperm.xlu0 %571, %v558
      %v573 = vpop.permute.xlu0 %572
      %576 = vset.pattern.permute.xlu0 0
      %577 = vperm.xlu0 %576, %v559
      %v578 = vpop.permute.xlu0 %577
      %vm580 = vcmask 220160
      %v582 = vsel %vm580, %v548, 0
      %v585 = vsel %vm580, %v549, 0
      %v588 = vsel %vm580, %v550, 0
      %v591 = vsel %vm580, %v551, 0
      %vm593 = vcmask 1042432
      %v595 = vsel %vm593, %v555, 0
      %597 = vmatprep.subr.mxu0 0.0
      %598 = vmatpush1.msra.mxu0 0.0
      %599 = vmatprep.subr.mxu0 0.0
      %600 = vmatpush1.msra.mxu0 0.0
      %601 = vmatprep.subr.mxu0 0.0
      %602 = vmatpush1.msra.mxu0 0.0
      %603 = vmatprep.subr.mxu0 0.0
      %604 = vmatpush1.msra.mxu0 0.0
      %605 = vmatprep.subr.mxu0 0.0
      %606 = vmatpush1.msra.mxu0 0.0
      %607 = vmatprep.subr.mxu0 0.0
      %608 = vmatpush1.msra.mxu0 0.0
      %609 = vmatprep.subr.mxu0 0.0
      %610 = vmatpush1.msra.mxu0 0.0
      %611 = vmatprep.subr.mxu0 0.0
      %612 = vmatpush1.msra.mxu0 0.0
      %613 = vmatprep.subr.mxu0 0.0
      %614 = vmatpush1.msra.mxu0 0.0
      %615 = vmatprep.subr.mxu0 0.0
      %616 = vmatpush1.msra.mxu0 0.0
      %617 = vmatprep.subr.mxu0 0.0
      %618 = vmatpush1.msra.mxu0 0.0
      %619 = vmatprep.subr.mxu0 0.0
      %620 = vmatpush1.msra.mxu0 0.0
      %621 = vmatprep.subr.mxu0 0.0
      %622 = vmatpush1.msra.mxu0 %v595
      %623 = vmatprep.subr.mxu0 0.0
      %624 = vmatpush1.msra.mxu0 %v554
      %625 = vmatprep.subr.mxu0 0.0
      %626 = vmatpush1.msra.mxu0 %v553
      %627 = vmatprep.subr.mxu0 0.0
      %628 = vmatpush1.msra.mxu0 %v552
      %629 = vmatprep.subr.mxu0 0.0
      %630 = vmatpush2.msra.mxu0 0.0
      %631 = vmatprep.subr.mxu0 0.0
      %632 = vmatpush2.msra.mxu0 0.0
      %633 = vmatprep.subr.mxu0 0.0
      %634 = vmatpush2.msra.mxu0 0.0
      %635 = vmatprep.subr.mxu0 0.0
      %636 = vmatpush2.msra.mxu0 0.0
      %637 = vmatprep.subr.mxu0 0.0
      %638 = vmatpush2.msra.mxu0 0.0
      %639 = vmatprep.subr.mxu0 0.0
      %640 = vmatpush2.msra.mxu0 0.0
      %641 = vmatprep.subr.mxu0 0.0
      %642 = vmatpush2.msra.mxu0 0.0
      %643 = vmatprep.subr.mxu0 0.0
      %644 = vmatpush2.msra.mxu0 0.0
      %645 = vmatprep.subr.mxu0 0.0
      %646 = vmatpush2.msra.mxu0 0.0
      %647 = vmatprep.subr.mxu0 0.0
      %648 = vmatpush2.msra.mxu0 0.0
      %649 = vmatprep.subr.mxu0 0.0
      %650 = vmatpush2.msra.mxu0 0.0
      %651 = vmatprep.subr.mxu0 0.0
      %652 = vmatpush2.msra.mxu0 0.0
      %653 = vmatprep.subr.mxu0 0.0
      %654 = vmatpush2.msra.mxu0 0.0
      %655 = vmatprep.subr.mxu0 0.0
      %656 = vmatpush2.msra.mxu0 0.0
      %657 = vmatprep.subr.mxu0 0.0
      %658 = vmatpush2.msra.mxu0 0.0
      %659 = vmatprep.subr.mxu0 0.0
      %660 = vmatpush2.msra.mxu0 0.0
      %661 = vmatprep.mubr.f32.mxu0 0.0
      %662 = vmatmul.mubr.f32.gmra.mxu0 %v582
      %v663 = vpop.f32.mrf.mxu0
      %v664 = vadd.f32 %v563, %v663
      %v665 = vpop.f32.mrf.mxu0
      %666 = vmatprep.mubr.f32.mxu0 0.0
      %667 = vmatmul.mubr.f32.gmra.mxu0 %v585
      %v668 = vpop.f32.mrf.mxu0
      %v669 = vadd.f32 %v568, %v668
      %v670 = vpop.f32.mrf.mxu0
      %671 = vmatprep.mubr.f32.mxu0 0.0
      %672 = vmatmul.mubr.f32.gmra.mxu0 %v588
      %v673 = vpop.f32.mrf.mxu0
      %v674 = vadd.f32 %v573, %v673
      %v675 = vpop.f32.mrf.mxu0
      %676 = vmatprep.mubr.f32.mxu0 0.0
      %677 = vmatmul.mubr.f32.gmra.mxu0 %v591
      %v678 = vpop.f32.mrf.mxu0
      %v679 = vadd.f32 %v578, %v678
      %v680 = vpop.f32.mrf.mxu0
      %681 = vdwg.mxu0
      %v682 = vmax.f32 %v664, 0.0
      %v683 = vmax.f32 %v669, 0.0
      %v684 = vmax.f32 %v674, 0.0
      %v685 = vmax.f32 %v679, 0.0
      %v686 = vld [vmem:[#allocation3] sm:$0xff]
      %v687 = vld [vmem:[#allocation3 + $0x8] sm:$0xff]
      %v688 = vld [vmem:[#allocation3 + $0x10] sm:$0xff]
      %v689 = vld [vmem:[#allocation3 + $0x18] sm:$0xff]
      %vm690 = vcmask 130048
      %v691 = vsel %vm690, %v682, 0.0
      %692 = vadd.xlane.f32.xlu0 %v691
      %v693 = vpop.xlane.xlu0 %692
      %v694 = vsel %vm690, %v683, 0.0
      %695 = vadd.xlane.f32.xlu0 %v694
      %v696 = vpop.xlane.xlu0 %695
      %v697 = vsel %vm690, %v684, 0.0
      %698 = vadd.xlane.f32.xlu0 %v697
      %v699 = vpop.xlane.xlu0 %698
      %v700 = vsel %vm690, %v685, 0.0
      %701 = vadd.xlane.f32.xlu0 %v700
      %v702 = vpop.xlane.xlu0 %701
      %v703 = vadd.f32 %v686, %v693
      %v704 = vadd.f32 %v687, %v696
      %v705 = vadd.f32 %v688, %v699
      %v706 = vadd.f32 %v689, %v702
      %707 = vst.msk [vmem:[#allocation3] sm:$0xff] %vm388, %v703
      %708 = vst.msk [vmem:[#allocation3 + $0x8] sm:$0xff] %vm388, %v704
      %709 = vst.msk [vmem:[#allocation3 + $0x10] sm:$0xff] %vm388, %v705
      %710 = vst.msk [vmem:[#allocation3 + $0x18] sm:$0xff] %vm388, %v706
      %v711 = vld [vmem:[%s441] sm:$0x1]
      %v712 = vmul.f32 %v711, %v443
      %714 = vrot.lane.b32.xlu0 %v712, 1
      %v715 = vpop.permute.xlu0 %714
      %v717 = vsel %vm388, 0.0, %v715
      %718 = vst.msk [vmem:[#allocation2] sm:$0x1] %vm390, %v717
      %719 = vst.msk [vmem:[#allocation2 + $0x3] sm:$0x1] %vm390, %v712
      %720 = vrot.lane.b32.xlu0 %v712, 127
      %v721 = vpop.permute.xlu0 %720
      %v723 = vsel %vm396, %v721, 0.0
      %724 = vst.msk [vmem:[#allocation2 + $0x6] sm:$0x1] %vm390, %v723
      %v725 = vld [vmem:[%s458] sm:$0x1]
      %v726 = vmul.f32 %v725, %v443
      %728 = vrot.lane.b32.xlu0 %v726, 1
      %v729 = vpop.permute.xlu0 %728
      %v731 = vsel %vm388, 0.0, %v729
      %732 = vst.msk [vmem:[#allocation2 + $0x1] sm:$0x1] %vm390, %v731
      %733 = vst.msk [vmem:[#allocation2 + $0x4] sm:$0x1] %vm390, %v726
      %734 = vrot.lane.b32.xlu0 %v726, 127
      %v735 = vpop.permute.xlu0 %734
      %v737 = vsel %vm396, %v735, 0.0
      %738 = vst.msk [vmem:[#allocation2 + $0x7] sm:$0x1] %vm390, %v737
      %v739 = vld [vmem:[%s474] sm:$0x1]
      %v740 = vmul.f32 %v739, %v443
      %742 = vrot.lane.b32.xlu0 %v740, 1
      %v743 = vpop.permute.xlu0 %742
      %v745 = vsel %vm388, 0.0, %v743
      %746 = vst.msk [vmem:[#allocation2 + $0x2] sm:$0x1] %vm390, %v745
      %747 = vst.msk [vmem:[#allocation2 + $0x5] sm:$0x1] %vm390, %v740
      %748 = vrot.lane.b32.xlu0 %v740, 127
      %v749 = vpop.permute.xlu0 %748
      %v751 = vsel %vm396, %v749, 0.0
      %752 = vst.msk [vmem:[#allocation2 + $0x8] sm:$0x1] %vm390, %v751
      %v753 = vld [vmem:[%s500] sm:$0x1]
      %v754 = vmul.f32 %v753, %v502
      %756 = vrot.lane.b32.xlu0 %v754, 1
      %v757 = vpop.permute.xlu0 %756
      %v759 = vsel %vm388, 0.0, %v757
      %760 = vst.msk [vmem:[#allocation2 + $0x9] sm:$0x1] %vm390, %v759
      %761 = vst.msk [vmem:[#allocation2 + $0xc] sm:$0x1] %vm390, %v754
      %762 = vrot.lane.b32.xlu0 %v754, 127
      %v763 = vpop.permute.xlu0 %762
      %v765 = vsel %vm396, %v763, 0.0
      %766 = vst.msk [vmem:[#allocation2 + $0xf] sm:$0x1] %vm390, %v765
      %v767 = vld [vmem:[%s517] sm:$0x1]
      %v768 = vmul.f32 %v767, %v502
      %770 = vrot.lane.b32.xlu0 %v768, 1
      %v771 = vpop.permute.xlu0 %770
      %v773 = vsel %vm388, 0.0, %v771
      %774 = vst.msk [vmem:[#allocation2 + $0xa] sm:$0x1] %vm390, %v773
      %775 = vst.msk [vmem:[#allocation2 + $0xd] sm:$0x1] %vm390, %v768
      %776 = vrot.lane.b32.xlu0 %v768, 127
      %v777 = vpop.permute.xlu0 %776
      %v779 = vsel %vm396, %v777, 0.0
      %780 = vst.msk [vmem:[#allocation2 + $0x10] sm:$0x1] %vm390, %v779
      %v781 = vld [vmem:[%s533] sm:$0x1]
      %v782 = vmul.f32 %v781, %v502
      %784 = vrot.lane.b32.xlu0 %v782, 1
      %v785 = vpop.permute.xlu0 %784
      %v787 = vsel %vm388, 0.0, %v785
      %788 = vst.msk [vmem:[#allocation2 + $0xb] sm:$0x1] %vm390, %v787
      %789 = vst.msk [vmem:[#allocation2 + $0xe] sm:$0x1] %vm390, %v782
      %790 = vrot.lane.b32.xlu0 %v782, 127
      %v791 = vpop.permute.xlu0 %790
      %v793 = vsel %vm396, %v791, 0.0
      %794 = vst.msk [vmem:[#allocation2 + $0x11] sm:$0x1] %vm390, %v793
      %s795 = sadd.s32 %s368, 2
      %p796 = scmp.ge.s32.totalorder %s795, 0
      %p797 = scmp.lt.s32.totalorder %s795, 16
      %p798 = pnand %p796, %p797
      %p799 = pneg %p798
      %s800 = scalar_select %p799, 1, 0
      %s801 = scvt.s32.f32 %s800
      %p802 = scmp.gt.s32.totalorder %s795, 0
      %s803 = scalar_select %p802, %s795, 0
      %p804 = scmp.lt.s32.totalorder %s803, 15
      %s805 = scalar_select %p804, %s803, 15
      %s806 = scalar_lea.vmem %s351, %s805
      %v807 = vld [vmem:[%s806] sm:$0x1]
      %v808 = vstv %s801
      %v809 = vmul.f32 %v807, %v808
      %811 = vrot.lane.b32.xlu0 %v809, 1
      %v812 = vpop.permute.xlu0 %811
      %v814 = vsel %vm388, 0.0, %v812
      %815 = vst.msk [vmem:[#allocation2 + $0x12] sm:$0x1] %vm390, %v814
      %816 = vst.msk [vmem:[#allocation2 + $0x15] sm:$0x1] %vm390, %v809
      %817 = vrot.lane.b32.xlu0 %v809, 127
      %v818 = vpop.permute.xlu0 %817
      %v820 = vsel %vm396, %v818, 0.0
      %821 = vst.msk [vmem:[#allocation2 + $0x18] sm:$0x1] %vm390, %v820
      %s822 = sadd.s32 %s805, 16
      %s823 = scalar_lea.vmem %s351, %s822
      %v824 = vld [vmem:[%s823] sm:$0x1]
      %v825 = vmul.f32 %v824, %v808
      %827 = vrot.lane.b32.xlu0 %v825, 1
      %v828 = vpop.permute.xlu0 %827
      %v830 = vsel %vm388, 0.0, %v828
      %831 = vst.msk [vmem:[#allocation2 + $0x13] sm:$0x1] %vm390, %v830
      %832 = vst.msk [vmem:[#allocation2 + $0x16] sm:$0x1] %vm390, %v825
      %833 = vrot.lane.b32.xlu0 %v825, 127
      %v834 = vpop.permute.xlu0 %833
      %v836 = vsel %vm396, %v834, 0.0
      %837 = vst.msk [vmem:[#allocation2 + $0x19] sm:$0x1] %vm390, %v836
      %s838 = sadd.s32 %s805, 32
      %s839 = scalar_lea.vmem %s351, %s838
      %v840 = vld [vmem:[%s839] sm:$0x1]
      %v841 = vmul.f32 %v840, %v808
      %843 = vrot.lane.b32.xlu0 %v841, 1
      %v844 = vpop.permute.xlu0 %843
      %v846 = vsel %vm388, 0.0, %v844
      %847 = vst.msk [vmem:[#allocation2 + $0x14] sm:$0x1] %vm390, %v846
      %848 = vst.msk [vmem:[#allocation2 + $0x17] sm:$0x1] %vm390, %v841
      %849 = vrot.lane.b32.xlu0 %v841, 127
      %v850 = vpop.permute.xlu0 %849
      %v852 = vsel %vm396, %v850, 0.0
      %853 = vst.msk [vmem:[#allocation2 + $0x1a] sm:$0x1] %vm390, %v852
      %v854 = vld [vmem:[%s1] sm:$0xff]
      %v855 = vld [vmem:[%s1 + $0x8] sm:$0xff]
      %v856 = vld [vmem:[%s1 + $0x10] sm:$0xff]
      %v857 = vld [vmem:[%s1 + $0x18] sm:$0xff]
      %v858 = vld [vmem:[#allocation2] sm:$0xff]
      %v859 = vld [vmem:[#allocation2 + $0x8] sm:$0xff]
      %v860 = vld [vmem:[#allocation2 + $0x10] sm:$0xff]
      %v861 = vld [vmem:[#allocation2 + $0x18] sm:$0x7]
      %v862 = vld [vmem:[%s2] sm:$0xff]
      %v863 = vld [vmem:[%s2 + $0x8] sm:$0xff]
      %v864 = vld [vmem:[%s2 + $0x10] sm:$0xff]
      %v865 = vld [vmem:[%s2 + $0x18] sm:$0xff]
      %867 = vset.pattern.permute.xlu0 0
      %868 = vperm.xlu0 %867, %v862
      %v869 = vpop.permute.xlu0 %868
      %872 = vset.pattern.permute.xlu0 0
      %873 = vperm.xlu0 %872, %v863
      %v874 = vpop.permute.xlu0 %873
      %877 = vset.pattern.permute.xlu0 0
      %878 = vperm.xlu0 %877, %v864
      %v879 = vpop.permute.xlu0 %878
      %882 = vset.pattern.permute.xlu0 0
      %883 = vperm.xlu0 %882, %v865
      %v884 = vpop.permute.xlu0 %883
      %v887 = vsel %vm580, %v854, 0
      %v890 = vsel %vm580, %v855, 0
      %v893 = vsel %vm580, %v856, 0
      %v896 = vsel %vm580, %v857, 0
      %v899 = vsel %vm593, %v861, 0
      %901 = vmatprep.subr.mxu0 0.0
      %902 = vmatpush1.msra.mxu0 0.0
      %903 = vmatprep.subr.mxu0 0.0
      %904 = vmatpush1.msra.mxu0 0.0
      %905 = vmatprep.subr.mxu0 0.0
      %906 = vmatpush1.msra.mxu0 0.0
      %907 = vmatprep.subr.mxu0 0.0
      %908 = vmatpush1.msra.mxu0 0.0
      %909 = vmatprep.subr.mxu0 0.0
      %910 = vmatpush1.msra.mxu0 0.0
      %911 = vmatprep.subr.mxu0 0.0
      %912 = vmatpush1.msra.mxu0 0.0
      %913 = vmatprep.subr.mxu0 0.0
      %914 = vmatpush1.msra.mxu0 0.0
      %915 = vmatprep.subr.mxu0 0.0
      %916 = vmatpush1.msra.mxu0 0.0
      %917 = vmatprep.subr.mxu0 0.0
      %918 = vmatpush1.msra.mxu0 0.0
      %919 = vmatprep.subr.mxu0 0.0
      %920 = vmatpush1.msra.mxu0 0.0
      %921 = vmatprep.subr.mxu0 0.0
      %922 = vmatpush1.msra.mxu0 0.0
      %923 = vmatprep.subr.mxu0 0.0
      %924 = vmatpush1.msra.mxu0 0.0
      %925 = vmatprep.subr.mxu0 0.0
      %926 = vmatpush1.msra.mxu0 %v899
      %927 = vmatprep.subr.mxu0 0.0
      %928 = vmatpush1.msra.mxu0 %v860
      %929 = vmatprep.subr.mxu0 0.0
      %930 = vmatpush1.msra.mxu0 %v859
      %931 = vmatprep.subr.mxu0 0.0
      %932 = vmatpush1.msra.mxu0 %v858
      %933 = vmatprep.subr.mxu0 0.0
      %934 = vmatpush2.msra.mxu0 0.0
      %935 = vmatprep.subr.mxu0 0.0
      %936 = vmatpush2.msra.mxu0 0.0
      %937 = vmatprep.subr.mxu0 0.0
      %938 = vmatpush2.msra.mxu0 0.0
      %939 = vmatprep.subr.mxu0 0.0
      %940 = vmatpush2.msra.mxu0 0.0
      %941 = vmatprep.subr.mxu0 0.0
      %942 = vmatpush2.msra.mxu0 0.0
      %943 = vmatprep.subr.mxu0 0.0
      %944 = vmatpush2.msra.mxu0 0.0
      %945 = vmatprep.subr.mxu0 0.0
      %946 = vmatpush2.msra.mxu0 0.0
      %947 = vmatprep.subr.mxu0 0.0
      %948 = vmatpush2.msra.mxu0 0.0
      %949 = vmatprep.subr.mxu0 0.0
      %950 = vmatpush2.msra.mxu0 0.0
      %951 = vmatprep.subr.mxu0 0.0
      %952 = vmatpush2.msra.mxu0 0.0
      %953 = vmatprep.subr.mxu0 0.0
      %954 = vmatpush2.msra.mxu0 0.0
      %955 = vmatprep.subr.mxu0 0.0
      %956 = vmatpush2.msra.mxu0 0.0
      %957 = vmatprep.subr.mxu0 0.0
      %958 = vmatpush2.msra.mxu0 0.0
      %959 = vmatprep.subr.mxu0 0.0
      %960 = vmatpush2.msra.mxu0 0.0
      %961 = vmatprep.subr.mxu0 0.0
      %962 = vmatpush2.msra.mxu0 0.0
      %963 = vmatprep.subr.mxu0 0.0
      %964 = vmatpush2.msra.mxu0 0.0
      %965 = vmatprep.mubr.f32.mxu0 0.0
      %966 = vmatmul.mubr.f32.gmra.mxu0 %v887
      %v967 = vpop.f32.mrf.mxu0
      %v968 = vadd.f32 %v869, %v967
      %v969 = vpop.f32.mrf.mxu0
      %970 = vmatprep.mubr.f32.mxu0 0.0
      %971 = vmatmul.mubr.f32.gmra.mxu0 %v890
      %v972 = vpop.f32.mrf.mxu0
      %v973 = vadd.f32 %v874, %v972
      %v974 = vpop.f32.mrf.mxu0
      %975 = vmatprep.mubr.f32.mxu0 0.0
      %976 = vmatmul.mubr.f32.gmra.mxu0 %v893
      %v977 = vpop.f32.mrf.mxu0
      %v978 = vadd.f32 %v879, %v977
      %v979 = vpop.f32.mrf.mxu0
      %980 = vmatprep.mubr.f32.mxu0 0.0
      %981 = vmatmul.mubr.f32.gmra.mxu0 %v896
      %v982 = vpop.f32.mrf.mxu0
      %v983 = vadd.f32 %v884, %v982
      %v984 = vpop.f32.mrf.mxu0
      %985 = vdwg.mxu0
      %v986 = vmax.f32 %v968, 0.0
      %v987 = vmax.f32 %v973, 0.0
      %v988 = vmax.f32 %v978, 0.0
      %v989 = vmax.f32 %v983, 0.0
      %v990 = vld [vmem:[#allocation3] sm:$0xff]
      %v991 = vld [vmem:[#allocation3 + $0x8] sm:$0xff]
      %v992 = vld [vmem:[#allocation3 + $0x10] sm:$0xff]
      %v993 = vld [vmem:[#allocation3 + $0x18] sm:$0xff]
      %v994 = vsel %vm690, %v986, 0.0
      %995 = vadd.xlane.f32.xlu0 %v994
      %v996 = vpop.xlane.xlu0 %995
      %v997 = vsel %vm690, %v987, 0.0
      %998 = vadd.xlane.f32.xlu0 %v997
      %v999 = vpop.xlane.xlu0 %998
      %v1000 = vsel %vm690, %v988, 0.0
      %1001 = vadd.xlane.f32.xlu0 %v1000
      %v1002 = vpop.xlane.xlu0 %1001
      %v1003 = vsel %vm690, %v989, 0.0
      %1004 = vadd.xlane.f32.xlu0 %v1003
      %v1005 = vpop.xlane.xlu0 %1004
      %v1006 = vadd.f32 %v990, %v996
      %v1007 = vadd.f32 %v991, %v999
      %v1008 = vadd.f32 %v992, %v1002
      %v1009 = vadd.f32 %v993, %v1005
      %1010 = vst.msk [vmem:[#allocation3] sm:$0xff] %vm388, %v1006
      %1011 = vst.msk [vmem:[#allocation3 + $0x8] sm:$0xff] %vm388, %v1007
      %1012 = vst.msk [vmem:[#allocation3 + $0x10] sm:$0xff] %vm388, %v1008
      %1013 = vst.msk [vmem:[#allocation3 + $0x18] sm:$0xff] %vm388, %v1009
      %v1014 = vld [vmem:[%s500] sm:$0x1]
      %v1015 = vmul.f32 %v1014, %v502
      %1017 = vrot.lane.b32.xlu0 %v1015, 1
      %v1018 = vpop.permute.xlu0 %1017
      %v1020 = vsel %vm388, 0.0, %v1018
      %1021 = vst.msk [vmem:[#allocation2] sm:$0x1] %vm390, %v1020
      %1022 = vst.msk [vmem:[#allocation2 + $0x3] sm:$0x1] %vm390, %v1015
      %1023 = vrot.lane.b32.xlu0 %v1015, 127
      %v1024 = vpop.permute.xlu0 %1023
      %v1026 = vsel %vm396, %v1024, 0.0
      %1027 = vst.msk [vmem:[#allocation2 + $0x6] sm:$0x1] %vm390, %v1026
      %v1028 = vld [vmem:[%s517] sm:$0x1]
      %v1029 = vmul.f32 %v1028, %v502
      %1031 = vrot.lane.b32.xlu0 %v1029, 1
      %v1032 = vpop.permute.xlu0 %1031
      %v1034 = vsel %vm388, 0.0, %v1032
      %1035 = vst.msk [vmem:[#allocation2 + $0x1] sm:$0x1] %vm390, %v1034
      %1036 = vst.msk [vmem:[#allocation2 + $0x4] sm:$0x1] %vm390, %v1029
      %1037 = vrot.lane.b32.xlu0 %v1029, 127
      %v1038 = vpop.permute.xlu0 %1037
      %v1040 = vsel %vm396, %v1038, 0.0
      %1041 = vst.msk [vmem:[#allocation2 + $0x7] sm:$0x1] %vm390, %v1040
      %v1042 = vld [vmem:[%s533] sm:$0x1]
      %v1043 = vmul.f32 %v1042, %v502
      %1045 = vrot.lane.b32.xlu0 %v1043, 1
      %v1046 = vpop.permute.xlu0 %1045
      %v1048 = vsel %vm388, 0.0, %v1046
      %1049 = vst.msk [vmem:[#allocation2 + $0x2] sm:$0x1] %vm390, %v1048
      %1050 = vst.msk [vmem:[#allocation2 + $0x5] sm:$0x1] %vm390, %v1043
      %1051 = vrot.lane.b32.xlu0 %v1043, 127
      %v1052 = vpop.permute.xlu0 %1051
      %v1054 = vsel %vm396, %v1052, 0.0
      %1055 = vst.msk [vmem:[#allocation2 + $0x8] sm:$0x1] %vm390, %v1054
      %v1056 = vld [vmem:[%s806] sm:$0x1]
      %v1057 = vmul.f32 %v1056, %v808
      %1059 = vrot.lane.b32.xlu0 %v1057, 1
      %v1060 = vpop.permute.xlu0 %1059
      %v1062 = vsel %vm388, 0.0, %v1060
      %1063 = vst.msk [vmem:[#allocation2 + $0x9] sm:$0x1] %vm390, %v1062
      %1064 = vst.msk [vmem:[#allocation2 + $0xc] sm:$0x1] %vm390, %v1057
      %1065 = vrot.lane.b32.xlu0 %v1057, 127
      %v1066 = vpop.permute.xlu0 %1065
      %v1068 = vsel %vm396, %v1066, 0.0
      %1069 = vst.msk [vmem:[#allocation2 + $0xf] sm:$0x1] %vm390, %v1068
      %v1070 = vld [vmem:[%s823] sm:$0x1]
      %v1071 = vmul.f32 %v1070, %v808
      %1073 = vrot.lane.b32.xlu0 %v1071, 1
      %v1074 = vpop.permute.xlu0 %1073
      %v1076 = vsel %vm388, 0.0, %v1074
      %1077 = vst.msk [vmem:[#allocation2 + $0xa] sm:$0x1] %vm390, %v1076
      %1078 = vst.msk [vmem:[#allocation2 + $0xd] sm:$0x1] %vm390, %v1071
      %1079 = vrot.lane.b32.xlu0 %v1071, 127
      %v1080 = vpop.permute.xlu0 %1079
      %v1082 = vsel %vm396, %v1080, 0.0
      %1083 = vst.msk [vmem:[#allocation2 + $0x10] sm:$0x1] %vm390, %v1082
      %v1084 = vld [vmem:[%s839] sm:$0x1]
      %v1085 = vmul.f32 %v1084, %v808
      %1087 = vrot.lane.b32.xlu0 %v1085, 1
      %v1088 = vpop.permute.xlu0 %1087
      %v1090 = vsel %vm388, 0.0, %v1088
      %1091 = vst.msk [vmem:[#allocation2 + $0xb] sm:$0x1] %vm390, %v1090
      %1092 = vst.msk [vmem:[#allocation2 + $0xe] sm:$0x1] %vm390, %v1085
      %1093 = vrot.lane.b32.xlu0 %v1085, 127
      %v1094 = vpop.permute.xlu0 %1093
      %v1096 = vsel %vm396, %v1094, 0.0
      %1097 = vst.msk [vmem:[#allocation2 + $0x11] sm:$0x1] %vm390, %v1096
      %s1098 = sadd.s32 %s368, 3
      %p1099 = scmp.ge.s32.totalorder %s1098, 0
      %p1100 = scmp.lt.s32.totalorder %s1098, 16
      %p1101 = pnand %p1099, %p1100
      %p1102 = pneg %p1101
      %s1103 = scalar_select %p1102, 1, 0
      %s1104 = scvt.s32.f32 %s1103
      %p1105 = scmp.gt.s32.totalorder %s1098, 0
      %s1106 = scalar_select %p1105, %s1098, 0
      %p1107 = scmp.lt.s32.totalorder %s1106, 15
      %s1108 = scalar_select %p1107, %s1106, 15
      %s1109 = scalar_lea.vmem %s351, %s1108
      %v1110 = vld [vmem:[%s1109] sm:$0x1]
      %v1111 = vstv %s1104
      %v1112 = vmul.f32 %v1110, %v1111
      %1114 = vrot.lane.b32.xlu0 %v1112, 1
      %v1115 = vpop.permute.xlu0 %1114
      %v1117 = vsel %vm388, 0.0, %v1115
      %1118 = vst.msk [vmem:[#allocation2 + $0x12] sm:$0x1] %vm390, %v1117
      %1119 = vst.msk [vmem:[#allocation2 + $0x15] sm:$0x1] %vm390, %v1112
      %1120 = vrot.lane.b32.xlu0 %v1112, 127
      %v1121 = vpop.permute.xlu0 %1120
      %v1123 = vsel %vm396, %v1121, 0.0
      %1124 = vst.msk [vmem:[#allocation2 + $0x18] sm:$0x1] %vm390, %v1123
      %s1125 = sadd.s32 %s1108, 16
      %s1126 = scalar_lea.vmem %s351, %s1125
      %v1127 = vld [vmem:[%s1126] sm:$0x1]
      %v1128 = vmul.f32 %v1127, %v1111
      %1130 = vrot.lane.b32.xlu0 %v1128, 1
      %v1131 = vpop.permute.xlu0 %1130
      %v1133 = vsel %vm388, 0.0, %v1131
      %1134 = vst.msk [vmem:[#allocation2 + $0x13] sm:$0x1] %vm390, %v1133
      %1135 = vst.msk [vmem:[#allocation2 + $0x16] sm:$0x1] %vm390, %v1128
      %1136 = vrot.lane.b32.xlu0 %v1128, 127
      %v1137 = vpop.permute.xlu0 %1136
      %v1139 = vsel %vm396, %v1137, 0.0
      %1140 = vst.msk [vmem:[#allocation2 + $0x19] sm:$0x1] %vm390, %v1139
      %s1141 = sadd.s32 %s1108, 32
      %s1142 = scalar_lea.vmem %s351, %s1141
      %v1143 = vld [vmem:[%s1142] sm:$0x1]
      %v1144 = vmul.f32 %v1143, %v1111
      %1146 = vrot.lane.b32.xlu0 %v1144, 1
      %v1147 = vpop.permute.xlu0 %1146
      %v1149 = vsel %vm388, 0.0, %v1147
      %1150 = vst.msk [vmem:[#allocation2 + $0x14] sm:$0x1] %vm390, %v1149
      %1151 = vst.msk [vmem:[#allocation2 + $0x17] sm:$0x1] %vm390, %v1144
      %1152 = vrot.lane.b32.xlu0 %v1144, 127
      %v1153 = vpop.permute.xlu0 %1152
      %v1155 = vsel %vm396, %v1153, 0.0
      %1156 = vst.msk [vmem:[#allocation2 + $0x1a] sm:$0x1] %vm390, %v1155
      %v1157 = vld [vmem:[%s1] sm:$0xff]
      %v1158 = vld [vmem:[%s1 + $0x8] sm:$0xff]
      %v1159 = vld [vmem:[%s1 + $0x10] sm:$0xff]
      %v1160 = vld [vmem:[%s1 + $0x18] sm:$0xff]
      %v1161 = vld [vmem:[#allocation2] sm:$0xff]
      %v1162 = vld [vmem:[#allocation2 + $0x8] sm:$0xff]
      %v1163 = vld [vmem:[#allocation2 + $0x10] sm:$0xff]
      %v1164 = vld [vmem:[#allocation2 + $0x18] sm:$0x7]
      %v1165 = vld [vmem:[%s2] sm:$0xff]
      %v1166 = vld [vmem:[%s2 + $0x8] sm:$0xff]
      %v1167 = vld [vmem:[%s2 + $0x10] sm:$0xff]
      %v1168 = vld [vmem:[%s2 + $0x18] sm:$0xff]
      %1170 = vset.pattern.permute.xlu0 0
      %1171 = vperm.xlu0 %1170, %v1165
      %v1172 = vpop.permute.xlu0 %1171
      %1175 = vset.pattern.permute.xlu0 0
      %1176 = vperm.xlu0 %1175, %v1166
      %v1177 = vpop.permute.xlu0 %1176
      %1180 = vset.pattern.permute.xlu0 0
      %1181 = vperm.xlu0 %1180, %v1167
      %v1182 = vpop.permute.xlu0 %1181
      %1185 = vset.pattern.permute.xlu0 0
      %1186 = vperm.xlu0 %1185, %v1168
      %v1187 = vpop.permute.xlu0 %1186
      %v1190 = vsel %vm580, %v1157, 0
      %v1193 = vsel %vm580, %v1158, 0
      %v1196 = vsel %vm580, %v1159, 0
      %v1199 = vsel %vm580, %v1160, 0
      %v1202 = vsel %vm593, %v1164, 0
      %1204 = vmatprep.subr.mxu0 0.0
      %1205 = vmatpush1.msra.mxu0 0.0
      %1206 = vmatprep.subr.mxu0 0.0
      %1207 = vmatpush1.msra.mxu0 0.0
      %1208 = vmatprep.subr.mxu0 0.0
      %1209 = vmatpush1.msra.mxu0 0.0
      %1210 = vmatprep.subr.mxu0 0.0
      %1211 = vmatpush1.msra.mxu0 0.0
      %1212 = vmatprep.subr.mxu0 0.0
      %1213 = vmatpush1.msra.mxu0 0.0
      %1214 = vmatprep.subr.mxu0 0.0
      %1215 = vmatpush1.msra.mxu0 0.0
      %1216 = vmatprep.subr.mxu0 0.0
      %1217 = vmatpush1.msra.mxu0 0.0
      %1218 = vmatprep.subr.mxu0 0.0
      %1219 = vmatpush1.msra.mxu0 0.0
      %1220 = vmatprep.subr.mxu0 0.0
      %1221 = vmatpush1.msra.mxu0 0.0
      %1222 = vmatprep.subr.mxu0 0.0
      %1223 = vmatpush1.msra.mxu0 0.0
      %1224 = vmatprep.subr.mxu0 0.0
      %1225 = vmatpush1.msra.mxu0 0.0
      %1226 = vmatprep.subr.mxu0 0.0
      %1227 = vmatpush1.msra.mxu0 0.0
      %1228 = vmatprep.subr.mxu0 0.0
      %1229 = vmatpush1.msra.mxu0 %v1202
      %1230 = vmatprep.subr.mxu0 0.0
      %1231 = vmatpush1.msra.mxu0 %v1163
      %1232 = vmatprep.subr.mxu0 0.0
      %1233 = vmatpush1.msra.mxu0 %v1162
      %1234 = vmatprep.subr.mxu0 0.0
      %1235 = vmatpush1.msra.mxu0 %v1161
      %1236 = vmatprep.subr.mxu0 0.0
      %1237 = vmatpush2.msra.mxu0 0.0
      %1238 = vmatprep.subr.mxu0 0.0
      %1239 = vmatpush2.msra.mxu0 0.0
      %1240 = vmatprep.subr.mxu0 0.0
      %1241 = vmatpush2.msra.mxu0 0.0
      %1242 = vmatprep.subr.mxu0 0.0
      %1243 = vmatpush2.msra.mxu0 0.0
      %1244 = vmatprep.subr.mxu0 0.0
      %1245 = vmatpush2.msra.mxu0 0.0
      %1246 = vmatprep.subr.mxu0 0.0
      %1247 = vmatpush2.msra.mxu0 0.0
      %1248 = vmatprep.subr.mxu0 0.0
      %1249 = vmatpush2.msra.mxu0 0.0
      %1250 = vmatprep.subr.mxu0 0.0
      %1251 = vmatpush2.msra.mxu0 0.0
      %1252 = vmatprep.subr.mxu0 0.0
      %1253 = vmatpush2.msra.mxu0 0.0
      %1254 = vmatprep.subr.mxu0 0.0
      %1255 = vmatpush2.msra.mxu0 0.0
      %1256 = vmatprep.subr.mxu0 0.0
      %1257 = vmatpush2.msra.mxu0 0.0
      %1258 = vmatprep.subr.mxu0 0.0
      %1259 = vmatpush2.msra.mxu0 0.0
      %1260 = vmatprep.subr.mxu0 0.0
      %1261 = vmatpush2.msra.mxu0 0.0
      %1262 = vmatprep.subr.mxu0 0.0
      %1263 = vmatpush2.msra.mxu0 0.0
      %1264 = vmatprep.subr.mxu0 0.0
      %1265 = vmatpush2.msra.mxu0 0.0
      %1266 = vmatprep.subr.mxu0 0.0
      %1267 = vmatpush2.msra.mxu0 0.0
      %1268 = vmatprep.mubr.f32.mxu0 0.0
      %1269 = vmatmul.mubr.f32.gmra.mxu0 %v1190
      %v1270 = vpop.f32.mrf.mxu0
      %v1271 = vadd.f32 %v1172, %v1270
      %v1272 = vpop.f32.mrf.mxu0
      %1273 = vmatprep.mubr.f32.mxu0 0.0
      %1274 = vmatmul.mubr.f32.gmra.mxu0 %v1193
      %v1275 = vpop.f32.mrf.mxu0
      %v1276 = vadd.f32 %v1177, %v1275
      %v1277 = vpop.f32.mrf.mxu0
      %1278 = vmatprep.mubr.f32.mxu0 0.0
      %1279 = vmatmul.mubr.f32.gmra.mxu0 %v1196
      %v1280 = vpop.f32.mrf.mxu0
      %v1281 = vadd.f32 %v1182, %v1280
      %v1282 = vpop.f32.mrf.mxu0
      %1283 = vmatprep.mubr.f32.mxu0 0.0
      %1284 = vmatmul.mubr.f32.gmra.mxu0 %v1199
      %v1285 = vpop.f32.mrf.mxu0
      %v1286 = vadd.f32 %v1187, %v1285
      %v1287 = vpop.f32.mrf.mxu0
      %1288 = vdwg.mxu0
      %v1289 = vmax.f32 %v1271, 0.0
      %v1290 = vmax.f32 %v1276, 0.0
      %v1291 = vmax.f32 %v1281, 0.0
      %v1292 = vmax.f32 %v1286, 0.0
      %v1293 = vld [vmem:[#allocation3] sm:$0xff]
      %v1294 = vld [vmem:[#allocation3 + $0x8] sm:$0xff]
      %v1295 = vld [vmem:[#allocation3 + $0x10] sm:$0xff]
      %v1296 = vld [vmem:[#allocation3 + $0x18] sm:$0xff]
      %v1297 = vsel %vm690, %v1289, 0.0
      %1298 = vadd.xlane.f32.xlu0 %v1297
      %v1299 = vpop.xlane.xlu0 %1298
      %v1300 = vsel %vm690, %v1290, 0.0
      %1301 = vadd.xlane.f32.xlu0 %v1300
      %v1302 = vpop.xlane.xlu0 %1301
      %v1303 = vsel %vm690, %v1291, 0.0
      %1304 = vadd.xlane.f32.xlu0 %v1303
      %v1305 = vpop.xlane.xlu0 %1304
      %v1306 = vsel %vm690, %v1292, 0.0
      %1307 = vadd.xlane.f32.xlu0 %v1306
      %v1308 = vpop.xlane.xlu0 %1307
      %v1309 = vadd.f32 %v1293, %v1299
      %v1310 = vadd.f32 %v1294, %v1302
      %v1311 = vadd.f32 %v1295, %v1305
      %v1312 = vadd.f32 %v1296, %v1308
      %1313 = vst.msk [vmem:[#allocation3] sm:$0xff] %vm388, %v1309
      %1314 = vst.msk [vmem:[#allocation3 + $0x8] sm:$0xff] %vm388, %v1310
      %1315 = vst.msk [vmem:[#allocation3 + $0x10] sm:$0xff] %vm388, %v1311
      %1316 = vst.msk [vmem:[#allocation3 + $0x18] sm:$0xff] %vm388, %v1312
      %v1317 = vld [vmem:[%s806] sm:$0x1]
      %v1318 = vmul.f32 %v1317, %v808
      %1320 = vrot.lane.b32.xlu0 %v1318, 1
      %v1321 = vpop.permute.xlu0 %1320
      %v1323 = vsel %vm388, 0.0, %v1321
      %1324 = vst.msk [vmem:[#allocation2] sm:$0x1] %vm390, %v1323
      %1325 = vst.msk [vmem:[#allocation2 + $0x3] sm:$0x1] %vm390, %v1318
      %1326 = vrot.lane.b32.xlu0 %v1318, 127
      %v1327 = vpop.permute.xlu0 %1326
      %v1329 = vsel %vm396, %v1327, 0.0
      %1330 = vst.msk [vmem:[#allocation2 + $0x6] sm:$0x1] %vm390, %v1329
      %v1331 = vld [vmem:[%s823] sm:$0x1]
      %v1332 = vmul.f32 %v1331, %v808
      %1334 = vrot.lane.b32.xlu0 %v1332, 1
      %v1335 = vpop.permute.xlu0 %1334
      %v1337 = vsel %vm388, 0.0, %v1335
      %1338 = vst.msk [vmem:[#allocation2 + $0x1] sm:$0x1] %vm390, %v1337
      %1339 = vst.msk [vmem:[#allocation2 + $0x4] sm:$0x1] %vm390, %v1332
      %1340 = vrot.lane.b32.xlu0 %v1332, 127
      %v1341 = vpop.permute.xlu0 %1340
      %v1343 = vsel %vm396, %v1341, 0.0
      %1344 = vst.msk [vmem:[#allocation2 + $0x7] sm:$0x1] %vm390, %v1343
      %v1345 = vld [vmem:[%s839] sm:$0x1]
      %v1346 = vmul.f32 %v1345, %v808
      %1348 = vrot.lane.b32.xlu0 %v1346, 1
      %v1349 = vpop.permute.xlu0 %1348
      %v1351 = vsel %vm388, 0.0, %v1349
      %1352 = vst.msk [vmem:[#allocation2 + $0x2] sm:$0x1] %vm390, %v1351
      %1353 = vst.msk [vmem:[#allocation2 + $0x5] sm:$0x1] %vm390, %v1346
      %1354 = vrot.lane.b32.xlu0 %v1346, 127
      %v1355 = vpop.permute.xlu0 %1354
      %v1357 = vsel %vm396, %v1355, 0.0
      %1358 = vst.msk [vmem:[#allocation2 + $0x8] sm:$0x1] %vm390, %v1357
      %v1359 = vld [vmem:[%s1109] sm:$0x1]
      %v1360 = vmul.f32 %v1359, %v1111
      %1362 = vrot.lane.b32.xlu0 %v1360, 1
      %v1363 = vpop.permute.xlu0 %1362
      %v1365 = vsel %vm388, 0.0, %v1363
      %1366 = vst.msk [vmem:[#allocation2 + $0x9] sm:$0x1] %vm390, %v1365
      %1367 = vst.msk [vmem:[#allocation2 + $0xc] sm:$0x1] %vm390, %v1360
      %1368 = vrot.lane.b32.xlu0 %v1360, 127
      %v1369 = vpop.permute.xlu0 %1368
      %v1371 = vsel %vm396, %v1369, 0.0
      %1372 = vst.msk [vmem:[#allocation2 + $0xf] sm:$0x1] %vm390, %v1371
      %v1373 = vld [vmem:[%s1126] sm:$0x1]
      %v1374 = vmul.f32 %v1373, %v1111
      %1376 = vrot.lane.b32.xlu0 %v1374, 1
      %v1377 = vpop.permute.xlu0 %1376
      %v1379 = vsel %vm388, 0.0, %v1377
      %1380 = vst.msk [vmem:[#allocation2 + $0xa] sm:$0x1] %vm390, %v1379
      %1381 = vst.msk [vmem:[#allocation2 + $0xd] sm:$0x1] %vm390, %v1374
      %1382 = vrot.lane.b32.xlu0 %v1374, 127
      %v1383 = vpop.permute.xlu0 %1382
      %v1385 = vsel %vm396, %v1383, 0.0
      %1386 = vst.msk [vmem:[#allocation2 + $0x10] sm:$0x1] %vm390, %v1385
      %v1387 = vld [vmem:[%s1142] sm:$0x1]
      %v1388 = vmul.f32 %v1387, %v1111
      %1390 = vrot.lane.b32.xlu0 %v1388, 1
      %v1391 = vpop.permute.xlu0 %1390
      %v1393 = vsel %vm388, 0.0, %v1391
      %1394 = vst.msk [vmem:[#allocation2 + $0xb] sm:$0x1] %vm390, %v1393
      %1395 = vst.msk [vmem:[#allocation2 + $0xe] sm:$0x1] %vm390, %v1388
      %1396 = vrot.lane.b32.xlu0 %v1388, 127
      %v1397 = vpop.permute.xlu0 %1396
      %v1399 = vsel %vm396, %v1397, 0.0
      %1400 = vst.msk [vmem:[#allocation2 + $0x11] sm:$0x1] %vm390, %v1399
      %s1401 = sadd.s32 %s368, 4
      %p1402 = scmp.ge.s32.totalorder %s1401, 0
      %p1403 = scmp.lt.s32.totalorder %s1401, 16
      %p1404 = pnand %p1402, %p1403
      %p1405 = pneg %p1404
      %s1406 = scalar_select %p1405, 1, 0
      %s1407 = scvt.s32.f32 %s1406
      %p1408 = scmp.gt.s32.totalorder %s1401, 0
      %s1409 = scalar_select %p1408, %s1401, 0
      %p1410 = scmp.lt.s32.totalorder %s1409, 15
      %s1411 = scalar_select %p1410, %s1409, 15
      %s1412 = scalar_lea.vmem %s351, %s1411
      %v1413 = vld [vmem:[%s1412] sm:$0x1]
      %v1414 = vstv %s1407
      %v1415 = vmul.f32 %v1413, %v1414
      %1417 = vrot.lane.b32.xlu0 %v1415, 1
      %v1418 = vpop.permute.xlu0 %1417
      %v1420 = vsel %vm388, 0.0, %v1418
      %1421 = vst.msk [vmem:[#allocation2 + $0x12] sm:$0x1] %vm390, %v1420
      %1422 = vst.msk [vmem:[#allocation2 + $0x15] sm:$0x1] %vm390, %v1415
      %1423 = vrot.lane.b32.xlu0 %v1415, 127
      %v1424 = vpop.permute.xlu0 %1423
      %v1426 = vsel %vm396, %v1424, 0.0
      %1427 = vst.msk [vmem:[#allocation2 + $0x18] sm:$0x1] %vm390, %v1426
      %s1428 = sadd.s32 %s1411, 16
      %s1429 = scalar_lea.vmem %s351, %s1428
      %v1430 = vld [vmem:[%s1429] sm:$0x1]
      %v1431 = vmul.f32 %v1430, %v1414
      %1433 = vrot.lane.b32.xlu0 %v1431, 1
      %v1434 = vpop.permute.xlu0 %1433
      %v1436 = vsel %vm388, 0.0, %v1434
      %1437 = vst.msk [vmem:[#allocation2 + $0x13] sm:$0x1] %vm390, %v1436
      %1438 = vst.msk [vmem:[#allocation2 + $0x16] sm:$0x1] %vm390, %v1431
      %1439 = vrot.lane.b32.xlu0 %v1431, 127
      %v1440 = vpop.permute.xlu0 %1439
      %v1442 = vsel %vm396, %v1440, 0.0
      %1443 = vst.msk [vmem:[#allocation2 + $0x19] sm:$0x1] %vm390, %v1442
      %s1444 = sadd.s32 %s1411, 32
      %s1445 = scalar_lea.vmem %s351, %s1444
      %v1446 = vld [vmem:[%s1445] sm:$0x1]
      %v1447 = vmul.f32 %v1446, %v1414
      %1449 = vrot.lane.b32.xlu0 %v1447, 1
      %v1450 = vpop.permute.xlu0 %1449
      %v1452 = vsel %vm388, 0.0, %v1450
      %1453 = vst.msk [vmem:[#allocation2 + $0x14] sm:$0x1] %vm390, %v1452
      %1454 = vst.msk [vmem:[#allocation2 + $0x17] sm:$0x1] %vm390, %v1447
      %1455 = vrot.lane.b32.xlu0 %v1447, 127
      %v1456 = vpop.permute.xlu0 %1455
      %v1458 = vsel %vm396, %v1456, 0.0
      %1459 = vst.msk [vmem:[#allocation2 + $0x1a] sm:$0x1] %vm390, %v1458
      %v1460 = vld [vmem:[%s1] sm:$0xff]
      %v1461 = vld [vmem:[%s1 + $0x8] sm:$0xff]
      %v1462 = vld [vmem:[%s1 + $0x10] sm:$0xff]
      %v1463 = vld [vmem:[%s1 + $0x18] sm:$0xff]
      %v1464 = vld [vmem:[#allocation2] sm:$0xff]
      %v1465 = vld [vmem:[#allocation2 + $0x8] sm:$0xff]
      %v1466 = vld [vmem:[#allocation2 + $0x10] sm:$0xff]
      %v1467 = vld [vmem:[#allocation2 + $0x18] sm:$0x7]
      %v1468 = vld [vmem:[%s2] sm:$0xff]
      %v1469 = vld [vmem:[%s2 + $0x8] sm:$0xff]
      %v1470 = vld [vmem:[%s2 + $0x10] sm:$0xff]
      %v1471 = vld [vmem:[%s2 + $0x18] sm:$0xff]
      %1473 = vset.pattern.permute.xlu0 0
      %1474 = vperm.xlu0 %1473, %v1468
      %v1475 = vpop.permute.xlu0 %1474
      %1478 = vset.pattern.permute.xlu0 0
      %1479 = vperm.xlu0 %1478, %v1469
      %v1480 = vpop.permute.xlu0 %1479
      %1483 = vset.pattern.permute.xlu0 0
      %1484 = vperm.xlu0 %1483, %v1470
      %v1485 = vpop.permute.xlu0 %1484
      %1488 = vset.pattern.permute.xlu0 0
      %1489 = vperm.xlu0 %1488, %v1471
      %v1490 = vpop.permute.xlu0 %1489
      %v1493 = vsel %vm580, %v1460, 0
      %v1496 = vsel %vm580, %v1461, 0
      %v1499 = vsel %vm580, %v1462, 0
      %v1502 = vsel %vm580, %v1463, 0
      %v1505 = vsel %vm593, %v1467, 0
      %1507 = vmatprep.subr.mxu0 0.0
      %1508 = vmatpush1.msra.mxu0 0.0
      %1509 = vmatprep.subr.mxu0 0.0
      %1510 = vmatpush1.msra.mxu0 0.0
      %1511 = vmatprep.subr.mxu0 0.0
      %1512 = vmatpush1.msra.mxu0 0.0
      %1513 = vmatprep.subr.mxu0 0.0
      %1514 = vmatpush1.msra.mxu0 0.0
      %1515 = vmatprep.subr.mxu0 0.0
      %1516 = vmatpush1.msra.mxu0 0.0
      %1517 = vmatprep.subr.mxu0 0.0
      %1518 = vmatpush1.msra.mxu0 0.0
      %1519 = vmatprep.subr.mxu0 0.0
      %1520 = vmatpush1.msra.mxu0 0.0
      %1521 = vmatprep.subr.mxu0 0.0
      %1522 = vmatpush1.msra.mxu0 0.0
      %1523 = vmatprep.subr.mxu0 0.0
      %1524 = vmatpush1.msra.mxu0 0.0
      %1525 = vmatprep.subr.mxu0 0.0
      %1526 = vmatpush1.msra.mxu0 0.0
      %1527 = vmatprep.subr.mxu0 0.0
      %1528 = vmatpush1.msra.mxu0 0.0
      %1529 = vmatprep.subr.mxu0 0.0
      %1530 = vmatpush1.msra.mxu0 0.0
      %1531 = vmatprep.subr.mxu0 0.0
      %1532 = vmatpush1.msra.mxu0 %v1505
      %1533 = vmatprep.subr.mxu0 0.0
      %1534 = vmatpush1.msra.mxu0 %v1466
      %1535 = vmatprep.subr.mxu0 0.0
      %1536 = vmatpush1.msra.mxu0 %v1465
      %1537 = vmatprep.subr.mxu0 0.0
      %1538 = vmatpush1.msra.mxu0 %v1464
      %1539 = vmatprep.subr.mxu0 0.0
      %1540 = vmatpush2.msra.mxu0 0.0
      %1541 = vmatprep.subr.mxu0 0.0
      %1542 = vmatpush2.msra.mxu0 0.0
      %1543 = vmatprep.subr.mxu0 0.0
      %1544 = vmatpush2.msra.mxu0 0.0
      %1545 = vmatprep.subr.mxu0 0.0
      %1546 = vmatpush2.msra.mxu0 0.0
      %1547 = vmatprep.subr.mxu0 0.0
      %1548 = vmatpush2.msra.mxu0 0.0
      %1549 = vmatprep.subr.mxu0 0.0
      %1550 = vmatpush2.msra.mxu0 0.0
      %1551 = vmatprep.subr.mxu0 0.0
      %1552 = vmatpush2.msra.mxu0 0.0
      %1553 = vmatprep.subr.mxu0 0.0
      %1554 = vmatpush2.msra.mxu0 0.0
      %1555 = vmatprep.subr.mxu0 0.0
      %1556 = vmatpush2.msra.mxu0 0.0
      %1557 = vmatprep.subr.mxu0 0.0
      %1558 = vmatpush2.msra.mxu0 0.0
      %1559 = vmatprep.subr.mxu0 0.0
      %1560 = vmatpush2.msra.mxu0 0.0
      %1561 = vmatprep.subr.mxu0 0.0
      %1562 = vmatpush2.msra.mxu0 0.0
      %1563 = vmatprep.subr.mxu0 0.0
      %1564 = vmatpush2.msra.mxu0 0.0
      %1565 = vmatprep.subr.mxu0 0.0
      %1566 = vmatpush2.msra.mxu0 0.0
      %1567 = vmatprep.subr.mxu0 0.0
      %1568 = vmatpush2.msra.mxu0 0.0
      %1569 = vmatprep.subr.mxu0 0.0
      %1570 = vmatpush2.msra.mxu0 0.0
      %1571 = vmatprep.mubr.f32.mxu0 0.0
      %1572 = vmatmul.mubr.f32.gmra.mxu0 %v1493
      %v1573 = vpop.f32.mrf.mxu0
      %v1574 = vadd.f32 %v1475, %v1573
      %v1575 = vpop.f32.mrf.mxu0
      %1576 = vmatprep.mubr.f32.mxu0 0.0
      %1577 = vmatmul.mubr.f32.gmra.mxu0 %v1496
      %v1578 = vpop.f32.mrf.mxu0
      %v1579 = vadd.f32 %v1480, %v1578
      %v1580 = vpop.f32.mrf.mxu0
      %1581 = vmatprep.mubr.f32.mxu0 0.0
      %1582 = vmatmul.mubr.f32.gmra.mxu0 %v1499
      %v1583 = vpop.f32.mrf.mxu0
      %v1584 = vadd.f32 %v1485, %v1583
      %v1585 = vpop.f32.mrf.mxu0
      %1586 = vmatprep.mubr.f32.mxu0 0.0
      %1587 = vmatmul.mubr.f32.gmra.mxu0 %v1502
      %v1588 = vpop.f32.mrf.mxu0
      %v1589 = vadd.f32 %v1490, %v1588
      %v1590 = vpop.f32.mrf.mxu0
      %1591 = vdwg.mxu0
      %v1592 = vmax.f32 %v1574, 0.0
      %v1593 = vmax.f32 %v1579, 0.0
      %v1594 = vmax.f32 %v1584, 0.0
      %v1595 = vmax.f32 %v1589, 0.0
      %v1596 = vld [vmem:[#allocation3] sm:$0xff]
      %v1597 = vld [vmem:[#allocation3 + $0x8] sm:$0xff]
      %v1598 = vld [vmem:[#allocation3 + $0x10] sm:$0xff]
      %v1599 = vld [vmem:[#allocation3 + $0x18] sm:$0xff]
      %v1600 = vsel %vm690, %v1592, 0.0
      %1601 = vadd.xlane.f32.xlu0 %v1600
      %v1602 = vpop.xlane.xlu0 %1601
      %v1603 = vsel %vm690, %v1593, 0.0
      %1604 = vadd.xlane.f32.xlu0 %v1603
      %v1605 = vpop.xlane.xlu0 %1604
      %v1606 = vsel %vm690, %v1594, 0.0
      %1607 = vadd.xlane.f32.xlu0 %v1606
      %v1608 = vpop.xlane.xlu0 %1607
      %v1609 = vsel %vm690, %v1595, 0.0
      %1610 = vadd.xlane.f32.xlu0 %v1609
      %v1611 = vpop.xlane.xlu0 %1610
      %v1612 = vadd.f32 %v1596, %v1602
      %v1613 = vadd.f32 %v1597, %v1605
      %v1614 = vadd.f32 %v1598, %v1608
      %v1615 = vadd.f32 %v1599, %v1611
      %1616 = vst.msk [vmem:[#allocation3] sm:$0xff] %vm388, %v1612
      %1617 = vst.msk [vmem:[#allocation3 + $0x8] sm:$0xff] %vm388, %v1613
      %1618 = vst.msk [vmem:[#allocation3 + $0x10] sm:$0xff] %vm388, %v1614
      %1619 = vst.msk [vmem:[#allocation3 + $0x18] sm:$0xff] %vm388, %v1615
      %v1620 = vld [vmem:[%s1109] sm:$0x1]
      %v1621 = vmul.f32 %v1620, %v1111
      %1623 = vrot.lane.b32.xlu0 %v1621, 1
      %v1624 = vpop.permute.xlu0 %1623
      %v1626 = vsel %vm388, 0.0, %v1624
      %1627 = vst.msk [vmem:[#allocation2] sm:$0x1] %vm390, %v1626
      %1628 = vst.msk [vmem:[#allocation2 + $0x3] sm:$0x1] %vm390, %v1621
      %1629 = vrot.lane.b32.xlu0 %v1621, 127
      %v1630 = vpop.permute.xlu0 %1629
      %v1632 = vsel %vm396, %v1630, 0.0
      %1633 = vst.msk [vmem:[#allocation2 + $0x6] sm:$0x1] %vm390, %v1632
      %v1634 = vld [vmem:[%s1126] sm:$0x1]
      %v1635 = vmul.f32 %v1634, %v1111
      %1637 = vrot.lane.b32.xlu0 %v1635, 1
      %v1638 = vpop.permute.xlu0 %1637
      %v1640 = vsel %vm388, 0.0, %v1638
      %1641 = vst.msk [vmem:[#allocation2 + $0x1] sm:$0x1] %vm390, %v1640
      %1642 = vst.msk [vmem:[#allocation2 + $0x4] sm:$0x1] %vm390, %v1635
      %1643 = vrot.lane.b32.xlu0 %v1635, 127
      %v1644 = vpop.permute.xlu0 %1643
      %v1646 = vsel %vm396, %v1644, 0.0
      %1647 = vst.msk [vmem:[#allocation2 + $0x7] sm:$0x1] %vm390, %v1646
      %v1648 = vld [vmem:[%s1142] sm:$0x1]
      %v1649 = vmul.f32 %v1648, %v1111
      %1651 = vrot.lane.b32.xlu0 %v1649, 1
      %v1652 = vpop.permute.xlu0 %1651
      %v1654 = vsel %vm388, 0.0, %v1652
      %1655 = vst.msk [vmem:[#allocation2 + $0x2] sm:$0x1] %vm390, %v1654
      %1656 = vst.msk [vmem:[#allocation2 + $0x5] sm:$0x1] %vm390, %v1649
      %1657 = vrot.lane.b32.xlu0 %v1649, 127
      %v1658 = vpop.permute.xlu0 %1657
      %v1660 = vsel %vm396, %v1658, 0.0
      %1661 = vst.msk [vmem:[#allocation2 + $0x8] sm:$0x1] %vm390, %v1660
      %v1662 = vld [vmem:[%s1412] sm:$0x1]
      %v1663 = vmul.f32 %v1662, %v1414
      %1665 = vrot.lane.b32.xlu0 %v1663, 1
      %v1666 = vpop.permute.xlu0 %1665
      %v1668 = vsel %vm388, 0.0, %v1666
      %1669 = vst.msk [vmem:[#allocation2 + $0x9] sm:$0x1] %vm390, %v1668
      %1670 = vst.msk [vmem:[#allocation2 + $0xc] sm:$0x1] %vm390, %v1663
      %1671 = vrot.lane.b32.xlu0 %v1663, 127
      %v1672 = vpop.permute.xlu0 %1671
      %v1674 = vsel %vm396, %v1672, 0.0
      %1675 = vst.msk [vmem:[#allocation2 + $0xf] sm:$0x1] %vm390, %v1674
      %v1676 = vld [vmem:[%s1429] sm:$0x1]
      %v1677 = vmul.f32 %v1676, %v1414
      %1679 = vrot.lane.b32.xlu0 %v1677, 1
      %v1680 = vpop.permute.xlu0 %1679
      %v1682 = vsel %vm388, 0.0, %v1680
      %1683 = vst.msk [vmem:[#allocation2 + $0xa] sm:$0x1] %vm390, %v1682
      %1684 = vst.msk [vmem:[#allocation2 + $0xd] sm:$0x1] %vm390, %v1677
      %1685 = vrot.lane.b32.xlu0 %v1677, 127
      %v1686 = vpop.permute.xlu0 %1685
      %v1688 = vsel %vm396, %v1686, 0.0
      %1689 = vst.msk [vmem:[#allocation2 + $0x10] sm:$0x1] %vm390, %v1688
      %v1690 = vld [vmem:[%s1445] sm:$0x1]
      %v1691 = vmul.f32 %v1690, %v1414
      %1693 = vrot.lane.b32.xlu0 %v1691, 1
      %v1694 = vpop.permute.xlu0 %1693
      %v1696 = vsel %vm388, 0.0, %v1694
      %1697 = vst.msk [vmem:[#allocation2 + $0xb] sm:$0x1] %vm390, %v1696
      %1698 = vst.msk [vmem:[#allocation2 + $0xe] sm:$0x1] %vm390, %v1691
      %1699 = vrot.lane.b32.xlu0 %v1691, 127
      %v1700 = vpop.permute.xlu0 %1699
      %v1702 = vsel %vm396, %v1700, 0.0
      %1703 = vst.msk [vmem:[#allocation2 + $0x11] sm:$0x1] %vm390, %v1702
      %s1704 = sadd.s32 %s368, 5
      %p1705 = scmp.ge.s32.totalorder %s1704, 0
      %p1706 = scmp.lt.s32.totalorder %s1704, 16
      %p1707 = pnand %p1705, %p1706
      %p1708 = pneg %p1707
      %s1709 = scalar_select %p1708, 1, 0
      %s1710 = scvt.s32.f32 %s1709
      %p1711 = scmp.gt.s32.totalorder %s1704, 0
      %s1712 = scalar_select %p1711, %s1704, 0
      %p1713 = scmp.lt.s32.totalorder %s1712, 15
      %s1714 = scalar_select %p1713, %s1712, 15
      %s1715 = scalar_lea.vmem %s351, %s1714
      %v1716 = vld [vmem:[%s1715] sm:$0x1]
      %v1717 = vstv %s1710
      %v1718 = vmul.f32 %v1716, %v1717
      %1720 = vrot.lane.b32.xlu0 %v1718, 1
      %v1721 = vpop.permute.xlu0 %1720
      %v1723 = vsel %vm388, 0.0, %v1721
      %1724 = vst.msk [vmem:[#allocation2 + $0x12] sm:$0x1] %vm390, %v1723
      %1725 = vst.msk [vmem:[#allocation2 + $0x15] sm:$0x1] %vm390, %v1718
      %1726 = vrot.lane.b32.xlu0 %v1718, 127
      %v1727 = vpop.permute.xlu0 %1726
      %v1729 = vsel %vm396, %v1727, 0.0
      %1730 = vst.msk [vmem:[#allocation2 + $0x18] sm:$0x1] %vm390, %v1729
      %s1731 = sadd.s32 %s1714, 16
      %s1732 = scalar_lea.vmem %s351, %s1731
      %v1733 = vld [vmem:[%s1732] sm:$0x1]
      %v1734 = vmul.f32 %v1733, %v1717
      %1736 = vrot.lane.b32.xlu0 %v1734, 1
      %v1737 = vpop.permute.xlu0 %1736
      %v1739 = vsel %vm388, 0.0, %v1737
      %1740 = vst.msk [vmem:[#allocation2 + $0x13] sm:$0x1] %vm390, %v1739
      %1741 = vst.msk [vmem:[#allocation2 + $0x16] sm:$0x1] %vm390, %v1734
      %1742 = vrot.lane.b32.xlu0 %v1734, 127
      %v1743 = vpop.permute.xlu0 %1742
      %v1745 = vsel %vm396, %v1743, 0.0
      %1746 = vst.msk [vmem:[#allocation2 + $0x19] sm:$0x1] %vm390, %v1745
      %s1747 = sadd.s32 %s1714, 32
      %s1748 = scalar_lea.vmem %s351, %s1747
      %v1749 = vld [vmem:[%s1748] sm:$0x1]
      %v1750 = vmul.f32 %v1749, %v1717
      %1752 = vrot.lane.b32.xlu0 %v1750, 1
      %v1753 = vpop.permute.xlu0 %1752
      %v1755 = vsel %vm388, 0.0, %v1753
      %1756 = vst.msk [vmem:[#allocation2 + $0x14] sm:$0x1] %vm390, %v1755
      %1757 = vst.msk [vmem:[#allocation2 + $0x17] sm:$0x1] %vm390, %v1750
      %1758 = vrot.lane.b32.xlu0 %v1750, 127
      %v1759 = vpop.permute.xlu0 %1758
      %v1761 = vsel %vm396, %v1759, 0.0
      %1762 = vst.msk [vmem:[#allocation2 + $0x1a] sm:$0x1] %vm390, %v1761
      %v1763 = vld [vmem:[%s1] sm:$0xff]
      %v1764 = vld [vmem:[%s1 + $0x8] sm:$0xff]
      %v1765 = vld [vmem:[%s1 + $0x10] sm:$0xff]
      %v1766 = vld [vmem:[%s1 + $0x18] sm:$0xff]
      %v1767 = vld [vmem:[#allocation2] sm:$0xff]
      %v1768 = vld [vmem:[#allocation2 + $0x8] sm:$0xff]
      %v1769 = vld [vmem:[#allocation2 + $0x10] sm:$0xff]
      %v1770 = vld [vmem:[#allocation2 + $0x18] sm:$0x7]
      %v1771 = vld [vmem:[%s2] sm:$0xff]
      %v1772 = vld [vmem:[%s2 + $0x8] sm:$0xff]
      %v1773 = vld [vmem:[%s2 + $0x10] sm:$0xff]
      %v1774 = vld [vmem:[%s2 + $0x18] sm:$0xff]
      %1776 = vset.pattern.permute.xlu0 0
      %1777 = vperm.xlu0 %1776, %v1771
      %v1778 = vpop.permute.xlu0 %1777
      %1781 = vset.pattern.permute.xlu0 0
      %1782 = vperm.xlu0 %1781, %v1772
      %v1783 = vpop.permute.xlu0 %1782
      %1786 = vset.pattern.permute.xlu0 0
      %1787 = vperm.xlu0 %1786, %v1773
      %v1788 = vpop.permute.xlu0 %1787
      %1791 = vset.pattern.permute.xlu0 0
      %1792 = vperm.xlu0 %1791, %v1774
      %v1793 = vpop.permute.xlu0 %1792
      %v1796 = vsel %vm580, %v1763, 0
      %v1799 = vsel %vm580, %v1764, 0
      %v1802 = vsel %vm580, %v1765, 0
      %v1805 = vsel %vm580, %v1766, 0
      %v1808 = vsel %vm593, %v1770, 0
      %1810 = vmatprep.subr.mxu0 0.0
      %1811 = vmatpush1.msra.mxu0 0.0
      %1812 = vmatprep.subr.mxu0 0.0
      %1813 = vmatpush1.msra.mxu0 0.0
      %1814 = vmatprep.subr.mxu0 0.0
      %1815 = vmatpush1.msra.mxu0 0.0
      %1816 = vmatprep.subr.mxu0 0.0
      %1817 = vmatpush1.msra.mxu0 0.0
      %1818 = vmatprep.subr.mxu0 0.0
      %1819 = vmatpush1.msra.mxu0 0.0
      %1820 = vmatprep.subr.mxu0 0.0
      %1821 = vmatpush1.msra.mxu0 0.0
      %1822 = vmatprep.subr.mxu0 0.0
      %1823 = vmatpush1.msra.mxu0 0.0
      %1824 = vmatprep.subr.mxu0 0.0
      %1825 = vmatpush1.msra.mxu0 0.0
      %1826 = vmatprep.subr.mxu0 0.0
      %1827 = vmatpush1.msra.mxu0 0.0
      %1828 = vmatprep.subr.mxu0 0.0
      %1829 = vmatpush1.msra.mxu0 0.0
      %1830 = vmatprep.subr.mxu0 0.0
      %1831 = vmatpush1.msra.mxu0 0.0
      %1832 = vmatprep.subr.mxu0 0.0
      %1833 = vmatpush1.msra.mxu0 0.0
      %1834 = vmatprep.subr.mxu0 0.0
      %1835 = vmatpush1.msra.mxu0 %v1808
      %1836 = vmatprep.subr.mxu0 0.0
      %1837 = vmatpush1.msra.mxu0 %v1769
      %1838 = vmatprep.subr.mxu0 0.0
      %1839 = vmatpush1.msra.mxu0 %v1768
      %1840 = vmatprep.subr.mxu0 0.0
      %1841 = vmatpush1.msra.mxu0 %v1767
      %1842 = vmatprep.subr.mxu0 0.0
      %1843 = vmatpush2.msra.mxu0 0.0
      %1844 = vmatprep.subr.mxu0 0.0
      %1845 = vmatpush2.msra.mxu0 0.0
      %1846 = vmatprep.subr.mxu0 0.0
      %1847 = vmatpush2.msra.mxu0 0.0
      %1848 = vmatprep.subr.mxu0 0.0
      %1849 = vmatpush2.msra.mxu0 0.0
      %1850 = vmatprep.subr.mxu0 0.0
      %1851 = vmatpush2.msra.mxu0 0.0
      %1852 = vmatprep.subr.mxu0 0.0
      %1853 = vmatpush2.msra.mxu0 0.0
      %1854 = vmatprep.subr.mxu0 0.0
      %1855 = vmatpush2.msra.mxu0 0.0
      %1856 = vmatprep.subr.mxu0 0.0
      %1857 = vmatpush2.msra.mxu0 0.0
      %1858 = vmatprep.subr.mxu0 0.0
      %1859 = vmatpush2.msra.mxu0 0.0
      %1860 = vmatprep.subr.mxu0 0.0
      %1861 = vmatpush2.msra.mxu0 0.0
      %1862 = vmatprep.subr.mxu0 0.0
      %1863 = vmatpush2.msra.mxu0 0.0
      %1864 = vmatprep.subr.mxu0 0.0
      %1865 = vmatpush2.msra.mxu0 0.0
      %1866 = vmatprep.subr.mxu0 0.0
      %1867 = vmatpush2.msra.mxu0 0.0
      %1868 = vmatprep.subr.mxu0 0.0
      %1869 = vmatpush2.msra.mxu0 0.0
      %1870 = vmatprep.subr.mxu0 0.0
      %1871 = vmatpush2.msra.mxu0 0.0
      %1872 = vmatprep.subr.mxu0 0.0
      %1873 = vmatpush2.msra.mxu0 0.0
      %1874 = vmatprep.mubr.f32.mxu0 0.0
      %1875 = vmatmul.mubr.f32.gmra.mxu0 %v1796
      %v1876 = vpop.f32.mrf.mxu0
      %v1877 = vadd.f32 %v1778, %v1876
      %v1878 = vpop.f32.mrf.mxu0
      %1879 = vmatprep.mubr.f32.mxu0 0.0
      %1880 = vmatmul.mubr.f32.gmra.mxu0 %v1799
      %v1881 = vpop.f32.mrf.mxu0
      %v1882 = vadd.f32 %v1783, %v1881
      %v1883 = vpop.f32.mrf.mxu0
      %1884 = vmatprep.mubr.f32.mxu0 0.0
      %1885 = vmatmul.mubr.f32.gmra.mxu0 %v1802
      %v1886 = vpop.f32.mrf.mxu0
      %v1887 = vadd.f32 %v1788, %v1886
      %v1888 = vpop.f32.mrf.mxu0
      %1889 = vmatprep.mubr.f32.mxu0 0.0
      %1890 = vmatmul.mubr.f32.gmra.mxu0 %v1805
      %v1891 = vpop.f32.mrf.mxu0
      %v1892 = vadd.f32 %v1793, %v1891
      %v1893 = vpop.f32.mrf.mxu0
      %1894 = vdwg.mxu0
      %v1895 = vmax.f32 %v1877, 0.0
      %v1896 = vmax.f32 %v1882, 0.0
      %v1897 = vmax.f32 %v1887, 0.0
      %v1898 = vmax.f32 %v1892, 0.0
      %v1899 = vld [vmem:[#allocation3] sm:$0xff]
      %v1900 = vld [vmem:[#allocation3 + $0x8] sm:$0xff]
      %v1901 = vld [vmem:[#allocation3 + $0x10] sm:$0xff]
      %v1902 = vld [vmem:[#allocation3 + $0x18] sm:$0xff]
      %v1903 = vsel %vm690, %v1895, 0.0
      %1904 = vadd.xlane.f32.xlu0 %v1903
      %v1905 = vpop.xlane.xlu0 %1904
      %v1906 = vsel %vm690, %v1896, 0.0
      %1907 = vadd.xlane.f32.xlu0 %v1906
      %v1908 = vpop.xlane.xlu0 %1907
      %v1909 = vsel %vm690, %v1897, 0.0
      %1910 = vadd.xlane.f32.xlu0 %v1909
      %v1911 = vpop.xlane.xlu0 %1910
      %v1912 = vsel %vm690, %v1898, 0.0
      %1913 = vadd.xlane.f32.xlu0 %v1912
      %v1914 = vpop.xlane.xlu0 %1913
      %v1915 = vadd.f32 %v1899, %v1905
      %v1916 = vadd.f32 %v1900, %v1908
      %v1917 = vadd.f32 %v1901, %v1911
      %v1918 = vadd.f32 %v1902, %v1914
      %1919 = vst.msk [vmem:[#allocation3] sm:$0xff] %vm388, %v1915
      %1920 = vst.msk [vmem:[#allocation3 + $0x8] sm:$0xff] %vm388, %v1916
      %1921 = vst.msk [vmem:[#allocation3 + $0x10] sm:$0xff] %vm388, %v1917
      %1922 = vst.msk [vmem:[#allocation3 + $0x18] sm:$0xff] %vm388, %v1918
      %v1923 = vld [vmem:[%s1412] sm:$0x1]
      %v1924 = vmul.f32 %v1923, %v1414
      %1926 = vrot.lane.b32.xlu0 %v1924, 1
      %v1927 = vpop.permute.xlu0 %1926
      %v1929 = vsel %vm388, 0.0, %v1927
      %1930 = vst.msk [vmem:[#allocation2] sm:$0x1] %vm390, %v1929
      %1931 = vst.msk [vmem:[#allocation2 + $0x3] sm:$0x1] %vm390, %v1924
      %1932 = vrot.lane.b32.xlu0 %v1924, 127
      %v1933 = vpop.permute.xlu0 %1932
      %v1935 = vsel %vm396, %v1933, 0.0
      %1936 = vst.msk [vmem:[#allocation2 + $0x6] sm:$0x1] %vm390, %v1935
      %v1937 = vld [vmem:[%s1429] sm:$0x1]
      %v1938 = vmul.f32 %v1937, %v1414
      %1940 = vrot.lane.b32.xlu0 %v1938, 1
      %v1941 = vpop.permute.xlu0 %1940
      %v1943 = vsel %vm388, 0.0, %v1941
      %1944 = vst.msk [vmem:[#allocation2 + $0x1] sm:$0x1] %vm390, %v1943
      %1945 = vst.msk [vmem:[#allocation2 + $0x4] sm:$0x1] %vm390, %v1938
      %1946 = vrot.lane.b32.xlu0 %v1938, 127
      %v1947 = vpop.permute.xlu0 %1946
      %v1949 = vsel %vm396, %v1947, 0.0
      %1950 = vst.msk [vmem:[#allocation2 + $0x7] sm:$0x1] %vm390, %v1949
      %v1951 = vld [vmem:[%s1445] sm:$0x1]
      %v1952 = vmul.f32 %v1951, %v1414
      %1954 = vrot.lane.b32.xlu0 %v1952, 1
      %v1955 = vpop.permute.xlu0 %1954
      %v1957 = vsel %vm388, 0.0, %v1955
      %1958 = vst.msk [vmem:[#allocation2 + $0x2] sm:$0x1] %vm390, %v1957
      %1959 = vst.msk [vmem:[#allocation2 + $0x5] sm:$0x1] %vm390, %v1952
      %1960 = vrot.lane.b32.xlu0 %v1952, 127
      %v1961 = vpop.permute.xlu0 %1960
      %v1963 = vsel %vm396, %v1961, 0.0
      %1964 = vst.msk [vmem:[#allocation2 + $0x8] sm:$0x1] %vm390, %v1963
      %v1965 = vld [vmem:[%s1715] sm:$0x1]
      %v1966 = vmul.f32 %v1965, %v1717
      %1968 = vrot.lane.b32.xlu0 %v1966, 1
      %v1969 = vpop.permute.xlu0 %1968
      %v1971 = vsel %vm388, 0.0, %v1969
      %1972 = vst.msk [vmem:[#allocation2 + $0x9] sm:$0x1] %vm390, %v1971
      %1973 = vst.msk [vmem:[#allocation2 + $0xc] sm:$0x1] %vm390, %v1966
      %1974 = vrot.lane.b32.xlu0 %v1966, 127
      %v1975 = vpop.permute.xlu0 %1974
      %v1977 = vsel %vm396, %v1975, 0.0
      %1978 = vst.msk [vmem:[#allocation2 + $0xf] sm:$0x1] %vm390, %v1977
      %v1979 = vld [vmem:[%s1732] sm:$0x1]
      %v1980 = vmul.f32 %v1979, %v1717
      %1982 = vrot.lane.b32.xlu0 %v1980, 1
      %v1983 = vpop.permute.xlu0 %1982
      %v1985 = vsel %vm388, 0.0, %v1983
      %1986 = vst.msk [vmem:[#allocation2 + $0xa] sm:$0x1] %vm390, %v1985
      %1987 = vst.msk [vmem:[#allocation2 + $0xd] sm:$0x1] %vm390, %v1980
      %1988 = vrot.lane.b32.xlu0 %v1980, 127
      %v1989 = vpop.permute.xlu0 %1988
      %v1991 = vsel %vm396, %v1989, 0.0
      %1992 = vst.msk [vmem:[#allocation2 + $0x10] sm:$0x1] %vm390, %v1991
      %v1993 = vld [vmem:[%s1748] sm:$0x1]
      %v1994 = vmul.f32 %v1993, %v1717
      %1996 = vrot.lane.b32.xlu0 %v1994, 1
      %v1997 = vpop.permute.xlu0 %1996
      %v1999 = vsel %vm388, 0.0, %v1997
      %2000 = vst.msk [vmem:[#allocation2 + $0xb] sm:$0x1] %vm390, %v1999
      %2001 = vst.msk [vmem:[#allocation2 + $0xe] sm:$0x1] %vm390, %v1994
      %2002 = vrot.lane.b32.xlu0 %v1994, 127
      %v2003 = vpop.permute.xlu0 %2002
      %v2005 = vsel %vm396, %v2003, 0.0
      %2006 = vst.msk [vmem:[#allocation2 + $0x11] sm:$0x1] %vm390, %v2005
      %s2007 = sadd.s32 %s368, 6
      %p2008 = scmp.ge.s32.totalorder %s2007, 0
      %p2009 = scmp.lt.s32.totalorder %s2007, 16
      %p2010 = pnand %p2008, %p2009
      %p2011 = pneg %p2010
      %s2012 = scalar_select %p2011, 1, 0
      %s2013 = scvt.s32.f32 %s2012
      %p2014 = scmp.gt.s32.totalorder %s2007, 0
      %s2015 = scalar_select %p2014, %s2007, 0
      %p2016 = scmp.lt.s32.totalorder %s2015, 15
      %s2017 = scalar_select %p2016, %s2015, 15
      %s2018 = scalar_lea.vmem %s351, %s2017
      %v2019 = vld [vmem:[%s2018] sm:$0x1]
      %v2020 = vstv %s2013
      %v2021 = vmul.f32 %v2019, %v2020
      %2023 = vrot.lane.b32.xlu0 %v2021, 1
      %v2024 = vpop.permute.xlu0 %2023
      %v2026 = vsel %vm388, 0.0, %v2024
      %2027 = vst.msk [vmem:[#allocation2 + $0x12] sm:$0x1] %vm390, %v2026
      %2028 = vst.msk [vmem:[#allocation2 + $0x15] sm:$0x1] %vm390, %v2021
      %2029 = vrot.lane.b32.xlu0 %v2021, 127
      %v2030 = vpop.permute.xlu0 %2029
      %v2032 = vsel %vm396, %v2030, 0.0
      %2033 = vst.msk [vmem:[#allocation2 + $0x18] sm:$0x1] %vm390, %v2032
      %s2034 = sadd.s32 %s2017, 16
      %s2035 = scalar_lea.vmem %s351, %s2034
      %v2036 = vld [vmem:[%s2035] sm:$0x1]
      %v2037 = vmul.f32 %v2036, %v2020
      %2039 = vrot.lane.b32.xlu0 %v2037, 1
      %v2040 = vpop.permute.xlu0 %2039
      %v2042 = vsel %vm388, 0.0, %v2040
      %2043 = vst.msk [vmem:[#allocation2 + $0x13] sm:$0x1] %vm390, %v2042
      %2044 = vst.msk [vmem:[#allocation2 + $0x16] sm:$0x1] %vm390, %v2037
      %2045 = vrot.lane.b32.xlu0 %v2037, 127
      %v2046 = vpop.permute.xlu0 %2045
      %v2048 = vsel %vm396, %v2046, 0.0
      %2049 = vst.msk [vmem:[#allocation2 + $0x19] sm:$0x1] %vm390, %v2048
      %s2050 = sadd.s32 %s2017, 32
      %s2051 = scalar_lea.vmem %s351, %s2050
      %v2052 = vld [vmem:[%s2051] sm:$0x1]
      %v2053 = vmul.f32 %v2052, %v2020
      %2055 = vrot.lane.b32.xlu0 %v2053, 1
      %v2056 = vpop.permute.xlu0 %2055
      %v2058 = vsel %vm388, 0.0, %v2056
      %2059 = vst.msk [vmem:[#allocation2 + $0x14] sm:$0x1] %vm390, %v2058
      %2060 = vst.msk [vmem:[#allocation2 + $0x17] sm:$0x1] %vm390, %v2053
      %2061 = vrot.lane.b32.xlu0 %v2053, 127
      %v2062 = vpop.permute.xlu0 %2061
      %v2064 = vsel %vm396, %v2062, 0.0
      %2065 = vst.msk [vmem:[#allocation2 + $0x1a] sm:$0x1] %vm390, %v2064
      %v2066 = vld [vmem:[%s1] sm:$0xff]
      %v2067 = vld [vmem:[%s1 + $0x8] sm:$0xff]
      %v2068 = vld [vmem:[%s1 + $0x10] sm:$0xff]
      %v2069 = vld [vmem:[%s1 + $0x18] sm:$0xff]
      %v2070 = vld [vmem:[#allocation2] sm:$0xff]
      %v2071 = vld [vmem:[#allocation2 + $0x8] sm:$0xff]
      %v2072 = vld [vmem:[#allocation2 + $0x10] sm:$0xff]
      %v2073 = vld [vmem:[#allocation2 + $0x18] sm:$0x7]
      %v2074 = vld [vmem:[%s2] sm:$0xff]
      %v2075 = vld [vmem:[%s2 + $0x8] sm:$0xff]
      %v2076 = vld [vmem:[%s2 + $0x10] sm:$0xff]
      %v2077 = vld [vmem:[%s2 + $0x18] sm:$0xff]
      %2079 = vset.pattern.permute.xlu0 0
      %2080 = vperm.xlu0 %2079, %v2074
      %v2081 = vpop.permute.xlu0 %2080
      %2084 = vset.pattern.permute.xlu0 0
      %2085 = vperm.xlu0 %2084, %v2075
      %v2086 = vpop.permute.xlu0 %2085
      %2089 = vset.pattern.permute.xlu0 0
      %2090 = vperm.xlu0 %2089, %v2076
      %v2091 = vpop.permute.xlu0 %2090
      %2094 = vset.pattern.permute.xlu0 0
      %2095 = vperm.xlu0 %2094, %v2077
      %v2096 = vpop.permute.xlu0 %2095
      %v2099 = vsel %vm580, %v2066, 0
      %v2102 = vsel %vm580, %v2067, 0
      %v2105 = vsel %vm580, %v2068, 0
      %v2108 = vsel %vm580, %v2069, 0
      %v2111 = vsel %vm593, %v2073, 0
      %2113 = vmatprep.subr.mxu0 0.0
      %2114 = vmatpush1.msra.mxu0 0.0
      %2115 = vmatprep.subr.mxu0 0.0
      %2116 = vmatpush1.msra.mxu0 0.0
      %2117 = vmatprep.subr.mxu0 0.0
      %2118 = vmatpush1.msra.mxu0 0.0
      %2119 = vmatprep.subr.mxu0 0.0
      %2120 = vmatpush1.msra.mxu0 0.0
      %2121 = vmatprep.subr.mxu0 0.0
      %2122 = vmatpush1.msra.mxu0 0.0
      %2123 = vmatprep.subr.mxu0 0.0
      %2124 = vmatpush1.msra.mxu0 0.0
      %2125 = vmatprep.subr.mxu0 0.0
      %2126 = vmatpush1.msra.mxu0 0.0
      %2127 = vmatprep.subr.mxu0 0.0
      %2128 = vmatpush1.msra.mxu0 0.0
      %2129 = vmatprep.subr.mxu0 0.0
      %2130 = vmatpush1.msra.mxu0 0.0
      %2131 = vmatprep.subr.mxu0 0.0
      %2132 = vmatpush1.msra.mxu0 0.0
      %2133 = vmatprep.subr.mxu0 0.0
      %2134 = vmatpush1.msra.mxu0 0.0
      %2135 = vmatprep.subr.mxu0 0.0
      %2136 = vmatpush1.msra.mxu0 0.0
      %2137 = vmatprep.subr.mxu0 0.0
      %2138 = vmatpush1.msra.mxu0 %v2111
      %2139 = vmatprep.subr.mxu0 0.0
      %2140 = vmatpush1.msra.mxu0 %v2072
      %2141 = vmatprep.subr.mxu0 0.0
      %2142 = vmatpush1.msra.mxu0 %v2071
      %2143 = vmatprep.subr.mxu0 0.0
      %2144 = vmatpush1.msra.mxu0 %v2070
      %2145 = vmatprep.subr.mxu0 0.0
      %2146 = vmatpush2.msra.mxu0 0.0
      %2147 = vmatprep.subr.mxu0 0.0
      %2148 = vmatpush2.msra.mxu0 0.0
      %2149 = vmatprep.subr.mxu0 0.0
      %2150 = vmatpush2.msra.mxu0 0.0
      %2151 = vmatprep.subr.mxu0 0.0
      %2152 = vmatpush2.msra.mxu0 0.0
      %2153 = vmatprep.subr.mxu0 0.0
      %2154 = vmatpush2.msra.mxu0 0.0
      %2155 = vmatprep.subr.mxu0 0.0
      %2156 = vmatpush2.msra.mxu0 0.0
      %2157 = vmatprep.subr.mxu0 0.0
      %2158 = vmatpush2.msra.mxu0 0.0
      %2159 = vmatprep.subr.mxu0 0.0
      %2160 = vmatpush2.msra.mxu0 0.0
      %2161 = vmatprep.subr.mxu0 0.0
      %2162 = vmatpush2.msra.mxu0 0.0
      %2163 = vmatprep.subr.mxu0 0.0
      %2164 = vmatpush2.msra.mxu0 0.0
      %2165 = vmatprep.subr.mxu0 0.0
      %2166 = vmatpush2.msra.mxu0 0.0
      %2167 = vmatprep.subr.mxu0 0.0
      %2168 = vmatpush2.msra.mxu0 0.0
      %2169 = vmatprep.subr.mxu0 0.0
      %2170 = vmatpush2.msra.mxu0 0.0
      %2171 = vmatprep.subr.mxu0 0.0
      %2172 = vmatpush2.msra.mxu0 0.0
      %2173 = vmatprep.subr.mxu0 0.0
      %2174 = vmatpush2.msra.mxu0 0.0
      %2175 = vmatprep.subr.mxu0 0.0
      %2176 = vmatpush2.msra.mxu0 0.0
      %2177 = vmatprep.mubr.f32.mxu0 0.0
      %2178 = vmatmul.mubr.f32.gmra.mxu0 %v2099
      %v2179 = vpop.f32.mrf.mxu0
      %v2180 = vadd.f32 %v2081, %v2179
      %v2181 = vpop.f32.mrf.mxu0
      %2182 = vmatprep.mubr.f32.mxu0 0.0
      %2183 = vmatmul.mubr.f32.gmra.mxu0 %v2102
      %v2184 = vpop.f32.mrf.mxu0
      %v2185 = vadd.f32 %v2086, %v2184
      %v2186 = vpop.f32.mrf.mxu0
      %2187 = vmatprep.mubr.f32.mxu0 0.0
      %2188 = vmatmul.mubr.f32.gmra.mxu0 %v2105
      %v2189 = vpop.f32.mrf.mxu0
      %v2190 = vadd.f32 %v2091, %v2189
      %v2191 = vpop.f32.mrf.mxu0
      %2192 = vmatprep.mubr.f32.mxu0 0.0
      %2193 = vmatmul.mubr.f32.gmra.mxu0 %v2108
      %v2194 = vpop.f32.mrf.mxu0
      %v2195 = vadd.f32 %v2096, %v2194
      %v2196 = vpop.f32.mrf.mxu0
      %2197 = vdwg.mxu0
      %v2198 = vmax.f32 %v2180, 0.0
      %v2199 = vmax.f32 %v2185, 0.0
      %v2200 = vmax.f32 %v2190, 0.0
      %v2201 = vmax.f32 %v2195, 0.0
      %v2202 = vld [vmem:[#allocation3] sm:$0xff]
      %v2203 = vld [vmem:[#allocation3 + $0x8] sm:$0xff]
      %v2204 = vld [vmem:[#allocation3 + $0x10] sm:$0xff]
      %v2205 = vld [vmem:[#allocation3 + $0x18] sm:$0xff]
      %v2206 = vsel %vm690, %v2198, 0.0
      %2207 = vadd.xlane.f32.xlu0 %v2206
      %v2208 = vpop.xlane.xlu0 %2207
      %v2209 = vsel %vm690, %v2199, 0.0
      %2210 = vadd.xlane.f32.xlu0 %v2209
      %v2211 = vpop.xlane.xlu0 %2210
      %v2212 = vsel %vm690, %v2200, 0.0
      %2213 = vadd.xlane.f32.xlu0 %v2212
      %v2214 = vpop.xlane.xlu0 %2213
      %v2215 = vsel %vm690, %v2201, 0.0
      %2216 = vadd.xlane.f32.xlu0 %v2215
      %v2217 = vpop.xlane.xlu0 %2216
      %v2218 = vadd.f32 %v2202, %v2208
      %v2219 = vadd.f32 %v2203, %v2211
      %v2220 = vadd.f32 %v2204, %v2214
      %v2221 = vadd.f32 %v2205, %v2217
      %2222 = vst.msk [vmem:[#allocation3] sm:$0xff] %vm388, %v2218
      %2223 = vst.msk [vmem:[#allocation3 + $0x8] sm:$0xff] %vm388, %v2219
      %2224 = vst.msk [vmem:[#allocation3 + $0x10] sm:$0xff] %vm388, %v2220
      %2225 = vst.msk [vmem:[#allocation3 + $0x18] sm:$0xff] %vm388, %v2221
      %v2226 = vld [vmem:[%s1715] sm:$0x1]
      %v2227 = vmul.f32 %v2226, %v1717
      %2229 = vrot.lane.b32.xlu0 %v2227, 1
      %v2230 = vpop.permute.xlu0 %2229
      %v2232 = vsel %vm388, 0.0, %v2230
      %2233 = vst.msk [vmem:[#allocation2] sm:$0x1] %vm390, %v2232
      %2234 = vst.msk [vmem:[#allocation2 + $0x3] sm:$0x1] %vm390, %v2227
      %2235 = vrot.lane.b32.xlu0 %v2227, 127
      %v2236 = vpop.permute.xlu0 %2235
      %v2238 = vsel %vm396, %v2236, 0.0
      %2239 = vst.msk [vmem:[#allocation2 + $0x6] sm:$0x1] %vm390, %v2238
      %v2240 = vld [vmem:[%s1732] sm:$0x1]
      %v2241 = vmul.f32 %v2240, %v1717
      %2243 = vrot.lane.b32.xlu0 %v2241, 1
      %v2244 = vpop.permute.xlu0 %2243
      %v2246 = vsel %vm388, 0.0, %v2244
      %2247 = vst.msk [vmem:[#allocation2 + $0x1] sm:$0x1] %vm390, %v2246
      %2248 = vst.msk [vmem:[#allocation2 + $0x4] sm:$0x1] %vm390, %v2241
      %2249 = vrot.lane.b32.xlu0 %v2241, 127
      %v2250 = vpop.permute.xlu0 %2249
      %v2252 = vsel %vm396, %v2250, 0.0
      %2253 = vst.msk [vmem:[#allocation2 + $0x7] sm:$0x1] %vm390, %v2252
      %v2254 = vld [vmem:[%s1748] sm:$0x1]
      %v2255 = vmul.f32 %v2254, %v1717
      %2257 = vrot.lane.b32.xlu0 %v2255, 1
      %v2258 = vpop.permute.xlu0 %2257
      %v2260 = vsel %vm388, 0.0, %v2258
      %2261 = vst.msk [vmem:[#allocation2 + $0x2] sm:$0x1] %vm390, %v2260
      %2262 = vst.msk [vmem:[#allocation2 + $0x5] sm:$0x1] %vm390, %v2255
      %2263 = vrot.lane.b32.xlu0 %v2255, 127
      %v2264 = vpop.permute.xlu0 %2263
      %v2266 = vsel %vm396, %v2264, 0.0
      %2267 = vst.msk [vmem:[#allocation2 + $0x8] sm:$0x1] %vm390, %v2266
      %v2268 = vld [vmem:[%s2018] sm:$0x1]
      %v2269 = vmul.f32 %v2268, %v2020
      %2271 = vrot.lane.b32.xlu0 %v2269, 1
      %v2272 = vpop.permute.xlu0 %2271
      %v2274 = vsel %vm388, 0.0, %v2272
      %2275 = vst.msk [vmem:[#allocation2 + $0x9] sm:$0x1] %vm390, %v2274
      %2276 = vst.msk [vmem:[#allocation2 + $0xc] sm:$0x1] %vm390, %v2269
      %2277 = vrot.lane.b32.xlu0 %v2269, 127
      %v2278 = vpop.permute.xlu0 %2277
      %v2280 = vsel %vm396, %v2278, 0.0
      %2281 = vst.msk [vmem:[#allocation2 + $0xf] sm:$0x1] %vm390, %v2280
      %v2282 = vld [vmem:[%s2035] sm:$0x1]
      %v2283 = vmul.f32 %v2282, %v2020
      %2285 = vrot.lane.b32.xlu0 %v2283, 1
      %v2286 = vpop.permute.xlu0 %2285
      %v2288 = vsel %vm388, 0.0, %v2286
      %2289 = vst.msk [vmem:[#allocation2 + $0xa] sm:$0x1] %vm390, %v2288
      %2290 = vst.msk [vmem:[#allocation2 + $0xd] sm:$0x1] %vm390, %v2283
      %2291 = vrot.lane.b32.xlu0 %v2283, 127
      %v2292 = vpop.permute.xlu0 %2291
      %v2294 = vsel %vm396, %v2292, 0.0
      %2295 = vst.msk [vmem:[#allocation2 + $0x10] sm:$0x1] %vm390, %v2294
      %v2296 = vld [vmem:[%s2051] sm:$0x1]
      %v2297 = vmul.f32 %v2296, %v2020
      %2299 = vrot.lane.b32.xlu0 %v2297, 1
      %v2300 = vpop.permute.xlu0 %2299
      %v2302 = vsel %vm388, 0.0, %v2300
      %2303 = vst.msk [vmem:[#allocation2 + $0xb] sm:$0x1] %vm390, %v2302
      %2304 = vst.msk [vmem:[#allocation2 + $0xe] sm:$0x1] %vm390, %v2297
      %2305 = vrot.lane.b32.xlu0 %v2297, 127
      %v2306 = vpop.permute.xlu0 %2305
      %v2308 = vsel %vm396, %v2306, 0.0
      %2309 = vst.msk [vmem:[#allocation2 + $0x11] sm:$0x1] %vm390, %v2308
      %s2310 = sadd.s32 %s368, 7
      %p2311 = scmp.ge.s32.totalorder %s2310, 0
      %p2312 = scmp.lt.s32.totalorder %s2310, 16
      %p2313 = pnand %p2311, %p2312
      %p2314 = pneg %p2313
      %s2315 = scalar_select %p2314, 1, 0
      %s2316 = scvt.s32.f32 %s2315
      %p2317 = scmp.gt.s32.totalorder %s2310, 0
      %s2318 = scalar_select %p2317, %s2310, 0
      %p2319 = scmp.lt.s32.totalorder %s2318, 15
      %s2320 = scalar_select %p2319, %s2318, 15
      %s2321 = scalar_lea.vmem %s351, %s2320
      %v2322 = vld [vmem:[%s2321] sm:$0x1]
      %v2323 = vstv %s2316
      %v2324 = vmul.f32 %v2322, %v2323
      %2326 = vrot.lane.b32.xlu0 %v2324, 1
      %v2327 = vpop.permute.xlu0 %2326
      %v2329 = vsel %vm388, 0.0, %v2327
      %2330 = vst.msk [vmem:[#allocation2 + $0x12] sm:$0x1] %vm390, %v2329
      %2331 = vst.msk [vmem:[#allocation2 + $0x15] sm:$0x1] %vm390, %v2324
      %2332 = vrot.lane.b32.xlu0 %v2324, 127
      %v2333 = vpop.permute.xlu0 %2332
      %v2335 = vsel %vm396, %v2333, 0.0
      %2336 = vst.msk [vmem:[#allocation2 + $0x18] sm:$0x1] %vm390, %v2335
      %s2337 = sadd.s32 %s2320, 16
      %s2338 = scalar_lea.vmem %s351, %s2337
      %v2339 = vld [vmem:[%s2338] sm:$0x1]
      %v2340 = vmul.f32 %v2339, %v2323
      %2342 = vrot.lane.b32.xlu0 %v2340, 1
      %v2343 = vpop.permute.xlu0 %2342
      %v2345 = vsel %vm388, 0.0, %v2343
      %2346 = vst.msk [vmem:[#allocation2 + $0x13] sm:$0x1] %vm390, %v2345
      %2347 = vst.msk [vmem:[#allocation2 + $0x16] sm:$0x1] %vm390, %v2340
      %2348 = vrot.lane.b32.xlu0 %v2340, 127
      %v2349 = vpop.permute.xlu0 %2348
      %v2351 = vsel %vm396, %v2349, 0.0
      %2352 = vst.msk [vmem:[#allocation2 + $0x19] sm:$0x1] %vm390, %v2351
      %s2353 = sadd.s32 %s2320, 32
      %s2354 = scalar_lea.vmem %s351, %s2353
      %v2355 = vld [vmem:[%s2354] sm:$0x1]
      %v2356 = vmul.f32 %v2355, %v2323
      %2358 = vrot.lane.b32.xlu0 %v2356, 1
      %v2359 = vpop.permute.xlu0 %2358
      %v2361 = vsel %vm388, 0.0, %v2359
      %2362 = vst.msk [vmem:[#allocation2 + $0x14] sm:$0x1] %vm390, %v2361
      %2363 = vst.msk [vmem:[#allocation2 + $0x17] sm:$0x1] %vm390, %v2356
      %2364 = vrot.lane.b32.xlu0 %v2356, 127
      %v2365 = vpop.permute.xlu0 %2364
      %v2367 = vsel %vm396, %v2365, 0.0
      %2368 = vst.msk [vmem:[#allocation2 + $0x1a] sm:$0x1] %vm390, %v2367
      %v2369 = vld [vmem:[%s1] sm:$0xff]
      %v2370 = vld [vmem:[%s1 + $0x8] sm:$0xff]
      %v2371 = vld [vmem:[%s1 + $0x10] sm:$0xff]
      %v2372 = vld [vmem:[%s1 + $0x18] sm:$0xff]
      %v2373 = vld [vmem:[#allocation2] sm:$0xff]
      %v2374 = vld [vmem:[#allocation2 + $0x8] sm:$0xff]
      %v2375 = vld [vmem:[#allocation2 + $0x10] sm:$0xff]
      %v2376 = vld [vmem:[#allocation2 + $0x18] sm:$0x7]
      %v2377 = vld [vmem:[%s2] sm:$0xff]
      %v2378 = vld [vmem:[%s2 + $0x8] sm:$0xff]
      %v2379 = vld [vmem:[%s2 + $0x10] sm:$0xff]
      %v2380 = vld [vmem:[%s2 + $0x18] sm:$0xff]
      %2382 = vset.pattern.permute.xlu0 0
      %2383 = vperm.xlu0 %2382, %v2377
      %v2384 = vpop.permute.xlu0 %2383
      %2387 = vset.pattern.permute.xlu0 0
      %2388 = vperm.xlu0 %2387, %v2378
      %v2389 = vpop.permute.xlu0 %2388
      %2392 = vset.pattern.permute.xlu0 0
      %2393 = vperm.xlu0 %2392, %v2379
      %v2394 = vpop.permute.xlu0 %2393
      %2397 = vset.pattern.permute.xlu0 0
      %2398 = vperm.xlu0 %2397, %v2380
      %v2399 = vpop.permute.xlu0 %2398
      %v2402 = vsel %vm580, %v2369, 0
      %v2405 = vsel %vm580, %v2370, 0
      %v2408 = vsel %vm580, %v2371, 0
      %v2411 = vsel %vm580, %v2372, 0
      %v2414 = vsel %vm593, %v2376, 0
      %2416 = vmatprep.subr.mxu0 0.0
      %2417 = vmatpush1.msra.mxu0 0.0
      %2418 = vmatprep.subr.mxu0 0.0
      %2419 = vmatpush1.msra.mxu0 0.0
      %2420 = vmatprep.subr.mxu0 0.0
      %2421 = vmatpush1.msra.mxu0 0.0
      %2422 = vmatprep.subr.mxu0 0.0
      %2423 = vmatpush1.msra.mxu0 0.0
      %2424 = vmatprep.subr.mxu0 0.0
      %2425 = vmatpush1.msra.mxu0 0.0
      %2426 = vmatprep.subr.mxu0 0.0
      %2427 = vmatpush1.msra.mxu0 0.0
      %2428 = vmatprep.subr.mxu0 0.0
      %2429 = vmatpush1.msra.mxu0 0.0
      %2430 = vmatprep.subr.mxu0 0.0
      %2431 = vmatpush1.msra.mxu0 0.0
      %2432 = vmatprep.subr.mxu0 0.0
      %2433 = vmatpush1.msra.mxu0 0.0
      %2434 = vmatprep.subr.mxu0 0.0
      %2435 = vmatpush1.msra.mxu0 0.0
      %2436 = vmatprep.subr.mxu0 0.0
      %2437 = vmatpush1.msra.mxu0 0.0
      %2438 = vmatprep.subr.mxu0 0.0
      %2439 = vmatpush1.msra.mxu0 0.0
      %2440 = vmatprep.subr.mxu0 0.0
      %2441 = vmatpush1.msra.mxu0 %v2414
      %2442 = vmatprep.subr.mxu0 0.0
      %2443 = vmatpush1.msra.mxu0 %v2375
      %2444 = vmatprep.subr.mxu0 0.0
      %2445 = vmatpush1.msra.mxu0 %v2374
      %2446 = vmatprep.subr.mxu0 0.0
      %2447 = vmatpush1.msra.mxu0 %v2373
      %2448 = vmatprep.subr.mxu0 0.0
      %2449 = vmatpush2.msra.mxu0 0.0
      %2450 = vmatprep.subr.mxu0 0.0
      %2451 = vmatpush2.msra.mxu0 0.0
      %2452 = vmatprep.subr.mxu0 0.0
      %2453 = vmatpush2.msra.mxu0 0.0
      %2454 = vmatprep.subr.mxu0 0.0
      %2455 = vmatpush2.msra.mxu0 0.0
      %2456 = vmatprep.subr.mxu0 0.0
      %2457 = vmatpush2.msra.mxu0 0.0
      %2458 = vmatprep.subr.mxu0 0.0
      %2459 = vmatpush2.msra.mxu0 0.0
      %2460 = vmatprep.subr.mxu0 0.0
      %2461 = vmatpush2.msra.mxu0 0.0
      %2462 = vmatprep.subr.mxu0 0.0
      %2463 = vmatpush2.msra.mxu0 0.0
      %2464 = vmatprep.subr.mxu0 0.0
      %2465 = vmatpush2.msra.mxu0 0.0
      %2466 = vmatprep.subr.mxu0 0.0
      %2467 = vmatpush2.msra.mxu0 0.0
      %2468 = vmatprep.subr.mxu0 0.0
      %2469 = vmatpush2.msra.mxu0 0.0
      %2470 = vmatprep.subr.mxu0 0.0
      %2471 = vmatpush2.msra.mxu0 0.0
      %2472 = vmatprep.subr.mxu0 0.0
      %2473 = vmatpush2.msra.mxu0 0.0
      %2474 = vmatprep.subr.mxu0 0.0
      %2475 = vmatpush2.msra.mxu0 0.0
      %2476 = vmatprep.subr.mxu0 0.0
      %2477 = vmatpush2.msra.mxu0 0.0
      %2478 = vmatprep.subr.mxu0 0.0
      %2479 = vmatpush2.msra.mxu0 0.0
      %2480 = vmatprep.mubr.f32.mxu0 0.0
      %2481 = vmatmul.mubr.f32.gmra.mxu0 %v2402
      %v2482 = vpop.f32.mrf.mxu0
      %v2483 = vadd.f32 %v2384, %v2482
      %v2484 = vpop.f32.mrf.mxu0
      %2485 = vmatprep.mubr.f32.mxu0 0.0
      %2486 = vmatmul.mubr.f32.gmra.mxu0 %v2405
      %v2487 = vpop.f32.mrf.mxu0
      %v2488 = vadd.f32 %v2389, %v2487
      %v2489 = vpop.f32.mrf.mxu0
      %2490 = vmatprep.mubr.f32.mxu0 0.0
      %2491 = vmatmul.mubr.f32.gmra.mxu0 %v2408
      %v2492 = vpop.f32.mrf.mxu0
      %v2493 = vadd.f32 %v2394, %v2492
      %v2494 = vpop.f32.mrf.mxu0
      %2495 = vmatprep.mubr.f32.mxu0 0.0
      %2496 = vmatmul.mubr.f32.gmra.mxu0 %v2411
      %v2497 = vpop.f32.mrf.mxu0
      %v2498 = vadd.f32 %v2399, %v2497
      %v2499 = vpop.f32.mrf.mxu0
      %2500 = vdwg.mxu0
      %v2501 = vmax.f32 %v2483, 0.0
      %v2502 = vmax.f32 %v2488, 0.0
      %v2503 = vmax.f32 %v2493, 0.0
      %v2504 = vmax.f32 %v2498, 0.0
      %v2505 = vld [vmem:[#allocation3] sm:$0xff]
      %v2506 = vld [vmem:[#allocation3 + $0x8] sm:$0xff]
      %v2507 = vld [vmem:[#allocation3 + $0x10] sm:$0xff]
      %v2508 = vld [vmem:[#allocation3 + $0x18] sm:$0xff]
      %v2509 = vsel %vm690, %v2501, 0.0
      %2510 = vadd.xlane.f32.xlu0 %v2509
      %v2511 = vpop.xlane.xlu0 %2510
      %v2512 = vsel %vm690, %v2502, 0.0
      %2513 = vadd.xlane.f32.xlu0 %v2512
      %v2514 = vpop.xlane.xlu0 %2513
      %v2515 = vsel %vm690, %v2503, 0.0
      %2516 = vadd.xlane.f32.xlu0 %v2515
      %v2517 = vpop.xlane.xlu0 %2516
      %v2518 = vsel %vm690, %v2504, 0.0
      %2519 = vadd.xlane.f32.xlu0 %v2518
      %v2520 = vpop.xlane.xlu0 %2519
      %v2521 = vadd.f32 %v2505, %v2511
      %v2522 = vadd.f32 %v2506, %v2514
      %v2523 = vadd.f32 %v2507, %v2517
      %v2524 = vadd.f32 %v2508, %v2520
      %2525 = vst.msk [vmem:[#allocation3] sm:$0xff] %vm388, %v2521
      %2526 = vst.msk [vmem:[#allocation3 + $0x8] sm:$0xff] %vm388, %v2522
      %2527 = vst.msk [vmem:[#allocation3 + $0x10] sm:$0xff] %vm388, %v2523
      %2528 = vst.msk [vmem:[#allocation3 + $0x18] sm:$0xff] %vm388, %v2524
      %v2529 = vld [vmem:[%s2018] sm:$0x1]
      %v2530 = vmul.f32 %v2529, %v2020
      %2532 = vrot.lane.b32.xlu0 %v2530, 1
      %v2533 = vpop.permute.xlu0 %2532
      %v2535 = vsel %vm388, 0.0, %v2533
      %2536 = vst.msk [vmem:[#allocation2] sm:$0x1] %vm390, %v2535
      %2537 = vst.msk [vmem:[#allocation2 + $0x3] sm:$0x1] %vm390, %v2530
      %2538 = vrot.lane.b32.xlu0 %v2530, 127
      %v2539 = vpop.permute.xlu0 %2538
      %v2541 = vsel %vm396, %v2539, 0.0
      %2542 = vst.msk [vmem:[#allocation2 + $0x6] sm:$0x1] %vm390, %v2541
      %v2543 = vld [vmem:[%s2035] sm:$0x1]
      %v2544 = vmul.f32 %v2543, %v2020
      %2546 = vrot.lane.b32.xlu0 %v2544, 1
      %v2547 = vpop.permute.xlu0 %2546
      %v2549 = vsel %vm388, 0.0, %v2547
      %2550 = vst.msk [vmem:[#allocation2 + $0x1] sm:$0x1] %vm390, %v2549
      %2551 = vst.msk [vmem:[#allocation2 + $0x4] sm:$0x1] %vm390, %v2544
      %2552 = vrot.lane.b32.xlu0 %v2544, 127
      %v2553 = vpop.permute.xlu0 %2552
      %v2555 = vsel %vm396, %v2553, 0.0
      %2556 = vst.msk [vmem:[#allocation2 + $0x7] sm:$0x1] %vm390, %v2555
      %v2557 = vld [vmem:[%s2051] sm:$0x1]
      %v2558 = vmul.f32 %v2557, %v2020
      %2560 = vrot.lane.b32.xlu0 %v2558, 1
      %v2561 = vpop.permute.xlu0 %2560
      %v2563 = vsel %vm388, 0.0, %v2561
      %2564 = vst.msk [vmem:[#allocation2 + $0x2] sm:$0x1] %vm390, %v2563
      %2565 = vst.msk [vmem:[#allocation2 + $0x5] sm:$0x1] %vm390, %v2558
      %2566 = vrot.lane.b32.xlu0 %v2558, 127
      %v2567 = vpop.permute.xlu0 %2566
      %v2569 = vsel %vm396, %v2567, 0.0
      %2570 = vst.msk [vmem:[#allocation2 + $0x8] sm:$0x1] %vm390, %v2569
      %v2571 = vld [vmem:[%s2321] sm:$0x1]
      %v2572 = vmul.f32 %v2571, %v2323
      %2574 = vrot.lane.b32.xlu0 %v2572, 1
      %v2575 = vpop.permute.xlu0 %2574
      %v2577 = vsel %vm388, 0.0, %v2575
      %2578 = vst.msk [vmem:[#allocation2 + $0x9] sm:$0x1] %vm390, %v2577
      %2579 = vst.msk [vmem:[#allocation2 + $0xc] sm:$0x1] %vm390, %v2572
      %2580 = vrot.lane.b32.xlu0 %v2572, 127
      %v2581 = vpop.permute.xlu0 %2580
      %v2583 = vsel %vm396, %v2581, 0.0
      %2584 = vst.msk [vmem:[#allocation2 + $0xf] sm:$0x1] %vm390, %v2583
      %v2585 = vld [vmem:[%s2338] sm:$0x1]
      %v2586 = vmul.f32 %v2585, %v2323
      %2588 = vrot.lane.b32.xlu0 %v2586, 1
      %v2589 = vpop.permute.xlu0 %2588
      %v2591 = vsel %vm388, 0.0, %v2589
      %2592 = vst.msk [vmem:[#allocation2 + $0xa] sm:$0x1] %vm390, %v2591
      %2593 = vst.msk [vmem:[#allocation2 + $0xd] sm:$0x1] %vm390, %v2586
      %2594 = vrot.lane.b32.xlu0 %v2586, 127
      %v2595 = vpop.permute.xlu0 %2594
      %v2597 = vsel %vm396, %v2595, 0.0
      %2598 = vst.msk [vmem:[#allocation2 + $0x10] sm:$0x1] %vm390, %v2597
      %v2599 = vld [vmem:[%s2354] sm:$0x1]
      %v2600 = vmul.f32 %v2599, %v2323
      %2602 = vrot.lane.b32.xlu0 %v2600, 1
      %v2603 = vpop.permute.xlu0 %2602
      %v2605 = vsel %vm388, 0.0, %v2603
      %2606 = vst.msk [vmem:[#allocation2 + $0xb] sm:$0x1] %vm390, %v2605
      %2607 = vst.msk [vmem:[#allocation2 + $0xe] sm:$0x1] %vm390, %v2600
      %2608 = vrot.lane.b32.xlu0 %v2600, 127
      %v2609 = vpop.permute.xlu0 %2608
      %v2611 = vsel %vm396, %v2609, 0.0
      %2612 = vst.msk [vmem:[#allocation2 + $0x11] sm:$0x1] %vm390, %v2611
      %s2613 = sadd.s32 %s368, 8
      %p2614 = scmp.ge.s32.totalorder %s2613, 0
      %p2615 = scmp.lt.s32.totalorder %s2613, 16
      %p2616 = pnand %p2614, %p2615
      %p2617 = pneg %p2616
      %s2618 = scalar_select %p2617, 1, 0
      %s2619 = scvt.s32.f32 %s2618
      %p2620 = scmp.gt.s32.totalorder %s2613, 0
      %s2621 = scalar_select %p2620, %s2613, 0
      %p2622 = scmp.lt.s32.totalorder %s2621, 15
      %s2623 = scalar_select %p2622, %s2621, 15
      %s2624 = scalar_lea.vmem %s351, %s2623
      %v2625 = vld [vmem:[%s2624] sm:$0x1]
      %v2626 = vstv %s2619
      %v2627 = vmul.f32 %v2625, %v2626
      %2629 = vrot.lane.b32.xlu0 %v2627, 1
      %v2630 = vpop.permute.xlu0 %2629
      %v2632 = vsel %vm388, 0.0, %v2630
      %2633 = vst.msk [vmem:[#allocation2 + $0x12] sm:$0x1] %vm390, %v2632
      %2634 = vst.msk [vmem:[#allocation2 + $0x15] sm:$0x1] %vm390, %v2627
      %2635 = vrot.lane.b32.xlu0 %v2627, 127
      %v2636 = vpop.permute.xlu0 %2635
      %v2638 = vsel %vm396, %v2636, 0.0
      %2639 = vst.msk [vmem:[#allocation2 + $0x18] sm:$0x1] %vm390, %v2638
      %s2640 = sadd.s32 %s2623, 16
      %s2641 = scalar_lea.vmem %s351, %s2640
      %v2642 = vld [vmem:[%s2641] sm:$0x1]
      %v2643 = vmul.f32 %v2642, %v2626
      %2645 = vrot.lane.b32.xlu0 %v2643, 1
      %v2646 = vpop.permute.xlu0 %2645
      %v2648 = vsel %vm388, 0.0, %v2646
      %2649 = vst.msk [vmem:[#allocation2 + $0x13] sm:$0x1] %vm390, %v2648
      %2650 = vst.msk [vmem:[#allocation2 + $0x16] sm:$0x1] %vm390, %v2643
      %2651 = vrot.lane.b32.xlu0 %v2643, 127
      %v2652 = vpop.permute.xlu0 %2651
      %v2654 = vsel %vm396, %v2652, 0.0
      %2655 = vst.msk [vmem:[#allocation2 + $0x19] sm:$0x1] %vm390, %v2654
      %s2656 = sadd.s32 %s2623, 32
      %s2657 = scalar_lea.vmem %s351, %s2656
      %v2658 = vld [vmem:[%s2657] sm:$0x1]
      %v2659 = vmul.f32 %v2658, %v2626
      %2661 = vrot.lane.b32.xlu0 %v2659, 1
      %v2662 = vpop.permute.xlu0 %2661
      %v2664 = vsel %vm388, 0.0, %v2662
      %2665 = vst.msk [vmem:[#allocation2 + $0x14] sm:$0x1] %vm390, %v2664
      %2666 = vst.msk [vmem:[#allocation2 + $0x17] sm:$0x1] %vm390, %v2659
      %2667 = vrot.lane.b32.xlu0 %v2659, 127
      %v2668 = vpop.permute.xlu0 %2667
      %v2670 = vsel %vm396, %v2668, 0.0
      %2671 = vst.msk [vmem:[#allocation2 + $0x1a] sm:$0x1] %vm390, %v2670
      %v2672 = vld [vmem:[%s1] sm:$0xff]
      %v2673 = vld [vmem:[%s1 + $0x8] sm:$0xff]
      %v2674 = vld [vmem:[%s1 + $0x10] sm:$0xff]
      %v2675 = vld [vmem:[%s1 + $0x18] sm:$0xff]
      %v2676 = vld [vmem:[#allocation2] sm:$0xff]
      %v2677 = vld [vmem:[#allocation2 + $0x8] sm:$0xff]
      %v2678 = vld [vmem:[#allocation2 + $0x10] sm:$0xff]
      %v2679 = vld [vmem:[#allocation2 + $0x18] sm:$0x7]
      %v2680 = vld [vmem:[%s2] sm:$0xff]
      %v2681 = vld [vmem:[%s2 + $0x8] sm:$0xff]
      %v2682 = vld [vmem:[%s2 + $0x10] sm:$0xff]
      %v2683 = vld [vmem:[%s2 + $0x18] sm:$0xff]
      %2685 = vset.pattern.permute.xlu0 0
      %2686 = vperm.xlu0 %2685, %v2680
      %v2687 = vpop.permute.xlu0 %2686
      %2690 = vset.pattern.permute.xlu0 0
      %2691 = vperm.xlu0 %2690, %v2681
      %v2692 = vpop.permute.xlu0 %2691
      %2695 = vset.pattern.permute.xlu0 0
      %2696 = vperm.xlu0 %2695, %v2682
      %v2697 = vpop.permute.xlu0 %2696
      %2700 = vset.pattern.permute.xlu0 0
      %2701 = vperm.xlu0 %2700, %v2683
      %v2702 = vpop.permute.xlu0 %2701
      %v2705 = vsel %vm580, %v2672, 0
      %v2708 = vsel %vm580, %v2673, 0
      %v2711 = vsel %vm580, %v2674, 0
      %v2714 = vsel %vm580, %v2675, 0
      %v2717 = vsel %vm593, %v2679, 0
      %2719 = vmatprep.subr.mxu0 0.0
      %2720 = vmatpush1.msra.mxu0 0.0
      %2721 = vmatprep.subr.mxu0 0.0
      %2722 = vmatpush1.msra.mxu0 0.0
      %2723 = vmatprep.subr.mxu0 0.0
      %2724 = vmatpush1.msra.mxu0 0.0
      %2725 = vmatprep.subr.mxu0 0.0
      %2726 = vmatpush1.msra.mxu0 0.0
      %2727 = vmatprep.subr.mxu0 0.0
      %2728 = vmatpush1.msra.mxu0 0.0
      %2729 = vmatprep.subr.mxu0 0.0
      %2730 = vmatpush1.msra.mxu0 0.0
      %2731 = vmatprep.subr.mxu0 0.0
      %2732 = vmatpush1.msra.mxu0 0.0
      %2733 = vmatprep.subr.mxu0 0.0
      %2734 = vmatpush1.msra.mxu0 0.0
      %2735 = vmatprep.subr.mxu0 0.0
      %2736 = vmatpush1.msra.mxu0 0.0
      %2737 = vmatprep.subr.mxu0 0.0
      %2738 = vmatpush1.msra.mxu0 0.0
      %2739 = vmatprep.subr.mxu0 0.0
      %2740 = vmatpush1.msra.mxu0 0.0
      %2741 = vmatprep.subr.mxu0 0.0
      %2742 = vmatpush1.msra.mxu0 0.0
      %2743 = vmatprep.subr.mxu0 0.0
      %2744 = vmatpush1.msra.mxu0 %v2717
      %2745 = vmatprep.subr.mxu0 0.0
      %2746 = vmatpush1.msra.mxu0 %v2678
      %2747 = vmatprep.subr.mxu0 0.0
      %2748 = vmatpush1.msra.mxu0 %v2677
      %2749 = vmatprep.subr.mxu0 0.0
      %2750 = vmatpush1.msra.mxu0 %v2676
      %2751 = vmatprep.subr.mxu0 0.0
      %2752 = vmatpush2.msra.mxu0 0.0
      %2753 = vmatprep.subr.mxu0 0.0
      %2754 = vmatpush2.msra.mxu0 0.0
      %2755 = vmatprep.subr.mxu0 0.0
      %2756 = vmatpush2.msra.mxu0 0.0
      %2757 = vmatprep.subr.mxu0 0.0
      %2758 = vmatpush2.msra.mxu0 0.0
      %2759 = vmatprep.subr.mxu0 0.0
      %2760 = vmatpush2.msra.mxu0 0.0
      %2761 = vmatprep.subr.mxu0 0.0
      %2762 = vmatpush2.msra.mxu0 0.0
      %2763 = vmatprep.subr.mxu0 0.0
      %2764 = vmatpush2.msra.mxu0 0.0
      %2765 = vmatprep.subr.mxu0 0.0
      %2766 = vmatpush2.msra.mxu0 0.0
      %2767 = vmatprep.subr.mxu0 0.0
      %2768 = vmatpush2.msra.mxu0 0.0
      %2769 = vmatprep.subr.mxu0 0.0
      %2770 = vmatpush2.msra.mxu0 0.0
      %2771 = vmatprep.subr.mxu0 0.0
      %2772 = vmatpush2.msra.mxu0 0.0
      %2773 = vmatprep.subr.mxu0 0.0
      %2774 = vmatpush2.msra.mxu0 0.0
      %2775 = vmatprep.subr.mxu0 0.0
      %2776 = vmatpush2.msra.mxu0 0.0
      %2777 = vmatprep.subr.mxu0 0.0
      %2778 = vmatpush2.msra.mxu0 0.0
      %2779 = vmatprep.subr.mxu0 0.0
      %2780 = vmatpush2.msra.mxu0 0.0
      %2781 = vmatprep.subr.mxu0 0.0
      %2782 = vmatpush2.msra.mxu0 0.0
      %2783 = vmatprep.mubr.f32.mxu0 0.0
      %2784 = vmatmul.mubr.f32.gmra.mxu0 %v2705
      %v2785 = vpop.f32.mrf.mxu0
      %v2786 = vadd.f32 %v2687, %v2785
      %v2787 = vpop.f32.mrf.mxu0
      %2788 = vmatprep.mubr.f32.mxu0 0.0
      %2789 = vmatmul.mubr.f32.gmra.mxu0 %v2708
      %v2790 = vpop.f32.mrf.mxu0
      %v2791 = vadd.f32 %v2692, %v2790
      %v2792 = vpop.f32.mrf.mxu0
      %2793 = vmatprep.mubr.f32.mxu0 0.0
      %2794 = vmatmul.mubr.f32.gmra.mxu0 %v2711
      %v2795 = vpop.f32.mrf.mxu0
      %v2796 = vadd.f32 %v2697, %v2795
      %v2797 = vpop.f32.mrf.mxu0
      %2798 = vmatprep.mubr.f32.mxu0 0.0
      %2799 = vmatmul.mubr.f32.gmra.mxu0 %v2714
      %v2800 = vpop.f32.mrf.mxu0
      %v2801 = vadd.f32 %v2702, %v2800
      %v2802 = vpop.f32.mrf.mxu0
      %2803 = vdwg.mxu0
      %v2804 = vmax.f32 %v2786, 0.0
      %v2805 = vmax.f32 %v2791, 0.0
      %v2806 = vmax.f32 %v2796, 0.0
      %v2807 = vmax.f32 %v2801, 0.0
      %v2808 = vld [vmem:[#allocation3] sm:$0xff]
      %v2809 = vld [vmem:[#allocation3 + $0x8] sm:$0xff]
      %v2810 = vld [vmem:[#allocation3 + $0x10] sm:$0xff]
      %v2811 = vld [vmem:[#allocation3 + $0x18] sm:$0xff]
      %v2812 = vsel %vm690, %v2804, 0.0
      %2813 = vadd.xlane.f32.xlu0 %v2812
      %v2814 = vpop.xlane.xlu0 %2813
      %v2815 = vsel %vm690, %v2805, 0.0
      %2816 = vadd.xlane.f32.xlu0 %v2815
      %v2817 = vpop.xlane.xlu0 %2816
      %v2818 = vsel %vm690, %v2806, 0.0
      %2819 = vadd.xlane.f32.xlu0 %v2818
      %v2820 = vpop.xlane.xlu0 %2819
      %v2821 = vsel %vm690, %v2807, 0.0
      %2822 = vadd.xlane.f32.xlu0 %v2821
      %v2823 = vpop.xlane.xlu0 %2822
      %v2824 = vadd.f32 %v2808, %v2814
      %v2825 = vadd.f32 %v2809, %v2817
      %v2826 = vadd.f32 %v2810, %v2820
      %v2827 = vadd.f32 %v2811, %v2823
      %2828 = vst.msk [vmem:[#allocation3] sm:$0xff] %vm388, %v2824
      %2829 = vst.msk [vmem:[#allocation3 + $0x8] sm:$0xff] %vm388, %v2825
      %2830 = vst.msk [vmem:[#allocation3 + $0x10] sm:$0xff] %vm388, %v2826
      %2831 = vst.msk [vmem:[#allocation3 + $0x18] sm:$0xff] %vm388, %v2827
      %p2832 = scmp.eq.s32.totalorder %s26, 1
      // Predicated region
      $region61: #{model_v2_forward.1} parent=55 // pred_check
        %p2833 = pneg %p2832
      $region62: #{model_v2_forward.1} parent=55 // pred_check_branch
        %2835 = sbr.rel (%p2833) target = $region64
      $region63: #{model_v2_forward.1} parent=55 // pred_region
        %v2836 = vld [vmem:[#allocation3] sm:$0xff]
        %v2837 = vld [vmem:[#allocation3 + $0x8] sm:$0xff]
        %v2838 = vld [vmem:[#allocation3 + $0x10] sm:$0xff]
        %v2839 = vld [vmem:[#allocation3 + $0x18] sm:$0xff]
        %v2840 = vmul.f32 %v2836, 0.00390625
        %v2841 = vmul.f32 %v2837, 0.00390625
        %v2842 = vmul.f32 %v2838, 0.00390625
        %v2843 = vmul.f32 %v2839, 0.00390625
        %v2844 = vld [vmem:[%s4] sm:$0xff]
        %v2845 = vld [vmem:[%s4 + $0x8] sm:$0xff]
        %v2846 = vld [vmem:[%s5] sm:$0xff]
        %v2847 = vld [vmem:[%s5 + $0x8] sm:$0xff]
        %v2848 = vld [vmem:[%s355] sm:$0x1f]
        %vm2849 = vcmask 39936
        %v2851 = vsel %vm2849, %v2846, 0
        %v2854 = vsel %vm2849, %v2847, 0
        %vm2856 = vcmask 1044480
        %v2858 = vsel %vm2856, %v2848, 0
        %2860 = vmatprep.subr.mxu0 0.0
        %2861 = vmatpush1.msra.mxu0 0.0
        %2862 = vmatprep.subr.mxu0 0.0
        %2863 = vmatpush1.msra.mxu0 0.0
        %2864 = vmatprep.subr.mxu0 0.0
        %2865 = vmatpush1.msra.mxu0 0.0
        %2866 = vmatprep.subr.mxu0 0.0
        %2867 = vmatpush1.msra.mxu0 0.0
        %2868 = vmatprep.subr.mxu0 0.0
        %2869 = vmatpush1.msra.mxu0 0.0
        %2870 = vmatprep.subr.mxu0 0.0
        %2871 = vmatpush1.msra.mxu0 0.0
        %2872 = vmatprep.subr.mxu0 0.0
        %2873 = vmatpush1.msra.mxu0 0.0
        %2874 = vmatprep.subr.mxu0 0.0
        %2875 = vmatpush1.msra.mxu0 0.0
        %2876 = vmatprep.subr.mxu0 0.0
        %2877 = vmatpush1.msra.mxu0 0.0
        %2878 = vmatprep.subr.mxu0 0.0
        %2879 = vmatpush1.msra.mxu0 0.0
        %2880 = vmatprep.subr.mxu0 0.0
        %2881 = vmatpush1.msra.mxu0 0.0
        %2882 = vmatprep.subr.mxu0 0.0
        %2883 = vmatpush1.msra.mxu0 0.0
        %2884 = vmatprep.subr.mxu0 0.0
        %2885 = vmatpush1.msra.mxu0 0.0
        %2886 = vmatprep.subr.mxu0 0.0
        %2887 = vmatpush1.msra.mxu0 0.0
        %2888 = vmatprep.subr.mxu0 0.0
        %2889 = vmatpush1.msra.mxu0 0.0
        %2890 = vmatprep.subr.mxu0 0.0
        %2891 = vmatpush1.msra.mxu0 %v2858
        %2892 = vmatprep.subr.mxu0 0.0
        %2893 = vmatpush2.msra.mxu0 0.0
        %2894 = vmatprep.subr.mxu0 0.0
        %2895 = vmatpush2.msra.mxu0 0.0
        %2896 = vmatprep.subr.mxu0 0.0
        %2897 = vmatpush2.msra.mxu0 0.0
        %2898 = vmatprep.subr.mxu0 0.0
        %2899 = vmatpush2.msra.mxu0 0.0
        %2900 = vmatprep.subr.mxu0 0.0
        %2901 = vmatpush2.msra.mxu0 0.0
        %2902 = vmatprep.subr.mxu0 0.0
        %2903 = vmatpush2.msra.mxu0 0.0
        %2904 = vmatprep.subr.mxu0 0.0
        %2905 = vmatpush2.msra.mxu0 0.0
        %2906 = vmatprep.subr.mxu0 0.0
        %2907 = vmatpush2.msra.mxu0 0.0
        %2908 = vmatprep.subr.mxu0 0.0
        %2909 = vmatpush2.msra.mxu0 0.0
        %2910 = vmatprep.subr.mxu0 0.0
        %2911 = vmatpush2.msra.mxu0 0.0
        %2912 = vmatprep.subr.mxu0 0.0
        %2913 = vmatpush2.msra.mxu0 0.0
        %2914 = vmatprep.subr.mxu0 0.0
        %2915 = vmatpush2.msra.mxu0 0.0
        %2916 = vmatprep.subr.mxu0 0.0
        %2917 = vmatpush2.msra.mxu0 0.0
        %2918 = vmatprep.subr.mxu0 0.0
        %2919 = vmatpush2.msra.mxu0 0.0
        %2920 = vmatprep.subr.mxu0 0.0
        %2921 = vmatpush2.msra.mxu0 0.0
        %2922 = vmatprep.subr.mxu0 0.0
        %2923 = vmatpush2.msra.mxu0 0.0
        %2924 = vmatprep.mubr.f32.mxu0 0.0
        %2925 = vmatmul.mubr.f32.gmra.mxu0 %v2851
        %v2926 = vpop.f32.mrf.mxu0
        %v2927 = vadd.f32 0.0, %v2926
        %v2928 = vpop.f32.mrf.mxu0
        %2929 = vmatprep.mubr.f32.mxu0 0.0
        %2930 = vmatmul.mubr.f32.gmra.mxu0 %v2854
        %v2931 = vpop.f32.mrf.mxu0
        %v2932 = vadd.f32 0.0, %v2931
        %v2933 = vpop.f32.mrf.mxu0
        %2934 = vdwg.mxu0
        %vm2935 = vcmask 261120
        %v2937 = vsel %vm2935, %v2844, 0
        %v2940 = vsel %vm2935, %v2845, 0
        %2942 = vmatprep.subr.mxu0 0.0
        %2943 = vmatpush1.msra.mxu0 0.0
        %2944 = vmatprep.subr.mxu0 0.0
        %2945 = vmatpush1.msra.mxu0 0.0
        %2946 = vmatprep.subr.mxu0 0.0
        %2947 = vmatpush1.msra.mxu0 0.0
        %2948 = vmatprep.subr.mxu0 0.0
        %2949 = vmatpush1.msra.mxu0 0.0
        %2950 = vmatprep.subr.mxu0 0.0
        %2951 = vmatpush1.msra.mxu0 0.0
        %2952 = vmatprep.subr.mxu0 0.0
        %2953 = vmatpush1.msra.mxu0 0.0
        %2954 = vmatprep.subr.mxu0 0.0
        %2955 = vmatpush1.msra.mxu0 0.0
        %2956 = vmatprep.subr.mxu0 0.0
        %2957 = vmatpush1.msra.mxu0 0.0
        %2958 = vmatprep.subr.mxu0 0.0
        %2959 = vmatpush1.msra.mxu0 0.0
        %2960 = vmatprep.subr.mxu0 0.0
        %2961 = vmatpush1.msra.mxu0 0.0
        %2962 = vmatprep.subr.mxu0 0.0
        %2963 = vmatpush1.msra.mxu0 0.0
        %2964 = vmatprep.subr.mxu0 0.0
        %2965 = vmatpush1.msra.mxu0 0.0
        %2966 = vmatprep.subr.mxu0 0.0
        %2967 = vmatpush1.msra.mxu0 %v2843
        %2968 = vmatprep.subr.mxu0 0.0
        %2969 = vmatpush1.msra.mxu0 %v2842
        %2970 = vmatprep.subr.mxu0 0.0
        %2971 = vmatpush1.msra.mxu0 %v2841
        %2972 = vmatprep.subr.mxu0 0.0
        %2973 = vmatpush1.msra.mxu0 %v2840
        %2974 = vmatprep.subr.mxu0 0.0
        %2975 = vmatpush2.msra.mxu0 0.0
        %2976 = vmatprep.subr.mxu0 0.0
        %2977 = vmatpush2.msra.mxu0 0.0
        %2978 = vmatprep.subr.mxu0 0.0
        %2979 = vmatpush2.msra.mxu0 0.0
        %2980 = vmatprep.subr.mxu0 0.0
        %2981 = vmatpush2.msra.mxu0 0.0
        %2982 = vmatprep.subr.mxu0 0.0
        %2983 = vmatpush2.msra.mxu0 0.0
        %2984 = vmatprep.subr.mxu0 0.0
        %2985 = vmatpush2.msra.mxu0 0.0
        %2986 = vmatprep.subr.mxu0 0.0
        %2987 = vmatpush2.msra.mxu0 0.0
        %2988 = vmatprep.subr.mxu0 0.0
        %2989 = vmatpush2.msra.mxu0 0.0
        %2990 = vmatprep.subr.mxu0 0.0
        %2991 = vmatpush2.msra.mxu0 0.0
        %2992 = vmatprep.subr.mxu0 0.0
        %2993 = vmatpush2.msra.mxu0 0.0
        %2994 = vmatprep.subr.mxu0 0.0
        %2995 = vmatpush2.msra.mxu0 0.0
        %2996 = vmatprep.subr.mxu0 0.0
        %2997 = vmatpush2.msra.mxu0 0.0
        %2998 = vmatprep.subr.mxu0 0.0
        %2999 = vmatpush2.msra.mxu0 0.0
        %3000 = vmatprep.subr.mxu0 0.0
        %3001 = vmatpush2.msra.mxu0 0.0
        %3002 = vmatprep.subr.mxu0 0.0
        %3003 = vmatpush2.msra.mxu0 0.0
        %3004 = vmatprep.subr.mxu0 0.0
        %3005 = vmatpush2.msra.mxu0 0.0
        %3006 = vmatprep.mubr.f32.mxu0 0.0
        %3007 = vmatmul.mubr.f32.gmra.mxu0 %v2937
        %v3008 = vpop.f32.mrf.mxu0
        %v3009 = vadd.f32 %v2927, %v3008
        %v3010 = vpop.f32.mrf.mxu0
        %3011 = vmatprep.mubr.f32.mxu0 0.0
        %3012 = vmatmul.mubr.f32.gmra.mxu0 %v2940
        %v3013 = vpop.f32.mrf.mxu0
        %v3014 = vadd.f32 %v2932, %v3013
        %v3015 = vpop.f32.mrf.mxu0
        %3016 = vdwg.mxu0
        %v3017 = vld [vmem:[%s6] sm:$0xff]
        %v3018 = vld [vmem:[%s6 + $0x8] sm:$0xff]
        %v3019 = vadd.f32 %v3009, %v3017
        %v3020 = vadd.f32 %v3014, %v3018
        %v3021 = vld [vmem:[%s7] sm:$0x1]
        %s3022 = sld [smem:[#allocation4]]
        %v3023 = vstv %s3022
        %v3025 = vsel %vm690, %v3021, 0
        %3027 = vmatprep.subr.mxu0 0.0
        %3028 = vmatpush1.msra.mxu0 0.0
        %3029 = vmatprep.subr.mxu0 0.0
        %3030 = vmatpush1.msra.mxu0 0.0
        %3031 = vmatprep.subr.mxu0 0.0
        %3032 = vmatpush1.msra.mxu0 0.0
        %3033 = vmatprep.subr.mxu0 0.0
        %3034 = vmatpush1.msra.mxu0 0.0
        %3035 = vmatprep.subr.mxu0 0.0
        %3036 = vmatpush1.msra.mxu0 0.0
        %3037 = vmatprep.subr.mxu0 0.0
        %3038 = vmatpush1.msra.mxu0 0.0
        %3039 = vmatprep.subr.mxu0 0.0
        %3040 = vmatpush1.msra.mxu0 0.0
        %3041 = vmatprep.subr.mxu0 0.0
        %3042 = vmatpush1.msra.mxu0 0.0
        %3043 = vmatprep.subr.mxu0 0.0
        %3044 = vmatpush1.msra.mxu0 0.0
        %3045 = vmatprep.subr.mxu0 0.0
        %3046 = vmatpush1.msra.mxu0 0.0
        %3047 = vmatprep.subr.mxu0 0.0
        %3048 = vmatpush1.msra.mxu0 0.0
        %3049 = vmatprep.subr.mxu0 0.0
        %3050 = vmatpush1.msra.mxu0 0.0
        %3051 = vmatprep.subr.mxu0 0.0
        %3052 = vmatpush1.msra.mxu0 0.0
        %3053 = vmatprep.subr.mxu0 0.0
        %3054 = vmatpush1.msra.mxu0 0.0
        %3055 = vmatprep.subr.mxu0 0.0
        %3056 = vmatpush1.msra.mxu0 %v3020
        %3057 = vmatprep.subr.mxu0 0.0
        %3058 = vmatpush1.msra.mxu0 %v3019
        %3059 = vmatprep.subr.mxu0 0.0
        %3060 = vmatpush2.msra.mxu0 0.0
        %3061 = vmatprep.subr.mxu0 0.0
        %3062 = vmatpush2.msra.mxu0 0.0
        %3063 = vmatprep.subr.mxu0 0.0
        %3064 = vmatpush2.msra.mxu0 0.0
        %3065 = vmatprep.subr.mxu0 0.0
        %3066 = vmatpush2.msra.mxu0 0.0
        %3067 = vmatprep.subr.mxu0 0.0
        %3068 = vmatpush2.msra.mxu0 0.0
        %3069 = vmatprep.subr.mxu0 0.0
        %3070 = vmatpush2.msra.mxu0 0.0
        %3071 = vmatprep.subr.mxu0 0.0
        %3072 = vmatpush2.msra.mxu0 0.0
        %3073 = vmatprep.subr.mxu0 0.0
        %3074 = vmatpush2.msra.mxu0 0.0
        %3075 = vmatprep.subr.mxu0 0.0
        %3076 = vmatpush2.msra.mxu0 0.0
        %3077 = vmatprep.subr.mxu0 0.0
        %3078 = vmatpush2.msra.mxu0 0.0
        %3079 = vmatprep.subr.mxu0 0.0
        %3080 = vmatpush2.msra.mxu0 0.0
        %3081 = vmatprep.subr.mxu0 0.0
        %3082 = vmatpush2.msra.mxu0 0.0
        %3083 = vmatprep.subr.mxu0 0.0
        %3084 = vmatpush2.msra.mxu0 0.0
        %3085 = vmatprep.subr.mxu0 0.0
        %3086 = vmatpush2.msra.mxu0 0.0
        %3087 = vmatprep.subr.mxu0 0.0
        %3088 = vmatpush2.msra.mxu0 0.0
        %3089 = vmatprep.subr.mxu0 0.0
        %3090 = vmatpush2.msra.mxu0 0.0
        %3091 = vmatprep.mubr.f32.mxu0 0.0
        %3092 = vmatmul.mubr.f32.gmra.mxu0 %v3025
        %v3093 = vpop.f32.mrf.mxu0
        %v3094 = vadd.f32 %v3023, %v3093
        %v3095 = vpop.f32.mrf.mxu0
        %3096 = vdwg.mxu0
        %vm3097 = vcmask 0
        %3098 = vst.msk [vmem:[%s358] sm:$0x1] %vm3097, %v3094
      $region64: #{model_v2_forward.1} parent=55 // pred_fallthru
        _
      %p3099 = scmp.lt.s32.totalorder %s25, 1
      %s3100 = scalar_select %p3099, %s25, 1
      %s3101 = scalar_lea.vmem %s9, %s3100
      // Predicated region
      $region65: #{model_v2_forward.1} parent=55 // pred_check
        %p3102 = pneg %p250
      $region66: #{model_v2_forward.1} parent=55 // pred_check_branch
        %3104 = sbr.rel (%p3102) target = $region68
      $region67: #{model_v2_forward.1} parent=55 // pred_region
        _
      $region68: #{model_v2_forward.1} parent=55 // pred_fallthru
        _
    $region56: #{model_v2_forward.1} parent=5 // pred_fallthru
      _
    %p3105 = scmp.le.s32.totalorder 2, %s16
    // Predicated region
    $region69: #{model_v2_forward.1} parent=5 // pred_check
      %p3106 = pneg %p3105
    $region70: #{model_v2_forward.1} parent=5 // pred_check_branch
      %3108 = sbr.rel (%p3106) target = $region72
    $region71: #{model_v2_forward.1} parent=5 // pred_region
      %s3109 = ssub.s32 %s16, 2
      // Predicated region
      $region73: #{model_v2_forward.1} parent=71 // pred_check
        %p3110 = pneg %p256
      $region74: #{model_v2_forward.1} parent=71 // pred_check_branch
        %3112 = sbr.rel (%p3110) target = $region76
      $region75: #{model_v2_forward.1} parent=71 // pred_region
        %p3113 = scmp.lt.s32.totalorder %s27, 1
        %s3114 = scalar_select %p3113, %s27, 1
        %s3115 = scalar_lea.vmem %s9, %s3114
      $region76: #{model_v2_forward.1} parent=71 // pred_fallthru
        _
    $region72: #{model_v2_forward.1} parent=5 // pred_fallthru
      _
  $region6: #{model_v2_forward.1} parent=0 // loop_footer
    %s20 = sadd.s32 1, %s16
  $region7: #{model_v2_forward.1} parent=0 // loop_footer_branch
    %15 = sbr.rel target = $region3
  $region8: #{model_v2_forward.1} parent=0 // loop_exit
    _

</llo_original>
